<compile_context>
chip_gen: v7x
topology: tpu7x:2x2x1
jax: 0.10.0
libtpu: 0.0.40
codegen_flags: <defaults>
</compile_context>

<pallas_src>
import functools

import jax
import jax.numpy as jnp
from jax import lax
from jax.experimental import pallas as pl
from jax.experimental.pallas import tpu as pltpu


def _mu_kernel(x_ref, o_ref, *scratch, seq_len, ts, mask_tail):
    # x_ref:   (tb, ts, D) block of im_features
    # o_ref:   (tb, D)     lane-dense output block, resident across the S axis
    # scratch: optional (tb, D) f32 accumulator (only for non-f32 outputs)
    acc_ref = scratch[0] if scratch else o_ref
    s = pl.program_id(1)

    @pl.when(s == 0)
    def _init():
        acc_ref[...] = jnp.zeros_like(acc_ref)

    x = x_ref[...]
    if mask_tail:
        # Zero out tokens past the true sequence length on the tail S-tile.
        tok = s * ts + lax.broadcasted_iota(jnp.int32, x.shape, 1)
        x = jnp.where(tok < seq_len, x, jnp.zeros_like(x))

    # f32 accumulation without materializing an f32 copy of the whole block.
    acc_ref[...] += jnp.sum(x, axis=1, dtype=jnp.float32)

    @pl.when(s == pl.num_programs(1) - 1)
    def _finalize():
        # torch: sum over dim 1 / x.shape[1]
        o_ref[...] = (acc_ref[...] * (1.0 / seq_len)).astype(o_ref.dtype)


def _vmem_capacity_bytes():
    try:
        info = pltpu.get_tpu_info()
        cap = getattr(info, "vmem_capacity_bytes", None)
        if cap:
            return int(cap)
    except Exception:
        pass
    return 128 << 20  # conservative default (v5e/v6e class)


def _pick_tiles(B, S, D, itemsize, budget):
    """Jointly pick (tb, ts). Modest tb, give the remaining budget to ts."""
    # Batch tile: output block is (tb, D) so tb must be a multiple of 8 or == B.
    if B % 8 != 0:
        tb = B
    else:
        tb = 8
        for cand in (32, 16, 8):
            # Keep >= 2 batch tiles whenever B >= 16 (v7x megacore sharding).
            if B % cand == 0 and (B < 16 or B // cand >= 2):
                tb = cand
                break

    # Sequence tile: largest sublane-aligned value fitting the per-block budget.
    sub = 8 * max(1, 4 // itemsize)          # 8 (f32), 16 (bf16), 32 (int8/fp8)
    max_ts = budget // max(1, tb * D * itemsize)
    if max_ts >= S:
        ts = S                               # whole reduction axis in one block
    else:
        ts = max(sub, (max_ts // sub) * sub)
    return tb, ts


def _reference(im_features):
    # Pure-JAX reference of the PyTorch forward.
    x_mu = jnp.sum(im_features, axis=1) / im_features.shape[1]   # (B, D)
    return x_mu[:, None, :]                                      # (B, 1, D)


def projector_forward(im_features):
    """im_features: (B, S, D). Returns (B, 1, D), matching the PyTorch module."""
    B, S, D = im_features.shape
    dtype = im_features.dtype
    itemsize = jnp.dtype(dtype).itemsize
    total_bytes = B * S * D * itemsize

    # Tiny inputs: a (1,1)-grid pallas_call is pure launch overhead; let XLA fuse.
    if total_bytes < (2 << 20):
        return _reference(im_features)

    # Generation-aware per-block budget (pipeline double-buffers the input).
    vmem_cap = _vmem_capacity_bytes()
    if vmem_cap <= (64 << 20):               # v7x-class: 64 MiB VMEM, fast HBM
        budget, vmem_limit = 4 << 20, 32 << 20
    else:                                    # v5e / v6e class: 128 MiB VMEM
        budget, vmem_limit = 8 << 20, 48 << 20

    tb, ts = _pick_tiles(B, S, D, itemsize, budget)
    block_bytes = tb * ts * D * itemsize
    if block_bytes > 2 * budget:
        # Pathological shape (e.g. huge non-8-divisible batch): don't risk VMEM OOM.
        return _reference(im_features)

    grid_b = B // tb                         # tb always divides B by construction
    grid_s = pl.cdiv(S, ts)
    mask_tail = (S % ts) != 0

    out_is_f32 = dtype == jnp.float32
    scratch_shapes = [] if out_is_f32 else [pltpu.VMEM((tb, D), jnp.float32)]

    in_spec_kwargs = {}
    if block_bytes < (1 << 20) and grid_s >= 3:
        # Small blocks expose DMA issue latency; pipeline one buffer deeper.
        in_spec_kwargs["pipeline_mode"] = pl.Buffered(3)

    out2d = pl.pallas_call(
        functools.partial(_mu_kernel, seq_len=S, ts=ts, mask_tail=mask_tail),
        out_shape=jax.ShapeDtypeStruct((B, D), dtype),
        grid_spec=pltpu.PrefetchScalarGridSpec(
            num_scalar_prefetch=0,
            grid=(grid_b, grid_s),
            in_specs=[
                pl.BlockSpec((tb, ts, D), lambda b, s: (b, s, 0), **in_spec_kwargs),
            ],
            # Lane-dense output: D is a multiple of 128 (or equals the full dim);
            # block index constant along the reduction axis -> accumulator output.
            out_specs=pl.BlockSpec((tb, D), lambda b, s: (b, 0)),
            scratch_shapes=scratch_shapes,
        ),
        compiler_params=pltpu.CompilerParams(
            dimension_semantics=("parallel", "arbitrary"),
            vmem_limit_bytes=vmem_limit,
        ),
        cost_estimate=pl.CostEstimate(
            flops=B * S * D,
            transcendentals=0,
            bytes_accessed=total_bytes + B * D * itemsize,
        ),
    )(im_features)

    # torch.stack([x_mu], 1): (B, D) -> (B, 1, D). Metadata-only reshape.
    return out2d.reshape(B, 1, D)


if __name__ == "__main__":
    # Case 1: CLIP-like f32 features, non-divisible S, multiple batch tiles.
    # Exercises the Pallas path with tail masking and the "parallel" batch axis.
    B, S, D = 16, 350, 768
    x1 = jax.random.normal(jax.random.PRNGKey(0), (B, S, D), dtype=jnp.float32)
    out1 = jax.block_until_ready(projector_forward(x1))
    ref1 = jax.block_until_ready(_reference(x1))
    assert out1.shape == (B, 1, D), out1.shape
    assert jnp.allclose(out1, ref1, atol=1e-5, rtol=1e-5)

    # Case 2: bf16 input -> f32 scratch accumulator path, non-divisible S.
    x2 = jax.random.normal(jax.random.PRNGKey(1), (8, 576, 1024), dtype=jnp.bfloat16)
    out2 = jax.block_until_ready(projector_forward(x2))
    ref2 = jax.block_until_ready(_reference(x2))
    assert out2.shape == (8, 1, 1024), out2.shape
    assert jnp.allclose(out2.astype(jnp.float32), ref2.astype(jnp.float32),
                        atol=1e-2, rtol=1e-2)

    # Case 3: tiny input -> pure-JAX fast path (no Pallas launch overhead).
    x3 = jax.random.normal(jax.random.PRNGKey(2), (2, 8, 768), dtype=jnp.float32)
    out3 = jax.block_until_ready(projector_forward(x3))
    ref3 = jax.block_until_ready(_reference(x3))
    assert out3.shape == (2, 1, 768), out3.shape
    assert jnp.allclose(out3, ref3, atol=1e-5, rtol=1e-5)

    print("KERNEL_OK")
</pallas_src>

<mosaic_0001>
module attributes {stable_mosaic.version = 11 : i64} {
  func.func @_mu_kernel(%arg0: i32, %arg1: i32, %arg2: memref<8x336x768xf32, #tpu.memory_space<vmem>>, %arg3: memref<8x768xf32, #tpu.memory_space<vmem>>) attributes {dimension_semantics = [#tpu.dimension_semantics<parallel>, #tpu.dimension_semantics<arbitrary>], iteration_bounds = array<i64: 2, 2>, scalar_prefetch = 0 : i64, scratch_operands = 0 : i64, tpu.core_type = #tpu.core_type<tc>, window_params = [{transform_indices = @transform_0, window_bounds = array<i64: 8, 336, 768>}, {transform_indices = @transform_1, window_bounds = array<i64: 8, 768>}]} {
    %c0_i32 = arith.constant 0 : i32
    %0 = arith.cmpi eq, %arg1, %c0_i32 : i32
    %1 = arith.extui %0 : i1 to i32
    %c0_i32_0 = arith.constant 0 : i32
    %2 = arith.cmpi ne, %1, %c0_i32_0 : i32
    scf.if %2 {
      %cst_9 = arith.constant 0.000000e+00 : f32
      %19 = vector.broadcast %cst_9 : f32 to vector<8x768xf32>
      %c0_10 = arith.constant 0 : index
      %c0_11 = arith.constant 0 : index
      %20 = vector.load %arg3[%c0_10, %c0_11] : memref<8x768xf32, #tpu.memory_space<vmem>>, vector<8x768xf32>
      tpu.vector_store %arg3[%c0_10, %c0_11], %19 {strides = array<i32>} : memref<8x768xf32, #tpu.memory_space<vmem>>, vector<8x768xf32>,
    } else {
    }
    %c0 = arith.constant 0 : index
    %c0_1 = arith.constant 0 : index
    %c0_2 = arith.constant 0 : index
    %3 = vector.load %arg2[%c0, %c0_1, %c0_2] : memref<8x336x768xf32, #tpu.memory_space<vmem>>, vector<8x336x768xf32>
    %c336_i32 = arith.constant 336 : i32
    %4 = arith.muli %arg1, %c336_i32 : i32
    %5 = tpu.iota {dimensions = array<i32: 1>} : vector<8x336x768xi32>
    %6 = vector.broadcast %4 : i32 to vector<8x336x768xi32>
    %7 = arith.addi %6, %5 : vector<8x336x768xi32>
    %c350_i32 = arith.constant 350 : i32
    %8 = vector.broadcast %c350_i32 : i32 to vector<8x336x768xi32>
    %9 = arith.cmpi slt, %7, %8 : vector<8x336x768xi32>
    %cst = arith.constant 0.000000e+00 : f32
    %10 = vector.broadcast %cst : f32 to vector<8x336x768xf32>
    %11 = arith.select %9, %3, %10 : vector<8x336x768xi1>, vector<8x336x768xf32>
    %c0_3 = arith.constant 0 : index
    %c0_4 = arith.constant 0 : index
    %12 = vector.load %arg3[%c0_3, %c0_4] : memref<8x768xf32, #tpu.memory_space<vmem>>, vector<8x768xf32>
    %cst_5 = arith.constant dense<0.000000e+00> : vector<8x768xf32>
    %13 = vector.multi_reduction <add>, %11, %cst_5 [1] : vector<8x336x768xf32> to vector<8x768xf32>
    %14 = arith.addf %12, %13 : vector<8x768xf32>
    %c0_6 = arith.constant 0 : index
    %c0_7 = arith.constant 0 : index
    %15 = vector.load %arg3[%c0_6, %c0_7] : memref<8x768xf32, #tpu.memory_space<vmem>>, vector<8x768xf32>
    tpu.vector_store %arg3[%c0_6, %c0_7], %14 {strides = array<i32>} : memref<8x768xf32, #tpu.memory_space<vmem>>, vector<8x768xf32>,
    %c1_i32 = arith.constant 1 : i32
    %16 = arith.cmpi eq, %arg1, %c1_i32 : i32
    %17 = arith.extui %16 : i1 to i32
    %c0_i32_8 = arith.constant 0 : i32
    %18 = arith.cmpi ne, %17, %c0_i32_8 : i32
    scf.if %18 {
      %c0_9 = arith.constant 0 : index
      %c0_10 = arith.constant 0 : index
      %19 = vector.load %arg3[%c0_9, %c0_10] : memref<8x768xf32, #tpu.memory_space<vmem>>, vector<8x768xf32>
      %cst_11 = arith.constant 0.00285714283 : f32
      %20 = vector.broadcast %cst_11 : f32 to vector<8x768xf32>
      %21 = arith.mulf %19, %20 : vector<8x768xf32>
      %c0_12 = arith.constant 0 : index
      %c0_13 = arith.constant 0 : index
      %22 = vector.load %arg3[%c0_12, %c0_13] : memref<8x768xf32, #tpu.memory_space<vmem>>, vector<8x768xf32>
      tpu.vector_store %arg3[%c0_12, %c0_13], %21 {strides = array<i32>} : memref<8x768xf32, #tpu.memory_space<vmem>>, vector<8x768xf32>,
    } else {
    }
    return
  }
  func.func @transform_0(%arg0: i32, %arg1: i32) -> (i32, i32, i32) {
    %c0_i32 = arith.constant 0 : i32
    %c0_i32_0 = arith.constant 0 : i32
    return %arg0, %arg1, %c0_i32 : i32, i32, i32
  }
  func.func @transform_1(%arg0: i32, %arg1: i32) -> (i32, i32) {
    %c0_i32 = arith.constant 0 : i32
    %c0_i32_0 = arith.constant 0 : i32
    return %arg0, %c0_i32 : i32, i32
  }
}

</mosaic_0001>

<llo_original>
// kernel: tpu_custom_call.1
$region0: #{tpu_custom_call.1}
  #allocation0 [shape = 'u32[]', space=smem, size = 0x4, offset = 0x4, fixed_abs, tag = 'smem constant byte address 0x4 - core index']
  #allocation1 [shape = 'u32[144,128]{1,0:T(1,128)}', space=vmem, size = 0x12000, scoped, tag = 'internal scratch']
  #allocation6 [shape = 's32[]', space=sflag, size = 0x4, offset = 0, fixed_abs, tag = 'sflag constant byte address 0x0 - dummy sync flag']
  %s0 = inlined_call_operand.hbm [shape: f32[16,350,768], index: 0, kind: input, shape index: {}]
  %s1 = inlined_call_operand.hbm [shape: f32[16,768], index: 1, kind: output, shape index: {}]
  %s2 = sld [smem:[#allocation0]]
  $region49: #{tpu_custom_call.1} parent=0
    _
  %s4 = ssub.s32 1, %s2
  %s5 = scalar_select 0, %s4, %s2
  $region1: #{tpu_custom_call.1} parent=0
    #allocation2 [shape = 'u8[16515072]{0}', space=vmem, size = 0xfc0000, scoped, tag = 'input window, operand 0']
    #allocation3 [shape = 's32[2]{0}', space=sflag, size = 0x8, scoped, tag = 'scoped memory for tpu_custom_call.1']
    #allocation4 [shape = 's32[2]{0}', space=sflag, size = 0x8, scoped, tag = 'scoped memory for tpu_custom_call.1']
    #allocation5 [shape = 'u8[49152]{0}', space=vmem, size = 0xc000, scoped, tag = 'output window, operand 0']
    %6 = vsyncpa [#allocation3], 0
    %s7 = scalar_lea.sflag [#allocation3], 1
    %8 = vsyncpa %s7, 0
    %9 = vsyncpa [#allocation4], 0
    %s10 = scalar_lea.sflag [#allocation4], 1
    %11 = vsyncpa %s10, 0
    loop: start=0, step=1, limit=6
    $region2: #{tpu_custom_call.1} parent=1 // loop_pre_header
      _
    $region3: #{tpu_custom_call.1} parent=1 // loop_header
      %s13 = sphi 0, %s17
      %p14 = scmp.ge.s32.totalorder %s13, 6
      %s20 = sphi 0, %s32
      %s21 = sphi 0, %s28
      %s22 = sphi 0, %s20
      %s23 = sphi 0, %s21
      %s24 = sphi 0, %s22
      %s25 = sphi 0, %s23
      %s37 = sphi 0, %s39
      %s40 = sphi 0, %s37
      %s41 = sphi 0, %s40
      %s57 = sphi 0, %s41
      %s63 = sphi 0, %s65
      %s66 = sphi 0, %s63
      %s67 = sphi 0, %s66
      %s83 = sphi 0, %s67
    $region4: #{tpu_custom_call.1} parent=1 // loop_header_branch
      %16 = sbr.rel (%p14) target = $region8
    $region5: #{tpu_custom_call.1} parent=1 // loop_body
      %s18 = ssub.s32 %s13, 1
      %s19 = ssub.s32 %s13, 2
      %s26 = sadd.s32 1, %s21
      %p27 = scmp.ge.s32.totalorder %s26, 2
      %s28 = scalar_select %p27, 0, %s26
      %s29 = sadd.s32 1, %s20
      %s30 = scalar_select %p27, %s29, %s20
      %p31 = scmp.ge.s32.totalorder %s30, 2
      %s32 = scalar_select %p31, 0, %s30
      %s33 = ssub.s32 %s20, %s32
      %s34 = ssub.s32 %s21, %s28
      %s35 = sor.u32 %s33, %s34
      %p36 = scmp.eq.s32.totalorder %s35, 0
      %s38 = sadd.s32 %s37, 1
      %s39 = scalar_select %p36, %s37, %s38
      %p42 = pneg %p36
      %p43 = scmp.eq.s32.totalorder %s13, 3
      %p44 = por %p42, %p43
      %p45 = scmp.ne.s32.totalorder %s37, %s40
      %p46 = scmp.eq.s32.totalorder %s13, 0
      %p47 = por %p45, %p46
      %p48 = scmp.ne.s32.totalorder %s37, %s40
      %p49 = scmp.eq.s32.totalorder %s18, 3
      %p50 = por %p48, %p49
      %p51 = scmp.ne.s32.totalorder %s40, %s41
      %p52 = scmp.eq.s32.totalorder %s18, 0
      %p53 = por %p51, %p52
      %p54 = scmp.ne.s32.totalorder %s40, %s41
      %p55 = scmp.eq.s32.totalorder %s19, 3
      %p56 = por %p54, %p55
      %p58 = scmp.ne.s32.totalorder %s41, %s57
      %p59 = scmp.eq.s32.totalorder %s19, 0
      %p60 = por %p58, %p59
      %s61 = ssub.s32 %s20, %s32
      %p62 = scmp.eq.s32.totalorder %s61, 0
      %s64 = sadd.s32 %s63, 1
      %s65 = scalar_select %p62, %s63, %s64
      %p68 = pneg %p62
      %p69 = scmp.eq.s32.totalorder %s13, 3
      %p70 = por %p68, %p69
      %p71 = scmp.ne.s32.totalorder %s63, %s66
      %p72 = scmp.eq.s32.totalorder %s13, 0
      %p73 = por %p71, %p72
      %p74 = scmp.ne.s32.totalorder %s63, %s66
      %p75 = scmp.eq.s32.totalorder %s18, 3
      %p76 = por %p74, %p75
      %p77 = scmp.ne.s32.totalorder %s66, %s67
      %p78 = scmp.eq.s32.totalorder %s18, 0
      %p79 = por %p77, %p78
      %p80 = scmp.ne.s32.totalorder %s66, %s67
      %p81 = scmp.eq.s32.totalorder %s19, 3
      %p82 = por %p80, %p81
      %p84 = scmp.ne.s32.totalorder %s67, %s83
      %p85 = scmp.eq.s32.totalorder %s19, 0
      %p86 = por %p84, %p85
      %p87 = scmp.le.s32.totalorder 1, %s13
      %p88 = scmp.lt.s32.totalorder %s13, 5
      %p89 = pnand %p87, %p88
      %p90 = pneg %p89
      // Predicated region
      $region9: #{tpu_custom_call.1} parent=5 // pred_check
        _
      $region10: #{tpu_custom_call.1} parent=5 // pred_check_branch
        %92 = sbr.rel (%p89) target = $region12
      $region11: #{tpu_custom_call.1} parent=5 // pred_region
        %s93 = ssub.s32 %s13, 1
      $region12: #{tpu_custom_call.1} parent=5 // pred_fallthru
        _
      %p94 = scmp.lt.s32.totalorder %s13, 4
      // Predicated region
      $region13: #{tpu_custom_call.1} parent=5 // pred_check
        %p95 = pneg %p94
      $region14: #{tpu_custom_call.1} parent=5 // pred_check_branch
        %97 = sbr.rel (%p95) target = $region16
      $region15: #{tpu_custom_call.1} parent=5 // pred_region
        // Predicated region
        $region17: #{tpu_custom_call.1} parent=15 // pred_check
          %p98 = pneg %p47
        $region18: #{tpu_custom_call.1} parent=15 // pred_check_branch
          %100 = sbr.rel (%p98) target = $region20
        $region19: #{tpu_custom_call.1} parent=15 // pred_region
          #allocation7 [shape = 'u32[6]{0}', space=smem, size = 0x18, scoped, tag = 'DMA stride descriptor']
          %s101 = sand.u32 %s37, 1
          %s102 = scalar_lea.sflag [#allocation3], %s101
          %s103 = sand.u32 %s37, 1
          %s104 = smul.addr %s103, 16128
          %s105 = scalar_lea.vmem [#allocation2], %s104
          %s106 = smul.u32 8, %s20
          %s107 = smul.u32 42, %s21
          %s108 = ssub.s32 44, %s107
          %p109 = scmp.lt.s32.totalorder %s108, 42
          %s110 = scalar_select %p109, %s108, 42
          %s111 = smul.u32 1024, %s110
          %s112 = smul.u32 %s111, 6
          %s114 = ssub.s32 258048, %s112
          %115 = vsyncadd %s102, %s114
          %p116 = scmp.ne.s32.totalorder 0, %s112
          %s117 = smul.addr %s107, 6
          %s118 = smul.addr %s106, 264
          %s119 = sadd.s32 %s117, %s118
          %s120 = smul.addr %s119, 128
          %s121 = scalar_lea.hbm %s0, %s120
          %s122 = smul.u32 48, %s110
          %s123 = smul.u32 %s122, 8
          %s125 = sshll.u32 1, 14
          %s126 = sxor.u32 4294967295, %s125
          %s128 = sld [smem:[#allocation0]]
          %s129 = sadd.s32 2, %s128
          %s131 = sshll.u32 7, 26
          %s132 = sxor.u32 4294967295, %s131
          %s133 = sand.u32 0, %s132
          %s134 = sshll.u32 %s129, 26
          %s135 = sor.u32 %s133, %s134
          %s136 = sshll.u32 %s105, 4
          %s137 = int_to_ptr.vmem [resolvable:$true] %s136
          %s138 = sshll.u32 %s123, 4
          %143 = sst [smem:[#allocation7]] 33792
          %s144 = scalar_lea.smem [#allocation7], 1
          %145 = sst [smem:[%s144]] 32256
          %s146 = scalar_lea.smem [#allocation7], 2
          %147 = sst [smem:[%s146]] %s110
          %s148 = scalar_lea.smem [#allocation7], 3
          %149 = sst [smem:[%s148]] 768
          %s150 = scalar_lea.smem [#allocation7], 4
          %151 = sst [smem:[%s150]] 768
          %s152 = scalar_lea.smem [#allocation7], 5
          %153 = sst [smem:[%s152]] 48
          %155 = dma.general (%p116), %s121, %s138, %s137, %s102, [#allocation6], [#allocation7], %s135, 0
        $region20: #{tpu_custom_call.1} parent=15 // pred_fallthru
          _
      $region16: #{tpu_custom_call.1} parent=5 // pred_fallthru
        _
      %p156 = scmp.le.s32.totalorder 1, %s13
      %p157 = scmp.lt.s32.totalorder %s13, 5
      %p158 = pnand %p156, %p157
      %p159 = pneg %p158
      // Predicated region
      $region21: #{tpu_custom_call.1} parent=5 // pred_check
        _
      $region22: #{tpu_custom_call.1} parent=5 // pred_check_branch
        %161 = sbr.rel (%p158) target = $region24
      $region23: #{tpu_custom_call.1} parent=5 // pred_region
        %s162 = ssub.s32 %s13, 1
        %s163 = sand.u32 %s40, 1
        %s164 = scalar_lea.sflag [#allocation3], %s163
        %s165 = sand.u32 %s40, 1
        %s166 = smul.addr %s165, 16128
        %s167 = scalar_lea.vmem [#allocation2], %s166
        // Predicated region
        $region25: #{tpu_custom_call.1} parent=23 // pred_check
          %p168 = pneg %p53
        $region26: #{tpu_custom_call.1} parent=23 // pred_check_branch
          %170 = sbr.rel (%p168) target = $region28
        $region27: #{tpu_custom_call.1} parent=23 // pred_region
          %171 = dma.done %s164, 258048
        $region28: #{tpu_custom_call.1} parent=23 // pred_fallthru
          _
        %s172 = sand.u32 %s40, 1
        %s173 = scalar_lea.sflag [#allocation3], %s172
        %s174 = sand.u32 %s40, 1
        %s175 = smul.addr %s174, 16128
        %s176 = scalar_lea.vmem [#allocation2], %s175
        %p177 = pneg %p53
        %p178 = pneg %p50
        %p179 = pneg %p79
        %p180 = pneg %p76
        %s181 = sand.u32 %s66, 1
        %s182 = scalar_lea.sflag [#allocation4], %s181
        %s183 = sand.u32 %s66, 1
        %s184 = smul.addr %s183, 48
        %s185 = scalar_lea.vmem [#allocation5], %s184
        %s186 = smul.u32 8, %s22
        %s187 = smul.u32 42, %s23
        %s188 = ssub.s32 44, %s187
        %p189 = scmp.lt.s32.totalorder %s188, 42
        %s190 = scalar_select %p189, %s188, 42
        %s191 = smul.u32 1024, %s190
        %s192 = smul.u32 %s191, 6
        %p193 = scmp.eq.s32.totalorder %s23, 0
        // Predicated region
        $region29: #{tpu_custom_call.1} parent=23 // pred_check
          %p194 = pneg %p193
        $region30: #{tpu_custom_call.1} parent=23 // pred_check_branch
          %196 = sbr.rel (%p194) target = $region32
        $region31: #{tpu_custom_call.1} parent=23 // pred_region
          %197 = vst [vmem:[%s185] sm:$0xff] 0.0
          %198 = vst [vmem:[%s185 + $0x8] sm:$0xff] 0.0
          %199 = vst [vmem:[%s185 + $0x10] sm:$0xff] 0.0
          %200 = vst [vmem:[%s185 + $0x18] sm:$0xff] 0.0
          %201 = vst [vmem:[%s185 + $0x20] sm:$0xff] 0.0
          %202 = vst [vmem:[%s185 + $0x28] sm:$0xff] 0.0
        $region32: #{tpu_custom_call.1} parent=23 // pred_fallthru
          _
        %v203 = vld [vmem:[%s167] sm:$0xff]
        %v204 = vld [vmem:[%s167 + $0x8] sm:$0xff]
        %v205 = vld [vmem:[%s167 + $0x10] sm:$0xff]
        %v206 = vld [vmem:[%s167 + $0x18] sm:$0xff]
        %v207 = vld [vmem:[%s167 + $0x20] sm:$0xff]
        %v208 = vld [vmem:[%s167 + $0x28] sm:$0xff]
        %v209 = vld [vmem:[%s167 + $0x30] sm:$0xff]
        %v210 = vld [vmem:[%s167 + $0x38] sm:$0xff]
        %v211 = vld [vmem:[%s167 + $0x40] sm:$0xff]
        %v212 = vld [vmem:[%s167 + $0x48] sm:$0xff]
        %v213 = vld [vmem:[%s167 + $0x50] sm:$0xff]
        %v214 = vld [vmem:[%s167 + $0x58] sm:$0xff]
        %v215 = vld [vmem:[%s167 + $0x60] sm:$0xff]
        %v216 = vld [vmem:[%s167 + $0x68] sm:$0xff]
        %v217 = vld [vmem:[%s167 + $0x70] sm:$0xff]
        %v218 = vld [vmem:[%s167 + $0x78] sm:$0xff]
        %v219 = vld [vmem:[%s167 + $0x80] sm:$0xff]
        %v220 = vld [vmem:[%s167 + $0x88] sm:$0xff]
        %v221 = vld [vmem:[%s167 + $0x90] sm:$0xff]
        %v222 = vld [vmem:[%s167 + $0x98] sm:$0xff]
        %v223 = vld [vmem:[%s167 + $0xa0] sm:$0xff]
        %v224 = vld [vmem:[%s167 + $0xa8] sm:$0xff]
        %v225 = vld [vmem:[%s167 + $0xb0] sm:$0xff]
        %v226 = vld [vmem:[%s167 + $0xb8] sm:$0xff]
        %v227 = vld [vmem:[%s167 + $0xc0] sm:$0xff]
        %v228 = vld [vmem:[%s167 + $0xc8] sm:$0xff]
        %v229 = vld [vmem:[%s167 + $0xd0] sm:$0xff]
        %v230 = vld [vmem:[%s167 + $0xd8] sm:$0xff]
        %v231 = vld [vmem:[%s167 + $0xe0] sm:$0xff]
        %v232 = vld [vmem:[%s167 + $0xe8] sm:$0xff]
        %v233 = vld [vmem:[%s167 + $0xf0] sm:$0xff]
        %v234 = vld [vmem:[%s167 + $0xf8] sm:$0xff]
        %v235 = vld [vmem:[%s167 + $0x100] sm:$0xff]
        %v236 = vld [vmem:[%s167 + $0x108] sm:$0xff]
        %v237 = vld [vmem:[%s167 + $0x110] sm:$0xff]
        %v238 = vld [vmem:[%s167 + $0x118] sm:$0xff]
        %v239 = vld [vmem:[%s167 + $0x120] sm:$0xff]
        %v240 = vld [vmem:[%s167 + $0x128] sm:$0xff]
        %v241 = vld [vmem:[%s167 + $0x130] sm:$0xff]
        %v242 = vld [vmem:[%s167 + $0x138] sm:$0xff]
        %v243 = vld [vmem:[%s167 + $0x140] sm:$0xff]
        %v244 = vld [vmem:[%s167 + $0x148] sm:$0xff]
        %v245 = vld [vmem:[%s167 + $0x150] sm:$0xff]
        %v246 = vld [vmem:[%s167 + $0x158] sm:$0xff]
        %v247 = vld [vmem:[%s167 + $0x160] sm:$0xff]
        %v248 = vld [vmem:[%s167 + $0x168] sm:$0xff]
        %v249 = vld [vmem:[%s167 + $0x170] sm:$0xff]
        %v250 = vld [vmem:[%s167 + $0x178] sm:$0xff]
        %v251 = vld [vmem:[%s167 + $0x180] sm:$0xff]
        %v252 = vld [vmem:[%s167 + $0x188] sm:$0xff]
        %v253 = vld [vmem:[%s167 + $0x190] sm:$0xff]
        %v254 = vld [vmem:[%s167 + $0x198] sm:$0xff]
        %v255 = vld [vmem:[%s167 + $0x1a0] sm:$0xff]
        %v256 = vld [vmem:[%s167 + $0x1a8] sm:$0xff]
        %v257 = vld [vmem:[%s167 + $0x1b0] sm:$0xff]
        %v258 = vld [vmem:[%s167 + $0x1b8] sm:$0xff]
        %v259 = vld [vmem:[%s167 + $0x1c0] sm:$0xff]
        %v260 = vld [vmem:[%s167 + $0x1c8] sm:$0xff]
        %v261 = vld [vmem:[%s167 + $0x1d0] sm:$0xff]
        %v262 = vld [vmem:[%s167 + $0x1d8] sm:$0xff]
        %v263 = vld [vmem:[%s167 + $0x1e0] sm:$0xff]
        %v264 = vld [vmem:[%s167 + $0x1e8] sm:$0xff]
        %v265 = vld [vmem:[%s167 + $0x1f0] sm:$0xff]
        %v266 = vld [vmem:[%s167 + $0x1f8] sm:$0xff]
        %v267 = vld [vmem:[%s167 + $0x200] sm:$0xff]
        %v268 = vld [vmem:[%s167 + $0x208] sm:$0xff]
        %v269 = vld [vmem:[%s167 + $0x210] sm:$0xff]
        %v270 = vld [vmem:[%s167 + $0x218] sm:$0xff]
        %v271 = vld [vmem:[%s167 + $0x220] sm:$0xff]
        %v272 = vld [vmem:[%s167 + $0x228] sm:$0xff]
        %v273 = vld [vmem:[%s167 + $0x230] sm:$0xff]
        %v274 = vld [vmem:[%s167 + $0x238] sm:$0xff]
        %v275 = vld [vmem:[%s167 + $0x240] sm:$0xff]
        %v276 = vld [vmem:[%s167 + $0x248] sm:$0xff]
        %v277 = vld [vmem:[%s167 + $0x250] sm:$0xff]
        %v278 = vld [vmem:[%s167 + $0x258] sm:$0xff]
        %v279 = vld [vmem:[%s167 + $0x260] sm:$0xff]
        %v280 = vld [vmem:[%s167 + $0x268] sm:$0xff]
        %v281 = vld [vmem:[%s167 + $0x270] sm:$0xff]
        %v282 = vld [vmem:[%s167 + $0x278] sm:$0xff]
        %v283 = vld [vmem:[%s167 + $0x280] sm:$0xff]
        %v284 = vld [vmem:[%s167 + $0x288] sm:$0xff]
        %v285 = vld [vmem:[%s167 + $0x290] sm:$0xff]
        %v286 = vld [vmem:[%s167 + $0x298] sm:$0xff]
        %v287 = vld [vmem:[%s167 + $0x2a0] sm:$0xff]
        %v288 = vld [vmem:[%s167 + $0x2a8] sm:$0xff]
        %v289 = vld [vmem:[%s167 + $0x2b0] sm:$0xff]
        %v290 = vld [vmem:[%s167 + $0x2b8] sm:$0xff]
        %v291 = vld [vmem:[%s167 + $0x2c0] sm:$0xff]
        %v292 = vld [vmem:[%s167 + $0x2c8] sm:$0xff]
        %v293 = vld [vmem:[%s167 + $0x2d0] sm:$0xff]
        %v294 = vld [vmem:[%s167 + $0x2d8] sm:$0xff]
        %v295 = vld [vmem:[%s167 + $0x2e0] sm:$0xff]
        %v296 = vld [vmem:[%s167 + $0x2e8] sm:$0xff]
        %v297 = vld [vmem:[%s167 + $0x2f0] sm:$0xff]
        %v298 = vld [vmem:[%s167 + $0x2f8] sm:$0xff]
        %v299 = vld [vmem:[%s167 + $0x300] sm:$0xff]
        %v300 = vld [vmem:[%s167 + $0x308] sm:$0xff]
        %v301 = vld [vmem:[%s167 + $0x310] sm:$0xff]
        %v302 = vld [vmem:[%s167 + $0x318] sm:$0xff]
        %v303 = vld [vmem:[%s167 + $0x320] sm:$0xff]
        %v304 = vld [vmem:[%s167 + $0x328] sm:$0xff]
        %v305 = vld [vmem:[%s167 + $0x330] sm:$0xff]
        %v306 = vld [vmem:[%s167 + $0x338] sm:$0xff]
        %v307 = vld [vmem:[%s167 + $0x340] sm:$0xff]
        %v308 = vld [vmem:[%s167 + $0x348] sm:$0xff]
        %v309 = vld [vmem:[%s167 + $0x350] sm:$0xff]
        %v310 = vld [vmem:[%s167 + $0x358] sm:$0xff]
        %v311 = vld [vmem:[%s167 + $0x360] sm:$0xff]
        %v312 = vld [vmem:[%s167 + $0x368] sm:$0xff]
        %v313 = vld [vmem:[%s167 + $0x370] sm:$0xff]
        %v314 = vld [vmem:[%s167 + $0x378] sm:$0xff]
        %v315 = vld [vmem:[%s167 + $0x380] sm:$0xff]
        %v316 = vld [vmem:[%s167 + $0x388] sm:$0xff]
        %v317 = vld [vmem:[%s167 + $0x390] sm:$0xff]
        %v318 = vld [vmem:[%s167 + $0x398] sm:$0xff]
        %v319 = vld [vmem:[%s167 + $0x3a0] sm:$0xff]
        %v320 = vld [vmem:[%s167 + $0x3a8] sm:$0xff]
        %v321 = vld [vmem:[%s167 + $0x3b0] sm:$0xff]
        %v322 = vld [vmem:[%s167 + $0x3b8] sm:$0xff]
        %v323 = vld [vmem:[%s167 + $0x3c0] sm:$0xff]
        %v324 = vld [vmem:[%s167 + $0x3c8] sm:$0xff]
        %v325 = vld [vmem:[%s167 + $0x3d0] sm:$0xff]
        %v326 = vld [vmem:[%s167 + $0x3d8] sm:$0xff]
        %v327 = vld [vmem:[%s167 + $0x3e0] sm:$0xff]
        %v328 = vld [vmem:[%s167 + $0x3e8] sm:$0xff]
        %v329 = vld [vmem:[%s167 + $0x3f0] sm:$0xff]
        %v330 = vld [vmem:[%s167 + $0x3f8] sm:$0xff]
        %v331 = vld [vmem:[%s167 + $0x400] sm:$0xff]
        %v332 = vld [vmem:[%s167 + $0x408] sm:$0xff]
        %v333 = vld [vmem:[%s167 + $0x410] sm:$0xff]
        %v334 = vld [vmem:[%s167 + $0x418] sm:$0xff]
        %v335 = vld [vmem:[%s167 + $0x420] sm:$0xff]
        %v336 = vld [vmem:[%s167 + $0x428] sm:$0xff]
        %v337 = vld [vmem:[%s167 + $0x430] sm:$0xff]
        %v338 = vld [vmem:[%s167 + $0x438] sm:$0xff]
        %v339 = vld [vmem:[%s167 + $0x440] sm:$0xff]
        %v340 = vld [vmem:[%s167 + $0x448] sm:$0xff]
        %v341 = vld [vmem:[%s167 + $0x450] sm:$0xff]
        %v342 = vld [vmem:[%s167 + $0x458] sm:$0xff]
        %v343 = vld [vmem:[%s167 + $0x460] sm:$0xff]
        %v344 = vld [vmem:[%s167 + $0x468] sm:$0xff]
        %v345 = vld [vmem:[%s167 + $0x470] sm:$0xff]
        %v346 = vld [vmem:[%s167 + $0x478] sm:$0xff]
        %v347 = vld [vmem:[%s167 + $0x480] sm:$0xff]
        %v348 = vld [vmem:[%s167 + $0x488] sm:$0xff]
        %v349 = vld [vmem:[%s167 + $0x490] sm:$0xff]
        %v350 = vld [vmem:[%s167 + $0x498] sm:$0xff]
        %v351 = vld [vmem:[%s167 + $0x4a0] sm:$0xff]
        %v352 = vld [vmem:[%s167 + $0x4a8] sm:$0xff]
        %v353 = vld [vmem:[%s167 + $0x4b0] sm:$0xff]
        %v354 = vld [vmem:[%s167 + $0x4b8] sm:$0xff]
        %v355 = vld [vmem:[%s167 + $0x4c0] sm:$0xff]
        %v356 = vld [vmem:[%s167 + $0x4c8] sm:$0xff]
        %v357 = vld [vmem:[%s167 + $0x4d0] sm:$0xff]
        %v358 = vld [vmem:[%s167 + $0x4d8] sm:$0xff]
        %v359 = vld [vmem:[%s167 + $0x4e0] sm:$0xff]
        %v360 = vld [vmem:[%s167 + $0x4e8] sm:$0xff]
        %v361 = vld [vmem:[%s167 + $0x4f0] sm:$0xff]
        %v362 = vld [vmem:[%s167 + $0x4f8] sm:$0xff]
        %v363 = vld [vmem:[%s167 + $0x500] sm:$0xff]
        %v364 = vld [vmem:[%s167 + $0x508] sm:$0xff]
        %v365 = vld [vmem:[%s167 + $0x510] sm:$0xff]
        %v366 = vld [vmem:[%s167 + $0x518] sm:$0xff]
        %v367 = vld [vmem:[%s167 + $0x520] sm:$0xff]
        %v368 = vld [vmem:[%s167 + $0x528] sm:$0xff]
        %v369 = vld [vmem:[%s167 + $0x530] sm:$0xff]
        %v370 = vld [vmem:[%s167 + $0x538] sm:$0xff]
        %v371 = vld [vmem:[%s167 + $0x540] sm:$0xff]
        %v372 = vld [vmem:[%s167 + $0x548] sm:$0xff]
        %v373 = vld [vmem:[%s167 + $0x550] sm:$0xff]
        %v374 = vld [vmem:[%s167 + $0x558] sm:$0xff]
        %v375 = vld [vmem:[%s167 + $0x560] sm:$0xff]
        %v376 = vld [vmem:[%s167 + $0x568] sm:$0xff]
        %v377 = vld [vmem:[%s167 + $0x570] sm:$0xff]
        %v378 = vld [vmem:[%s167 + $0x578] sm:$0xff]
        %v379 = vld [vmem:[%s167 + $0x580] sm:$0xff]
        %v380 = vld [vmem:[%s167 + $0x588] sm:$0xff]
        %v381 = vld [vmem:[%s167 + $0x590] sm:$0xff]
        %v382 = vld [vmem:[%s167 + $0x598] sm:$0xff]
        %v383 = vld [vmem:[%s167 + $0x5a0] sm:$0xff]
        %v384 = vld [vmem:[%s167 + $0x5a8] sm:$0xff]
        %v385 = vld [vmem:[%s167 + $0x5b0] sm:$0xff]
        %v386 = vld [vmem:[%s167 + $0x5b8] sm:$0xff]
        %v387 = vld [vmem:[%s167 + $0x5c0] sm:$0xff]
        %v388 = vld [vmem:[%s167 + $0x5c8] sm:$0xff]
        %v389 = vld [vmem:[%s167 + $0x5d0] sm:$0xff]
        %v390 = vld [vmem:[%s167 + $0x5d8] sm:$0xff]
        %v391 = vld [vmem:[%s167 + $0x5e0] sm:$0xff]
        %v392 = vld [vmem:[%s167 + $0x5e8] sm:$0xff]
        %v393 = vld [vmem:[%s167 + $0x5f0] sm:$0xff]
        %v394 = vld [vmem:[%s167 + $0x5f8] sm:$0xff]
        %v395 = vld [vmem:[%s167 + $0x600] sm:$0xff]
        %v396 = vld [vmem:[%s167 + $0x608] sm:$0xff]
        %v397 = vld [vmem:[%s167 + $0x610] sm:$0xff]
        %v398 = vld [vmem:[%s167 + $0x618] sm:$0xff]
        %v399 = vld [vmem:[%s167 + $0x620] sm:$0xff]
        %v400 = vld [vmem:[%s167 + $0x628] sm:$0xff]
        %v401 = vld [vmem:[%s167 + $0x630] sm:$0xff]
        %v402 = vld [vmem:[%s167 + $0x638] sm:$0xff]
        %v403 = vld [vmem:[%s167 + $0x640] sm:$0xff]
        %v404 = vld [vmem:[%s167 + $0x648] sm:$0xff]
        %v405 = vld [vmem:[%s167 + $0x650] sm:$0xff]
        %v406 = vld [vmem:[%s167 + $0x658] sm:$0xff]
        %v407 = vld [vmem:[%s167 + $0x660] sm:$0xff]
        %v408 = vld [vmem:[%s167 + $0x668] sm:$0xff]
        %v409 = vld [vmem:[%s167 + $0x670] sm:$0xff]
        %v410 = vld [vmem:[%s167 + $0x678] sm:$0xff]
        %v411 = vld [vmem:[%s167 + $0x680] sm:$0xff]
        %v412 = vld [vmem:[%s167 + $0x688] sm:$0xff]
        %v413 = vld [vmem:[%s167 + $0x690] sm:$0xff]
        %v414 = vld [vmem:[%s167 + $0x698] sm:$0xff]
        %v415 = vld [vmem:[%s167 + $0x6a0] sm:$0xff]
        %v416 = vld [vmem:[%s167 + $0x6a8] sm:$0xff]
        %v417 = vld [vmem:[%s167 + $0x6b0] sm:$0xff]
        %v418 = vld [vmem:[%s167 + $0x6b8] sm:$0xff]
        %v419 = vld [vmem:[%s167 + $0x6c0] sm:$0xff]
        %v420 = vld [vmem:[%s167 + $0x6c8] sm:$0xff]
        %v421 = vld [vmem:[%s167 + $0x6d0] sm:$0xff]
        %v422 = vld [vmem:[%s167 + $0x6d8] sm:$0xff]
        %v423 = vld [vmem:[%s167 + $0x6e0] sm:$0xff]
        %v424 = vld [vmem:[%s167 + $0x6e8] sm:$0xff]
        %v425 = vld [vmem:[%s167 + $0x6f0] sm:$0xff]
        %v426 = vld [vmem:[%s167 + $0x6f8] sm:$0xff]
        %v427 = vld [vmem:[%s167 + $0x700] sm:$0xff]
        %v428 = vld [vmem:[%s167 + $0x708] sm:$0xff]
        %v429 = vld [vmem:[%s167 + $0x710] sm:$0xff]
        %v430 = vld [vmem:[%s167 + $0x718] sm:$0xff]
        %v431 = vld [vmem:[%s167 + $0x720] sm:$0xff]
        %v432 = vld [vmem:[%s167 + $0x728] sm:$0xff]
        %v433 = vld [vmem:[%s167 + $0x730] sm:$0xff]
        %v434 = vld [vmem:[%s167 + $0x738] sm:$0xff]
        %v435 = vld [vmem:[%s167 + $0x740] sm:$0xff]
        %v436 = vld [vmem:[%s167 + $0x748] sm:$0xff]
        %v437 = vld [vmem:[%s167 + $0x750] sm:$0xff]
        %v438 = vld [vmem:[%s167 + $0x758] sm:$0xff]
        %v439 = vld [vmem:[%s167 + $0x760] sm:$0xff]
        %v440 = vld [vmem:[%s167 + $0x768] sm:$0xff]
        %v441 = vld [vmem:[%s167 + $0x770] sm:$0xff]
        %v442 = vld [vmem:[%s167 + $0x778] sm:$0xff]
        %v443 = vld [vmem:[%s167 + $0x780] sm:$0xff]
        %v444 = vld [vmem:[%s167 + $0x788] sm:$0xff]
        %v445 = vld [vmem:[%s167 + $0x790] sm:$0xff]
        %v446 = vld [vmem:[%s167 + $0x798] sm:$0xff]
        %v447 = vld [vmem:[%s167 + $0x7a0] sm:$0xff]
        %v448 = vld [vmem:[%s167 + $0x7a8] sm:$0xff]
        %v449 = vld [vmem:[%s167 + $0x7b0] sm:$0xff]
        %v450 = vld [vmem:[%s167 + $0x7b8] sm:$0xff]
        %v451 = vld [vmem:[%s167 + $0x7c0] sm:$0xff]
        %v452 = vld [vmem:[%s167 + $0x7c8] sm:$0xff]
        %v453 = vld [vmem:[%s167 + $0x7d0] sm:$0xff]
        %v454 = vld [vmem:[%s167 + $0x7d8] sm:$0xff]
        %v455 = vld [vmem:[%s167 + $0x7e0] sm:$0xff]
        %v456 = vld [vmem:[%s167 + $0x7e8] sm:$0xff]
        %v457 = vld [vmem:[%s167 + $0x7f0] sm:$0xff]
        %v458 = vld [vmem:[%s167 + $0x7f8] sm:$0xff]
        %v459 = vld [vmem:[%s167 + $0x800] sm:$0xff]
        %v460 = vld [vmem:[%s167 + $0x808] sm:$0xff]
        %v461 = vld [vmem:[%s167 + $0x810] sm:$0xff]
        %v462 = vld [vmem:[%s167 + $0x818] sm:$0xff]
        %v463 = vld [vmem:[%s167 + $0x820] sm:$0xff]
        %v464 = vld [vmem:[%s167 + $0x828] sm:$0xff]
        %v465 = vld [vmem:[%s167 + $0x830] sm:$0xff]
        %v466 = vld [vmem:[%s167 + $0x838] sm:$0xff]
        %v467 = vld [vmem:[%s167 + $0x840] sm:$0xff]
        %v468 = vld [vmem:[%s167 + $0x848] sm:$0xff]
        %v469 = vld [vmem:[%s167 + $0x850] sm:$0xff]
        %v470 = vld [vmem:[%s167 + $0x858] sm:$0xff]
        %v471 = vld [vmem:[%s167 + $0x860] sm:$0xff]
        %v472 = vld [vmem:[%s167 + $0x868] sm:$0xff]
        %v473 = vld [vmem:[%s167 + $0x870] sm:$0xff]
        %v474 = vld [vmem:[%s167 + $0x878] sm:$0xff]
        %v475 = vld [vmem:[%s167 + $0x880] sm:$0xff]
        %v476 = vld [vmem:[%s167 + $0x888] sm:$0xff]
        %v477 = vld [vmem:[%s167 + $0x890] sm:$0xff]
        %v478 = vld [vmem:[%s167 + $0x898] sm:$0xff]
        %v479 = vld [vmem:[%s167 + $0x8a0] sm:$0xff]
        %v480 = vld [vmem:[%s167 + $0x8a8] sm:$0xff]
        %v481 = vld [vmem:[%s167 + $0x8b0] sm:$0xff]
        %v482 = vld [vmem:[%s167 + $0x8b8] sm:$0xff]
        %v483 = vld [vmem:[%s167 + $0x8c0] sm:$0xff]
        %v484 = vld [vmem:[%s167 + $0x8c8] sm:$0xff]
        %v485 = vld [vmem:[%s167 + $0x8d0] sm:$0xff]
        %v486 = vld [vmem:[%s167 + $0x8d8] sm:$0xff]
        %v487 = vld [vmem:[%s167 + $0x8e0] sm:$0xff]
        %v488 = vld [vmem:[%s167 + $0x8e8] sm:$0xff]
        %v489 = vld [vmem:[%s167 + $0x8f0] sm:$0xff]
        %v490 = vld [vmem:[%s167 + $0x8f8] sm:$0xff]
        %v491 = vld [vmem:[%s167 + $0x900] sm:$0xff]
        %v492 = vld [vmem:[%s167 + $0x908] sm:$0xff]
        %v493 = vld [vmem:[%s167 + $0x910] sm:$0xff]
        %v494 = vld [vmem:[%s167 + $0x918] sm:$0xff]
        %v495 = vld [vmem:[%s167 + $0x920] sm:$0xff]
        %v496 = vld [vmem:[%s167 + $0x928] sm:$0xff]
        %v497 = vld [vmem:[%s167 + $0x930] sm:$0xff]
        %v498 = vld [vmem:[%s167 + $0x938] sm:$0xff]
        %v499 = vld [vmem:[%s167 + $0x940] sm:$0xff]
        %v500 = vld [vmem:[%s167 + $0x948] sm:$0xff]
        %v501 = vld [vmem:[%s167 + $0x950] sm:$0xff]
        %v502 = vld [vmem:[%s167 + $0x958] sm:$0xff]
        %v503 = vld [vmem:[%s167 + $0x960] sm:$0xff]
        %v504 = vld [vmem:[%s167 + $0x968] sm:$0xff]
        %v505 = vld [vmem:[%s167 + $0x970] sm:$0xff]
        %v506 = vld [vmem:[%s167 + $0x978] sm:$0xff]
        %v507 = vld [vmem:[%s167 + $0x980] sm:$0xff]
        %v508 = vld [vmem:[%s167 + $0x988] sm:$0xff]
        %v509 = vld [vmem:[%s167 + $0x990] sm:$0xff]
        %v510 = vld [vmem:[%s167 + $0x998] sm:$0xff]
        %v511 = vld [vmem:[%s167 + $0x9a0] sm:$0xff]
        %v512 = vld [vmem:[%s167 + $0x9a8] sm:$0xff]
        %v513 = vld [vmem:[%s167 + $0x9b0] sm:$0xff]
        %v514 = vld [vmem:[%s167 + $0x9b8] sm:$0xff]
        %v515 = vld [vmem:[%s167 + $0x9c0] sm:$0xff]
        %v516 = vld [vmem:[%s167 + $0x9c8] sm:$0xff]
        %v517 = vld [vmem:[%s167 + $0x9d0] sm:$0xff]
        %v518 = vld [vmem:[%s167 + $0x9d8] sm:$0xff]
        %v519 = vld [vmem:[%s167 + $0x9e0] sm:$0xff]
        %v520 = vld [vmem:[%s167 + $0x9e8] sm:$0xff]
        %v521 = vld [vmem:[%s167 + $0x9f0] sm:$0xff]
        %v522 = vld [vmem:[%s167 + $0x9f8] sm:$0xff]
        %v523 = vld [vmem:[%s167 + $0xa00] sm:$0xff]
        %v524 = vld [vmem:[%s167 + $0xa08] sm:$0xff]
        %v525 = vld [vmem:[%s167 + $0xa10] sm:$0xff]
        %v526 = vld [vmem:[%s167 + $0xa18] sm:$0xff]
        %v527 = vld [vmem:[%s167 + $0xa20] sm:$0xff]
        %v528 = vld [vmem:[%s167 + $0xa28] sm:$0xff]
        %v529 = vld [vmem:[%s167 + $0xa30] sm:$0xff]
        %v530 = vld [vmem:[%s167 + $0xa38] sm:$0xff]
        %v531 = vld [vmem:[%s167 + $0xa40] sm:$0xff]
        %v532 = vld [vmem:[%s167 + $0xa48] sm:$0xff]
        %v533 = vld [vmem:[%s167 + $0xa50] sm:$0xff]
        %v534 = vld [vmem:[%s167 + $0xa58] sm:$0xff]
        %v535 = vld [vmem:[%s167 + $0xa60] sm:$0xff]
        %v536 = vld [vmem:[%s167 + $0xa68] sm:$0xff]
        %v537 = vld [vmem:[%s167 + $0xa70] sm:$0xff]
        %v538 = vld [vmem:[%s167 + $0xa78] sm:$0xff]
        %v539 = vld [vmem:[%s167 + $0xa80] sm:$0xff]
        %v540 = vld [vmem:[%s167 + $0xa88] sm:$0xff]
        %v541 = vld [vmem:[%s167 + $0xa90] sm:$0xff]
        %v542 = vld [vmem:[%s167 + $0xa98] sm:$0xff]
        %v543 = vld [vmem:[%s167 + $0xaa0] sm:$0xff]
        %v544 = vld [vmem:[%s167 + $0xaa8] sm:$0xff]
        %v545 = vld [vmem:[%s167 + $0xab0] sm:$0xff]
        %v546 = vld [vmem:[%s167 + $0xab8] sm:$0xff]
        %v547 = vld [vmem:[%s167 + $0xac0] sm:$0xff]
        %v548 = vld [vmem:[%s167 + $0xac8] sm:$0xff]
        %v549 = vld [vmem:[%s167 + $0xad0] sm:$0xff]
        %v550 = vld [vmem:[%s167 + $0xad8] sm:$0xff]
        %v551 = vld [vmem:[%s167 + $0xae0] sm:$0xff]
        %v552 = vld [vmem:[%s167 + $0xae8] sm:$0xff]
        %v553 = vld [vmem:[%s167 + $0xaf0] sm:$0xff]
        %v554 = vld [vmem:[%s167 + $0xaf8] sm:$0xff]
        %v555 = vld [vmem:[%s167 + $0xb00] sm:$0xff]
        %v556 = vld [vmem:[%s167 + $0xb08] sm:$0xff]
        %v557 = vld [vmem:[%s167 + $0xb10] sm:$0xff]
        %v558 = vld [vmem:[%s167 + $0xb18] sm:$0xff]
        %v559 = vld [vmem:[%s167 + $0xb20] sm:$0xff]
        %v560 = vld [vmem:[%s167 + $0xb28] sm:$0xff]
        %v561 = vld [vmem:[%s167 + $0xb30] sm:$0xff]
        %v562 = vld [vmem:[%s167 + $0xb38] sm:$0xff]
        %v563 = vld [vmem:[%s167 + $0xb40] sm:$0xff]
        %v564 = vld [vmem:[%s167 + $0xb48] sm:$0xff]
        %v565 = vld [vmem:[%s167 + $0xb50] sm:$0xff]
        %v566 = vld [vmem:[%s167 + $0xb58] sm:$0xff]
        %v567 = vld [vmem:[%s167 + $0xb60] sm:$0xff]
        %v568 = vld [vmem:[%s167 + $0xb68] sm:$0xff]
        %v569 = vld [vmem:[%s167 + $0xb70] sm:$0xff]
        %v570 = vld [vmem:[%s167 + $0xb78] sm:$0xff]
        %v571 = vld [vmem:[%s167 + $0xb80] sm:$0xff]
        %v572 = vld [vmem:[%s167 + $0xb88] sm:$0xff]
        %v573 = vld [vmem:[%s167 + $0xb90] sm:$0xff]
        %v574 = vld [vmem:[%s167 + $0xb98] sm:$0xff]
        %v575 = vld [vmem:[%s167 + $0xba0] sm:$0xff]
        %v576 = vld [vmem:[%s167 + $0xba8] sm:$0xff]
        %v577 = vld [vmem:[%s167 + $0xbb0] sm:$0xff]
        %v578 = vld [vmem:[%s167 + $0xbb8] sm:$0xff]
        %v579 = vld [vmem:[%s167 + $0xbc0] sm:$0xff]
        %v580 = vld [vmem:[%s167 + $0xbc8] sm:$0xff]
        %v581 = vld [vmem:[%s167 + $0xbd0] sm:$0xff]
        %v582 = vld [vmem:[%s167 + $0xbd8] sm:$0xff]
        %v583 = vld [vmem:[%s167 + $0xbe0] sm:$0xff]
        %v584 = vld [vmem:[%s167 + $0xbe8] sm:$0xff]
        %v585 = vld [vmem:[%s167 + $0xbf0] sm:$0xff]
        %v586 = vld [vmem:[%s167 + $0xbf8] sm:$0xff]
        %v587 = vld [vmem:[%s167 + $0xc00] sm:$0xff]
        %v588 = vld [vmem:[%s167 + $0xc08] sm:$0xff]
        %v589 = vld [vmem:[%s167 + $0xc10] sm:$0xff]
        %v590 = vld [vmem:[%s167 + $0xc18] sm:$0xff]
        %v591 = vld [vmem:[%s167 + $0xc20] sm:$0xff]
        %v592 = vld [vmem:[%s167 + $0xc28] sm:$0xff]
        %v593 = vld [vmem:[%s167 + $0xc30] sm:$0xff]
        %v594 = vld [vmem:[%s167 + $0xc38] sm:$0xff]
        %v595 = vld [vmem:[%s167 + $0xc40] sm:$0xff]
        %v596 = vld [vmem:[%s167 + $0xc48] sm:$0xff]
        %v597 = vld [vmem:[%s167 + $0xc50] sm:$0xff]
        %v598 = vld [vmem:[%s167 + $0xc58] sm:$0xff]
        %v599 = vld [vmem:[%s167 + $0xc60] sm:$0xff]
        %v600 = vld [vmem:[%s167 + $0xc68] sm:$0xff]
        %v601 = vld [vmem:[%s167 + $0xc70] sm:$0xff]
        %v602 = vld [vmem:[%s167 + $0xc78] sm:$0xff]
        %v603 = vld [vmem:[%s167 + $0xc80] sm:$0xff]
        %v604 = vld [vmem:[%s167 + $0xc88] sm:$0xff]
        %v605 = vld [vmem:[%s167 + $0xc90] sm:$0xff]
        %v606 = vld [vmem:[%s167 + $0xc98] sm:$0xff]
        %v607 = vld [vmem:[%s167 + $0xca0] sm:$0xff]
        %v608 = vld [vmem:[%s167 + $0xca8] sm:$0xff]
        %v609 = vld [vmem:[%s167 + $0xcb0] sm:$0xff]
        %v610 = vld [vmem:[%s167 + $0xcb8] sm:$0xff]
        %v611 = vld [vmem:[%s167 + $0xcc0] sm:$0xff]
        %v612 = vld [vmem:[%s167 + $0xcc8] sm:$0xff]
        %v613 = vld [vmem:[%s167 + $0xcd0] sm:$0xff]
        %v614 = vld [vmem:[%s167 + $0xcd8] sm:$0xff]
        %v615 = vld [vmem:[%s167 + $0xce0] sm:$0xff]
        %v616 = vld [vmem:[%s167 + $0xce8] sm:$0xff]
        %v617 = vld [vmem:[%s167 + $0xcf0] sm:$0xff]
        %v618 = vld [vmem:[%s167 + $0xcf8] sm:$0xff]
        %v619 = vld [vmem:[%s167 + $0xd00] sm:$0xff]
        %v620 = vld [vmem:[%s167 + $0xd08] sm:$0xff]
        %v621 = vld [vmem:[%s167 + $0xd10] sm:$0xff]
        %v622 = vld [vmem:[%s167 + $0xd18] sm:$0xff]
        %v623 = vld [vmem:[%s167 + $0xd20] sm:$0xff]
        %v624 = vld [vmem:[%s167 + $0xd28] sm:$0xff]
        %v625 = vld [vmem:[%s167 + $0xd30] sm:$0xff]
        %v626 = vld [vmem:[%s167 + $0xd38] sm:$0xff]
        %v627 = vld [vmem:[%s167 + $0xd40] sm:$0xff]
        %v628 = vld [vmem:[%s167 + $0xd48] sm:$0xff]
        %v629 = vld [vmem:[%s167 + $0xd50] sm:$0xff]
        %v630 = vld [vmem:[%s167 + $0xd58] sm:$0xff]
        %v631 = vld [vmem:[%s167 + $0xd60] sm:$0xff]
        %v632 = vld [vmem:[%s167 + $0xd68] sm:$0xff]
        %v633 = vld [vmem:[%s167 + $0xd70] sm:$0xff]
        %v634 = vld [vmem:[%s167 + $0xd78] sm:$0xff]
        %v635 = vld [vmem:[%s167 + $0xd80] sm:$0xff]
        %v636 = vld [vmem:[%s167 + $0xd88] sm:$0xff]
        %v637 = vld [vmem:[%s167 + $0xd90] sm:$0xff]
        %v638 = vld [vmem:[%s167 + $0xd98] sm:$0xff]
        %v639 = vld [vmem:[%s167 + $0xda0] sm:$0xff]
        %v640 = vld [vmem:[%s167 + $0xda8] sm:$0xff]
        %v641 = vld [vmem:[%s167 + $0xdb0] sm:$0xff]
        %v642 = vld [vmem:[%s167 + $0xdb8] sm:$0xff]
        %v643 = vld [vmem:[%s167 + $0xdc0] sm:$0xff]
        %v644 = vld [vmem:[%s167 + $0xdc8] sm:$0xff]
        %v645 = vld [vmem:[%s167 + $0xdd0] sm:$0xff]
        %v646 = vld [vmem:[%s167 + $0xdd8] sm:$0xff]
        %v647 = vld [vmem:[%s167 + $0xde0] sm:$0xff]
        %v648 = vld [vmem:[%s167 + $0xde8] sm:$0xff]
        %v649 = vld [vmem:[%s167 + $0xdf0] sm:$0xff]
        %v650 = vld [vmem:[%s167 + $0xdf8] sm:$0xff]
        %v651 = vld [vmem:[%s167 + $0xe00] sm:$0xff]
        %v652 = vld [vmem:[%s167 + $0xe08] sm:$0xff]
        %v653 = vld [vmem:[%s167 + $0xe10] sm:$0xff]
        %v654 = vld [vmem:[%s167 + $0xe18] sm:$0xff]
        %v655 = vld [vmem:[%s167 + $0xe20] sm:$0xff]
        %v656 = vld [vmem:[%s167 + $0xe28] sm:$0xff]
        %v657 = vld [vmem:[%s167 + $0xe30] sm:$0xff]
        %v658 = vld [vmem:[%s167 + $0xe38] sm:$0xff]
        %v659 = vld [vmem:[%s167 + $0xe40] sm:$0xff]
        %v660 = vld [vmem:[%s167 + $0xe48] sm:$0xff]
        %v661 = vld [vmem:[%s167 + $0xe50] sm:$0xff]
        %v662 = vld [vmem:[%s167 + $0xe58] sm:$0xff]
        %v663 = vld [vmem:[%s167 + $0xe60] sm:$0xff]
        %v664 = vld [vmem:[%s167 + $0xe68] sm:$0xff]
        %v665 = vld [vmem:[%s167 + $0xe70] sm:$0xff]
        %v666 = vld [vmem:[%s167 + $0xe78] sm:$0xff]
        %v667 = vld [vmem:[%s167 + $0xe80] sm:$0xff]
        %v668 = vld [vmem:[%s167 + $0xe88] sm:$0xff]
        %v669 = vld [vmem:[%s167 + $0xe90] sm:$0xff]
        %v670 = vld [vmem:[%s167 + $0xe98] sm:$0xff]
        %v671 = vld [vmem:[%s167 + $0xea0] sm:$0xff]
        %v672 = vld [vmem:[%s167 + $0xea8] sm:$0xff]
        %v673 = vld [vmem:[%s167 + $0xeb0] sm:$0xff]
        %v674 = vld [vmem:[%s167 + $0xeb8] sm:$0xff]
        %v675 = vld [vmem:[%s167 + $0xec0] sm:$0xff]
        %v676 = vld [vmem:[%s167 + $0xec8] sm:$0xff]
        %v677 = vld [vmem:[%s167 + $0xed0] sm:$0xff]
        %v678 = vld [vmem:[%s167 + $0xed8] sm:$0xff]
        %v679 = vld [vmem:[%s167 + $0xee0] sm:$0xff]
        %v680 = vld [vmem:[%s167 + $0xee8] sm:$0xff]
        %v681 = vld [vmem:[%s167 + $0xef0] sm:$0xff]
        %v682 = vld [vmem:[%s167 + $0xef8] sm:$0xff]
        %v683 = vld [vmem:[%s167 + $0xf00] sm:$0xff]
        %v684 = vld [vmem:[%s167 + $0xf08] sm:$0xff]
        %v685 = vld [vmem:[%s167 + $0xf10] sm:$0xff]
        %v686 = vld [vmem:[%s167 + $0xf18] sm:$0xff]
        %v687 = vld [vmem:[%s167 + $0xf20] sm:$0xff]
        %v688 = vld [vmem:[%s167 + $0xf28] sm:$0xff]
        %v689 = vld [vmem:[%s167 + $0xf30] sm:$0xff]
        %v690 = vld [vmem:[%s167 + $0xf38] sm:$0xff]
        %v691 = vld [vmem:[%s167 + $0xf40] sm:$0xff]
        %v692 = vld [vmem:[%s167 + $0xf48] sm:$0xff]
        %v693 = vld [vmem:[%s167 + $0xf50] sm:$0xff]
        %v694 = vld [vmem:[%s167 + $0xf58] sm:$0xff]
        %v695 = vld [vmem:[%s167 + $0xf60] sm:$0xff]
        %v696 = vld [vmem:[%s167 + $0xf68] sm:$0xff]
        %v697 = vld [vmem:[%s167 + $0xf70] sm:$0xff]
        %v698 = vld [vmem:[%s167 + $0xf78] sm:$0xff]
        %v699 = vld [vmem:[%s167 + $0xf80] sm:$0xff]
        %v700 = vld [vmem:[%s167 + $0xf88] sm:$0xff]
        %v701 = vld [vmem:[%s167 + $0xf90] sm:$0xff]
        %v702 = vld [vmem:[%s167 + $0xf98] sm:$0xff]
        %v703 = vld [vmem:[%s167 + $0xfa0] sm:$0xff]
        %v704 = vld [vmem:[%s167 + $0xfa8] sm:$0xff]
        %v705 = vld [vmem:[%s167 + $0xfb0] sm:$0xff]
        %v706 = vld [vmem:[%s167 + $0xfb8] sm:$0xff]
        %v707 = vld [vmem:[%s167 + $0xfc0] sm:$0xff]
        %v708 = vld [vmem:[%s167 + $0xfc8] sm:$0xff]
        %v709 = vld [vmem:[%s167 + $0xfd0] sm:$0xff]
        %v710 = vld [vmem:[%s167 + $0xfd8] sm:$0xff]
        %v711 = vld [vmem:[%s167 + $0xfe0] sm:$0xff]
        %v712 = vld [vmem:[%s167 + $0xfe8] sm:$0xff]
        %v713 = vld [vmem:[%s167 + $0xff0] sm:$0xff]
        %v714 = vld [vmem:[%s167 + $0xff8] sm:$0xff]
        %v715 = vld [vmem:[%s167 + $0x1000] sm:$0xff]
        %v716 = vld [vmem:[%s167 + $0x1008] sm:$0xff]
        %v717 = vld [vmem:[%s167 + $0x1010] sm:$0xff]
        %v718 = vld [vmem:[%s167 + $0x1018] sm:$0xff]
        %v719 = vld [vmem:[%s167 + $0x1020] sm:$0xff]
        %v720 = vld [vmem:[%s167 + $0x1028] sm:$0xff]
        %v721 = vld [vmem:[%s167 + $0x1030] sm:$0xff]
        %v722 = vld [vmem:[%s167 + $0x1038] sm:$0xff]
        %v723 = vld [vmem:[%s167 + $0x1040] sm:$0xff]
        %v724 = vld [vmem:[%s167 + $0x1048] sm:$0xff]
        %v725 = vld [vmem:[%s167 + $0x1050] sm:$0xff]
        %v726 = vld [vmem:[%s167 + $0x1058] sm:$0xff]
        %v727 = vld [vmem:[%s167 + $0x1060] sm:$0xff]
        %v728 = vld [vmem:[%s167 + $0x1068] sm:$0xff]
        %v729 = vld [vmem:[%s167 + $0x1070] sm:$0xff]
        %v730 = vld [vmem:[%s167 + $0x1078] sm:$0xff]
        %v731 = vld [vmem:[%s167 + $0x1080] sm:$0xff]
        %v732 = vld [vmem:[%s167 + $0x1088] sm:$0xff]
        %v733 = vld [vmem:[%s167 + $0x1090] sm:$0xff]
        %v734 = vld [vmem:[%s167 + $0x1098] sm:$0xff]
        %v735 = vld [vmem:[%s167 + $0x10a0] sm:$0xff]
        %v736 = vld [vmem:[%s167 + $0x10a8] sm:$0xff]
        %v737 = vld [vmem:[%s167 + $0x10b0] sm:$0xff]
        %v738 = vld [vmem:[%s167 + $0x10b8] sm:$0xff]
        %v739 = vld [vmem:[%s167 + $0x10c0] sm:$0xff]
        %v740 = vld [vmem:[%s167 + $0x10c8] sm:$0xff]
        %v741 = vld [vmem:[%s167 + $0x10d0] sm:$0xff]
        %v742 = vld [vmem:[%s167 + $0x10d8] sm:$0xff]
        %v743 = vld [vmem:[%s167 + $0x10e0] sm:$0xff]
        %v744 = vld [vmem:[%s167 + $0x10e8] sm:$0xff]
        %v745 = vld [vmem:[%s167 + $0x10f0] sm:$0xff]
        %v746 = vld [vmem:[%s167 + $0x10f8] sm:$0xff]
        %v747 = vld [vmem:[%s167 + $0x1100] sm:$0xff]
        %v748 = vld [vmem:[%s167 + $0x1108] sm:$0xff]
        %v749 = vld [vmem:[%s167 + $0x1110] sm:$0xff]
        %v750 = vld [vmem:[%s167 + $0x1118] sm:$0xff]
        %v751 = vld [vmem:[%s167 + $0x1120] sm:$0xff]
        %v752 = vld [vmem:[%s167 + $0x1128] sm:$0xff]
        %v753 = vld [vmem:[%s167 + $0x1130] sm:$0xff]
        %v754 = vld [vmem:[%s167 + $0x1138] sm:$0xff]
        %v755 = vld [vmem:[%s167 + $0x1140] sm:$0xff]
        %v756 = vld [vmem:[%s167 + $0x1148] sm:$0xff]
        %v757 = vld [vmem:[%s167 + $0x1150] sm:$0xff]
        %v758 = vld [vmem:[%s167 + $0x1158] sm:$0xff]
        %v759 = vld [vmem:[%s167 + $0x1160] sm:$0xff]
        %v760 = vld [vmem:[%s167 + $0x1168] sm:$0xff]
        %v761 = vld [vmem:[%s167 + $0x1170] sm:$0xff]
        %v762 = vld [vmem:[%s167 + $0x1178] sm:$0xff]
        %v763 = vld [vmem:[%s167 + $0x1180] sm:$0xff]
        %v764 = vld [vmem:[%s167 + $0x1188] sm:$0xff]
        %v765 = vld [vmem:[%s167 + $0x1190] sm:$0xff]
        %v766 = vld [vmem:[%s167 + $0x1198] sm:$0xff]
        %v767 = vld [vmem:[%s167 + $0x11a0] sm:$0xff]
        %v768 = vld [vmem:[%s167 + $0x11a8] sm:$0xff]
        %v769 = vld [vmem:[%s167 + $0x11b0] sm:$0xff]
        %v770 = vld [vmem:[%s167 + $0x11b8] sm:$0xff]
        %v771 = vld [vmem:[%s167 + $0x11c0] sm:$0xff]
        %v772 = vld [vmem:[%s167 + $0x11c8] sm:$0xff]
        %v773 = vld [vmem:[%s167 + $0x11d0] sm:$0xff]
        %v774 = vld [vmem:[%s167 + $0x11d8] sm:$0xff]
        %v775 = vld [vmem:[%s167 + $0x11e0] sm:$0xff]
        %v776 = vld [vmem:[%s167 + $0x11e8] sm:$0xff]
        %v777 = vld [vmem:[%s167 + $0x11f0] sm:$0xff]
        %v778 = vld [vmem:[%s167 + $0x11f8] sm:$0xff]
        %v779 = vld [vmem:[%s167 + $0x1200] sm:$0xff]
        %v780 = vld [vmem:[%s167 + $0x1208] sm:$0xff]
        %v781 = vld [vmem:[%s167 + $0x1210] sm:$0xff]
        %v782 = vld [vmem:[%s167 + $0x1218] sm:$0xff]
        %v783 = vld [vmem:[%s167 + $0x1220] sm:$0xff]
        %v784 = vld [vmem:[%s167 + $0x1228] sm:$0xff]
        %v785 = vld [vmem:[%s167 + $0x1230] sm:$0xff]
        %v786 = vld [vmem:[%s167 + $0x1238] sm:$0xff]
        %v787 = vld [vmem:[%s167 + $0x1240] sm:$0xff]
        %v788 = vld [vmem:[%s167 + $0x1248] sm:$0xff]
        %v789 = vld [vmem:[%s167 + $0x1250] sm:$0xff]
        %v790 = vld [vmem:[%s167 + $0x1258] sm:$0xff]
        %v791 = vld [vmem:[%s167 + $0x1260] sm:$0xff]
        %v792 = vld [vmem:[%s167 + $0x1268] sm:$0xff]
        %v793 = vld [vmem:[%s167 + $0x1270] sm:$0xff]
        %v794 = vld [vmem:[%s167 + $0x1278] sm:$0xff]
        %v795 = vld [vmem:[%s167 + $0x1280] sm:$0xff]
        %v796 = vld [vmem:[%s167 + $0x1288] sm:$0xff]
        %v797 = vld [vmem:[%s167 + $0x1290] sm:$0xff]
        %v798 = vld [vmem:[%s167 + $0x1298] sm:$0xff]
        %v799 = vld [vmem:[%s167 + $0x12a0] sm:$0xff]
        %v800 = vld [vmem:[%s167 + $0x12a8] sm:$0xff]
        %v801 = vld [vmem:[%s167 + $0x12b0] sm:$0xff]
        %v802 = vld [vmem:[%s167 + $0x12b8] sm:$0xff]
        %v803 = vld [vmem:[%s167 + $0x12c0] sm:$0xff]
        %v804 = vld [vmem:[%s167 + $0x12c8] sm:$0xff]
        %v805 = vld [vmem:[%s167 + $0x12d0] sm:$0xff]
        %v806 = vld [vmem:[%s167 + $0x12d8] sm:$0xff]
        %v807 = vld [vmem:[%s167 + $0x12e0] sm:$0xff]
        %v808 = vld [vmem:[%s167 + $0x12e8] sm:$0xff]
        %v809 = vld [vmem:[%s167 + $0x12f0] sm:$0xff]
        %v810 = vld [vmem:[%s167 + $0x12f8] sm:$0xff]
        %v811 = vld [vmem:[%s167 + $0x1300] sm:$0xff]
        %v812 = vld [vmem:[%s167 + $0x1308] sm:$0xff]
        %v813 = vld [vmem:[%s167 + $0x1310] sm:$0xff]
        %v814 = vld [vmem:[%s167 + $0x1318] sm:$0xff]
        %v815 = vld [vmem:[%s167 + $0x1320] sm:$0xff]
        %v816 = vld [vmem:[%s167 + $0x1328] sm:$0xff]
        %v817 = vld [vmem:[%s167 + $0x1330] sm:$0xff]
        %v818 = vld [vmem:[%s167 + $0x1338] sm:$0xff]
        %v819 = vld [vmem:[%s167 + $0x1340] sm:$0xff]
        %v820 = vld [vmem:[%s167 + $0x1348] sm:$0xff]
        %v821 = vld [vmem:[%s167 + $0x1350] sm:$0xff]
        %v822 = vld [vmem:[%s167 + $0x1358] sm:$0xff]
        %v823 = vld [vmem:[%s167 + $0x1360] sm:$0xff]
        %v824 = vld [vmem:[%s167 + $0x1368] sm:$0xff]
        %v825 = vld [vmem:[%s167 + $0x1370] sm:$0xff]
        %v826 = vld [vmem:[%s167 + $0x1378] sm:$0xff]
        %v827 = vld [vmem:[%s167 + $0x1380] sm:$0xff]
        %v828 = vld [vmem:[%s167 + $0x1388] sm:$0xff]
        %v829 = vld [vmem:[%s167 + $0x1390] sm:$0xff]
        %v830 = vld [vmem:[%s167 + $0x1398] sm:$0xff]
        %v831 = vld [vmem:[%s167 + $0x13a0] sm:$0xff]
        %v832 = vld [vmem:[%s167 + $0x13a8] sm:$0xff]
        %v833 = vld [vmem:[%s167 + $0x13b0] sm:$0xff]
        %v834 = vld [vmem:[%s167 + $0x13b8] sm:$0xff]
        %v835 = vld [vmem:[%s167 + $0x13c0] sm:$0xff]
        %v836 = vld [vmem:[%s167 + $0x13c8] sm:$0xff]
        %v837 = vld [vmem:[%s167 + $0x13d0] sm:$0xff]
        %v838 = vld [vmem:[%s167 + $0x13d8] sm:$0xff]
        %v839 = vld [vmem:[%s167 + $0x13e0] sm:$0xff]
        %v840 = vld [vmem:[%s167 + $0x13e8] sm:$0xff]
        %v841 = vld [vmem:[%s167 + $0x13f0] sm:$0xff]
        %v842 = vld [vmem:[%s167 + $0x13f8] sm:$0xff]
        %v843 = vld [vmem:[%s167 + $0x1400] sm:$0xff]
        %v844 = vld [vmem:[%s167 + $0x1408] sm:$0xff]
        %v845 = vld [vmem:[%s167 + $0x1410] sm:$0xff]
        %v846 = vld [vmem:[%s167 + $0x1418] sm:$0xff]
        %v847 = vld [vmem:[%s167 + $0x1420] sm:$0xff]
        %v848 = vld [vmem:[%s167 + $0x1428] sm:$0xff]
        %v849 = vld [vmem:[%s167 + $0x1430] sm:$0xff]
        %v850 = vld [vmem:[%s167 + $0x1438] sm:$0xff]
        %v851 = vld [vmem:[%s167 + $0x1440] sm:$0xff]
        %v852 = vld [vmem:[%s167 + $0x1448] sm:$0xff]
        %v853 = vld [vmem:[%s167 + $0x1450] sm:$0xff]
        %v854 = vld [vmem:[%s167 + $0x1458] sm:$0xff]
        %v855 = vld [vmem:[%s167 + $0x1460] sm:$0xff]
        %v856 = vld [vmem:[%s167 + $0x1468] sm:$0xff]
        %v857 = vld [vmem:[%s167 + $0x1470] sm:$0xff]
        %v858 = vld [vmem:[%s167 + $0x1478] sm:$0xff]
        %v859 = vld [vmem:[%s167 + $0x1480] sm:$0xff]
        %v860 = vld [vmem:[%s167 + $0x1488] sm:$0xff]
        %v861 = vld [vmem:[%s167 + $0x1490] sm:$0xff]
        %v862 = vld [vmem:[%s167 + $0x1498] sm:$0xff]
        %v863 = vld [vmem:[%s167 + $0x14a0] sm:$0xff]
        %v864 = vld [vmem:[%s167 + $0x14a8] sm:$0xff]
        %v865 = vld [vmem:[%s167 + $0x14b0] sm:$0xff]
        %v866 = vld [vmem:[%s167 + $0x14b8] sm:$0xff]
        %v867 = vld [vmem:[%s167 + $0x14c0] sm:$0xff]
        %v868 = vld [vmem:[%s167 + $0x14c8] sm:$0xff]
        %v869 = vld [vmem:[%s167 + $0x14d0] sm:$0xff]
        %v870 = vld [vmem:[%s167 + $0x14d8] sm:$0xff]
        %v871 = vld [vmem:[%s167 + $0x14e0] sm:$0xff]
        %v872 = vld [vmem:[%s167 + $0x14e8] sm:$0xff]
        %v873 = vld [vmem:[%s167 + $0x14f0] sm:$0xff]
        %v874 = vld [vmem:[%s167 + $0x14f8] sm:$0xff]
        %v875 = vld [vmem:[%s167 + $0x1500] sm:$0xff]
        %v876 = vld [vmem:[%s167 + $0x1508] sm:$0xff]
        %v877 = vld [vmem:[%s167 + $0x1510] sm:$0xff]
        %v878 = vld [vmem:[%s167 + $0x1518] sm:$0xff]
        %v879 = vld [vmem:[%s167 + $0x1520] sm:$0xff]
        %v880 = vld [vmem:[%s167 + $0x1528] sm:$0xff]
        %v881 = vld [vmem:[%s167 + $0x1530] sm:$0xff]
        %v882 = vld [vmem:[%s167 + $0x1538] sm:$0xff]
        %v883 = vld [vmem:[%s167 + $0x1540] sm:$0xff]
        %v884 = vld [vmem:[%s167 + $0x1548] sm:$0xff]
        %v885 = vld [vmem:[%s167 + $0x1550] sm:$0xff]
        %v886 = vld [vmem:[%s167 + $0x1558] sm:$0xff]
        %v887 = vld [vmem:[%s167 + $0x1560] sm:$0xff]
        %v888 = vld [vmem:[%s167 + $0x1568] sm:$0xff]
        %v889 = vld [vmem:[%s167 + $0x1570] sm:$0xff]
        %v890 = vld [vmem:[%s167 + $0x1578] sm:$0xff]
        %v891 = vld [vmem:[%s167 + $0x1580] sm:$0xff]
        %v892 = vld [vmem:[%s167 + $0x1588] sm:$0xff]
        %v893 = vld [vmem:[%s167 + $0x1590] sm:$0xff]
        %v894 = vld [vmem:[%s167 + $0x1598] sm:$0xff]
        %v895 = vld [vmem:[%s167 + $0x15a0] sm:$0xff]
        %v896 = vld [vmem:[%s167 + $0x15a8] sm:$0xff]
        %v897 = vld [vmem:[%s167 + $0x15b0] sm:$0xff]
        %v898 = vld [vmem:[%s167 + $0x15b8] sm:$0xff]
        %v899 = vld [vmem:[%s167 + $0x15c0] sm:$0xff]
        %v900 = vld [vmem:[%s167 + $0x15c8] sm:$0xff]
        %v901 = vld [vmem:[%s167 + $0x15d0] sm:$0xff]
        %v902 = vld [vmem:[%s167 + $0x15d8] sm:$0xff]
        %v903 = vld [vmem:[%s167 + $0x15e0] sm:$0xff]
        %v904 = vld [vmem:[%s167 + $0x15e8] sm:$0xff]
        %v905 = vld [vmem:[%s167 + $0x15f0] sm:$0xff]
        %v906 = vld [vmem:[%s167 + $0x15f8] sm:$0xff]
        %v907 = vld [vmem:[%s167 + $0x1600] sm:$0xff]
        %v908 = vld [vmem:[%s167 + $0x1608] sm:$0xff]
        %v909 = vld [vmem:[%s167 + $0x1610] sm:$0xff]
        %v910 = vld [vmem:[%s167 + $0x1618] sm:$0xff]
        %v911 = vld [vmem:[%s167 + $0x1620] sm:$0xff]
        %v912 = vld [vmem:[%s167 + $0x1628] sm:$0xff]
        %v913 = vld [vmem:[%s167 + $0x1630] sm:$0xff]
        %v914 = vld [vmem:[%s167 + $0x1638] sm:$0xff]
        %v915 = vld [vmem:[%s167 + $0x1640] sm:$0xff]
        %v916 = vld [vmem:[%s167 + $0x1648] sm:$0xff]
        %v917 = vld [vmem:[%s167 + $0x1650] sm:$0xff]
        %v918 = vld [vmem:[%s167 + $0x1658] sm:$0xff]
        %v919 = vld [vmem:[%s167 + $0x1660] sm:$0xff]
        %v920 = vld [vmem:[%s167 + $0x1668] sm:$0xff]
        %v921 = vld [vmem:[%s167 + $0x1670] sm:$0xff]
        %v922 = vld [vmem:[%s167 + $0x1678] sm:$0xff]
        %v923 = vld [vmem:[%s167 + $0x1680] sm:$0xff]
        %v924 = vld [vmem:[%s167 + $0x1688] sm:$0xff]
        %v925 = vld [vmem:[%s167 + $0x1690] sm:$0xff]
        %v926 = vld [vmem:[%s167 + $0x1698] sm:$0xff]
        %v927 = vld [vmem:[%s167 + $0x16a0] sm:$0xff]
        %v928 = vld [vmem:[%s167 + $0x16a8] sm:$0xff]
        %v929 = vld [vmem:[%s167 + $0x16b0] sm:$0xff]
        %v930 = vld [vmem:[%s167 + $0x16b8] sm:$0xff]
        %v931 = vld [vmem:[%s167 + $0x16c0] sm:$0xff]
        %v932 = vld [vmem:[%s167 + $0x16c8] sm:$0xff]
        %v933 = vld [vmem:[%s167 + $0x16d0] sm:$0xff]
        %v934 = vld [vmem:[%s167 + $0x16d8] sm:$0xff]
        %v935 = vld [vmem:[%s167 + $0x16e0] sm:$0xff]
        %v936 = vld [vmem:[%s167 + $0x16e8] sm:$0xff]
        %v937 = vld [vmem:[%s167 + $0x16f0] sm:$0xff]
        %v938 = vld [vmem:[%s167 + $0x16f8] sm:$0xff]
        %v939 = vld [vmem:[%s167 + $0x1700] sm:$0xff]
        %v940 = vld [vmem:[%s167 + $0x1708] sm:$0xff]
        %v941 = vld [vmem:[%s167 + $0x1710] sm:$0xff]
        %v942 = vld [vmem:[%s167 + $0x1718] sm:$0xff]
        %v943 = vld [vmem:[%s167 + $0x1720] sm:$0xff]
        %v944 = vld [vmem:[%s167 + $0x1728] sm:$0xff]
        %v945 = vld [vmem:[%s167 + $0x1730] sm:$0xff]
        %v946 = vld [vmem:[%s167 + $0x1738] sm:$0xff]
        %v947 = vld [vmem:[%s167 + $0x1740] sm:$0xff]
        %v948 = vld [vmem:[%s167 + $0x1748] sm:$0xff]
        %v949 = vld [vmem:[%s167 + $0x1750] sm:$0xff]
        %v950 = vld [vmem:[%s167 + $0x1758] sm:$0xff]
        %v951 = vld [vmem:[%s167 + $0x1760] sm:$0xff]
        %v952 = vld [vmem:[%s167 + $0x1768] sm:$0xff]
        %v953 = vld [vmem:[%s167 + $0x1770] sm:$0xff]
        %v954 = vld [vmem:[%s167 + $0x1778] sm:$0xff]
        %v955 = vld [vmem:[%s167 + $0x1780] sm:$0xff]
        %v956 = vld [vmem:[%s167 + $0x1788] sm:$0xff]
        %v957 = vld [vmem:[%s167 + $0x1790] sm:$0xff]
        %v958 = vld [vmem:[%s167 + $0x1798] sm:$0xff]
        %v959 = vld [vmem:[%s167 + $0x17a0] sm:$0xff]
        %v960 = vld [vmem:[%s167 + $0x17a8] sm:$0xff]
        %v961 = vld [vmem:[%s167 + $0x17b0] sm:$0xff]
        %v962 = vld [vmem:[%s167 + $0x17b8] sm:$0xff]
        %v963 = vld [vmem:[%s167 + $0x17c0] sm:$0xff]
        %v964 = vld [vmem:[%s167 + $0x17c8] sm:$0xff]
        %v965 = vld [vmem:[%s167 + $0x17d0] sm:$0xff]
        %v966 = vld [vmem:[%s167 + $0x17d8] sm:$0xff]
        %v967 = vld [vmem:[%s167 + $0x17e0] sm:$0xff]
        %v968 = vld [vmem:[%s167 + $0x17e8] sm:$0xff]
        %v969 = vld [vmem:[%s167 + $0x17f0] sm:$0xff]
        %v970 = vld [vmem:[%s167 + $0x17f8] sm:$0xff]
        %v971 = vld [vmem:[%s167 + $0x1800] sm:$0xff]
        %v972 = vld [vmem:[%s167 + $0x1808] sm:$0xff]
        %v973 = vld [vmem:[%s167 + $0x1810] sm:$0xff]
        %v974 = vld [vmem:[%s167 + $0x1818] sm:$0xff]
        %v975 = vld [vmem:[%s167 + $0x1820] sm:$0xff]
        %v976 = vld [vmem:[%s167 + $0x1828] sm:$0xff]
        %v977 = vld [vmem:[%s167 + $0x1830] sm:$0xff]
        %v978 = vld [vmem:[%s167 + $0x1838] sm:$0xff]
        %v979 = vld [vmem:[%s167 + $0x1840] sm:$0xff]
        %v980 = vld [vmem:[%s167 + $0x1848] sm:$0xff]
        %v981 = vld [vmem:[%s167 + $0x1850] sm:$0xff]
        %v982 = vld [vmem:[%s167 + $0x1858] sm:$0xff]
        %v983 = vld [vmem:[%s167 + $0x1860] sm:$0xff]
        %v984 = vld [vmem:[%s167 + $0x1868] sm:$0xff]
        %v985 = vld [vmem:[%s167 + $0x1870] sm:$0xff]
        %v986 = vld [vmem:[%s167 + $0x1878] sm:$0xff]
        %v987 = vld [vmem:[%s167 + $0x1880] sm:$0xff]
        %v988 = vld [vmem:[%s167 + $0x1888] sm:$0xff]
        %v989 = vld [vmem:[%s167 + $0x1890] sm:$0xff]
        %v990 = vld [vmem:[%s167 + $0x1898] sm:$0xff]
        %v991 = vld [vmem:[%s167 + $0x18a0] sm:$0xff]
        %v992 = vld [vmem:[%s167 + $0x18a8] sm:$0xff]
        %v993 = vld [vmem:[%s167 + $0x18b0] sm:$0xff]
        %v994 = vld [vmem:[%s167 + $0x18b8] sm:$0xff]
        %v995 = vld [vmem:[%s167 + $0x18c0] sm:$0xff]
        %v996 = vld [vmem:[%s167 + $0x18c8] sm:$0xff]
        %v997 = vld [vmem:[%s167 + $0x18d0] sm:$0xff]
        %v998 = vld [vmem:[%s167 + $0x18d8] sm:$0xff]
        %v999 = vld [vmem:[%s167 + $0x18e0] sm:$0xff]
        %v1000 = vld [vmem:[%s167 + $0x18e8] sm:$0xff]
        %v1001 = vld [vmem:[%s167 + $0x18f0] sm:$0xff]
        %v1002 = vld [vmem:[%s167 + $0x18f8] sm:$0xff]
        %v1003 = vld [vmem:[%s167 + $0x1900] sm:$0xff]
        %v1004 = vld [vmem:[%s167 + $0x1908] sm:$0xff]
        %v1005 = vld [vmem:[%s167 + $0x1910] sm:$0xff]
        %v1006 = vld [vmem:[%s167 + $0x1918] sm:$0xff]
        %v1007 = vld [vmem:[%s167 + $0x1920] sm:$0xff]
        %v1008 = vld [vmem:[%s167 + $0x1928] sm:$0xff]
        %v1009 = vld [vmem:[%s167 + $0x1930] sm:$0xff]
        %v1010 = vld [vmem:[%s167 + $0x1938] sm:$0xff]
        %v1011 = vld [vmem:[%s167 + $0x1940] sm:$0xff]
        %v1012 = vld [vmem:[%s167 + $0x1948] sm:$0xff]
        %v1013 = vld [vmem:[%s167 + $0x1950] sm:$0xff]
        %v1014 = vld [vmem:[%s167 + $0x1958] sm:$0xff]
        %v1015 = vld [vmem:[%s167 + $0x1960] sm:$0xff]
        %v1016 = vld [vmem:[%s167 + $0x1968] sm:$0xff]
        %v1017 = vld [vmem:[%s167 + $0x1970] sm:$0xff]
        %v1018 = vld [vmem:[%s167 + $0x1978] sm:$0xff]
        %v1019 = vld [vmem:[%s167 + $0x1980] sm:$0xff]
        %v1020 = vld [vmem:[%s167 + $0x1988] sm:$0xff]
        %v1021 = vld [vmem:[%s167 + $0x1990] sm:$0xff]
        %v1022 = vld [vmem:[%s167 + $0x1998] sm:$0xff]
        %v1023 = vld [vmem:[%s167 + $0x19a0] sm:$0xff]
        %v1024 = vld [vmem:[%s167 + $0x19a8] sm:$0xff]
        %v1025 = vld [vmem:[%s167 + $0x19b0] sm:$0xff]
        %v1026 = vld [vmem:[%s167 + $0x19b8] sm:$0xff]
        %v1027 = vld [vmem:[%s167 + $0x19c0] sm:$0xff]
        %v1028 = vld [vmem:[%s167 + $0x19c8] sm:$0xff]
        %v1029 = vld [vmem:[%s167 + $0x19d0] sm:$0xff]
        %v1030 = vld [vmem:[%s167 + $0x19d8] sm:$0xff]
        %v1031 = vld [vmem:[%s167 + $0x19e0] sm:$0xff]
        %v1032 = vld [vmem:[%s167 + $0x19e8] sm:$0xff]
        %v1033 = vld [vmem:[%s167 + $0x19f0] sm:$0xff]
        %v1034 = vld [vmem:[%s167 + $0x19f8] sm:$0xff]
        %v1035 = vld [vmem:[%s167 + $0x1a00] sm:$0xff]
        %v1036 = vld [vmem:[%s167 + $0x1a08] sm:$0xff]
        %v1037 = vld [vmem:[%s167 + $0x1a10] sm:$0xff]
        %v1038 = vld [vmem:[%s167 + $0x1a18] sm:$0xff]
        %v1039 = vld [vmem:[%s167 + $0x1a20] sm:$0xff]
        %v1040 = vld [vmem:[%s167 + $0x1a28] sm:$0xff]
        %v1041 = vld [vmem:[%s167 + $0x1a30] sm:$0xff]
        %v1042 = vld [vmem:[%s167 + $0x1a38] sm:$0xff]
        %v1043 = vld [vmem:[%s167 + $0x1a40] sm:$0xff]
        %v1044 = vld [vmem:[%s167 + $0x1a48] sm:$0xff]
        %v1045 = vld [vmem:[%s167 + $0x1a50] sm:$0xff]
        %v1046 = vld [vmem:[%s167 + $0x1a58] sm:$0xff]
        %v1047 = vld [vmem:[%s167 + $0x1a60] sm:$0xff]
        %v1048 = vld [vmem:[%s167 + $0x1a68] sm:$0xff]
        %v1049 = vld [vmem:[%s167 + $0x1a70] sm:$0xff]
        %v1050 = vld [vmem:[%s167 + $0x1a78] sm:$0xff]
        %v1051 = vld [vmem:[%s167 + $0x1a80] sm:$0xff]
        %v1052 = vld [vmem:[%s167 + $0x1a88] sm:$0xff]
        %v1053 = vld [vmem:[%s167 + $0x1a90] sm:$0xff]
        %v1054 = vld [vmem:[%s167 + $0x1a98] sm:$0xff]
        %v1055 = vld [vmem:[%s167 + $0x1aa0] sm:$0xff]
        %v1056 = vld [vmem:[%s167 + $0x1aa8] sm:$0xff]
        %v1057 = vld [vmem:[%s167 + $0x1ab0] sm:$0xff]
        %v1058 = vld [vmem:[%s167 + $0x1ab8] sm:$0xff]
        %v1059 = vld [vmem:[%s167 + $0x1ac0] sm:$0xff]
        %v1060 = vld [vmem:[%s167 + $0x1ac8] sm:$0xff]
        %v1061 = vld [vmem:[%s167 + $0x1ad0] sm:$0xff]
        %v1062 = vld [vmem:[%s167 + $0x1ad8] sm:$0xff]
        %v1063 = vld [vmem:[%s167 + $0x1ae0] sm:$0xff]
        %v1064 = vld [vmem:[%s167 + $0x1ae8] sm:$0xff]
        %v1065 = vld [vmem:[%s167 + $0x1af0] sm:$0xff]
        %v1066 = vld [vmem:[%s167 + $0x1af8] sm:$0xff]
        %v1067 = vld [vmem:[%s167 + $0x1b00] sm:$0xff]
        %v1068 = vld [vmem:[%s167 + $0x1b08] sm:$0xff]
        %v1069 = vld [vmem:[%s167 + $0x1b10] sm:$0xff]
        %v1070 = vld [vmem:[%s167 + $0x1b18] sm:$0xff]
        %v1071 = vld [vmem:[%s167 + $0x1b20] sm:$0xff]
        %v1072 = vld [vmem:[%s167 + $0x1b28] sm:$0xff]
        %v1073 = vld [vmem:[%s167 + $0x1b30] sm:$0xff]
        %v1074 = vld [vmem:[%s167 + $0x1b38] sm:$0xff]
        %v1075 = vld [vmem:[%s167 + $0x1b40] sm:$0xff]
        %v1076 = vld [vmem:[%s167 + $0x1b48] sm:$0xff]
        %v1077 = vld [vmem:[%s167 + $0x1b50] sm:$0xff]
        %v1078 = vld [vmem:[%s167 + $0x1b58] sm:$0xff]
        %v1079 = vld [vmem:[%s167 + $0x1b60] sm:$0xff]
        %v1080 = vld [vmem:[%s167 + $0x1b68] sm:$0xff]
        %v1081 = vld [vmem:[%s167 + $0x1b70] sm:$0xff]
        %v1082 = vld [vmem:[%s167 + $0x1b78] sm:$0xff]
        %v1083 = vld [vmem:[%s167 + $0x1b80] sm:$0xff]
        %v1084 = vld [vmem:[%s167 + $0x1b88] sm:$0xff]
        %v1085 = vld [vmem:[%s167 + $0x1b90] sm:$0xff]
        %v1086 = vld [vmem:[%s167 + $0x1b98] sm:$0xff]
        %v1087 = vld [vmem:[%s167 + $0x1ba0] sm:$0xff]
        %v1088 = vld [vmem:[%s167 + $0x1ba8] sm:$0xff]
        %v1089 = vld [vmem:[%s167 + $0x1bb0] sm:$0xff]
        %v1090 = vld [vmem:[%s167 + $0x1bb8] sm:$0xff]
        %v1091 = vld [vmem:[%s167 + $0x1bc0] sm:$0xff]
        %v1092 = vld [vmem:[%s167 + $0x1bc8] sm:$0xff]
        %v1093 = vld [vmem:[%s167 + $0x1bd0] sm:$0xff]
        %v1094 = vld [vmem:[%s167 + $0x1bd8] sm:$0xff]
        %v1095 = vld [vmem:[%s167 + $0x1be0] sm:$0xff]
        %v1096 = vld [vmem:[%s167 + $0x1be8] sm:$0xff]
        %v1097 = vld [vmem:[%s167 + $0x1bf0] sm:$0xff]
        %v1098 = vld [vmem:[%s167 + $0x1bf8] sm:$0xff]
        %v1099 = vld [vmem:[%s167 + $0x1c00] sm:$0xff]
        %v1100 = vld [vmem:[%s167 + $0x1c08] sm:$0xff]
        %v1101 = vld [vmem:[%s167 + $0x1c10] sm:$0xff]
        %v1102 = vld [vmem:[%s167 + $0x1c18] sm:$0xff]
        %v1103 = vld [vmem:[%s167 + $0x1c20] sm:$0xff]
        %v1104 = vld [vmem:[%s167 + $0x1c28] sm:$0xff]
        %v1105 = vld [vmem:[%s167 + $0x1c30] sm:$0xff]
        %v1106 = vld [vmem:[%s167 + $0x1c38] sm:$0xff]
        %v1107 = vld [vmem:[%s167 + $0x1c40] sm:$0xff]
        %v1108 = vld [vmem:[%s167 + $0x1c48] sm:$0xff]
        %v1109 = vld [vmem:[%s167 + $0x1c50] sm:$0xff]
        %v1110 = vld [vmem:[%s167 + $0x1c58] sm:$0xff]
        %v1111 = vld [vmem:[%s167 + $0x1c60] sm:$0xff]
        %v1112 = vld [vmem:[%s167 + $0x1c68] sm:$0xff]
        %v1113 = vld [vmem:[%s167 + $0x1c70] sm:$0xff]
        %v1114 = vld [vmem:[%s167 + $0x1c78] sm:$0xff]
        %v1115 = vld [vmem:[%s167 + $0x1c80] sm:$0xff]
        %v1116 = vld [vmem:[%s167 + $0x1c88] sm:$0xff]
        %v1117 = vld [vmem:[%s167 + $0x1c90] sm:$0xff]
        %v1118 = vld [vmem:[%s167 + $0x1c98] sm:$0xff]
        %v1119 = vld [vmem:[%s167 + $0x1ca0] sm:$0xff]
        %v1120 = vld [vmem:[%s167 + $0x1ca8] sm:$0xff]
        %v1121 = vld [vmem:[%s167 + $0x1cb0] sm:$0xff]
        %v1122 = vld [vmem:[%s167 + $0x1cb8] sm:$0xff]
        %v1123 = vld [vmem:[%s167 + $0x1cc0] sm:$0xff]
        %v1124 = vld [vmem:[%s167 + $0x1cc8] sm:$0xff]
        %v1125 = vld [vmem:[%s167 + $0x1cd0] sm:$0xff]
        %v1126 = vld [vmem:[%s167 + $0x1cd8] sm:$0xff]
        %v1127 = vld [vmem:[%s167 + $0x1ce0] sm:$0xff]
        %v1128 = vld [vmem:[%s167 + $0x1ce8] sm:$0xff]
        %v1129 = vld [vmem:[%s167 + $0x1cf0] sm:$0xff]
        %v1130 = vld [vmem:[%s167 + $0x1cf8] sm:$0xff]
        %v1131 = vld [vmem:[%s167 + $0x1d00] sm:$0xff]
        %v1132 = vld [vmem:[%s167 + $0x1d08] sm:$0xff]
        %v1133 = vld [vmem:[%s167 + $0x1d10] sm:$0xff]
        %v1134 = vld [vmem:[%s167 + $0x1d18] sm:$0xff]
        %v1135 = vld [vmem:[%s167 + $0x1d20] sm:$0xff]
        %v1136 = vld [vmem:[%s167 + $0x1d28] sm:$0xff]
        %v1137 = vld [vmem:[%s167 + $0x1d30] sm:$0xff]
        %v1138 = vld [vmem:[%s167 + $0x1d38] sm:$0xff]
        %v1139 = vld [vmem:[%s167 + $0x1d40] sm:$0xff]
        %v1140 = vld [vmem:[%s167 + $0x1d48] sm:$0xff]
        %v1141 = vld [vmem:[%s167 + $0x1d50] sm:$0xff]
        %v1142 = vld [vmem:[%s167 + $0x1d58] sm:$0xff]
        %v1143 = vld [vmem:[%s167 + $0x1d60] sm:$0xff]
        %v1144 = vld [vmem:[%s167 + $0x1d68] sm:$0xff]
        %v1145 = vld [vmem:[%s167 + $0x1d70] sm:$0xff]
        %v1146 = vld [vmem:[%s167 + $0x1d78] sm:$0xff]
        %v1147 = vld [vmem:[%s167 + $0x1d80] sm:$0xff]
        %v1148 = vld [vmem:[%s167 + $0x1d88] sm:$0xff]
        %v1149 = vld [vmem:[%s167 + $0x1d90] sm:$0xff]
        %v1150 = vld [vmem:[%s167 + $0x1d98] sm:$0xff]
        %v1151 = vld [vmem:[%s167 + $0x1da0] sm:$0xff]
        %v1152 = vld [vmem:[%s167 + $0x1da8] sm:$0xff]
        %v1153 = vld [vmem:[%s167 + $0x1db0] sm:$0xff]
        %v1154 = vld [vmem:[%s167 + $0x1db8] sm:$0xff]
        %v1155 = vld [vmem:[%s167 + $0x1dc0] sm:$0xff]
        %v1156 = vld [vmem:[%s167 + $0x1dc8] sm:$0xff]
        %v1157 = vld [vmem:[%s167 + $0x1dd0] sm:$0xff]
        %v1158 = vld [vmem:[%s167 + $0x1dd8] sm:$0xff]
        %v1159 = vld [vmem:[%s167 + $0x1de0] sm:$0xff]
        %v1160 = vld [vmem:[%s167 + $0x1de8] sm:$0xff]
        %v1161 = vld [vmem:[%s167 + $0x1df0] sm:$0xff]
        %v1162 = vld [vmem:[%s167 + $0x1df8] sm:$0xff]
        %v1163 = vld [vmem:[%s167 + $0x1e00] sm:$0xff]
        %v1164 = vld [vmem:[%s167 + $0x1e08] sm:$0xff]
        %v1165 = vld [vmem:[%s167 + $0x1e10] sm:$0xff]
        %v1166 = vld [vmem:[%s167 + $0x1e18] sm:$0xff]
        %v1167 = vld [vmem:[%s167 + $0x1e20] sm:$0xff]
        %v1168 = vld [vmem:[%s167 + $0x1e28] sm:$0xff]
        %v1169 = vld [vmem:[%s167 + $0x1e30] sm:$0xff]
        %v1170 = vld [vmem:[%s167 + $0x1e38] sm:$0xff]
        %v1171 = vld [vmem:[%s167 + $0x1e40] sm:$0xff]
        %v1172 = vld [vmem:[%s167 + $0x1e48] sm:$0xff]
        %v1173 = vld [vmem:[%s167 + $0x1e50] sm:$0xff]
        %v1174 = vld [vmem:[%s167 + $0x1e58] sm:$0xff]
        %v1175 = vld [vmem:[%s167 + $0x1e60] sm:$0xff]
        %v1176 = vld [vmem:[%s167 + $0x1e68] sm:$0xff]
        %v1177 = vld [vmem:[%s167 + $0x1e70] sm:$0xff]
        %v1178 = vld [vmem:[%s167 + $0x1e78] sm:$0xff]
        %v1179 = vld [vmem:[%s167 + $0x1e80] sm:$0xff]
        %v1180 = vld [vmem:[%s167 + $0x1e88] sm:$0xff]
        %v1181 = vld [vmem:[%s167 + $0x1e90] sm:$0xff]
        %v1182 = vld [vmem:[%s167 + $0x1e98] sm:$0xff]
        %v1183 = vld [vmem:[%s167 + $0x1ea0] sm:$0xff]
        %v1184 = vld [vmem:[%s167 + $0x1ea8] sm:$0xff]
        %v1185 = vld [vmem:[%s167 + $0x1eb0] sm:$0xff]
        %v1186 = vld [vmem:[%s167 + $0x1eb8] sm:$0xff]
        %v1187 = vld [vmem:[%s167 + $0x1ec0] sm:$0xff]
        %v1188 = vld [vmem:[%s167 + $0x1ec8] sm:$0xff]
        %v1189 = vld [vmem:[%s167 + $0x1ed0] sm:$0xff]
        %v1190 = vld [vmem:[%s167 + $0x1ed8] sm:$0xff]
        %v1191 = vld [vmem:[%s167 + $0x1ee0] sm:$0xff]
        %v1192 = vld [vmem:[%s167 + $0x1ee8] sm:$0xff]
        %v1193 = vld [vmem:[%s167 + $0x1ef0] sm:$0xff]
        %v1194 = vld [vmem:[%s167 + $0x1ef8] sm:$0xff]
        %v1195 = vld [vmem:[%s167 + $0x1f00] sm:$0xff]
        %v1196 = vld [vmem:[%s167 + $0x1f08] sm:$0xff]
        %v1197 = vld [vmem:[%s167 + $0x1f10] sm:$0xff]
        %v1198 = vld [vmem:[%s167 + $0x1f18] sm:$0xff]
        %v1199 = vld [vmem:[%s167 + $0x1f20] sm:$0xff]
        %v1200 = vld [vmem:[%s167 + $0x1f28] sm:$0xff]
        %v1201 = vld [vmem:[%s167 + $0x1f30] sm:$0xff]
        %v1202 = vld [vmem:[%s167 + $0x1f38] sm:$0xff]
        %v1203 = vld [vmem:[%s167 + $0x1f40] sm:$0xff]
        %v1204 = vld [vmem:[%s167 + $0x1f48] sm:$0xff]
        %v1205 = vld [vmem:[%s167 + $0x1f50] sm:$0xff]
        %v1206 = vld [vmem:[%s167 + $0x1f58] sm:$0xff]
        %v1207 = vld [vmem:[%s167 + $0x1f60] sm:$0xff]
        %v1208 = vld [vmem:[%s167 + $0x1f68] sm:$0xff]
        %v1209 = vld [vmem:[%s167 + $0x1f70] sm:$0xff]
        %v1210 = vld [vmem:[%s167 + $0x1f78] sm:$0xff]
        %v1211 = vld [vmem:[%s167 + $0x1f80] sm:$0xff]
        %v1212 = vld [vmem:[%s167 + $0x1f88] sm:$0xff]
        %v1213 = vld [vmem:[%s167 + $0x1f90] sm:$0xff]
        %v1214 = vld [vmem:[%s167 + $0x1f98] sm:$0xff]
        %v1215 = vld [vmem:[%s167 + $0x1fa0] sm:$0xff]
        %v1216 = vld [vmem:[%s167 + $0x1fa8] sm:$0xff]
        %v1217 = vld [vmem:[%s167 + $0x1fb0] sm:$0xff]
        %v1218 = vld [vmem:[%s167 + $0x1fb8] sm:$0xff]
        %v1219 = vld [vmem:[%s167 + $0x1fc0] sm:$0xff]
        %v1220 = vld [vmem:[%s167 + $0x1fc8] sm:$0xff]
        %v1221 = vld [vmem:[%s167 + $0x1fd0] sm:$0xff]
        %v1222 = vld [vmem:[%s167 + $0x1fd8] sm:$0xff]
        %v1223 = vld [vmem:[%s167 + $0x1fe0] sm:$0xff]
        %v1224 = vld [vmem:[%s167 + $0x1fe8] sm:$0xff]
        %v1225 = vld [vmem:[%s167 + $0x1ff0] sm:$0xff]
        %v1226 = vld [vmem:[%s167 + $0x1ff8] sm:$0xff]
        %v1227 = vld [vmem:[%s167 + $0x2000] sm:$0xff]
        %v1228 = vld [vmem:[%s167 + $0x2008] sm:$0xff]
        %v1229 = vld [vmem:[%s167 + $0x2010] sm:$0xff]
        %v1230 = vld [vmem:[%s167 + $0x2018] sm:$0xff]
        %v1231 = vld [vmem:[%s167 + $0x2020] sm:$0xff]
        %v1232 = vld [vmem:[%s167 + $0x2028] sm:$0xff]
        %v1233 = vld [vmem:[%s167 + $0x2030] sm:$0xff]
        %v1234 = vld [vmem:[%s167 + $0x2038] sm:$0xff]
        %v1235 = vld [vmem:[%s167 + $0x2040] sm:$0xff]
        %v1236 = vld [vmem:[%s167 + $0x2048] sm:$0xff]
        %v1237 = vld [vmem:[%s167 + $0x2050] sm:$0xff]
        %v1238 = vld [vmem:[%s167 + $0x2058] sm:$0xff]
        %v1239 = vld [vmem:[%s167 + $0x2060] sm:$0xff]
        %v1240 = vld [vmem:[%s167 + $0x2068] sm:$0xff]
        %v1241 = vld [vmem:[%s167 + $0x2070] sm:$0xff]
        %v1242 = vld [vmem:[%s167 + $0x2078] sm:$0xff]
        %v1243 = vld [vmem:[%s167 + $0x2080] sm:$0xff]
        %v1244 = vld [vmem:[%s167 + $0x2088] sm:$0xff]
        %v1245 = vld [vmem:[%s167 + $0x2090] sm:$0xff]
        %v1246 = vld [vmem:[%s167 + $0x2098] sm:$0xff]
        %v1247 = vld [vmem:[%s167 + $0x20a0] sm:$0xff]
        %v1248 = vld [vmem:[%s167 + $0x20a8] sm:$0xff]
        %v1249 = vld [vmem:[%s167 + $0x20b0] sm:$0xff]
        %v1250 = vld [vmem:[%s167 + $0x20b8] sm:$0xff]
        %v1251 = vld [vmem:[%s167 + $0x20c0] sm:$0xff]
        %v1252 = vld [vmem:[%s167 + $0x20c8] sm:$0xff]
        %v1253 = vld [vmem:[%s167 + $0x20d0] sm:$0xff]
        %v1254 = vld [vmem:[%s167 + $0x20d8] sm:$0xff]
        %v1255 = vld [vmem:[%s167 + $0x20e0] sm:$0xff]
        %v1256 = vld [vmem:[%s167 + $0x20e8] sm:$0xff]
        %v1257 = vld [vmem:[%s167 + $0x20f0] sm:$0xff]
        %v1258 = vld [vmem:[%s167 + $0x20f8] sm:$0xff]
        %v1259 = vld [vmem:[%s167 + $0x2100] sm:$0xff]
        %v1260 = vld [vmem:[%s167 + $0x2108] sm:$0xff]
        %v1261 = vld [vmem:[%s167 + $0x2110] sm:$0xff]
        %v1262 = vld [vmem:[%s167 + $0x2118] sm:$0xff]
        %v1263 = vld [vmem:[%s167 + $0x2120] sm:$0xff]
        %v1264 = vld [vmem:[%s167 + $0x2128] sm:$0xff]
        %v1265 = vld [vmem:[%s167 + $0x2130] sm:$0xff]
        %v1266 = vld [vmem:[%s167 + $0x2138] sm:$0xff]
        %v1267 = vld [vmem:[%s167 + $0x2140] sm:$0xff]
        %v1268 = vld [vmem:[%s167 + $0x2148] sm:$0xff]
        %v1269 = vld [vmem:[%s167 + $0x2150] sm:$0xff]
        %v1270 = vld [vmem:[%s167 + $0x2158] sm:$0xff]
        %v1271 = vld [vmem:[%s167 + $0x2160] sm:$0xff]
        %v1272 = vld [vmem:[%s167 + $0x2168] sm:$0xff]
        %v1273 = vld [vmem:[%s167 + $0x2170] sm:$0xff]
        %v1274 = vld [vmem:[%s167 + $0x2178] sm:$0xff]
        %v1275 = vld [vmem:[%s167 + $0x2180] sm:$0xff]
        %v1276 = vld [vmem:[%s167 + $0x2188] sm:$0xff]
        %v1277 = vld [vmem:[%s167 + $0x2190] sm:$0xff]
        %v1278 = vld [vmem:[%s167 + $0x2198] sm:$0xff]
        %v1279 = vld [vmem:[%s167 + $0x21a0] sm:$0xff]
        %v1280 = vld [vmem:[%s167 + $0x21a8] sm:$0xff]
        %v1281 = vld [vmem:[%s167 + $0x21b0] sm:$0xff]
        %v1282 = vld [vmem:[%s167 + $0x21b8] sm:$0xff]
        %v1283 = vld [vmem:[%s167 + $0x21c0] sm:$0xff]
        %v1284 = vld [vmem:[%s167 + $0x21c8] sm:$0xff]
        %v1285 = vld [vmem:[%s167 + $0x21d0] sm:$0xff]
        %v1286 = vld [vmem:[%s167 + $0x21d8] sm:$0xff]
        %v1287 = vld [vmem:[%s167 + $0x21e0] sm:$0xff]
        %v1288 = vld [vmem:[%s167 + $0x21e8] sm:$0xff]
        %v1289 = vld [vmem:[%s167 + $0x21f0] sm:$0xff]
        %v1290 = vld [vmem:[%s167 + $0x21f8] sm:$0xff]
        %v1291 = vld [vmem:[%s167 + $0x2200] sm:$0xff]
        %v1292 = vld [vmem:[%s167 + $0x2208] sm:$0xff]
        %v1293 = vld [vmem:[%s167 + $0x2210] sm:$0xff]
        %v1294 = vld [vmem:[%s167 + $0x2218] sm:$0xff]
        %v1295 = vld [vmem:[%s167 + $0x2220] sm:$0xff]
        %v1296 = vld [vmem:[%s167 + $0x2228] sm:$0xff]
        %v1297 = vld [vmem:[%s167 + $0x2230] sm:$0xff]
        %v1298 = vld [vmem:[%s167 + $0x2238] sm:$0xff]
        %v1299 = vld [vmem:[%s167 + $0x2240] sm:$0xff]
        %v1300 = vld [vmem:[%s167 + $0x2248] sm:$0xff]
        %v1301 = vld [vmem:[%s167 + $0x2250] sm:$0xff]
        %v1302 = vld [vmem:[%s167 + $0x2258] sm:$0xff]
        %v1303 = vld [vmem:[%s167 + $0x2260] sm:$0xff]
        %v1304 = vld [vmem:[%s167 + $0x2268] sm:$0xff]
        %v1305 = vld [vmem:[%s167 + $0x2270] sm:$0xff]
        %v1306 = vld [vmem:[%s167 + $0x2278] sm:$0xff]
        %v1307 = vld [vmem:[%s167 + $0x2280] sm:$0xff]
        %v1308 = vld [vmem:[%s167 + $0x2288] sm:$0xff]
        %v1309 = vld [vmem:[%s167 + $0x2290] sm:$0xff]
        %v1310 = vld [vmem:[%s167 + $0x2298] sm:$0xff]
        %v1311 = vld [vmem:[%s167 + $0x22a0] sm:$0xff]
        %v1312 = vld [vmem:[%s167 + $0x22a8] sm:$0xff]
        %v1313 = vld [vmem:[%s167 + $0x22b0] sm:$0xff]
        %v1314 = vld [vmem:[%s167 + $0x22b8] sm:$0xff]
        %v1315 = vld [vmem:[%s167 + $0x22c0] sm:$0xff]
        %v1316 = vld [vmem:[%s167 + $0x22c8] sm:$0xff]
        %v1317 = vld [vmem:[%s167 + $0x22d0] sm:$0xff]
        %v1318 = vld [vmem:[%s167 + $0x22d8] sm:$0xff]
        %v1319 = vld [vmem:[%s167 + $0x22e0] sm:$0xff]
        %v1320 = vld [vmem:[%s167 + $0x22e8] sm:$0xff]
        %v1321 = vld [vmem:[%s167 + $0x22f0] sm:$0xff]
        %v1322 = vld [vmem:[%s167 + $0x22f8] sm:$0xff]
        %v1323 = vld [vmem:[%s167 + $0x2300] sm:$0xff]
        %v1324 = vld [vmem:[%s167 + $0x2308] sm:$0xff]
        %v1325 = vld [vmem:[%s167 + $0x2310] sm:$0xff]
        %v1326 = vld [vmem:[%s167 + $0x2318] sm:$0xff]
        %v1327 = vld [vmem:[%s167 + $0x2320] sm:$0xff]
        %v1328 = vld [vmem:[%s167 + $0x2328] sm:$0xff]
        %v1329 = vld [vmem:[%s167 + $0x2330] sm:$0xff]
        %v1330 = vld [vmem:[%s167 + $0x2338] sm:$0xff]
        %v1331 = vld [vmem:[%s167 + $0x2340] sm:$0xff]
        %v1332 = vld [vmem:[%s167 + $0x2348] sm:$0xff]
        %v1333 = vld [vmem:[%s167 + $0x2350] sm:$0xff]
        %v1334 = vld [vmem:[%s167 + $0x2358] sm:$0xff]
        %v1335 = vld [vmem:[%s167 + $0x2360] sm:$0xff]
        %v1336 = vld [vmem:[%s167 + $0x2368] sm:$0xff]
        %v1337 = vld [vmem:[%s167 + $0x2370] sm:$0xff]
        %v1338 = vld [vmem:[%s167 + $0x2378] sm:$0xff]
        %v1339 = vld [vmem:[%s167 + $0x2380] sm:$0xff]
        %v1340 = vld [vmem:[%s167 + $0x2388] sm:$0xff]
        %v1341 = vld [vmem:[%s167 + $0x2390] sm:$0xff]
        %v1342 = vld [vmem:[%s167 + $0x2398] sm:$0xff]
        %v1343 = vld [vmem:[%s167 + $0x23a0] sm:$0xff]
        %v1344 = vld [vmem:[%s167 + $0x23a8] sm:$0xff]
        %v1345 = vld [vmem:[%s167 + $0x23b0] sm:$0xff]
        %v1346 = vld [vmem:[%s167 + $0x23b8] sm:$0xff]
        %v1347 = vld [vmem:[%s167 + $0x23c0] sm:$0xff]
        %v1348 = vld [vmem:[%s167 + $0x23c8] sm:$0xff]
        %v1349 = vld [vmem:[%s167 + $0x23d0] sm:$0xff]
        %v1350 = vld [vmem:[%s167 + $0x23d8] sm:$0xff]
        %v1351 = vld [vmem:[%s167 + $0x23e0] sm:$0xff]
        %v1352 = vld [vmem:[%s167 + $0x23e8] sm:$0xff]
        %v1353 = vld [vmem:[%s167 + $0x23f0] sm:$0xff]
        %v1354 = vld [vmem:[%s167 + $0x23f8] sm:$0xff]
        %v1355 = vld [vmem:[%s167 + $0x2400] sm:$0xff]
        %v1356 = vld [vmem:[%s167 + $0x2408] sm:$0xff]
        %v1357 = vld [vmem:[%s167 + $0x2410] sm:$0xff]
        %v1358 = vld [vmem:[%s167 + $0x2418] sm:$0xff]
        %v1359 = vld [vmem:[%s167 + $0x2420] sm:$0xff]
        %v1360 = vld [vmem:[%s167 + $0x2428] sm:$0xff]
        %v1361 = vld [vmem:[%s167 + $0x2430] sm:$0xff]
        %v1362 = vld [vmem:[%s167 + $0x2438] sm:$0xff]
        %v1363 = vld [vmem:[%s167 + $0x2440] sm:$0xff]
        %v1364 = vld [vmem:[%s167 + $0x2448] sm:$0xff]
        %v1365 = vld [vmem:[%s167 + $0x2450] sm:$0xff]
        %v1366 = vld [vmem:[%s167 + $0x2458] sm:$0xff]
        %v1367 = vld [vmem:[%s167 + $0x2460] sm:$0xff]
        %v1368 = vld [vmem:[%s167 + $0x2468] sm:$0xff]
        %v1369 = vld [vmem:[%s167 + $0x2470] sm:$0xff]
        %v1370 = vld [vmem:[%s167 + $0x2478] sm:$0xff]
        %v1371 = vld [vmem:[%s167 + $0x2480] sm:$0xff]
        %v1372 = vld [vmem:[%s167 + $0x2488] sm:$0xff]
        %v1373 = vld [vmem:[%s167 + $0x2490] sm:$0xff]
        %v1374 = vld [vmem:[%s167 + $0x2498] sm:$0xff]
        %v1375 = vld [vmem:[%s167 + $0x24a0] sm:$0xff]
        %v1376 = vld [vmem:[%s167 + $0x24a8] sm:$0xff]
        %v1377 = vld [vmem:[%s167 + $0x24b0] sm:$0xff]
        %v1378 = vld [vmem:[%s167 + $0x24b8] sm:$0xff]
        %v1379 = vld [vmem:[%s167 + $0x24c0] sm:$0xff]
        %v1380 = vld [vmem:[%s167 + $0x24c8] sm:$0xff]
        %v1381 = vld [vmem:[%s167 + $0x24d0] sm:$0xff]
        %v1382 = vld [vmem:[%s167 + $0x24d8] sm:$0xff]
        %v1383 = vld [vmem:[%s167 + $0x24e0] sm:$0xff]
        %v1384 = vld [vmem:[%s167 + $0x24e8] sm:$0xff]
        %v1385 = vld [vmem:[%s167 + $0x24f0] sm:$0xff]
        %v1386 = vld [vmem:[%s167 + $0x24f8] sm:$0xff]
        %v1387 = vld [vmem:[%s167 + $0x2500] sm:$0xff]
        %v1388 = vld [vmem:[%s167 + $0x2508] sm:$0xff]
        %v1389 = vld [vmem:[%s167 + $0x2510] sm:$0xff]
        %v1390 = vld [vmem:[%s167 + $0x2518] sm:$0xff]
        %v1391 = vld [vmem:[%s167 + $0x2520] sm:$0xff]
        %v1392 = vld [vmem:[%s167 + $0x2528] sm:$0xff]
        %v1393 = vld [vmem:[%s167 + $0x2530] sm:$0xff]
        %v1394 = vld [vmem:[%s167 + $0x2538] sm:$0xff]
        %v1395 = vld [vmem:[%s167 + $0x2540] sm:$0xff]
        %v1396 = vld [vmem:[%s167 + $0x2548] sm:$0xff]
        %v1397 = vld [vmem:[%s167 + $0x2550] sm:$0xff]
        %v1398 = vld [vmem:[%s167 + $0x2558] sm:$0xff]
        %v1399 = vld [vmem:[%s167 + $0x2560] sm:$0xff]
        %v1400 = vld [vmem:[%s167 + $0x2568] sm:$0xff]
        %v1401 = vld [vmem:[%s167 + $0x2570] sm:$0xff]
        %v1402 = vld [vmem:[%s167 + $0x2578] sm:$0xff]
        %v1403 = vld [vmem:[%s167 + $0x2580] sm:$0xff]
        %v1404 = vld [vmem:[%s167 + $0x2588] sm:$0xff]
        %v1405 = vld [vmem:[%s167 + $0x2590] sm:$0xff]
        %v1406 = vld [vmem:[%s167 + $0x2598] sm:$0xff]
        %v1407 = vld [vmem:[%s167 + $0x25a0] sm:$0xff]
        %v1408 = vld [vmem:[%s167 + $0x25a8] sm:$0xff]
        %v1409 = vld [vmem:[%s167 + $0x25b0] sm:$0xff]
        %v1410 = vld [vmem:[%s167 + $0x25b8] sm:$0xff]
        %v1411 = vld [vmem:[%s167 + $0x25c0] sm:$0xff]
        %v1412 = vld [vmem:[%s167 + $0x25c8] sm:$0xff]
        %v1413 = vld [vmem:[%s167 + $0x25d0] sm:$0xff]
        %v1414 = vld [vmem:[%s167 + $0x25d8] sm:$0xff]
        %v1415 = vld [vmem:[%s167 + $0x25e0] sm:$0xff]
        %v1416 = vld [vmem:[%s167 + $0x25e8] sm:$0xff]
        %v1417 = vld [vmem:[%s167 + $0x25f0] sm:$0xff]
        %v1418 = vld [vmem:[%s167 + $0x25f8] sm:$0xff]
        %v1419 = vld [vmem:[%s167 + $0x2600] sm:$0xff]
        %v1420 = vld [vmem:[%s167 + $0x2608] sm:$0xff]
        %v1421 = vld [vmem:[%s167 + $0x2610] sm:$0xff]
        %v1422 = vld [vmem:[%s167 + $0x2618] sm:$0xff]
        %v1423 = vld [vmem:[%s167 + $0x2620] sm:$0xff]
        %v1424 = vld [vmem:[%s167 + $0x2628] sm:$0xff]
        %v1425 = vld [vmem:[%s167 + $0x2630] sm:$0xff]
        %v1426 = vld [vmem:[%s167 + $0x2638] sm:$0xff]
        %v1427 = vld [vmem:[%s167 + $0x2640] sm:$0xff]
        %v1428 = vld [vmem:[%s167 + $0x2648] sm:$0xff]
        %v1429 = vld [vmem:[%s167 + $0x2650] sm:$0xff]
        %v1430 = vld [vmem:[%s167 + $0x2658] sm:$0xff]
        %v1431 = vld [vmem:[%s167 + $0x2660] sm:$0xff]
        %v1432 = vld [vmem:[%s167 + $0x2668] sm:$0xff]
        %v1433 = vld [vmem:[%s167 + $0x2670] sm:$0xff]
        %v1434 = vld [vmem:[%s167 + $0x2678] sm:$0xff]
        %v1435 = vld [vmem:[%s167 + $0x2680] sm:$0xff]
        %v1436 = vld [vmem:[%s167 + $0x2688] sm:$0xff]
        %v1437 = vld [vmem:[%s167 + $0x2690] sm:$0xff]
        %v1438 = vld [vmem:[%s167 + $0x2698] sm:$0xff]
        %v1439 = vld [vmem:[%s167 + $0x26a0] sm:$0xff]
        %v1440 = vld [vmem:[%s167 + $0x26a8] sm:$0xff]
        %v1441 = vld [vmem:[%s167 + $0x26b0] sm:$0xff]
        %v1442 = vld [vmem:[%s167 + $0x26b8] sm:$0xff]
        %v1443 = vld [vmem:[%s167 + $0x26c0] sm:$0xff]
        %v1444 = vld [vmem:[%s167 + $0x26c8] sm:$0xff]
        %v1445 = vld [vmem:[%s167 + $0x26d0] sm:$0xff]
        %v1446 = vld [vmem:[%s167 + $0x26d8] sm:$0xff]
        %v1447 = vld [vmem:[%s167 + $0x26e0] sm:$0xff]
        %v1448 = vld [vmem:[%s167 + $0x26e8] sm:$0xff]
        %v1449 = vld [vmem:[%s167 + $0x26f0] sm:$0xff]
        %v1450 = vld [vmem:[%s167 + $0x26f8] sm:$0xff]
        %v1451 = vld [vmem:[%s167 + $0x2700] sm:$0xff]
        %v1452 = vld [vmem:[%s167 + $0x2708] sm:$0xff]
        %v1453 = vld [vmem:[%s167 + $0x2710] sm:$0xff]
        %v1454 = vld [vmem:[%s167 + $0x2718] sm:$0xff]
        %v1455 = vld [vmem:[%s167 + $0x2720] sm:$0xff]
        %v1456 = vld [vmem:[%s167 + $0x2728] sm:$0xff]
        %v1457 = vld [vmem:[%s167 + $0x2730] sm:$0xff]
        %v1458 = vld [vmem:[%s167 + $0x2738] sm:$0xff]
        %v1459 = vld [vmem:[%s167 + $0x2740] sm:$0xff]
        %v1460 = vld [vmem:[%s167 + $0x2748] sm:$0xff]
        %v1461 = vld [vmem:[%s167 + $0x2750] sm:$0xff]
        %v1462 = vld [vmem:[%s167 + $0x2758] sm:$0xff]
        %v1463 = vld [vmem:[%s167 + $0x2760] sm:$0xff]
        %v1464 = vld [vmem:[%s167 + $0x2768] sm:$0xff]
        %v1465 = vld [vmem:[%s167 + $0x2770] sm:$0xff]
        %v1466 = vld [vmem:[%s167 + $0x2778] sm:$0xff]
        %v1467 = vld [vmem:[%s167 + $0x2780] sm:$0xff]
        %v1468 = vld [vmem:[%s167 + $0x2788] sm:$0xff]
        %v1469 = vld [vmem:[%s167 + $0x2790] sm:$0xff]
        %v1470 = vld [vmem:[%s167 + $0x2798] sm:$0xff]
        %v1471 = vld [vmem:[%s167 + $0x27a0] sm:$0xff]
        %v1472 = vld [vmem:[%s167 + $0x27a8] sm:$0xff]
        %v1473 = vld [vmem:[%s167 + $0x27b0] sm:$0xff]
        %v1474 = vld [vmem:[%s167 + $0x27b8] sm:$0xff]
        %v1475 = vld [vmem:[%s167 + $0x27c0] sm:$0xff]
        %v1476 = vld [vmem:[%s167 + $0x27c8] sm:$0xff]
        %v1477 = vld [vmem:[%s167 + $0x27d0] sm:$0xff]
        %v1478 = vld [vmem:[%s167 + $0x27d8] sm:$0xff]
        %v1479 = vld [vmem:[%s167 + $0x27e0] sm:$0xff]
        %v1480 = vld [vmem:[%s167 + $0x27e8] sm:$0xff]
        %v1481 = vld [vmem:[%s167 + $0x27f0] sm:$0xff]
        %v1482 = vld [vmem:[%s167 + $0x27f8] sm:$0xff]
        %v1483 = vld [vmem:[%s167 + $0x2800] sm:$0xff]
        %v1484 = vld [vmem:[%s167 + $0x2808] sm:$0xff]
        %v1485 = vld [vmem:[%s167 + $0x2810] sm:$0xff]
        %v1486 = vld [vmem:[%s167 + $0x2818] sm:$0xff]
        %v1487 = vld [vmem:[%s167 + $0x2820] sm:$0xff]
        %v1488 = vld [vmem:[%s167 + $0x2828] sm:$0xff]
        %v1489 = vld [vmem:[%s167 + $0x2830] sm:$0xff]
        %v1490 = vld [vmem:[%s167 + $0x2838] sm:$0xff]
        %v1491 = vld [vmem:[%s167 + $0x2840] sm:$0xff]
        %v1492 = vld [vmem:[%s167 + $0x2848] sm:$0xff]
        %v1493 = vld [vmem:[%s167 + $0x2850] sm:$0xff]
        %v1494 = vld [vmem:[%s167 + $0x2858] sm:$0xff]
        %v1495 = vld [vmem:[%s167 + $0x2860] sm:$0xff]
        %v1496 = vld [vmem:[%s167 + $0x2868] sm:$0xff]
        %v1497 = vld [vmem:[%s167 + $0x2870] sm:$0xff]
        %v1498 = vld [vmem:[%s167 + $0x2878] sm:$0xff]
        %v1499 = vld [vmem:[%s167 + $0x2880] sm:$0xff]
        %v1500 = vld [vmem:[%s167 + $0x2888] sm:$0xff]
        %v1501 = vld [vmem:[%s167 + $0x2890] sm:$0xff]
        %v1502 = vld [vmem:[%s167 + $0x2898] sm:$0xff]
        %v1503 = vld [vmem:[%s167 + $0x28a0] sm:$0xff]
        %v1504 = vld [vmem:[%s167 + $0x28a8] sm:$0xff]
        %v1505 = vld [vmem:[%s167 + $0x28b0] sm:$0xff]
        %v1506 = vld [vmem:[%s167 + $0x28b8] sm:$0xff]
        %v1507 = vld [vmem:[%s167 + $0x28c0] sm:$0xff]
        %v1508 = vld [vmem:[%s167 + $0x28c8] sm:$0xff]
        %v1509 = vld [vmem:[%s167 + $0x28d0] sm:$0xff]
        %v1510 = vld [vmem:[%s167 + $0x28d8] sm:$0xff]
        %v1511 = vld [vmem:[%s167 + $0x28e0] sm:$0xff]
        %v1512 = vld [vmem:[%s167 + $0x28e8] sm:$0xff]
        %v1513 = vld [vmem:[%s167 + $0x28f0] sm:$0xff]
        %v1514 = vld [vmem:[%s167 + $0x28f8] sm:$0xff]
        %v1515 = vld [vmem:[%s167 + $0x2900] sm:$0xff]
        %v1516 = vld [vmem:[%s167 + $0x2908] sm:$0xff]
        %v1517 = vld [vmem:[%s167 + $0x2910] sm:$0xff]
        %v1518 = vld [vmem:[%s167 + $0x2918] sm:$0xff]
        %v1519 = vld [vmem:[%s167 + $0x2920] sm:$0xff]
        %v1520 = vld [vmem:[%s167 + $0x2928] sm:$0xff]
        %v1521 = vld [vmem:[%s167 + $0x2930] sm:$0xff]
        %v1522 = vld [vmem:[%s167 + $0x2938] sm:$0xff]
        %v1523 = vld [vmem:[%s167 + $0x2940] sm:$0xff]
        %v1524 = vld [vmem:[%s167 + $0x2948] sm:$0xff]
        %v1525 = vld [vmem:[%s167 + $0x2950] sm:$0xff]
        %v1526 = vld [vmem:[%s167 + $0x2958] sm:$0xff]
        %v1527 = vld [vmem:[%s167 + $0x2960] sm:$0xff]
        %v1528 = vld [vmem:[%s167 + $0x2968] sm:$0xff]
        %v1529 = vld [vmem:[%s167 + $0x2970] sm:$0xff]
        %v1530 = vld [vmem:[%s167 + $0x2978] sm:$0xff]
        %v1531 = vld [vmem:[%s167 + $0x2980] sm:$0xff]
        %v1532 = vld [vmem:[%s167 + $0x2988] sm:$0xff]
        %v1533 = vld [vmem:[%s167 + $0x2990] sm:$0xff]
        %v1534 = vld [vmem:[%s167 + $0x2998] sm:$0xff]
        %v1535 = vld [vmem:[%s167 + $0x29a0] sm:$0xff]
        %v1536 = vld [vmem:[%s167 + $0x29a8] sm:$0xff]
        %v1537 = vld [vmem:[%s167 + $0x29b0] sm:$0xff]
        %v1538 = vld [vmem:[%s167 + $0x29b8] sm:$0xff]
        %v1539 = vld [vmem:[%s167 + $0x29c0] sm:$0xff]
        %v1540 = vld [vmem:[%s167 + $0x29c8] sm:$0xff]
        %v1541 = vld [vmem:[%s167 + $0x29d0] sm:$0xff]
        %v1542 = vld [vmem:[%s167 + $0x29d8] sm:$0xff]
        %v1543 = vld [vmem:[%s167 + $0x29e0] sm:$0xff]
        %v1544 = vld [vmem:[%s167 + $0x29e8] sm:$0xff]
        %v1545 = vld [vmem:[%s167 + $0x29f0] sm:$0xff]
        %v1546 = vld [vmem:[%s167 + $0x29f8] sm:$0xff]
        %v1547 = vld [vmem:[%s167 + $0x2a00] sm:$0xff]
        %v1548 = vld [vmem:[%s167 + $0x2a08] sm:$0xff]
        %v1549 = vld [vmem:[%s167 + $0x2a10] sm:$0xff]
        %v1550 = vld [vmem:[%s167 + $0x2a18] sm:$0xff]
        %v1551 = vld [vmem:[%s167 + $0x2a20] sm:$0xff]
        %v1552 = vld [vmem:[%s167 + $0x2a28] sm:$0xff]
        %v1553 = vld [vmem:[%s167 + $0x2a30] sm:$0xff]
        %v1554 = vld [vmem:[%s167 + $0x2a38] sm:$0xff]
        %v1555 = vld [vmem:[%s167 + $0x2a40] sm:$0xff]
        %v1556 = vld [vmem:[%s167 + $0x2a48] sm:$0xff]
        %v1557 = vld [vmem:[%s167 + $0x2a50] sm:$0xff]
        %v1558 = vld [vmem:[%s167 + $0x2a58] sm:$0xff]
        %v1559 = vld [vmem:[%s167 + $0x2a60] sm:$0xff]
        %v1560 = vld [vmem:[%s167 + $0x2a68] sm:$0xff]
        %v1561 = vld [vmem:[%s167 + $0x2a70] sm:$0xff]
        %v1562 = vld [vmem:[%s167 + $0x2a78] sm:$0xff]
        %v1563 = vld [vmem:[%s167 + $0x2a80] sm:$0xff]
        %v1564 = vld [vmem:[%s167 + $0x2a88] sm:$0xff]
        %v1565 = vld [vmem:[%s167 + $0x2a90] sm:$0xff]
        %v1566 = vld [vmem:[%s167 + $0x2a98] sm:$0xff]
        %v1567 = vld [vmem:[%s167 + $0x2aa0] sm:$0xff]
        %v1568 = vld [vmem:[%s167 + $0x2aa8] sm:$0xff]
        %v1569 = vld [vmem:[%s167 + $0x2ab0] sm:$0xff]
        %v1570 = vld [vmem:[%s167 + $0x2ab8] sm:$0xff]
        %v1571 = vld [vmem:[%s167 + $0x2ac0] sm:$0xff]
        %v1572 = vld [vmem:[%s167 + $0x2ac8] sm:$0xff]
        %v1573 = vld [vmem:[%s167 + $0x2ad0] sm:$0xff]
        %v1574 = vld [vmem:[%s167 + $0x2ad8] sm:$0xff]
        %v1575 = vld [vmem:[%s167 + $0x2ae0] sm:$0xff]
        %v1576 = vld [vmem:[%s167 + $0x2ae8] sm:$0xff]
        %v1577 = vld [vmem:[%s167 + $0x2af0] sm:$0xff]
        %v1578 = vld [vmem:[%s167 + $0x2af8] sm:$0xff]
        %v1579 = vld [vmem:[%s167 + $0x2b00] sm:$0xff]
        %v1580 = vld [vmem:[%s167 + $0x2b08] sm:$0xff]
        %v1581 = vld [vmem:[%s167 + $0x2b10] sm:$0xff]
        %v1582 = vld [vmem:[%s167 + $0x2b18] sm:$0xff]
        %v1583 = vld [vmem:[%s167 + $0x2b20] sm:$0xff]
        %v1584 = vld [vmem:[%s167 + $0x2b28] sm:$0xff]
        %v1585 = vld [vmem:[%s167 + $0x2b30] sm:$0xff]
        %v1586 = vld [vmem:[%s167 + $0x2b38] sm:$0xff]
        %v1587 = vld [vmem:[%s167 + $0x2b40] sm:$0xff]
        %v1588 = vld [vmem:[%s167 + $0x2b48] sm:$0xff]
        %v1589 = vld [vmem:[%s167 + $0x2b50] sm:$0xff]
        %v1590 = vld [vmem:[%s167 + $0x2b58] sm:$0xff]
        %v1591 = vld [vmem:[%s167 + $0x2b60] sm:$0xff]
        %v1592 = vld [vmem:[%s167 + $0x2b68] sm:$0xff]
        %v1593 = vld [vmem:[%s167 + $0x2b70] sm:$0xff]
        %v1594 = vld [vmem:[%s167 + $0x2b78] sm:$0xff]
        %v1595 = vld [vmem:[%s167 + $0x2b80] sm:$0xff]
        %v1596 = vld [vmem:[%s167 + $0x2b88] sm:$0xff]
        %v1597 = vld [vmem:[%s167 + $0x2b90] sm:$0xff]
        %v1598 = vld [vmem:[%s167 + $0x2b98] sm:$0xff]
        %v1599 = vld [vmem:[%s167 + $0x2ba0] sm:$0xff]
        %v1600 = vld [vmem:[%s167 + $0x2ba8] sm:$0xff]
        %v1601 = vld [vmem:[%s167 + $0x2bb0] sm:$0xff]
        %v1602 = vld [vmem:[%s167 + $0x2bb8] sm:$0xff]
        %v1603 = vld [vmem:[%s167 + $0x2bc0] sm:$0xff]
        %v1604 = vld [vmem:[%s167 + $0x2bc8] sm:$0xff]
        %v1605 = vld [vmem:[%s167 + $0x2bd0] sm:$0xff]
        %v1606 = vld [vmem:[%s167 + $0x2bd8] sm:$0xff]
        %v1607 = vld [vmem:[%s167 + $0x2be0] sm:$0xff]
        %v1608 = vld [vmem:[%s167 + $0x2be8] sm:$0xff]
        %v1609 = vld [vmem:[%s167 + $0x2bf0] sm:$0xff]
        %v1610 = vld [vmem:[%s167 + $0x2bf8] sm:$0xff]
        %v1611 = vld [vmem:[%s167 + $0x2c00] sm:$0xff]
        %v1612 = vld [vmem:[%s167 + $0x2c08] sm:$0xff]
        %v1613 = vld [vmem:[%s167 + $0x2c10] sm:$0xff]
        %v1614 = vld [vmem:[%s167 + $0x2c18] sm:$0xff]
        %v1615 = vld [vmem:[%s167 + $0x2c20] sm:$0xff]
        %v1616 = vld [vmem:[%s167 + $0x2c28] sm:$0xff]
        %v1617 = vld [vmem:[%s167 + $0x2c30] sm:$0xff]
        %v1618 = vld [vmem:[%s167 + $0x2c38] sm:$0xff]
        %v1619 = vld [vmem:[%s167 + $0x2c40] sm:$0xff]
        %v1620 = vld [vmem:[%s167 + $0x2c48] sm:$0xff]
        %v1621 = vld [vmem:[%s167 + $0x2c50] sm:$0xff]
        %v1622 = vld [vmem:[%s167 + $0x2c58] sm:$0xff]
        %v1623 = vld [vmem:[%s167 + $0x2c60] sm:$0xff]
        %v1624 = vld [vmem:[%s167 + $0x2c68] sm:$0xff]
        %v1625 = vld [vmem:[%s167 + $0x2c70] sm:$0xff]
        %v1626 = vld [vmem:[%s167 + $0x2c78] sm:$0xff]
        %v1627 = vld [vmem:[%s167 + $0x2c80] sm:$0xff]
        %v1628 = vld [vmem:[%s167 + $0x2c88] sm:$0xff]
        %v1629 = vld [vmem:[%s167 + $0x2c90] sm:$0xff]
        %v1630 = vld [vmem:[%s167 + $0x2c98] sm:$0xff]
        %v1631 = vld [vmem:[%s167 + $0x2ca0] sm:$0xff]
        %v1632 = vld [vmem:[%s167 + $0x2ca8] sm:$0xff]
        %v1633 = vld [vmem:[%s167 + $0x2cb0] sm:$0xff]
        %v1634 = vld [vmem:[%s167 + $0x2cb8] sm:$0xff]
        %v1635 = vld [vmem:[%s167 + $0x2cc0] sm:$0xff]
        %v1636 = vld [vmem:[%s167 + $0x2cc8] sm:$0xff]
        %v1637 = vld [vmem:[%s167 + $0x2cd0] sm:$0xff]
        %v1638 = vld [vmem:[%s167 + $0x2cd8] sm:$0xff]
        %v1639 = vld [vmem:[%s167 + $0x2ce0] sm:$0xff]
        %v1640 = vld [vmem:[%s167 + $0x2ce8] sm:$0xff]
        %v1641 = vld [vmem:[%s167 + $0x2cf0] sm:$0xff]
        %v1642 = vld [vmem:[%s167 + $0x2cf8] sm:$0xff]
        %v1643 = vld [vmem:[%s167 + $0x2d00] sm:$0xff]
        %v1644 = vld [vmem:[%s167 + $0x2d08] sm:$0xff]
        %v1645 = vld [vmem:[%s167 + $0x2d10] sm:$0xff]
        %v1646 = vld [vmem:[%s167 + $0x2d18] sm:$0xff]
        %v1647 = vld [vmem:[%s167 + $0x2d20] sm:$0xff]
        %v1648 = vld [vmem:[%s167 + $0x2d28] sm:$0xff]
        %v1649 = vld [vmem:[%s167 + $0x2d30] sm:$0xff]
        %v1650 = vld [vmem:[%s167 + $0x2d38] sm:$0xff]
        %v1651 = vld [vmem:[%s167 + $0x2d40] sm:$0xff]
        %v1652 = vld [vmem:[%s167 + $0x2d48] sm:$0xff]
        %v1653 = vld [vmem:[%s167 + $0x2d50] sm:$0xff]
        %v1654 = vld [vmem:[%s167 + $0x2d58] sm:$0xff]
        %v1655 = vld [vmem:[%s167 + $0x2d60] sm:$0xff]
        %v1656 = vld [vmem:[%s167 + $0x2d68] sm:$0xff]
        %v1657 = vld [vmem:[%s167 + $0x2d70] sm:$0xff]
        %v1658 = vld [vmem:[%s167 + $0x2d78] sm:$0xff]
        %v1659 = vld [vmem:[%s167 + $0x2d80] sm:$0xff]
        %v1660 = vld [vmem:[%s167 + $0x2d88] sm:$0xff]
        %v1661 = vld [vmem:[%s167 + $0x2d90] sm:$0xff]
        %v1662 = vld [vmem:[%s167 + $0x2d98] sm:$0xff]
        %v1663 = vld [vmem:[%s167 + $0x2da0] sm:$0xff]
        %v1664 = vld [vmem:[%s167 + $0x2da8] sm:$0xff]
        %v1665 = vld [vmem:[%s167 + $0x2db0] sm:$0xff]
        %v1666 = vld [vmem:[%s167 + $0x2db8] sm:$0xff]
        %v1667 = vld [vmem:[%s167 + $0x2dc0] sm:$0xff]
        %v1668 = vld [vmem:[%s167 + $0x2dc8] sm:$0xff]
        %v1669 = vld [vmem:[%s167 + $0x2dd0] sm:$0xff]
        %v1670 = vld [vmem:[%s167 + $0x2dd8] sm:$0xff]
        %v1671 = vld [vmem:[%s167 + $0x2de0] sm:$0xff]
        %v1672 = vld [vmem:[%s167 + $0x2de8] sm:$0xff]
        %v1673 = vld [vmem:[%s167 + $0x2df0] sm:$0xff]
        %v1674 = vld [vmem:[%s167 + $0x2df8] sm:$0xff]
        %v1675 = vld [vmem:[%s167 + $0x2e00] sm:$0xff]
        %v1676 = vld [vmem:[%s167 + $0x2e08] sm:$0xff]
        %v1677 = vld [vmem:[%s167 + $0x2e10] sm:$0xff]
        %v1678 = vld [vmem:[%s167 + $0x2e18] sm:$0xff]
        %v1679 = vld [vmem:[%s167 + $0x2e20] sm:$0xff]
        %v1680 = vld [vmem:[%s167 + $0x2e28] sm:$0xff]
        %v1681 = vld [vmem:[%s167 + $0x2e30] sm:$0xff]
        %v1682 = vld [vmem:[%s167 + $0x2e38] sm:$0xff]
        %v1683 = vld [vmem:[%s167 + $0x2e40] sm:$0xff]
        %v1684 = vld [vmem:[%s167 + $0x2e48] sm:$0xff]
        %v1685 = vld [vmem:[%s167 + $0x2e50] sm:$0xff]
        %v1686 = vld [vmem:[%s167 + $0x2e58] sm:$0xff]
        %v1687 = vld [vmem:[%s167 + $0x2e60] sm:$0xff]
        %v1688 = vld [vmem:[%s167 + $0x2e68] sm:$0xff]
        %v1689 = vld [vmem:[%s167 + $0x2e70] sm:$0xff]
        %v1690 = vld [vmem:[%s167 + $0x2e78] sm:$0xff]
        %v1691 = vld [vmem:[%s167 + $0x2e80] sm:$0xff]
        %v1692 = vld [vmem:[%s167 + $0x2e88] sm:$0xff]
        %v1693 = vld [vmem:[%s167 + $0x2e90] sm:$0xff]
        %v1694 = vld [vmem:[%s167 + $0x2e98] sm:$0xff]
        %v1695 = vld [vmem:[%s167 + $0x2ea0] sm:$0xff]
        %v1696 = vld [vmem:[%s167 + $0x2ea8] sm:$0xff]
        %v1697 = vld [vmem:[%s167 + $0x2eb0] sm:$0xff]
        %v1698 = vld [vmem:[%s167 + $0x2eb8] sm:$0xff]
        %v1699 = vld [vmem:[%s167 + $0x2ec0] sm:$0xff]
        %v1700 = vld [vmem:[%s167 + $0x2ec8] sm:$0xff]
        %v1701 = vld [vmem:[%s167 + $0x2ed0] sm:$0xff]
        %v1702 = vld [vmem:[%s167 + $0x2ed8] sm:$0xff]
        %v1703 = vld [vmem:[%s167 + $0x2ee0] sm:$0xff]
        %v1704 = vld [vmem:[%s167 + $0x2ee8] sm:$0xff]
        %v1705 = vld [vmem:[%s167 + $0x2ef0] sm:$0xff]
        %v1706 = vld [vmem:[%s167 + $0x2ef8] sm:$0xff]
        %v1707 = vld [vmem:[%s167 + $0x2f00] sm:$0xff]
        %v1708 = vld [vmem:[%s167 + $0x2f08] sm:$0xff]
        %v1709 = vld [vmem:[%s167 + $0x2f10] sm:$0xff]
        %v1710 = vld [vmem:[%s167 + $0x2f18] sm:$0xff]
        %v1711 = vld [vmem:[%s167 + $0x2f20] sm:$0xff]
        %v1712 = vld [vmem:[%s167 + $0x2f28] sm:$0xff]
        %v1713 = vld [vmem:[%s167 + $0x2f30] sm:$0xff]
        %v1714 = vld [vmem:[%s167 + $0x2f38] sm:$0xff]
        %v1715 = vld [vmem:[%s167 + $0x2f40] sm:$0xff]
        %v1716 = vld [vmem:[%s167 + $0x2f48] sm:$0xff]
        %v1717 = vld [vmem:[%s167 + $0x2f50] sm:$0xff]
        %v1718 = vld [vmem:[%s167 + $0x2f58] sm:$0xff]
        %v1719 = vld [vmem:[%s167 + $0x2f60] sm:$0xff]
        %v1720 = vld [vmem:[%s167 + $0x2f68] sm:$0xff]
        %v1721 = vld [vmem:[%s167 + $0x2f70] sm:$0xff]
        %v1722 = vld [vmem:[%s167 + $0x2f78] sm:$0xff]
        %v1723 = vld [vmem:[%s167 + $0x2f80] sm:$0xff]
        %v1724 = vld [vmem:[%s167 + $0x2f88] sm:$0xff]
        %v1725 = vld [vmem:[%s167 + $0x2f90] sm:$0xff]
        %v1726 = vld [vmem:[%s167 + $0x2f98] sm:$0xff]
        %v1727 = vld [vmem:[%s167 + $0x2fa0] sm:$0xff]
        %v1728 = vld [vmem:[%s167 + $0x2fa8] sm:$0xff]
        %v1729 = vld [vmem:[%s167 + $0x2fb0] sm:$0xff]
        %v1730 = vld [vmem:[%s167 + $0x2fb8] sm:$0xff]
        %v1731 = vld [vmem:[%s167 + $0x2fc0] sm:$0xff]
        %v1732 = vld [vmem:[%s167 + $0x2fc8] sm:$0xff]
        %v1733 = vld [vmem:[%s167 + $0x2fd0] sm:$0xff]
        %v1734 = vld [vmem:[%s167 + $0x2fd8] sm:$0xff]
        %v1735 = vld [vmem:[%s167 + $0x2fe0] sm:$0xff]
        %v1736 = vld [vmem:[%s167 + $0x2fe8] sm:$0xff]
        %v1737 = vld [vmem:[%s167 + $0x2ff0] sm:$0xff]
        %v1738 = vld [vmem:[%s167 + $0x2ff8] sm:$0xff]
        %v1739 = vld [vmem:[%s167 + $0x3000] sm:$0xff]
        %v1740 = vld [vmem:[%s167 + $0x3008] sm:$0xff]
        %v1741 = vld [vmem:[%s167 + $0x3010] sm:$0xff]
        %v1742 = vld [vmem:[%s167 + $0x3018] sm:$0xff]
        %v1743 = vld [vmem:[%s167 + $0x3020] sm:$0xff]
        %v1744 = vld [vmem:[%s167 + $0x3028] sm:$0xff]
        %v1745 = vld [vmem:[%s167 + $0x3030] sm:$0xff]
        %v1746 = vld [vmem:[%s167 + $0x3038] sm:$0xff]
        %v1747 = vld [vmem:[%s167 + $0x3040] sm:$0xff]
        %v1748 = vld [vmem:[%s167 + $0x3048] sm:$0xff]
        %v1749 = vld [vmem:[%s167 + $0x3050] sm:$0xff]
        %v1750 = vld [vmem:[%s167 + $0x3058] sm:$0xff]
        %v1751 = vld [vmem:[%s167 + $0x3060] sm:$0xff]
        %v1752 = vld [vmem:[%s167 + $0x3068] sm:$0xff]
        %v1753 = vld [vmem:[%s167 + $0x3070] sm:$0xff]
        %v1754 = vld [vmem:[%s167 + $0x3078] sm:$0xff]
        %v1755 = vld [vmem:[%s167 + $0x3080] sm:$0xff]
        %v1756 = vld [vmem:[%s167 + $0x3088] sm:$0xff]
        %v1757 = vld [vmem:[%s167 + $0x3090] sm:$0xff]
        %v1758 = vld [vmem:[%s167 + $0x3098] sm:$0xff]
        %v1759 = vld [vmem:[%s167 + $0x30a0] sm:$0xff]
        %v1760 = vld [vmem:[%s167 + $0x30a8] sm:$0xff]
        %v1761 = vld [vmem:[%s167 + $0x30b0] sm:$0xff]
        %v1762 = vld [vmem:[%s167 + $0x30b8] sm:$0xff]
        %v1763 = vld [vmem:[%s167 + $0x30c0] sm:$0xff]
        %v1764 = vld [vmem:[%s167 + $0x30c8] sm:$0xff]
        %v1765 = vld [vmem:[%s167 + $0x30d0] sm:$0xff]
        %v1766 = vld [vmem:[%s167 + $0x30d8] sm:$0xff]
        %v1767 = vld [vmem:[%s167 + $0x30e0] sm:$0xff]
        %v1768 = vld [vmem:[%s167 + $0x30e8] sm:$0xff]
        %v1769 = vld [vmem:[%s167 + $0x30f0] sm:$0xff]
        %v1770 = vld [vmem:[%s167 + $0x30f8] sm:$0xff]
        %v1771 = vld [vmem:[%s167 + $0x3100] sm:$0xff]
        %v1772 = vld [vmem:[%s167 + $0x3108] sm:$0xff]
        %v1773 = vld [vmem:[%s167 + $0x3110] sm:$0xff]
        %v1774 = vld [vmem:[%s167 + $0x3118] sm:$0xff]
        %v1775 = vld [vmem:[%s167 + $0x3120] sm:$0xff]
        %v1776 = vld [vmem:[%s167 + $0x3128] sm:$0xff]
        %v1777 = vld [vmem:[%s167 + $0x3130] sm:$0xff]
        %v1778 = vld [vmem:[%s167 + $0x3138] sm:$0xff]
        %v1779 = vld [vmem:[%s167 + $0x3140] sm:$0xff]
        %v1780 = vld [vmem:[%s167 + $0x3148] sm:$0xff]
        %v1781 = vld [vmem:[%s167 + $0x3150] sm:$0xff]
        %v1782 = vld [vmem:[%s167 + $0x3158] sm:$0xff]
        %v1783 = vld [vmem:[%s167 + $0x3160] sm:$0xff]
        %v1784 = vld [vmem:[%s167 + $0x3168] sm:$0xff]
        %v1785 = vld [vmem:[%s167 + $0x3170] sm:$0xff]
        %v1786 = vld [vmem:[%s167 + $0x3178] sm:$0xff]
        %v1787 = vld [vmem:[%s167 + $0x3180] sm:$0xff]
        %v1788 = vld [vmem:[%s167 + $0x3188] sm:$0xff]
        %v1789 = vld [vmem:[%s167 + $0x3190] sm:$0xff]
        %v1790 = vld [vmem:[%s167 + $0x3198] sm:$0xff]
        %v1791 = vld [vmem:[%s167 + $0x31a0] sm:$0xff]
        %v1792 = vld [vmem:[%s167 + $0x31a8] sm:$0xff]
        %v1793 = vld [vmem:[%s167 + $0x31b0] sm:$0xff]
        %v1794 = vld [vmem:[%s167 + $0x31b8] sm:$0xff]
        %v1795 = vld [vmem:[%s167 + $0x31c0] sm:$0xff]
        %v1796 = vld [vmem:[%s167 + $0x31c8] sm:$0xff]
        %v1797 = vld [vmem:[%s167 + $0x31d0] sm:$0xff]
        %v1798 = vld [vmem:[%s167 + $0x31d8] sm:$0xff]
        %v1799 = vld [vmem:[%s167 + $0x31e0] sm:$0xff]
        %v1800 = vld [vmem:[%s167 + $0x31e8] sm:$0xff]
        %v1801 = vld [vmem:[%s167 + $0x31f0] sm:$0xff]
        %v1802 = vld [vmem:[%s167 + $0x31f8] sm:$0xff]
        %v1803 = vld [vmem:[%s167 + $0x3200] sm:$0xff]
        %v1804 = vld [vmem:[%s167 + $0x3208] sm:$0xff]
        %v1805 = vld [vmem:[%s167 + $0x3210] sm:$0xff]
        %v1806 = vld [vmem:[%s167 + $0x3218] sm:$0xff]
        %v1807 = vld [vmem:[%s167 + $0x3220] sm:$0xff]
        %v1808 = vld [vmem:[%s167 + $0x3228] sm:$0xff]
        %v1809 = vld [vmem:[%s167 + $0x3230] sm:$0xff]
        %v1810 = vld [vmem:[%s167 + $0x3238] sm:$0xff]
        %v1811 = vld [vmem:[%s167 + $0x3240] sm:$0xff]
        %v1812 = vld [vmem:[%s167 + $0x3248] sm:$0xff]
        %v1813 = vld [vmem:[%s167 + $0x3250] sm:$0xff]
        %v1814 = vld [vmem:[%s167 + $0x3258] sm:$0xff]
        %v1815 = vld [vmem:[%s167 + $0x3260] sm:$0xff]
        %v1816 = vld [vmem:[%s167 + $0x3268] sm:$0xff]
        %v1817 = vld [vmem:[%s167 + $0x3270] sm:$0xff]
        %v1818 = vld [vmem:[%s167 + $0x3278] sm:$0xff]
        %v1819 = vld [vmem:[%s167 + $0x3280] sm:$0xff]
        %v1820 = vld [vmem:[%s167 + $0x3288] sm:$0xff]
        %v1821 = vld [vmem:[%s167 + $0x3290] sm:$0xff]
        %v1822 = vld [vmem:[%s167 + $0x3298] sm:$0xff]
        %v1823 = vld [vmem:[%s167 + $0x32a0] sm:$0xff]
        %v1824 = vld [vmem:[%s167 + $0x32a8] sm:$0xff]
        %v1825 = vld [vmem:[%s167 + $0x32b0] sm:$0xff]
        %v1826 = vld [vmem:[%s167 + $0x32b8] sm:$0xff]
        %v1827 = vld [vmem:[%s167 + $0x32c0] sm:$0xff]
        %v1828 = vld [vmem:[%s167 + $0x32c8] sm:$0xff]
        %v1829 = vld [vmem:[%s167 + $0x32d0] sm:$0xff]
        %v1830 = vld [vmem:[%s167 + $0x32d8] sm:$0xff]
        %v1831 = vld [vmem:[%s167 + $0x32e0] sm:$0xff]
        %v1832 = vld [vmem:[%s167 + $0x32e8] sm:$0xff]
        %v1833 = vld [vmem:[%s167 + $0x32f0] sm:$0xff]
        %v1834 = vld [vmem:[%s167 + $0x32f8] sm:$0xff]
        %v1835 = vld [vmem:[%s167 + $0x3300] sm:$0xff]
        %v1836 = vld [vmem:[%s167 + $0x3308] sm:$0xff]
        %v1837 = vld [vmem:[%s167 + $0x3310] sm:$0xff]
        %v1838 = vld [vmem:[%s167 + $0x3318] sm:$0xff]
        %v1839 = vld [vmem:[%s167 + $0x3320] sm:$0xff]
        %v1840 = vld [vmem:[%s167 + $0x3328] sm:$0xff]
        %v1841 = vld [vmem:[%s167 + $0x3330] sm:$0xff]
        %v1842 = vld [vmem:[%s167 + $0x3338] sm:$0xff]
        %v1843 = vld [vmem:[%s167 + $0x3340] sm:$0xff]
        %v1844 = vld [vmem:[%s167 + $0x3348] sm:$0xff]
        %v1845 = vld [vmem:[%s167 + $0x3350] sm:$0xff]
        %v1846 = vld [vmem:[%s167 + $0x3358] sm:$0xff]
        %v1847 = vld [vmem:[%s167 + $0x3360] sm:$0xff]
        %v1848 = vld [vmem:[%s167 + $0x3368] sm:$0xff]
        %v1849 = vld [vmem:[%s167 + $0x3370] sm:$0xff]
        %v1850 = vld [vmem:[%s167 + $0x3378] sm:$0xff]
        %v1851 = vld [vmem:[%s167 + $0x3380] sm:$0xff]
        %v1852 = vld [vmem:[%s167 + $0x3388] sm:$0xff]
        %v1853 = vld [vmem:[%s167 + $0x3390] sm:$0xff]
        %v1854 = vld [vmem:[%s167 + $0x3398] sm:$0xff]
        %v1855 = vld [vmem:[%s167 + $0x33a0] sm:$0xff]
        %v1856 = vld [vmem:[%s167 + $0x33a8] sm:$0xff]
        %v1857 = vld [vmem:[%s167 + $0x33b0] sm:$0xff]
        %v1858 = vld [vmem:[%s167 + $0x33b8] sm:$0xff]
        %v1859 = vld [vmem:[%s167 + $0x33c0] sm:$0xff]
        %v1860 = vld [vmem:[%s167 + $0x33c8] sm:$0xff]
        %v1861 = vld [vmem:[%s167 + $0x33d0] sm:$0xff]
        %v1862 = vld [vmem:[%s167 + $0x33d8] sm:$0xff]
        %v1863 = vld [vmem:[%s167 + $0x33e0] sm:$0xff]
        %v1864 = vld [vmem:[%s167 + $0x33e8] sm:$0xff]
        %v1865 = vld [vmem:[%s167 + $0x33f0] sm:$0xff]
        %v1866 = vld [vmem:[%s167 + $0x33f8] sm:$0xff]
        %v1867 = vld [vmem:[%s167 + $0x3400] sm:$0xff]
        %v1868 = vld [vmem:[%s167 + $0x3408] sm:$0xff]
        %v1869 = vld [vmem:[%s167 + $0x3410] sm:$0xff]
        %v1870 = vld [vmem:[%s167 + $0x3418] sm:$0xff]
        %v1871 = vld [vmem:[%s167 + $0x3420] sm:$0xff]
        %v1872 = vld [vmem:[%s167 + $0x3428] sm:$0xff]
        %v1873 = vld [vmem:[%s167 + $0x3430] sm:$0xff]
        %v1874 = vld [vmem:[%s167 + $0x3438] sm:$0xff]
        %v1875 = vld [vmem:[%s167 + $0x3440] sm:$0xff]
        %v1876 = vld [vmem:[%s167 + $0x3448] sm:$0xff]
        %v1877 = vld [vmem:[%s167 + $0x3450] sm:$0xff]
        %v1878 = vld [vmem:[%s167 + $0x3458] sm:$0xff]
        %v1879 = vld [vmem:[%s167 + $0x3460] sm:$0xff]
        %v1880 = vld [vmem:[%s167 + $0x3468] sm:$0xff]
        %v1881 = vld [vmem:[%s167 + $0x3470] sm:$0xff]
        %v1882 = vld [vmem:[%s167 + $0x3478] sm:$0xff]
        %v1883 = vld [vmem:[%s167 + $0x3480] sm:$0xff]
        %v1884 = vld [vmem:[%s167 + $0x3488] sm:$0xff]
        %v1885 = vld [vmem:[%s167 + $0x3490] sm:$0xff]
        %v1886 = vld [vmem:[%s167 + $0x3498] sm:$0xff]
        %v1887 = vld [vmem:[%s167 + $0x34a0] sm:$0xff]
        %v1888 = vld [vmem:[%s167 + $0x34a8] sm:$0xff]
        %v1889 = vld [vmem:[%s167 + $0x34b0] sm:$0xff]
        %v1890 = vld [vmem:[%s167 + $0x34b8] sm:$0xff]
        %v1891 = vld [vmem:[%s167 + $0x34c0] sm:$0xff]
        %v1892 = vld [vmem:[%s167 + $0x34c8] sm:$0xff]
        %v1893 = vld [vmem:[%s167 + $0x34d0] sm:$0xff]
        %v1894 = vld [vmem:[%s167 + $0x34d8] sm:$0xff]
        %v1895 = vld [vmem:[%s167 + $0x34e0] sm:$0xff]
        %v1896 = vld [vmem:[%s167 + $0x34e8] sm:$0xff]
        %v1897 = vld [vmem:[%s167 + $0x34f0] sm:$0xff]
        %v1898 = vld [vmem:[%s167 + $0x34f8] sm:$0xff]
        %v1899 = vld [vmem:[%s167 + $0x3500] sm:$0xff]
        %v1900 = vld [vmem:[%s167 + $0x3508] sm:$0xff]
        %v1901 = vld [vmem:[%s167 + $0x3510] sm:$0xff]
        %v1902 = vld [vmem:[%s167 + $0x3518] sm:$0xff]
        %v1903 = vld [vmem:[%s167 + $0x3520] sm:$0xff]
        %v1904 = vld [vmem:[%s167 + $0x3528] sm:$0xff]
        %v1905 = vld [vmem:[%s167 + $0x3530] sm:$0xff]
        %v1906 = vld [vmem:[%s167 + $0x3538] sm:$0xff]
        %v1907 = vld [vmem:[%s167 + $0x3540] sm:$0xff]
        %v1908 = vld [vmem:[%s167 + $0x3548] sm:$0xff]
        %v1909 = vld [vmem:[%s167 + $0x3550] sm:$0xff]
        %v1910 = vld [vmem:[%s167 + $0x3558] sm:$0xff]
        %v1911 = vld [vmem:[%s167 + $0x3560] sm:$0xff]
        %v1912 = vld [vmem:[%s167 + $0x3568] sm:$0xff]
        %v1913 = vld [vmem:[%s167 + $0x3570] sm:$0xff]
        %v1914 = vld [vmem:[%s167 + $0x3578] sm:$0xff]
        %v1915 = vld [vmem:[%s167 + $0x3580] sm:$0xff]
        %v1916 = vld [vmem:[%s167 + $0x3588] sm:$0xff]
        %v1917 = vld [vmem:[%s167 + $0x3590] sm:$0xff]
        %v1918 = vld [vmem:[%s167 + $0x3598] sm:$0xff]
        %v1919 = vld [vmem:[%s167 + $0x35a0] sm:$0xff]
        %v1920 = vld [vmem:[%s167 + $0x35a8] sm:$0xff]
        %v1921 = vld [vmem:[%s167 + $0x35b0] sm:$0xff]
        %v1922 = vld [vmem:[%s167 + $0x35b8] sm:$0xff]
        %v1923 = vld [vmem:[%s167 + $0x35c0] sm:$0xff]
        %v1924 = vld [vmem:[%s167 + $0x35c8] sm:$0xff]
        %v1925 = vld [vmem:[%s167 + $0x35d0] sm:$0xff]
        %v1926 = vld [vmem:[%s167 + $0x35d8] sm:$0xff]
        %v1927 = vld [vmem:[%s167 + $0x35e0] sm:$0xff]
        %v1928 = vld [vmem:[%s167 + $0x35e8] sm:$0xff]
        %v1929 = vld [vmem:[%s167 + $0x35f0] sm:$0xff]
        %v1930 = vld [vmem:[%s167 + $0x35f8] sm:$0xff]
        %v1931 = vld [vmem:[%s167 + $0x3600] sm:$0xff]
        %v1932 = vld [vmem:[%s167 + $0x3608] sm:$0xff]
        %v1933 = vld [vmem:[%s167 + $0x3610] sm:$0xff]
        %v1934 = vld [vmem:[%s167 + $0x3618] sm:$0xff]
        %v1935 = vld [vmem:[%s167 + $0x3620] sm:$0xff]
        %v1936 = vld [vmem:[%s167 + $0x3628] sm:$0xff]
        %v1937 = vld [vmem:[%s167 + $0x3630] sm:$0xff]
        %v1938 = vld [vmem:[%s167 + $0x3638] sm:$0xff]
        %v1939 = vld [vmem:[%s167 + $0x3640] sm:$0xff]
        %v1940 = vld [vmem:[%s167 + $0x3648] sm:$0xff]
        %v1941 = vld [vmem:[%s167 + $0x3650] sm:$0xff]
        %v1942 = vld [vmem:[%s167 + $0x3658] sm:$0xff]
        %v1943 = vld [vmem:[%s167 + $0x3660] sm:$0xff]
        %v1944 = vld [vmem:[%s167 + $0x3668] sm:$0xff]
        %v1945 = vld [vmem:[%s167 + $0x3670] sm:$0xff]
        %v1946 = vld [vmem:[%s167 + $0x3678] sm:$0xff]
        %v1947 = vld [vmem:[%s167 + $0x3680] sm:$0xff]
        %v1948 = vld [vmem:[%s167 + $0x3688] sm:$0xff]
        %v1949 = vld [vmem:[%s167 + $0x3690] sm:$0xff]
        %v1950 = vld [vmem:[%s167 + $0x3698] sm:$0xff]
        %v1951 = vld [vmem:[%s167 + $0x36a0] sm:$0xff]
        %v1952 = vld [vmem:[%s167 + $0x36a8] sm:$0xff]
        %v1953 = vld [vmem:[%s167 + $0x36b0] sm:$0xff]
        %v1954 = vld [vmem:[%s167 + $0x36b8] sm:$0xff]
        %v1955 = vld [vmem:[%s167 + $0x36c0] sm:$0xff]
        %v1956 = vld [vmem:[%s167 + $0x36c8] sm:$0xff]
        %v1957 = vld [vmem:[%s167 + $0x36d0] sm:$0xff]
        %v1958 = vld [vmem:[%s167 + $0x36d8] sm:$0xff]
        %v1959 = vld [vmem:[%s167 + $0x36e0] sm:$0xff]
        %v1960 = vld [vmem:[%s167 + $0x36e8] sm:$0xff]
        %v1961 = vld [vmem:[%s167 + $0x36f0] sm:$0xff]
        %v1962 = vld [vmem:[%s167 + $0x36f8] sm:$0xff]
        %v1963 = vld [vmem:[%s167 + $0x3700] sm:$0xff]
        %v1964 = vld [vmem:[%s167 + $0x3708] sm:$0xff]
        %v1965 = vld [vmem:[%s167 + $0x3710] sm:$0xff]
        %v1966 = vld [vmem:[%s167 + $0x3718] sm:$0xff]
        %v1967 = vld [vmem:[%s167 + $0x3720] sm:$0xff]
        %v1968 = vld [vmem:[%s167 + $0x3728] sm:$0xff]
        %v1969 = vld [vmem:[%s167 + $0x3730] sm:$0xff]
        %v1970 = vld [vmem:[%s167 + $0x3738] sm:$0xff]
        %v1971 = vld [vmem:[%s167 + $0x3740] sm:$0xff]
        %v1972 = vld [vmem:[%s167 + $0x3748] sm:$0xff]
        %v1973 = vld [vmem:[%s167 + $0x3750] sm:$0xff]
        %v1974 = vld [vmem:[%s167 + $0x3758] sm:$0xff]
        %v1975 = vld [vmem:[%s167 + $0x3760] sm:$0xff]
        %v1976 = vld [vmem:[%s167 + $0x3768] sm:$0xff]
        %v1977 = vld [vmem:[%s167 + $0x3770] sm:$0xff]
        %v1978 = vld [vmem:[%s167 + $0x3778] sm:$0xff]
        %v1979 = vld [vmem:[%s167 + $0x3780] sm:$0xff]
        %v1980 = vld [vmem:[%s167 + $0x3788] sm:$0xff]
        %v1981 = vld [vmem:[%s167 + $0x3790] sm:$0xff]
        %v1982 = vld [vmem:[%s167 + $0x3798] sm:$0xff]
        %v1983 = vld [vmem:[%s167 + $0x37a0] sm:$0xff]
        %v1984 = vld [vmem:[%s167 + $0x37a8] sm:$0xff]
        %v1985 = vld [vmem:[%s167 + $0x37b0] sm:$0xff]
        %v1986 = vld [vmem:[%s167 + $0x37b8] sm:$0xff]
        %v1987 = vld [vmem:[%s167 + $0x37c0] sm:$0xff]
        %v1988 = vld [vmem:[%s167 + $0x37c8] sm:$0xff]
        %v1989 = vld [vmem:[%s167 + $0x37d0] sm:$0xff]
        %v1990 = vld [vmem:[%s167 + $0x37d8] sm:$0xff]
        %v1991 = vld [vmem:[%s167 + $0x37e0] sm:$0xff]
        %v1992 = vld [vmem:[%s167 + $0x37e8] sm:$0xff]
        %v1993 = vld [vmem:[%s167 + $0x37f0] sm:$0xff]
        %v1994 = vld [vmem:[%s167 + $0x37f8] sm:$0xff]
        %v1995 = vld [vmem:[%s167 + $0x3800] sm:$0xff]
        %v1996 = vld [vmem:[%s167 + $0x3808] sm:$0xff]
        %v1997 = vld [vmem:[%s167 + $0x3810] sm:$0xff]
        %v1998 = vld [vmem:[%s167 + $0x3818] sm:$0xff]
        %v1999 = vld [vmem:[%s167 + $0x3820] sm:$0xff]
        %v2000 = vld [vmem:[%s167 + $0x3828] sm:$0xff]
        %v2001 = vld [vmem:[%s167 + $0x3830] sm:$0xff]
        %v2002 = vld [vmem:[%s167 + $0x3838] sm:$0xff]
        %v2003 = vld [vmem:[%s167 + $0x3840] sm:$0xff]
        %v2004 = vld [vmem:[%s167 + $0x3848] sm:$0xff]
        %v2005 = vld [vmem:[%s167 + $0x3850] sm:$0xff]
        %v2006 = vld [vmem:[%s167 + $0x3858] sm:$0xff]
        %v2007 = vld [vmem:[%s167 + $0x3860] sm:$0xff]
        %v2008 = vld [vmem:[%s167 + $0x3868] sm:$0xff]
        %v2009 = vld [vmem:[%s167 + $0x3870] sm:$0xff]
        %v2010 = vld [vmem:[%s167 + $0x3878] sm:$0xff]
        %v2011 = vld [vmem:[%s167 + $0x3880] sm:$0xff]
        %v2012 = vld [vmem:[%s167 + $0x3888] sm:$0xff]
        %v2013 = vld [vmem:[%s167 + $0x3890] sm:$0xff]
        %v2014 = vld [vmem:[%s167 + $0x3898] sm:$0xff]
        %v2015 = vld [vmem:[%s167 + $0x38a0] sm:$0xff]
        %v2016 = vld [vmem:[%s167 + $0x38a8] sm:$0xff]
        %v2017 = vld [vmem:[%s167 + $0x38b0] sm:$0xff]
        %v2018 = vld [vmem:[%s167 + $0x38b8] sm:$0xff]
        %v2019 = vld [vmem:[%s167 + $0x38c0] sm:$0xff]
        %v2020 = vld [vmem:[%s167 + $0x38c8] sm:$0xff]
        %v2021 = vld [vmem:[%s167 + $0x38d0] sm:$0xff]
        %v2022 = vld [vmem:[%s167 + $0x38d8] sm:$0xff]
        %v2023 = vld [vmem:[%s167 + $0x38e0] sm:$0xff]
        %v2024 = vld [vmem:[%s167 + $0x38e8] sm:$0xff]
        %v2025 = vld [vmem:[%s167 + $0x38f0] sm:$0xff]
        %v2026 = vld [vmem:[%s167 + $0x38f8] sm:$0xff]
        %v2027 = vld [vmem:[%s167 + $0x3900] sm:$0xff]
        %v2028 = vld [vmem:[%s167 + $0x3908] sm:$0xff]
        %v2029 = vld [vmem:[%s167 + $0x3910] sm:$0xff]
        %v2030 = vld [vmem:[%s167 + $0x3918] sm:$0xff]
        %v2031 = vld [vmem:[%s167 + $0x3920] sm:$0xff]
        %v2032 = vld [vmem:[%s167 + $0x3928] sm:$0xff]
        %v2033 = vld [vmem:[%s167 + $0x3930] sm:$0xff]
        %v2034 = vld [vmem:[%s167 + $0x3938] sm:$0xff]
        %v2035 = vld [vmem:[%s167 + $0x3940] sm:$0xff]
        %v2036 = vld [vmem:[%s167 + $0x3948] sm:$0xff]
        %v2037 = vld [vmem:[%s167 + $0x3950] sm:$0xff]
        %v2038 = vld [vmem:[%s167 + $0x3958] sm:$0xff]
        %v2039 = vld [vmem:[%s167 + $0x3960] sm:$0xff]
        %v2040 = vld [vmem:[%s167 + $0x3968] sm:$0xff]
        %v2041 = vld [vmem:[%s167 + $0x3970] sm:$0xff]
        %v2042 = vld [vmem:[%s167 + $0x3978] sm:$0xff]
        %v2043 = vld [vmem:[%s167 + $0x3980] sm:$0xff]
        %v2044 = vld [vmem:[%s167 + $0x3988] sm:$0xff]
        %v2045 = vld [vmem:[%s167 + $0x3990] sm:$0xff]
        %v2046 = vld [vmem:[%s167 + $0x3998] sm:$0xff]
        %v2047 = vld [vmem:[%s167 + $0x39a0] sm:$0xff]
        %v2048 = vld [vmem:[%s167 + $0x39a8] sm:$0xff]
        %v2049 = vld [vmem:[%s167 + $0x39b0] sm:$0xff]
        %v2050 = vld [vmem:[%s167 + $0x39b8] sm:$0xff]
        %v2051 = vld [vmem:[%s167 + $0x39c0] sm:$0xff]
        %v2052 = vld [vmem:[%s167 + $0x39c8] sm:$0xff]
        %v2053 = vld [vmem:[%s167 + $0x39d0] sm:$0xff]
        %v2054 = vld [vmem:[%s167 + $0x39d8] sm:$0xff]
        %v2055 = vld [vmem:[%s167 + $0x39e0] sm:$0xff]
        %v2056 = vld [vmem:[%s167 + $0x39e8] sm:$0xff]
        %v2057 = vld [vmem:[%s167 + $0x39f0] sm:$0xff]
        %v2058 = vld [vmem:[%s167 + $0x39f8] sm:$0xff]
        %v2059 = vld [vmem:[%s167 + $0x3a00] sm:$0xff]
        %v2060 = vld [vmem:[%s167 + $0x3a08] sm:$0xff]
        %v2061 = vld [vmem:[%s167 + $0x3a10] sm:$0xff]
        %v2062 = vld [vmem:[%s167 + $0x3a18] sm:$0xff]
        %v2063 = vld [vmem:[%s167 + $0x3a20] sm:$0xff]
        %v2064 = vld [vmem:[%s167 + $0x3a28] sm:$0xff]
        %v2065 = vld [vmem:[%s167 + $0x3a30] sm:$0xff]
        %v2066 = vld [vmem:[%s167 + $0x3a38] sm:$0xff]
        %v2067 = vld [vmem:[%s167 + $0x3a40] sm:$0xff]
        %v2068 = vld [vmem:[%s167 + $0x3a48] sm:$0xff]
        %v2069 = vld [vmem:[%s167 + $0x3a50] sm:$0xff]
        %v2070 = vld [vmem:[%s167 + $0x3a58] sm:$0xff]
        %v2071 = vld [vmem:[%s167 + $0x3a60] sm:$0xff]
        %v2072 = vld [vmem:[%s167 + $0x3a68] sm:$0xff]
        %v2073 = vld [vmem:[%s167 + $0x3a70] sm:$0xff]
        %v2074 = vld [vmem:[%s167 + $0x3a78] sm:$0xff]
        %v2075 = vld [vmem:[%s167 + $0x3a80] sm:$0xff]
        %v2076 = vld [vmem:[%s167 + $0x3a88] sm:$0xff]
        %v2077 = vld [vmem:[%s167 + $0x3a90] sm:$0xff]
        %v2078 = vld [vmem:[%s167 + $0x3a98] sm:$0xff]
        %v2079 = vld [vmem:[%s167 + $0x3aa0] sm:$0xff]
        %v2080 = vld [vmem:[%s167 + $0x3aa8] sm:$0xff]
        %v2081 = vld [vmem:[%s167 + $0x3ab0] sm:$0xff]
        %v2082 = vld [vmem:[%s167 + $0x3ab8] sm:$0xff]
        %v2083 = vld [vmem:[%s167 + $0x3ac0] sm:$0xff]
        %v2084 = vld [vmem:[%s167 + $0x3ac8] sm:$0xff]
        %v2085 = vld [vmem:[%s167 + $0x3ad0] sm:$0xff]
        %v2086 = vld [vmem:[%s167 + $0x3ad8] sm:$0xff]
        %v2087 = vld [vmem:[%s167 + $0x3ae0] sm:$0xff]
        %v2088 = vld [vmem:[%s167 + $0x3ae8] sm:$0xff]
        %v2089 = vld [vmem:[%s167 + $0x3af0] sm:$0xff]
        %v2090 = vld [vmem:[%s167 + $0x3af8] sm:$0xff]
        %v2091 = vld [vmem:[%s167 + $0x3b00] sm:$0xff]
        %v2092 = vld [vmem:[%s167 + $0x3b08] sm:$0xff]
        %v2093 = vld [vmem:[%s167 + $0x3b10] sm:$0xff]
        %v2094 = vld [vmem:[%s167 + $0x3b18] sm:$0xff]
        %v2095 = vld [vmem:[%s167 + $0x3b20] sm:$0xff]
        %v2096 = vld [vmem:[%s167 + $0x3b28] sm:$0xff]
        %v2097 = vld [vmem:[%s167 + $0x3b30] sm:$0xff]
        %v2098 = vld [vmem:[%s167 + $0x3b38] sm:$0xff]
        %v2099 = vld [vmem:[%s167 + $0x3b40] sm:$0xff]
        %v2100 = vld [vmem:[%s167 + $0x3b48] sm:$0xff]
        %v2101 = vld [vmem:[%s167 + $0x3b50] sm:$0xff]
        %v2102 = vld [vmem:[%s167 + $0x3b58] sm:$0xff]
        %v2103 = vld [vmem:[%s167 + $0x3b60] sm:$0xff]
        %v2104 = vld [vmem:[%s167 + $0x3b68] sm:$0xff]
        %v2105 = vld [vmem:[%s167 + $0x3b70] sm:$0xff]
        %v2106 = vld [vmem:[%s167 + $0x3b78] sm:$0xff]
        %v2107 = vld [vmem:[%s167 + $0x3b80] sm:$0xff]
        %v2108 = vld [vmem:[%s167 + $0x3b88] sm:$0xff]
        %v2109 = vld [vmem:[%s167 + $0x3b90] sm:$0xff]
        %v2110 = vld [vmem:[%s167 + $0x3b98] sm:$0xff]
        %v2111 = vld [vmem:[%s167 + $0x3ba0] sm:$0xff]
        %v2112 = vld [vmem:[%s167 + $0x3ba8] sm:$0xff]
        %v2113 = vld [vmem:[%s167 + $0x3bb0] sm:$0xff]
        %v2114 = vld [vmem:[%s167 + $0x3bb8] sm:$0xff]
        %v2115 = vld [vmem:[%s167 + $0x3bc0] sm:$0xff]
        %v2116 = vld [vmem:[%s167 + $0x3bc8] sm:$0xff]
        %v2117 = vld [vmem:[%s167 + $0x3bd0] sm:$0xff]
        %v2118 = vld [vmem:[%s167 + $0x3bd8] sm:$0xff]
        %v2119 = vld [vmem:[%s167 + $0x3be0] sm:$0xff]
        %v2120 = vld [vmem:[%s167 + $0x3be8] sm:$0xff]
        %v2121 = vld [vmem:[%s167 + $0x3bf0] sm:$0xff]
        %v2122 = vld [vmem:[%s167 + $0x3bf8] sm:$0xff]
        %v2123 = vld [vmem:[%s167 + $0x3c00] sm:$0xff]
        %v2124 = vld [vmem:[%s167 + $0x3c08] sm:$0xff]
        %v2125 = vld [vmem:[%s167 + $0x3c10] sm:$0xff]
        %v2126 = vld [vmem:[%s167 + $0x3c18] sm:$0xff]
        %v2127 = vld [vmem:[%s167 + $0x3c20] sm:$0xff]
        %v2128 = vld [vmem:[%s167 + $0x3c28] sm:$0xff]
        %v2129 = vld [vmem:[%s167 + $0x3c30] sm:$0xff]
        %v2130 = vld [vmem:[%s167 + $0x3c38] sm:$0xff]
        %v2131 = vld [vmem:[%s167 + $0x3c40] sm:$0xff]
        %v2132 = vld [vmem:[%s167 + $0x3c48] sm:$0xff]
        %v2133 = vld [vmem:[%s167 + $0x3c50] sm:$0xff]
        %v2134 = vld [vmem:[%s167 + $0x3c58] sm:$0xff]
        %v2135 = vld [vmem:[%s167 + $0x3c60] sm:$0xff]
        %v2136 = vld [vmem:[%s167 + $0x3c68] sm:$0xff]
        %v2137 = vld [vmem:[%s167 + $0x3c70] sm:$0xff]
        %v2138 = vld [vmem:[%s167 + $0x3c78] sm:$0xff]
        %v2139 = vld [vmem:[%s167 + $0x3c80] sm:$0xff]
        %v2140 = vld [vmem:[%s167 + $0x3c88] sm:$0xff]
        %v2141 = vld [vmem:[%s167 + $0x3c90] sm:$0xff]
        %v2142 = vld [vmem:[%s167 + $0x3c98] sm:$0xff]
        %v2143 = vld [vmem:[%s167 + $0x3ca0] sm:$0xff]
        %v2144 = vld [vmem:[%s167 + $0x3ca8] sm:$0xff]
        %v2145 = vld [vmem:[%s167 + $0x3cb0] sm:$0xff]
        %v2146 = vld [vmem:[%s167 + $0x3cb8] sm:$0xff]
        %v2147 = vld [vmem:[%s167 + $0x3cc0] sm:$0xff]
        %v2148 = vld [vmem:[%s167 + $0x3cc8] sm:$0xff]
        %v2149 = vld [vmem:[%s167 + $0x3cd0] sm:$0xff]
        %v2150 = vld [vmem:[%s167 + $0x3cd8] sm:$0xff]
        %v2151 = vld [vmem:[%s167 + $0x3ce0] sm:$0xff]
        %v2152 = vld [vmem:[%s167 + $0x3ce8] sm:$0xff]
        %v2153 = vld [vmem:[%s167 + $0x3cf0] sm:$0xff]
        %v2154 = vld [vmem:[%s167 + $0x3cf8] sm:$0xff]
        %v2155 = vld [vmem:[%s167 + $0x3d00] sm:$0xff]
        %v2156 = vld [vmem:[%s167 + $0x3d08] sm:$0xff]
        %v2157 = vld [vmem:[%s167 + $0x3d10] sm:$0xff]
        %v2158 = vld [vmem:[%s167 + $0x3d18] sm:$0xff]
        %v2159 = vld [vmem:[%s167 + $0x3d20] sm:$0xff]
        %v2160 = vld [vmem:[%s167 + $0x3d28] sm:$0xff]
        %v2161 = vld [vmem:[%s167 + $0x3d30] sm:$0xff]
        %v2162 = vld [vmem:[%s167 + $0x3d38] sm:$0xff]
        %v2163 = vld [vmem:[%s167 + $0x3d40] sm:$0xff]
        %v2164 = vld [vmem:[%s167 + $0x3d48] sm:$0xff]
        %v2165 = vld [vmem:[%s167 + $0x3d50] sm:$0xff]
        %v2166 = vld [vmem:[%s167 + $0x3d58] sm:$0xff]
        %v2167 = vld [vmem:[%s167 + $0x3d60] sm:$0xff]
        %v2168 = vld [vmem:[%s167 + $0x3d68] sm:$0xff]
        %v2169 = vld [vmem:[%s167 + $0x3d70] sm:$0xff]
        %v2170 = vld [vmem:[%s167 + $0x3d78] sm:$0xff]
        %v2171 = vld [vmem:[%s167 + $0x3d80] sm:$0xff]
        %v2172 = vld [vmem:[%s167 + $0x3d88] sm:$0xff]
        %v2173 = vld [vmem:[%s167 + $0x3d90] sm:$0xff]
        %v2174 = vld [vmem:[%s167 + $0x3d98] sm:$0xff]
        %v2175 = vld [vmem:[%s167 + $0x3da0] sm:$0xff]
        %v2176 = vld [vmem:[%s167 + $0x3da8] sm:$0xff]
        %v2177 = vld [vmem:[%s167 + $0x3db0] sm:$0xff]
        %v2178 = vld [vmem:[%s167 + $0x3db8] sm:$0xff]
        %v2179 = vld [vmem:[%s167 + $0x3dc0] sm:$0xff]
        %v2180 = vld [vmem:[%s167 + $0x3dc8] sm:$0xff]
        %v2181 = vld [vmem:[%s167 + $0x3dd0] sm:$0xff]
        %v2182 = vld [vmem:[%s167 + $0x3dd8] sm:$0xff]
        %v2183 = vld [vmem:[%s167 + $0x3de0] sm:$0xff]
        %v2184 = vld [vmem:[%s167 + $0x3de8] sm:$0xff]
        %v2185 = vld [vmem:[%s167 + $0x3df0] sm:$0xff]
        %v2186 = vld [vmem:[%s167 + $0x3df8] sm:$0xff]
        %v2187 = vld [vmem:[%s167 + $0x3e00] sm:$0xff]
        %v2188 = vld [vmem:[%s167 + $0x3e08] sm:$0xff]
        %v2189 = vld [vmem:[%s167 + $0x3e10] sm:$0xff]
        %v2190 = vld [vmem:[%s167 + $0x3e18] sm:$0xff]
        %v2191 = vld [vmem:[%s167 + $0x3e20] sm:$0xff]
        %v2192 = vld [vmem:[%s167 + $0x3e28] sm:$0xff]
        %v2193 = vld [vmem:[%s167 + $0x3e30] sm:$0xff]
        %v2194 = vld [vmem:[%s167 + $0x3e38] sm:$0xff]
        %v2195 = vld [vmem:[%s167 + $0x3e40] sm:$0xff]
        %v2196 = vld [vmem:[%s167 + $0x3e48] sm:$0xff]
        %v2197 = vld [vmem:[%s167 + $0x3e50] sm:$0xff]
        %v2198 = vld [vmem:[%s167 + $0x3e58] sm:$0xff]
        %v2199 = vld [vmem:[%s167 + $0x3e60] sm:$0xff]
        %v2200 = vld [vmem:[%s167 + $0x3e68] sm:$0xff]
        %v2201 = vld [vmem:[%s167 + $0x3e70] sm:$0xff]
        %v2202 = vld [vmem:[%s167 + $0x3e78] sm:$0xff]
        %v2203 = vld [vmem:[%s167 + $0x3e80] sm:$0xff]
        %v2204 = vld [vmem:[%s167 + $0x3e88] sm:$0xff]
        %v2205 = vld [vmem:[%s167 + $0x3e90] sm:$0xff]
        %v2206 = vld [vmem:[%s167 + $0x3e98] sm:$0xff]
        %v2207 = vld [vmem:[%s167 + $0x3ea0] sm:$0xff]
        %v2208 = vld [vmem:[%s167 + $0x3ea8] sm:$0xff]
        %v2209 = vld [vmem:[%s167 + $0x3eb0] sm:$0xff]
        %v2210 = vld [vmem:[%s167 + $0x3eb8] sm:$0xff]
        %v2211 = vld [vmem:[%s167 + $0x3ec0] sm:$0xff]
        %v2212 = vld [vmem:[%s167 + $0x3ec8] sm:$0xff]
        %v2213 = vld [vmem:[%s167 + $0x3ed0] sm:$0xff]
        %v2214 = vld [vmem:[%s167 + $0x3ed8] sm:$0xff]
        %v2215 = vld [vmem:[%s167 + $0x3ee0] sm:$0xff]
        %v2216 = vld [vmem:[%s167 + $0x3ee8] sm:$0xff]
        %v2217 = vld [vmem:[%s167 + $0x3ef0] sm:$0xff]
        %v2218 = vld [vmem:[%s167 + $0x3ef8] sm:$0xff]
        %s2219 = smul.u32 %s23, 336
        %v2220 = vlaneseq
        %v2221 = vshrl.u32 %v2220, 7
        %v2222 = vadd.s32 %v2221, 8
        %v2223 = vadd.s32 %v2221, 16
        %v2224 = vadd.s32 %v2221, 24
        %v2225 = vadd.s32 %v2221, 32
        %v2226 = vadd.s32 %v2221, 40
        %v2227 = vadd.s32 %v2221, 48
        %v2228 = vadd.s32 %v2221, 56
        %v2229 = vadd.s32 %v2221, 64
        %v2230 = vadd.s32 %v2221, 72
        %v2231 = vadd.s32 %v2221, 80
        %v2232 = vadd.s32 %v2221, 88
        %v2233 = vadd.s32 %v2221, 96
        %v2234 = vadd.s32 %v2221, 104
        %v2235 = vadd.s32 %v2221, 112
        %v2236 = vadd.s32 %v2221, 120
        %v2237 = vadd.s32 %v2221, 128
        %v2238 = vadd.s32 %v2221, 136
        %v2239 = vadd.s32 %v2221, 144
        %v2240 = vadd.s32 %v2221, 152
        %v2241 = vadd.s32 %v2221, 160
        %v2242 = vadd.s32 %v2221, 168
        %v2243 = vadd.s32 %v2221, 176
        %v2244 = vadd.s32 %v2221, 184
        %v2245 = vadd.s32 %v2221, 192
        %v2246 = vadd.s32 %v2221, 200
        %v2247 = vadd.s32 %v2221, 208
        %v2248 = vadd.s32 %v2221, 216
        %v2249 = vadd.s32 %v2221, 224
        %v2250 = vadd.s32 %v2221, 232
        %v2251 = vadd.s32 %v2221, 240
        %v2252 = vadd.s32 %v2221, 248
        %v2253 = vadd.s32 %v2221, 256
        %v2254 = vadd.s32 %v2221, 264
        %v2255 = vadd.s32 %v2221, 272
        %v2256 = vadd.s32 %v2221, 280
        %v2257 = vadd.s32 %v2221, 288
        %v2258 = vadd.s32 %v2221, 296
        %v2259 = vadd.s32 %v2221, 304
        %v2260 = vadd.s32 %v2221, 312
        %v2261 = vadd.s32 %v2221, 320
        %v2262 = vadd.s32 %v2221, 328
        %v2263 = vstv %s2219
        %v2264 = vadd.s32 %v2263, %v2221
        %v2265 = vadd.s32 %v2263, %v2222
        %v2266 = vadd.s32 %v2263, %v2223
        %v2267 = vadd.s32 %v2263, %v2224
        %v2268 = vadd.s32 %v2263, %v2225
        %v2269 = vadd.s32 %v2263, %v2226
        %v2270 = vadd.s32 %v2263, %v2227
        %v2271 = vadd.s32 %v2263, %v2228
        %v2272 = vadd.s32 %v2263, %v2229
        %v2273 = vadd.s32 %v2263, %v2230
        %v2274 = vadd.s32 %v2263, %v2231
        %v2275 = vadd.s32 %v2263, %v2232
        %v2276 = vadd.s32 %v2263, %v2233
        %v2277 = vadd.s32 %v2263, %v2234
        %v2278 = vadd.s32 %v2263, %v2235
        %v2279 = vadd.s32 %v2263, %v2236
        %v2280 = vadd.s32 %v2263, %v2237
        %v2281 = vadd.s32 %v2263, %v2238
        %v2282 = vadd.s32 %v2263, %v2239
        %v2283 = vadd.s32 %v2263, %v2240
        %v2284 = vadd.s32 %v2263, %v2241
        %v2285 = vadd.s32 %v2263, %v2242
        %v2286 = vadd.s32 %v2263, %v2243
        %v2287 = vadd.s32 %v2263, %v2244
        %v2288 = vadd.s32 %v2263, %v2245
        %v2289 = vadd.s32 %v2263, %v2246
        %v2290 = vadd.s32 %v2263, %v2247
        %v2291 = vadd.s32 %v2263, %v2248
        %v2292 = vadd.s32 %v2263, %v2249
        %v2293 = vadd.s32 %v2263, %v2250
        %v2294 = vadd.s32 %v2263, %v2251
        %v2295 = vadd.s32 %v2263, %v2252
        %v2296 = vadd.s32 %v2263, %v2253
        %v2297 = vadd.s32 %v2263, %v2254
        %v2298 = vadd.s32 %v2263, %v2255
        %v2299 = vadd.s32 %v2263, %v2256
        %v2300 = vadd.s32 %v2263, %v2257
        %v2301 = vadd.s32 %v2263, %v2258
        %v2302 = vadd.s32 %v2263, %v2259
        %v2303 = vadd.s32 %v2263, %v2260
        %v2304 = vadd.s32 %v2263, %v2261
        %v2305 = vadd.s32 %v2263, %v2262
        %vm2306 = vcmp.lt.s32.totalorder %v2264, 350
        %vm2307 = vcmp.lt.s32.totalorder %v2265, 350
        %vm2308 = vcmp.lt.s32.totalorder %v2266, 350
        %vm2309 = vcmp.lt.s32.totalorder %v2267, 350
        %vm2310 = vcmp.lt.s32.totalorder %v2268, 350
        %vm2311 = vcmp.lt.s32.totalorder %v2269, 350
        %vm2312 = vcmp.lt.s32.totalorder %v2270, 350
        %vm2313 = vcmp.lt.s32.totalorder %v2271, 350
        %vm2314 = vcmp.lt.s32.totalorder %v2272, 350
        %vm2315 = vcmp.lt.s32.totalorder %v2273, 350
        %vm2316 = vcmp.lt.s32.totalorder %v2274, 350
        %vm2317 = vcmp.lt.s32.totalorder %v2275, 350
        %vm2318 = vcmp.lt.s32.totalorder %v2276, 350
        %vm2319 = vcmp.lt.s32.totalorder %v2277, 350
        %vm2320 = vcmp.lt.s32.totalorder %v2278, 350
        %vm2321 = vcmp.lt.s32.totalorder %v2279, 350
        %vm2322 = vcmp.lt.s32.totalorder %v2280, 350
        %vm2323 = vcmp.lt.s32.totalorder %v2281, 350
        %vm2324 = vcmp.lt.s32.totalorder %v2282, 350
        %vm2325 = vcmp.lt.s32.totalorder %v2283, 350
        %vm2326 = vcmp.lt.s32.totalorder %v2284, 350
        %vm2327 = vcmp.lt.s32.totalorder %v2285, 350
        %vm2328 = vcmp.lt.s32.totalorder %v2286, 350
        %vm2329 = vcmp.lt.s32.totalorder %v2287, 350
        %vm2330 = vcmp.lt.s32.totalorder %v2288, 350
        %vm2331 = vcmp.lt.s32.totalorder %v2289, 350
        %vm2332 = vcmp.lt.s32.totalorder %v2290, 350
        %vm2333 = vcmp.lt.s32.totalorder %v2291, 350
        %vm2334 = vcmp.lt.s32.totalorder %v2292, 350
        %vm2335 = vcmp.lt.s32.totalorder %v2293, 350
        %vm2336 = vcmp.lt.s32.totalorder %v2294, 350
        %vm2337 = vcmp.lt.s32.totalorder %v2295, 350
        %vm2338 = vcmp.lt.s32.totalorder %v2296, 350
        %vm2339 = vcmp.lt.s32.totalorder %v2297, 350
        %vm2340 = vcmp.lt.s32.totalorder %v2298, 350
        %vm2341 = vcmp.lt.s32.totalorder %v2299, 350
        %vm2342 = vcmp.lt.s32.totalorder %v2300, 350
        %vm2343 = vcmp.lt.s32.totalorder %v2301, 350
        %vm2344 = vcmp.lt.s32.totalorder %v2302, 350
        %vm2345 = vcmp.lt.s32.totalorder %v2303, 350
        %vm2346 = vcmp.lt.s32.totalorder %v2304, 350
        %vm2347 = vcmp.lt.s32.totalorder %v2305, 350
        %v2348 = vsel %vm2306, %v203, 0.0
        %v2349 = vsel %vm2306, %v204, 0.0
        %v2350 = vsel %vm2306, %v205, 0.0
        %v2351 = vsel %vm2306, %v206, 0.0
        %v2352 = vsel %vm2306, %v207, 0.0
        %v2353 = vsel %vm2306, %v208, 0.0
        %v2354 = vsel %vm2307, %v209, 0.0
        %v2355 = vsel %vm2307, %v210, 0.0
        %v2356 = vsel %vm2307, %v211, 0.0
        %v2357 = vsel %vm2307, %v212, 0.0
        %v2358 = vsel %vm2307, %v213, 0.0
        %v2359 = vsel %vm2307, %v214, 0.0
        %v2360 = vsel %vm2308, %v215, 0.0
        %v2361 = vsel %vm2308, %v216, 0.0
        %v2362 = vsel %vm2308, %v217, 0.0
        %v2363 = vsel %vm2308, %v218, 0.0
        %v2364 = vsel %vm2308, %v219, 0.0
        %v2365 = vsel %vm2308, %v220, 0.0
        %v2366 = vsel %vm2309, %v221, 0.0
        %v2367 = vsel %vm2309, %v222, 0.0
        %v2368 = vsel %vm2309, %v223, 0.0
        %v2369 = vsel %vm2309, %v224, 0.0
        %v2370 = vsel %vm2309, %v225, 0.0
        %v2371 = vsel %vm2309, %v226, 0.0
        %v2372 = vsel %vm2310, %v227, 0.0
        %v2373 = vsel %vm2310, %v228, 0.0
        %v2374 = vsel %vm2310, %v229, 0.0
        %v2375 = vsel %vm2310, %v230, 0.0
        %v2376 = vsel %vm2310, %v231, 0.0
        %v2377 = vsel %vm2310, %v232, 0.0
        %v2378 = vsel %vm2311, %v233, 0.0
        %v2379 = vsel %vm2311, %v234, 0.0
        %v2380 = vsel %vm2311, %v235, 0.0
        %v2381 = vsel %vm2311, %v236, 0.0
        %v2382 = vsel %vm2311, %v237, 0.0
        %v2383 = vsel %vm2311, %v238, 0.0
        %v2384 = vsel %vm2312, %v239, 0.0
        %v2385 = vsel %vm2312, %v240, 0.0
        %v2386 = vsel %vm2312, %v241, 0.0
        %v2387 = vsel %vm2312, %v242, 0.0
        %v2388 = vsel %vm2312, %v243, 0.0
        %v2389 = vsel %vm2312, %v244, 0.0
        %v2390 = vsel %vm2313, %v245, 0.0
        %v2391 = vsel %vm2313, %v246, 0.0
        %v2392 = vsel %vm2313, %v247, 0.0
        %v2393 = vsel %vm2313, %v248, 0.0
        %v2394 = vsel %vm2313, %v249, 0.0
        %v2395 = vsel %vm2313, %v250, 0.0
        %v2396 = vsel %vm2314, %v251, 0.0
        %v2397 = vsel %vm2314, %v252, 0.0
        %v2398 = vsel %vm2314, %v253, 0.0
        %v2399 = vsel %vm2314, %v254, 0.0
        %v2400 = vsel %vm2314, %v255, 0.0
        %v2401 = vsel %vm2314, %v256, 0.0
        %v2402 = vsel %vm2315, %v257, 0.0
        %v2403 = vsel %vm2315, %v258, 0.0
        %v2404 = vsel %vm2315, %v259, 0.0
        %v2405 = vsel %vm2315, %v260, 0.0
        %v2406 = vsel %vm2315, %v261, 0.0
        %v2407 = vsel %vm2315, %v262, 0.0
        %v2408 = vsel %vm2316, %v263, 0.0
        %v2409 = vsel %vm2316, %v264, 0.0
        %v2410 = vsel %vm2316, %v265, 0.0
        %v2411 = vsel %vm2316, %v266, 0.0
        %v2412 = vsel %vm2316, %v267, 0.0
        %v2413 = vsel %vm2316, %v268, 0.0
        %v2414 = vsel %vm2317, %v269, 0.0
        %v2415 = vsel %vm2317, %v270, 0.0
        %v2416 = vsel %vm2317, %v271, 0.0
        %v2417 = vsel %vm2317, %v272, 0.0
        %v2418 = vsel %vm2317, %v273, 0.0
        %v2419 = vsel %vm2317, %v274, 0.0
        %v2420 = vsel %vm2318, %v275, 0.0
        %v2421 = vsel %vm2318, %v276, 0.0
        %v2422 = vsel %vm2318, %v277, 0.0
        %v2423 = vsel %vm2318, %v278, 0.0
        %v2424 = vsel %vm2318, %v279, 0.0
        %v2425 = vsel %vm2318, %v280, 0.0
        %v2426 = vsel %vm2319, %v281, 0.0
        %v2427 = vsel %vm2319, %v282, 0.0
        %v2428 = vsel %vm2319, %v283, 0.0
        %v2429 = vsel %vm2319, %v284, 0.0
        %v2430 = vsel %vm2319, %v285, 0.0
        %v2431 = vsel %vm2319, %v286, 0.0
        %v2432 = vsel %vm2320, %v287, 0.0
        %v2433 = vsel %vm2320, %v288, 0.0
        %v2434 = vsel %vm2320, %v289, 0.0
        %v2435 = vsel %vm2320, %v290, 0.0
        %v2436 = vsel %vm2320, %v291, 0.0
        %v2437 = vsel %vm2320, %v292, 0.0
        %v2438 = vsel %vm2321, %v293, 0.0
        %v2439 = vsel %vm2321, %v294, 0.0
        %v2440 = vsel %vm2321, %v295, 0.0
        %v2441 = vsel %vm2321, %v296, 0.0
        %v2442 = vsel %vm2321, %v297, 0.0
        %v2443 = vsel %vm2321, %v298, 0.0
        %v2444 = vsel %vm2322, %v299, 0.0
        %v2445 = vsel %vm2322, %v300, 0.0
        %v2446 = vsel %vm2322, %v301, 0.0
        %v2447 = vsel %vm2322, %v302, 0.0
        %v2448 = vsel %vm2322, %v303, 0.0
        %v2449 = vsel %vm2322, %v304, 0.0
        %v2450 = vsel %vm2323, %v305, 0.0
        %v2451 = vsel %vm2323, %v306, 0.0
        %v2452 = vsel %vm2323, %v307, 0.0
        %v2453 = vsel %vm2323, %v308, 0.0
        %v2454 = vsel %vm2323, %v309, 0.0
        %v2455 = vsel %vm2323, %v310, 0.0
        %v2456 = vsel %vm2324, %v311, 0.0
        %v2457 = vsel %vm2324, %v312, 0.0
        %v2458 = vsel %vm2324, %v313, 0.0
        %v2459 = vsel %vm2324, %v314, 0.0
        %v2460 = vsel %vm2324, %v315, 0.0
        %v2461 = vsel %vm2324, %v316, 0.0
        %v2462 = vsel %vm2325, %v317, 0.0
        %v2463 = vsel %vm2325, %v318, 0.0
        %v2464 = vsel %vm2325, %v319, 0.0
        %v2465 = vsel %vm2325, %v320, 0.0
        %v2466 = vsel %vm2325, %v321, 0.0
        %v2467 = vsel %vm2325, %v322, 0.0
        %v2468 = vsel %vm2326, %v323, 0.0
        %v2469 = vsel %vm2326, %v324, 0.0
        %v2470 = vsel %vm2326, %v325, 0.0
        %v2471 = vsel %vm2326, %v326, 0.0
        %v2472 = vsel %vm2326, %v327, 0.0
        %v2473 = vsel %vm2326, %v328, 0.0
        %v2474 = vsel %vm2327, %v329, 0.0
        %v2475 = vsel %vm2327, %v330, 0.0
        %v2476 = vsel %vm2327, %v331, 0.0
        %v2477 = vsel %vm2327, %v332, 0.0
        %v2478 = vsel %vm2327, %v333, 0.0
        %v2479 = vsel %vm2327, %v334, 0.0
        %v2480 = vsel %vm2328, %v335, 0.0
        %v2481 = vsel %vm2328, %v336, 0.0
        %v2482 = vsel %vm2328, %v337, 0.0
        %v2483 = vsel %vm2328, %v338, 0.0
        %v2484 = vsel %vm2328, %v339, 0.0
        %v2485 = vsel %vm2328, %v340, 0.0
        %v2486 = vsel %vm2329, %v341, 0.0
        %v2487 = vsel %vm2329, %v342, 0.0
        %v2488 = vsel %vm2329, %v343, 0.0
        %v2489 = vsel %vm2329, %v344, 0.0
        %v2490 = vsel %vm2329, %v345, 0.0
        %v2491 = vsel %vm2329, %v346, 0.0
        %v2492 = vsel %vm2330, %v347, 0.0
        %v2493 = vsel %vm2330, %v348, 0.0
        %v2494 = vsel %vm2330, %v349, 0.0
        %v2495 = vsel %vm2330, %v350, 0.0
        %v2496 = vsel %vm2330, %v351, 0.0
        %v2497 = vsel %vm2330, %v352, 0.0
        %v2498 = vsel %vm2331, %v353, 0.0
        %v2499 = vsel %vm2331, %v354, 0.0
        %v2500 = vsel %vm2331, %v355, 0.0
        %v2501 = vsel %vm2331, %v356, 0.0
        %v2502 = vsel %vm2331, %v357, 0.0
        %v2503 = vsel %vm2331, %v358, 0.0
        %v2504 = vsel %vm2332, %v359, 0.0
        %v2505 = vsel %vm2332, %v360, 0.0
        %v2506 = vsel %vm2332, %v361, 0.0
        %v2507 = vsel %vm2332, %v362, 0.0
        %v2508 = vsel %vm2332, %v363, 0.0
        %v2509 = vsel %vm2332, %v364, 0.0
        %v2510 = vsel %vm2333, %v365, 0.0
        %v2511 = vsel %vm2333, %v366, 0.0
        %v2512 = vsel %vm2333, %v367, 0.0
        %v2513 = vsel %vm2333, %v368, 0.0
        %v2514 = vsel %vm2333, %v369, 0.0
        %v2515 = vsel %vm2333, %v370, 0.0
        %v2516 = vsel %vm2334, %v371, 0.0
        %v2517 = vsel %vm2334, %v372, 0.0
        %v2518 = vsel %vm2334, %v373, 0.0
        %v2519 = vsel %vm2334, %v374, 0.0
        %v2520 = vsel %vm2334, %v375, 0.0
        %v2521 = vsel %vm2334, %v376, 0.0
        %v2522 = vsel %vm2335, %v377, 0.0
        %v2523 = vsel %vm2335, %v378, 0.0
        %v2524 = vsel %vm2335, %v379, 0.0
        %v2525 = vsel %vm2335, %v380, 0.0
        %v2526 = vsel %vm2335, %v381, 0.0
        %v2527 = vsel %vm2335, %v382, 0.0
        %v2528 = vsel %vm2336, %v383, 0.0
        %v2529 = vsel %vm2336, %v384, 0.0
        %v2530 = vsel %vm2336, %v385, 0.0
        %v2531 = vsel %vm2336, %v386, 0.0
        %v2532 = vsel %vm2336, %v387, 0.0
        %v2533 = vsel %vm2336, %v388, 0.0
        %v2534 = vsel %vm2337, %v389, 0.0
        %v2535 = vsel %vm2337, %v390, 0.0
        %v2536 = vsel %vm2337, %v391, 0.0
        %v2537 = vsel %vm2337, %v392, 0.0
        %v2538 = vsel %vm2337, %v393, 0.0
        %v2539 = vsel %vm2337, %v394, 0.0
        %v2540 = vsel %vm2338, %v395, 0.0
        %v2541 = vsel %vm2338, %v396, 0.0
        %v2542 = vsel %vm2338, %v397, 0.0
        %v2543 = vsel %vm2338, %v398, 0.0
        %v2544 = vsel %vm2338, %v399, 0.0
        %v2545 = vsel %vm2338, %v400, 0.0
        %v2546 = vsel %vm2339, %v401, 0.0
        %v2547 = vsel %vm2339, %v402, 0.0
        %v2548 = vsel %vm2339, %v403, 0.0
        %v2549 = vsel %vm2339, %v404, 0.0
        %v2550 = vsel %vm2339, %v405, 0.0
        %v2551 = vsel %vm2339, %v406, 0.0
        %v2552 = vsel %vm2340, %v407, 0.0
        %v2553 = vsel %vm2340, %v408, 0.0
        %v2554 = vsel %vm2340, %v409, 0.0
        %v2555 = vsel %vm2340, %v410, 0.0
        %v2556 = vsel %vm2340, %v411, 0.0
        %v2557 = vsel %vm2340, %v412, 0.0
        %v2558 = vsel %vm2341, %v413, 0.0
        %v2559 = vsel %vm2341, %v414, 0.0
        %v2560 = vsel %vm2341, %v415, 0.0
        %v2561 = vsel %vm2341, %v416, 0.0
        %v2562 = vsel %vm2341, %v417, 0.0
        %v2563 = vsel %vm2341, %v418, 0.0
        %v2564 = vsel %vm2342, %v419, 0.0
        %v2565 = vsel %vm2342, %v420, 0.0
        %v2566 = vsel %vm2342, %v421, 0.0
        %v2567 = vsel %vm2342, %v422, 0.0
        %v2568 = vsel %vm2342, %v423, 0.0
        %v2569 = vsel %vm2342, %v424, 0.0
        %v2570 = vsel %vm2343, %v425, 0.0
        %v2571 = vsel %vm2343, %v426, 0.0
        %v2572 = vsel %vm2343, %v427, 0.0
        %v2573 = vsel %vm2343, %v428, 0.0
        %v2574 = vsel %vm2343, %v429, 0.0
        %v2575 = vsel %vm2343, %v430, 0.0
        %v2576 = vsel %vm2344, %v431, 0.0
        %v2577 = vsel %vm2344, %v432, 0.0
        %v2578 = vsel %vm2344, %v433, 0.0
        %v2579 = vsel %vm2344, %v434, 0.0
        %v2580 = vsel %vm2344, %v435, 0.0
        %v2581 = vsel %vm2344, %v436, 0.0
        %v2582 = vsel %vm2345, %v437, 0.0
        %v2583 = vsel %vm2345, %v438, 0.0
        %v2584 = vsel %vm2345, %v439, 0.0
        %v2585 = vsel %vm2345, %v440, 0.0
        %v2586 = vsel %vm2345, %v441, 0.0
        %v2587 = vsel %vm2345, %v442, 0.0
        %v2588 = vsel %vm2346, %v443, 0.0
        %v2589 = vsel %vm2346, %v444, 0.0
        %v2590 = vsel %vm2346, %v445, 0.0
        %v2591 = vsel %vm2346, %v446, 0.0
        %v2592 = vsel %vm2346, %v447, 0.0
        %v2593 = vsel %vm2346, %v448, 0.0
        %v2594 = vsel %vm2347, %v449, 0.0
        %v2595 = vsel %vm2347, %v450, 0.0
        %v2596 = vsel %vm2347, %v451, 0.0
        %v2597 = vsel %vm2347, %v452, 0.0
        %v2598 = vsel %vm2347, %v453, 0.0
        %v2599 = vsel %vm2347, %v454, 0.0
        %v2600 = vsel %vm2306, %v455, 0.0
        %v2601 = vsel %vm2306, %v456, 0.0
        %v2602 = vsel %vm2306, %v457, 0.0
        %v2603 = vsel %vm2306, %v458, 0.0
        %v2604 = vsel %vm2306, %v459, 0.0
        %v2605 = vsel %vm2306, %v460, 0.0
        %v2606 = vsel %vm2307, %v461, 0.0
        %v2607 = vsel %vm2307, %v462, 0.0
        %v2608 = vsel %vm2307, %v463, 0.0
        %v2609 = vsel %vm2307, %v464, 0.0
        %v2610 = vsel %vm2307, %v465, 0.0
        %v2611 = vsel %vm2307, %v466, 0.0
        %v2612 = vsel %vm2308, %v467, 0.0
        %v2613 = vsel %vm2308, %v468, 0.0
        %v2614 = vsel %vm2308, %v469, 0.0
        %v2615 = vsel %vm2308, %v470, 0.0
        %v2616 = vsel %vm2308, %v471, 0.0
        %v2617 = vsel %vm2308, %v472, 0.0
        %v2618 = vsel %vm2309, %v473, 0.0
        %v2619 = vsel %vm2309, %v474, 0.0
        %v2620 = vsel %vm2309, %v475, 0.0
        %v2621 = vsel %vm2309, %v476, 0.0
        %v2622 = vsel %vm2309, %v477, 0.0
        %v2623 = vsel %vm2309, %v478, 0.0
        %v2624 = vsel %vm2310, %v479, 0.0
        %v2625 = vsel %vm2310, %v480, 0.0
        %v2626 = vsel %vm2310, %v481, 0.0
        %v2627 = vsel %vm2310, %v482, 0.0
        %v2628 = vsel %vm2310, %v483, 0.0
        %v2629 = vsel %vm2310, %v484, 0.0
        %v2630 = vsel %vm2311, %v485, 0.0
        %v2631 = vsel %vm2311, %v486, 0.0
        %v2632 = vsel %vm2311, %v487, 0.0
        %v2633 = vsel %vm2311, %v488, 0.0
        %v2634 = vsel %vm2311, %v489, 0.0
        %v2635 = vsel %vm2311, %v490, 0.0
        %v2636 = vsel %vm2312, %v491, 0.0
        %v2637 = vsel %vm2312, %v492, 0.0
        %v2638 = vsel %vm2312, %v493, 0.0
        %v2639 = vsel %vm2312, %v494, 0.0
        %v2640 = vsel %vm2312, %v495, 0.0
        %v2641 = vsel %vm2312, %v496, 0.0
        %v2642 = vsel %vm2313, %v497, 0.0
        %v2643 = vsel %vm2313, %v498, 0.0
        %v2644 = vsel %vm2313, %v499, 0.0
        %v2645 = vsel %vm2313, %v500, 0.0
        %v2646 = vsel %vm2313, %v501, 0.0
        %v2647 = vsel %vm2313, %v502, 0.0
        %v2648 = vsel %vm2314, %v503, 0.0
        %v2649 = vsel %vm2314, %v504, 0.0
        %v2650 = vsel %vm2314, %v505, 0.0
        %v2651 = vsel %vm2314, %v506, 0.0
        %v2652 = vsel %vm2314, %v507, 0.0
        %v2653 = vsel %vm2314, %v508, 0.0
        %v2654 = vsel %vm2315, %v509, 0.0
        %v2655 = vsel %vm2315, %v510, 0.0
        %v2656 = vsel %vm2315, %v511, 0.0
        %v2657 = vsel %vm2315, %v512, 0.0
        %v2658 = vsel %vm2315, %v513, 0.0
        %v2659 = vsel %vm2315, %v514, 0.0
        %v2660 = vsel %vm2316, %v515, 0.0
        %v2661 = vsel %vm2316, %v516, 0.0
        %v2662 = vsel %vm2316, %v517, 0.0
        %v2663 = vsel %vm2316, %v518, 0.0
        %v2664 = vsel %vm2316, %v519, 0.0
        %v2665 = vsel %vm2316, %v520, 0.0
        %v2666 = vsel %vm2317, %v521, 0.0
        %v2667 = vsel %vm2317, %v522, 0.0
        %v2668 = vsel %vm2317, %v523, 0.0
        %v2669 = vsel %vm2317, %v524, 0.0
        %v2670 = vsel %vm2317, %v525, 0.0
        %v2671 = vsel %vm2317, %v526, 0.0
        %v2672 = vsel %vm2318, %v527, 0.0
        %v2673 = vsel %vm2318, %v528, 0.0
        %v2674 = vsel %vm2318, %v529, 0.0
        %v2675 = vsel %vm2318, %v530, 0.0
        %v2676 = vsel %vm2318, %v531, 0.0
        %v2677 = vsel %vm2318, %v532, 0.0
        %v2678 = vsel %vm2319, %v533, 0.0
        %v2679 = vsel %vm2319, %v534, 0.0
        %v2680 = vsel %vm2319, %v535, 0.0
        %v2681 = vsel %vm2319, %v536, 0.0
        %v2682 = vsel %vm2319, %v537, 0.0
        %v2683 = vsel %vm2319, %v538, 0.0
        %v2684 = vsel %vm2320, %v539, 0.0
        %v2685 = vsel %vm2320, %v540, 0.0
        %v2686 = vsel %vm2320, %v541, 0.0
        %v2687 = vsel %vm2320, %v542, 0.0
        %v2688 = vsel %vm2320, %v543, 0.0
        %v2689 = vsel %vm2320, %v544, 0.0
        %v2690 = vsel %vm2321, %v545, 0.0
        %v2691 = vsel %vm2321, %v546, 0.0
        %v2692 = vsel %vm2321, %v547, 0.0
        %v2693 = vsel %vm2321, %v548, 0.0
        %v2694 = vsel %vm2321, %v549, 0.0
        %v2695 = vsel %vm2321, %v550, 0.0
        %v2696 = vsel %vm2322, %v551, 0.0
        %v2697 = vsel %vm2322, %v552, 0.0
        %v2698 = vsel %vm2322, %v553, 0.0
        %v2699 = vsel %vm2322, %v554, 0.0
        %v2700 = vsel %vm2322, %v555, 0.0
        %v2701 = vsel %vm2322, %v556, 0.0
        %v2702 = vsel %vm2323, %v557, 0.0
        %v2703 = vsel %vm2323, %v558, 0.0
        %v2704 = vsel %vm2323, %v559, 0.0
        %v2705 = vsel %vm2323, %v560, 0.0
        %v2706 = vsel %vm2323, %v561, 0.0
        %v2707 = vsel %vm2323, %v562, 0.0
        %v2708 = vsel %vm2324, %v563, 0.0
        %v2709 = vsel %vm2324, %v564, 0.0
        %v2710 = vsel %vm2324, %v565, 0.0
        %v2711 = vsel %vm2324, %v566, 0.0
        %v2712 = vsel %vm2324, %v567, 0.0
        %v2713 = vsel %vm2324, %v568, 0.0
        %v2714 = vsel %vm2325, %v569, 0.0
        %v2715 = vsel %vm2325, %v570, 0.0
        %v2716 = vsel %vm2325, %v571, 0.0
        %v2717 = vsel %vm2325, %v572, 0.0
        %v2718 = vsel %vm2325, %v573, 0.0
        %v2719 = vsel %vm2325, %v574, 0.0
        %v2720 = vsel %vm2326, %v575, 0.0
        %v2721 = vsel %vm2326, %v576, 0.0
        %v2722 = vsel %vm2326, %v577, 0.0
        %v2723 = vsel %vm2326, %v578, 0.0
        %v2724 = vsel %vm2326, %v579, 0.0
        %v2725 = vsel %vm2326, %v580, 0.0
        %v2726 = vsel %vm2327, %v581, 0.0
        %v2727 = vsel %vm2327, %v582, 0.0
        %v2728 = vsel %vm2327, %v583, 0.0
        %v2729 = vsel %vm2327, %v584, 0.0
        %v2730 = vsel %vm2327, %v585, 0.0
        %v2731 = vsel %vm2327, %v586, 0.0
        %v2732 = vsel %vm2328, %v587, 0.0
        %v2733 = vsel %vm2328, %v588, 0.0
        %v2734 = vsel %vm2328, %v589, 0.0
        %v2735 = vsel %vm2328, %v590, 0.0
        %v2736 = vsel %vm2328, %v591, 0.0
        %v2737 = vsel %vm2328, %v592, 0.0
        %v2738 = vsel %vm2329, %v593, 0.0
        %v2739 = vsel %vm2329, %v594, 0.0
        %v2740 = vsel %vm2329, %v595, 0.0
        %v2741 = vsel %vm2329, %v596, 0.0
        %v2742 = vsel %vm2329, %v597, 0.0
        %v2743 = vsel %vm2329, %v598, 0.0
        %v2744 = vsel %vm2330, %v599, 0.0
        %v2745 = vsel %vm2330, %v600, 0.0
        %v2746 = vsel %vm2330, %v601, 0.0
        %v2747 = vsel %vm2330, %v602, 0.0
        %v2748 = vsel %vm2330, %v603, 0.0
        %v2749 = vsel %vm2330, %v604, 0.0
        %v2750 = vsel %vm2331, %v605, 0.0
        %v2751 = vsel %vm2331, %v606, 0.0
        %v2752 = vsel %vm2331, %v607, 0.0
        %v2753 = vsel %vm2331, %v608, 0.0
        %v2754 = vsel %vm2331, %v609, 0.0
        %v2755 = vsel %vm2331, %v610, 0.0
        %v2756 = vsel %vm2332, %v611, 0.0
        %v2757 = vsel %vm2332, %v612, 0.0
        %v2758 = vsel %vm2332, %v613, 0.0
        %v2759 = vsel %vm2332, %v614, 0.0
        %v2760 = vsel %vm2332, %v615, 0.0
        %v2761 = vsel %vm2332, %v616, 0.0
        %v2762 = vsel %vm2333, %v617, 0.0
        %v2763 = vsel %vm2333, %v618, 0.0
        %v2764 = vsel %vm2333, %v619, 0.0
        %v2765 = vsel %vm2333, %v620, 0.0
        %v2766 = vsel %vm2333, %v621, 0.0
        %v2767 = vsel %vm2333, %v622, 0.0
        %v2768 = vsel %vm2334, %v623, 0.0
        %v2769 = vsel %vm2334, %v624, 0.0
        %v2770 = vsel %vm2334, %v625, 0.0
        %v2771 = vsel %vm2334, %v626, 0.0
        %v2772 = vsel %vm2334, %v627, 0.0
        %v2773 = vsel %vm2334, %v628, 0.0
        %v2774 = vsel %vm2335, %v629, 0.0
        %v2775 = vsel %vm2335, %v630, 0.0
        %v2776 = vsel %vm2335, %v631, 0.0
        %v2777 = vsel %vm2335, %v632, 0.0
        %v2778 = vsel %vm2335, %v633, 0.0
        %v2779 = vsel %vm2335, %v634, 0.0
        %v2780 = vsel %vm2336, %v635, 0.0
        %v2781 = vsel %vm2336, %v636, 0.0
        %v2782 = vsel %vm2336, %v637, 0.0
        %v2783 = vsel %vm2336, %v638, 0.0
        %v2784 = vsel %vm2336, %v639, 0.0
        %v2785 = vsel %vm2336, %v640, 0.0
        %v2786 = vsel %vm2337, %v641, 0.0
        %v2787 = vsel %vm2337, %v642, 0.0
        %v2788 = vsel %vm2337, %v643, 0.0
        %v2789 = vsel %vm2337, %v644, 0.0
        %v2790 = vsel %vm2337, %v645, 0.0
        %v2791 = vsel %vm2337, %v646, 0.0
        %v2792 = vsel %vm2338, %v647, 0.0
        %v2793 = vsel %vm2338, %v648, 0.0
        %v2794 = vsel %vm2338, %v649, 0.0
        %v2795 = vsel %vm2338, %v650, 0.0
        %v2796 = vsel %vm2338, %v651, 0.0
        %v2797 = vsel %vm2338, %v652, 0.0
        %v2798 = vsel %vm2339, %v653, 0.0
        %v2799 = vsel %vm2339, %v654, 0.0
        %v2800 = vsel %vm2339, %v655, 0.0
        %v2801 = vsel %vm2339, %v656, 0.0
        %v2802 = vsel %vm2339, %v657, 0.0
        %v2803 = vsel %vm2339, %v658, 0.0
        %v2804 = vsel %vm2340, %v659, 0.0
        %v2805 = vsel %vm2340, %v660, 0.0
        %v2806 = vsel %vm2340, %v661, 0.0
        %v2807 = vsel %vm2340, %v662, 0.0
        %v2808 = vsel %vm2340, %v663, 0.0
        %v2809 = vsel %vm2340, %v664, 0.0
        %v2810 = vsel %vm2341, %v665, 0.0
        %v2811 = vsel %vm2341, %v666, 0.0
        %v2812 = vsel %vm2341, %v667, 0.0
        %v2813 = vsel %vm2341, %v668, 0.0
        %v2814 = vsel %vm2341, %v669, 0.0
        %v2815 = vsel %vm2341, %v670, 0.0
        %v2816 = vsel %vm2342, %v671, 0.0
        %v2817 = vsel %vm2342, %v672, 0.0
        %v2818 = vsel %vm2342, %v673, 0.0
        %v2819 = vsel %vm2342, %v674, 0.0
        %v2820 = vsel %vm2342, %v675, 0.0
        %v2821 = vsel %vm2342, %v676, 0.0
        %v2822 = vsel %vm2343, %v677, 0.0
        %v2823 = vsel %vm2343, %v678, 0.0
        %v2824 = vsel %vm2343, %v679, 0.0
        %v2825 = vsel %vm2343, %v680, 0.0
        %v2826 = vsel %vm2343, %v681, 0.0
        %v2827 = vsel %vm2343, %v682, 0.0
        %v2828 = vsel %vm2344, %v683, 0.0
        %v2829 = vsel %vm2344, %v684, 0.0
        %v2830 = vsel %vm2344, %v685, 0.0
        %v2831 = vsel %vm2344, %v686, 0.0
        %v2832 = vsel %vm2344, %v687, 0.0
        %v2833 = vsel %vm2344, %v688, 0.0
        %v2834 = vsel %vm2345, %v689, 0.0
        %v2835 = vsel %vm2345, %v690, 0.0
        %v2836 = vsel %vm2345, %v691, 0.0
        %v2837 = vsel %vm2345, %v692, 0.0
        %v2838 = vsel %vm2345, %v693, 0.0
        %v2839 = vsel %vm2345, %v694, 0.0
        %v2840 = vsel %vm2346, %v695, 0.0
        %v2841 = vsel %vm2346, %v696, 0.0
        %v2842 = vsel %vm2346, %v697, 0.0
        %v2843 = vsel %vm2346, %v698, 0.0
        %v2844 = vsel %vm2346, %v699, 0.0
        %v2845 = vsel %vm2346, %v700, 0.0
        %v2846 = vsel %vm2347, %v701, 0.0
        %v2847 = vsel %vm2347, %v702, 0.0
        %v2848 = vsel %vm2347, %v703, 0.0
        %v2849 = vsel %vm2347, %v704, 0.0
        %v2850 = vsel %vm2347, %v705, 0.0
        %v2851 = vsel %vm2347, %v706, 0.0
        %v2852 = vsel %vm2306, %v707, 0.0
        %v2853 = vsel %vm2306, %v708, 0.0
        %v2854 = vsel %vm2306, %v709, 0.0
        %v2855 = vsel %vm2306, %v710, 0.0
        %v2856 = vsel %vm2306, %v711, 0.0
        %v2857 = vsel %vm2306, %v712, 0.0
        %v2858 = vsel %vm2307, %v713, 0.0
        %v2859 = vsel %vm2307, %v714, 0.0
        %v2860 = vsel %vm2307, %v715, 0.0
        %v2861 = vsel %vm2307, %v716, 0.0
        %v2862 = vsel %vm2307, %v717, 0.0
        %v2863 = vsel %vm2307, %v718, 0.0
        %v2864 = vsel %vm2308, %v719, 0.0
        %v2865 = vsel %vm2308, %v720, 0.0
        %v2866 = vsel %vm2308, %v721, 0.0
        %v2867 = vsel %vm2308, %v722, 0.0
        %v2868 = vsel %vm2308, %v723, 0.0
        %v2869 = vsel %vm2308, %v724, 0.0
        %v2870 = vsel %vm2309, %v725, 0.0
        %v2871 = vsel %vm2309, %v726, 0.0
        %v2872 = vsel %vm2309, %v727, 0.0
        %v2873 = vsel %vm2309, %v728, 0.0
        %v2874 = vsel %vm2309, %v729, 0.0
        %v2875 = vsel %vm2309, %v730, 0.0
        %v2876 = vsel %vm2310, %v731, 0.0
        %v2877 = vsel %vm2310, %v732, 0.0
        %v2878 = vsel %vm2310, %v733, 0.0
        %v2879 = vsel %vm2310, %v734, 0.0
        %v2880 = vsel %vm2310, %v735, 0.0
        %v2881 = vsel %vm2310, %v736, 0.0
        %v2882 = vsel %vm2311, %v737, 0.0
        %v2883 = vsel %vm2311, %v738, 0.0
        %v2884 = vsel %vm2311, %v739, 0.0
        %v2885 = vsel %vm2311, %v740, 0.0
        %v2886 = vsel %vm2311, %v741, 0.0
        %v2887 = vsel %vm2311, %v742, 0.0
        %v2888 = vsel %vm2312, %v743, 0.0
        %v2889 = vsel %vm2312, %v744, 0.0
        %v2890 = vsel %vm2312, %v745, 0.0
        %v2891 = vsel %vm2312, %v746, 0.0
        %v2892 = vsel %vm2312, %v747, 0.0
        %v2893 = vsel %vm2312, %v748, 0.0
        %v2894 = vsel %vm2313, %v749, 0.0
        %v2895 = vsel %vm2313, %v750, 0.0
        %v2896 = vsel %vm2313, %v751, 0.0
        %v2897 = vsel %vm2313, %v752, 0.0
        %v2898 = vsel %vm2313, %v753, 0.0
        %v2899 = vsel %vm2313, %v754, 0.0
        %v2900 = vsel %vm2314, %v755, 0.0
        %v2901 = vsel %vm2314, %v756, 0.0
        %v2902 = vsel %vm2314, %v757, 0.0
        %v2903 = vsel %vm2314, %v758, 0.0
        %v2904 = vsel %vm2314, %v759, 0.0
        %v2905 = vsel %vm2314, %v760, 0.0
        %v2906 = vsel %vm2315, %v761, 0.0
        %v2907 = vsel %vm2315, %v762, 0.0
        %v2908 = vsel %vm2315, %v763, 0.0
        %v2909 = vsel %vm2315, %v764, 0.0
        %v2910 = vsel %vm2315, %v765, 0.0
        %v2911 = vsel %vm2315, %v766, 0.0
        %v2912 = vsel %vm2316, %v767, 0.0
        %v2913 = vsel %vm2316, %v768, 0.0
        %v2914 = vsel %vm2316, %v769, 0.0
        %v2915 = vsel %vm2316, %v770, 0.0
        %v2916 = vsel %vm2316, %v771, 0.0
        %v2917 = vsel %vm2316, %v772, 0.0
        %v2918 = vsel %vm2317, %v773, 0.0
        %v2919 = vsel %vm2317, %v774, 0.0
        %v2920 = vsel %vm2317, %v775, 0.0
        %v2921 = vsel %vm2317, %v776, 0.0
        %v2922 = vsel %vm2317, %v777, 0.0
        %v2923 = vsel %vm2317, %v778, 0.0
        %v2924 = vsel %vm2318, %v779, 0.0
        %v2925 = vsel %vm2318, %v780, 0.0
        %v2926 = vsel %vm2318, %v781, 0.0
        %v2927 = vsel %vm2318, %v782, 0.0
        %v2928 = vsel %vm2318, %v783, 0.0
        %v2929 = vsel %vm2318, %v784, 0.0
        %v2930 = vsel %vm2319, %v785, 0.0
        %v2931 = vsel %vm2319, %v786, 0.0
        %v2932 = vsel %vm2319, %v787, 0.0
        %v2933 = vsel %vm2319, %v788, 0.0
        %v2934 = vsel %vm2319, %v789, 0.0
        %v2935 = vsel %vm2319, %v790, 0.0
        %v2936 = vsel %vm2320, %v791, 0.0
        %v2937 = vsel %vm2320, %v792, 0.0
        %v2938 = vsel %vm2320, %v793, 0.0
        %v2939 = vsel %vm2320, %v794, 0.0
        %v2940 = vsel %vm2320, %v795, 0.0
        %v2941 = vsel %vm2320, %v796, 0.0
        %v2942 = vsel %vm2321, %v797, 0.0
        %v2943 = vsel %vm2321, %v798, 0.0
        %v2944 = vsel %vm2321, %v799, 0.0
        %v2945 = vsel %vm2321, %v800, 0.0
        %v2946 = vsel %vm2321, %v801, 0.0
        %v2947 = vsel %vm2321, %v802, 0.0
        %v2948 = vsel %vm2322, %v803, 0.0
        %v2949 = vsel %vm2322, %v804, 0.0
        %v2950 = vsel %vm2322, %v805, 0.0
        %v2951 = vsel %vm2322, %v806, 0.0
        %v2952 = vsel %vm2322, %v807, 0.0
        %v2953 = vsel %vm2322, %v808, 0.0
        %v2954 = vsel %vm2323, %v809, 0.0
        %v2955 = vsel %vm2323, %v810, 0.0
        %v2956 = vsel %vm2323, %v811, 0.0
        %v2957 = vsel %vm2323, %v812, 0.0
        %v2958 = vsel %vm2323, %v813, 0.0
        %v2959 = vsel %vm2323, %v814, 0.0
        %v2960 = vsel %vm2324, %v815, 0.0
        %v2961 = vsel %vm2324, %v816, 0.0
        %v2962 = vsel %vm2324, %v817, 0.0
        %v2963 = vsel %vm2324, %v818, 0.0
        %v2964 = vsel %vm2324, %v819, 0.0
        %v2965 = vsel %vm2324, %v820, 0.0
        %v2966 = vsel %vm2325, %v821, 0.0
        %v2967 = vsel %vm2325, %v822, 0.0
        %v2968 = vsel %vm2325, %v823, 0.0
        %v2969 = vsel %vm2325, %v824, 0.0
        %v2970 = vsel %vm2325, %v825, 0.0
        %v2971 = vsel %vm2325, %v826, 0.0
        %v2972 = vsel %vm2326, %v827, 0.0
        %v2973 = vsel %vm2326, %v828, 0.0
        %v2974 = vsel %vm2326, %v829, 0.0
        %v2975 = vsel %vm2326, %v830, 0.0
        %v2976 = vsel %vm2326, %v831, 0.0
        %v2977 = vsel %vm2326, %v832, 0.0
        %v2978 = vsel %vm2327, %v833, 0.0
        %v2979 = vsel %vm2327, %v834, 0.0
        %v2980 = vsel %vm2327, %v835, 0.0
        %v2981 = vsel %vm2327, %v836, 0.0
        %v2982 = vsel %vm2327, %v837, 0.0
        %v2983 = vsel %vm2327, %v838, 0.0
        %v2984 = vsel %vm2328, %v839, 0.0
        %v2985 = vsel %vm2328, %v840, 0.0
        %v2986 = vsel %vm2328, %v841, 0.0
        %v2987 = vsel %vm2328, %v842, 0.0
        %v2988 = vsel %vm2328, %v843, 0.0
        %v2989 = vsel %vm2328, %v844, 0.0
        %v2990 = vsel %vm2329, %v845, 0.0
        %v2991 = vsel %vm2329, %v846, 0.0
        %v2992 = vsel %vm2329, %v847, 0.0
        %v2993 = vsel %vm2329, %v848, 0.0
        %v2994 = vsel %vm2329, %v849, 0.0
        %v2995 = vsel %vm2329, %v850, 0.0
        %v2996 = vsel %vm2330, %v851, 0.0
        %v2997 = vsel %vm2330, %v852, 0.0
        %v2998 = vsel %vm2330, %v853, 0.0
        %v2999 = vsel %vm2330, %v854, 0.0
        %v3000 = vsel %vm2330, %v855, 0.0
        %v3001 = vsel %vm2330, %v856, 0.0
        %v3002 = vsel %vm2331, %v857, 0.0
        %v3003 = vsel %vm2331, %v858, 0.0
        %v3004 = vsel %vm2331, %v859, 0.0
        %v3005 = vsel %vm2331, %v860, 0.0
        %v3006 = vsel %vm2331, %v861, 0.0
        %v3007 = vsel %vm2331, %v862, 0.0
        %v3008 = vsel %vm2332, %v863, 0.0
        %v3009 = vsel %vm2332, %v864, 0.0
        %v3010 = vsel %vm2332, %v865, 0.0
        %v3011 = vsel %vm2332, %v866, 0.0
        %v3012 = vsel %vm2332, %v867, 0.0
        %v3013 = vsel %vm2332, %v868, 0.0
        %v3014 = vsel %vm2333, %v869, 0.0
        %v3015 = vsel %vm2333, %v870, 0.0
        %v3016 = vsel %vm2333, %v871, 0.0
        %v3017 = vsel %vm2333, %v872, 0.0
        %v3018 = vsel %vm2333, %v873, 0.0
        %v3019 = vsel %vm2333, %v874, 0.0
        %v3020 = vsel %vm2334, %v875, 0.0
        %v3021 = vsel %vm2334, %v876, 0.0
        %v3022 = vsel %vm2334, %v877, 0.0
        %v3023 = vsel %vm2334, %v878, 0.0
        %v3024 = vsel %vm2334, %v879, 0.0
        %v3025 = vsel %vm2334, %v880, 0.0
        %v3026 = vsel %vm2335, %v881, 0.0
        %v3027 = vsel %vm2335, %v882, 0.0
        %v3028 = vsel %vm2335, %v883, 0.0
        %v3029 = vsel %vm2335, %v884, 0.0
        %v3030 = vsel %vm2335, %v885, 0.0
        %v3031 = vsel %vm2335, %v886, 0.0
        %v3032 = vsel %vm2336, %v887, 0.0
        %v3033 = vsel %vm2336, %v888, 0.0
        %v3034 = vsel %vm2336, %v889, 0.0
        %v3035 = vsel %vm2336, %v890, 0.0
        %v3036 = vsel %vm2336, %v891, 0.0
        %v3037 = vsel %vm2336, %v892, 0.0
        %v3038 = vsel %vm2337, %v893, 0.0
        %v3039 = vsel %vm2337, %v894, 0.0
        %v3040 = vsel %vm2337, %v895, 0.0
        %v3041 = vsel %vm2337, %v896, 0.0
        %v3042 = vsel %vm2337, %v897, 0.0
        %v3043 = vsel %vm2337, %v898, 0.0
        %v3044 = vsel %vm2338, %v899, 0.0
        %v3045 = vsel %vm2338, %v900, 0.0
        %v3046 = vsel %vm2338, %v901, 0.0
        %v3047 = vsel %vm2338, %v902, 0.0
        %v3048 = vsel %vm2338, %v903, 0.0
        %v3049 = vsel %vm2338, %v904, 0.0
        %v3050 = vsel %vm2339, %v905, 0.0
        %v3051 = vsel %vm2339, %v906, 0.0
        %v3052 = vsel %vm2339, %v907, 0.0
        %v3053 = vsel %vm2339, %v908, 0.0
        %v3054 = vsel %vm2339, %v909, 0.0
        %v3055 = vsel %vm2339, %v910, 0.0
        %v3056 = vsel %vm2340, %v911, 0.0
        %v3057 = vsel %vm2340, %v912, 0.0
        %v3058 = vsel %vm2340, %v913, 0.0
        %v3059 = vsel %vm2340, %v914, 0.0
        %v3060 = vsel %vm2340, %v915, 0.0
        %v3061 = vsel %vm2340, %v916, 0.0
        %v3062 = vsel %vm2341, %v917, 0.0
        %v3063 = vsel %vm2341, %v918, 0.0
        %v3064 = vsel %vm2341, %v919, 0.0
        %v3065 = vsel %vm2341, %v920, 0.0
        %v3066 = vsel %vm2341, %v921, 0.0
        %v3067 = vsel %vm2341, %v922, 0.0
        %v3068 = vsel %vm2342, %v923, 0.0
        %v3069 = vsel %vm2342, %v924, 0.0
        %v3070 = vsel %vm2342, %v925, 0.0
        %v3071 = vsel %vm2342, %v926, 0.0
        %v3072 = vsel %vm2342, %v927, 0.0
        %v3073 = vsel %vm2342, %v928, 0.0
        %v3074 = vsel %vm2343, %v929, 0.0
        %v3075 = vsel %vm2343, %v930, 0.0
        %v3076 = vsel %vm2343, %v931, 0.0
        %v3077 = vsel %vm2343, %v932, 0.0
        %v3078 = vsel %vm2343, %v933, 0.0
        %v3079 = vsel %vm2343, %v934, 0.0
        %v3080 = vsel %vm2344, %v935, 0.0
        %v3081 = vsel %vm2344, %v936, 0.0
        %v3082 = vsel %vm2344, %v937, 0.0
        %v3083 = vsel %vm2344, %v938, 0.0
        %v3084 = vsel %vm2344, %v939, 0.0
        %v3085 = vsel %vm2344, %v940, 0.0
        %v3086 = vsel %vm2345, %v941, 0.0
        %v3087 = vsel %vm2345, %v942, 0.0
        %v3088 = vsel %vm2345, %v943, 0.0
        %v3089 = vsel %vm2345, %v944, 0.0
        %v3090 = vsel %vm2345, %v945, 0.0
        %v3091 = vsel %vm2345, %v946, 0.0
        %v3092 = vsel %vm2346, %v947, 0.0
        %v3093 = vsel %vm2346, %v948, 0.0
        %v3094 = vsel %vm2346, %v949, 0.0
        %v3095 = vsel %vm2346, %v950, 0.0
        %v3096 = vsel %vm2346, %v951, 0.0
        %v3097 = vsel %vm2346, %v952, 0.0
        %v3098 = vsel %vm2347, %v953, 0.0
        %v3099 = vsel %vm2347, %v954, 0.0
        %v3100 = vsel %vm2347, %v955, 0.0
        %v3101 = vsel %vm2347, %v956, 0.0
        %v3102 = vsel %vm2347, %v957, 0.0
        %v3103 = vsel %vm2347, %v958, 0.0
        %v3104 = vsel %vm2306, %v959, 0.0
        %v3105 = vsel %vm2306, %v960, 0.0
        %v3106 = vsel %vm2306, %v961, 0.0
        %v3107 = vsel %vm2306, %v962, 0.0
        %v3108 = vsel %vm2306, %v963, 0.0
        %v3109 = vsel %vm2306, %v964, 0.0
        %v3110 = vsel %vm2307, %v965, 0.0
        %v3111 = vsel %vm2307, %v966, 0.0
        %v3112 = vsel %vm2307, %v967, 0.0
        %v3113 = vsel %vm2307, %v968, 0.0
        %v3114 = vsel %vm2307, %v969, 0.0
        %v3115 = vsel %vm2307, %v970, 0.0
        %v3116 = vsel %vm2308, %v971, 0.0
        %v3117 = vsel %vm2308, %v972, 0.0
        %v3118 = vsel %vm2308, %v973, 0.0
        %v3119 = vsel %vm2308, %v974, 0.0
        %v3120 = vsel %vm2308, %v975, 0.0
        %v3121 = vsel %vm2308, %v976, 0.0
        %v3122 = vsel %vm2309, %v977, 0.0
        %v3123 = vsel %vm2309, %v978, 0.0
        %v3124 = vsel %vm2309, %v979, 0.0
        %v3125 = vsel %vm2309, %v980, 0.0
        %v3126 = vsel %vm2309, %v981, 0.0
        %v3127 = vsel %vm2309, %v982, 0.0
        %v3128 = vsel %vm2310, %v983, 0.0
        %v3129 = vsel %vm2310, %v984, 0.0
        %v3130 = vsel %vm2310, %v985, 0.0
        %v3131 = vsel %vm2310, %v986, 0.0
        %v3132 = vsel %vm2310, %v987, 0.0
        %v3133 = vsel %vm2310, %v988, 0.0
        %v3134 = vsel %vm2311, %v989, 0.0
        %v3135 = vsel %vm2311, %v990, 0.0
        %v3136 = vsel %vm2311, %v991, 0.0
        %v3137 = vsel %vm2311, %v992, 0.0
        %v3138 = vsel %vm2311, %v993, 0.0
        %v3139 = vsel %vm2311, %v994, 0.0
        %v3140 = vsel %vm2312, %v995, 0.0
        %v3141 = vsel %vm2312, %v996, 0.0
        %v3142 = vsel %vm2312, %v997, 0.0
        %v3143 = vsel %vm2312, %v998, 0.0
        %v3144 = vsel %vm2312, %v999, 0.0
        %v3145 = vsel %vm2312, %v1000, 0.0
        %v3146 = vsel %vm2313, %v1001, 0.0
        %v3147 = vsel %vm2313, %v1002, 0.0
        %v3148 = vsel %vm2313, %v1003, 0.0
        %v3149 = vsel %vm2313, %v1004, 0.0
        %v3150 = vsel %vm2313, %v1005, 0.0
        %v3151 = vsel %vm2313, %v1006, 0.0
        %v3152 = vsel %vm2314, %v1007, 0.0
        %v3153 = vsel %vm2314, %v1008, 0.0
        %v3154 = vsel %vm2314, %v1009, 0.0
        %v3155 = vsel %vm2314, %v1010, 0.0
        %v3156 = vsel %vm2314, %v1011, 0.0
        %v3157 = vsel %vm2314, %v1012, 0.0
        %v3158 = vsel %vm2315, %v1013, 0.0
        %v3159 = vsel %vm2315, %v1014, 0.0
        %v3160 = vsel %vm2315, %v1015, 0.0
        %v3161 = vsel %vm2315, %v1016, 0.0
        %v3162 = vsel %vm2315, %v1017, 0.0
        %v3163 = vsel %vm2315, %v1018, 0.0
        %v3164 = vsel %vm2316, %v1019, 0.0
        %v3165 = vsel %vm2316, %v1020, 0.0
        %v3166 = vsel %vm2316, %v1021, 0.0
        %v3167 = vsel %vm2316, %v1022, 0.0
        %v3168 = vsel %vm2316, %v1023, 0.0
        %v3169 = vsel %vm2316, %v1024, 0.0
        %v3170 = vsel %vm2317, %v1025, 0.0
        %v3171 = vsel %vm2317, %v1026, 0.0
        %v3172 = vsel %vm2317, %v1027, 0.0
        %v3173 = vsel %vm2317, %v1028, 0.0
        %v3174 = vsel %vm2317, %v1029, 0.0
        %v3175 = vsel %vm2317, %v1030, 0.0
        %v3176 = vsel %vm2318, %v1031, 0.0
        %v3177 = vsel %vm2318, %v1032, 0.0
        %v3178 = vsel %vm2318, %v1033, 0.0
        %v3179 = vsel %vm2318, %v1034, 0.0
        %v3180 = vsel %vm2318, %v1035, 0.0
        %v3181 = vsel %vm2318, %v1036, 0.0
        %v3182 = vsel %vm2319, %v1037, 0.0
        %v3183 = vsel %vm2319, %v1038, 0.0
        %v3184 = vsel %vm2319, %v1039, 0.0
        %v3185 = vsel %vm2319, %v1040, 0.0
        %v3186 = vsel %vm2319, %v1041, 0.0
        %v3187 = vsel %vm2319, %v1042, 0.0
        %v3188 = vsel %vm2320, %v1043, 0.0
        %v3189 = vsel %vm2320, %v1044, 0.0
        %v3190 = vsel %vm2320, %v1045, 0.0
        %v3191 = vsel %vm2320, %v1046, 0.0
        %v3192 = vsel %vm2320, %v1047, 0.0
        %v3193 = vsel %vm2320, %v1048, 0.0
        %v3194 = vsel %vm2321, %v1049, 0.0
        %v3195 = vsel %vm2321, %v1050, 0.0
        %v3196 = vsel %vm2321, %v1051, 0.0
        %v3197 = vsel %vm2321, %v1052, 0.0
        %v3198 = vsel %vm2321, %v1053, 0.0
        %v3199 = vsel %vm2321, %v1054, 0.0
        %v3200 = vsel %vm2322, %v1055, 0.0
        %v3201 = vsel %vm2322, %v1056, 0.0
        %v3202 = vsel %vm2322, %v1057, 0.0
        %v3203 = vsel %vm2322, %v1058, 0.0
        %v3204 = vsel %vm2322, %v1059, 0.0
        %v3205 = vsel %vm2322, %v1060, 0.0
        %v3206 = vsel %vm2323, %v1061, 0.0
        %v3207 = vsel %vm2323, %v1062, 0.0
        %v3208 = vsel %vm2323, %v1063, 0.0
        %v3209 = vsel %vm2323, %v1064, 0.0
        %v3210 = vsel %vm2323, %v1065, 0.0
        %v3211 = vsel %vm2323, %v1066, 0.0
        %v3212 = vsel %vm2324, %v1067, 0.0
        %v3213 = vsel %vm2324, %v1068, 0.0
        %v3214 = vsel %vm2324, %v1069, 0.0
        %v3215 = vsel %vm2324, %v1070, 0.0
        %v3216 = vsel %vm2324, %v1071, 0.0
        %v3217 = vsel %vm2324, %v1072, 0.0
        %v3218 = vsel %vm2325, %v1073, 0.0
        %v3219 = vsel %vm2325, %v1074, 0.0
        %v3220 = vsel %vm2325, %v1075, 0.0
        %v3221 = vsel %vm2325, %v1076, 0.0
        %v3222 = vsel %vm2325, %v1077, 0.0
        %v3223 = vsel %vm2325, %v1078, 0.0
        %v3224 = vsel %vm2326, %v1079, 0.0
        %v3225 = vsel %vm2326, %v1080, 0.0
        %v3226 = vsel %vm2326, %v1081, 0.0
        %v3227 = vsel %vm2326, %v1082, 0.0
        %v3228 = vsel %vm2326, %v1083, 0.0
        %v3229 = vsel %vm2326, %v1084, 0.0
        %v3230 = vsel %vm2327, %v1085, 0.0
        %v3231 = vsel %vm2327, %v1086, 0.0
        %v3232 = vsel %vm2327, %v1087, 0.0
        %v3233 = vsel %vm2327, %v1088, 0.0
        %v3234 = vsel %vm2327, %v1089, 0.0
        %v3235 = vsel %vm2327, %v1090, 0.0
        %v3236 = vsel %vm2328, %v1091, 0.0
        %v3237 = vsel %vm2328, %v1092, 0.0
        %v3238 = vsel %vm2328, %v1093, 0.0
        %v3239 = vsel %vm2328, %v1094, 0.0
        %v3240 = vsel %vm2328, %v1095, 0.0
        %v3241 = vsel %vm2328, %v1096, 0.0
        %v3242 = vsel %vm2329, %v1097, 0.0
        %v3243 = vsel %vm2329, %v1098, 0.0
        %v3244 = vsel %vm2329, %v1099, 0.0
        %v3245 = vsel %vm2329, %v1100, 0.0
        %v3246 = vsel %vm2329, %v1101, 0.0
        %v3247 = vsel %vm2329, %v1102, 0.0
        %v3248 = vsel %vm2330, %v1103, 0.0
        %v3249 = vsel %vm2330, %v1104, 0.0
        %v3250 = vsel %vm2330, %v1105, 0.0
        %v3251 = vsel %vm2330, %v1106, 0.0
        %v3252 = vsel %vm2330, %v1107, 0.0
        %v3253 = vsel %vm2330, %v1108, 0.0
        %v3254 = vsel %vm2331, %v1109, 0.0
        %v3255 = vsel %vm2331, %v1110, 0.0
        %v3256 = vsel %vm2331, %v1111, 0.0
        %v3257 = vsel %vm2331, %v1112, 0.0
        %v3258 = vsel %vm2331, %v1113, 0.0
        %v3259 = vsel %vm2331, %v1114, 0.0
        %v3260 = vsel %vm2332, %v1115, 0.0
        %v3261 = vsel %vm2332, %v1116, 0.0
        %v3262 = vsel %vm2332, %v1117, 0.0
        %v3263 = vsel %vm2332, %v1118, 0.0
        %v3264 = vsel %vm2332, %v1119, 0.0
        %v3265 = vsel %vm2332, %v1120, 0.0
        %v3266 = vsel %vm2333, %v1121, 0.0
        %v3267 = vsel %vm2333, %v1122, 0.0
        %v3268 = vsel %vm2333, %v1123, 0.0
        %v3269 = vsel %vm2333, %v1124, 0.0
        %v3270 = vsel %vm2333, %v1125, 0.0
        %v3271 = vsel %vm2333, %v1126, 0.0
        %v3272 = vsel %vm2334, %v1127, 0.0
        %v3273 = vsel %vm2334, %v1128, 0.0
        %v3274 = vsel %vm2334, %v1129, 0.0
        %v3275 = vsel %vm2334, %v1130, 0.0
        %v3276 = vsel %vm2334, %v1131, 0.0
        %v3277 = vsel %vm2334, %v1132, 0.0
        %v3278 = vsel %vm2335, %v1133, 0.0
        %v3279 = vsel %vm2335, %v1134, 0.0
        %v3280 = vsel %vm2335, %v1135, 0.0
        %v3281 = vsel %vm2335, %v1136, 0.0
        %v3282 = vsel %vm2335, %v1137, 0.0
        %v3283 = vsel %vm2335, %v1138, 0.0
        %v3284 = vsel %vm2336, %v1139, 0.0
        %v3285 = vsel %vm2336, %v1140, 0.0
        %v3286 = vsel %vm2336, %v1141, 0.0
        %v3287 = vsel %vm2336, %v1142, 0.0
        %v3288 = vsel %vm2336, %v1143, 0.0
        %v3289 = vsel %vm2336, %v1144, 0.0
        %v3290 = vsel %vm2337, %v1145, 0.0
        %v3291 = vsel %vm2337, %v1146, 0.0
        %v3292 = vsel %vm2337, %v1147, 0.0
        %v3293 = vsel %vm2337, %v1148, 0.0
        %v3294 = vsel %vm2337, %v1149, 0.0
        %v3295 = vsel %vm2337, %v1150, 0.0
        %v3296 = vsel %vm2338, %v1151, 0.0
        %v3297 = vsel %vm2338, %v1152, 0.0
        %v3298 = vsel %vm2338, %v1153, 0.0
        %v3299 = vsel %vm2338, %v1154, 0.0
        %v3300 = vsel %vm2338, %v1155, 0.0
        %v3301 = vsel %vm2338, %v1156, 0.0
        %v3302 = vsel %vm2339, %v1157, 0.0
        %v3303 = vsel %vm2339, %v1158, 0.0
        %v3304 = vsel %vm2339, %v1159, 0.0
        %v3305 = vsel %vm2339, %v1160, 0.0
        %v3306 = vsel %vm2339, %v1161, 0.0
        %v3307 = vsel %vm2339, %v1162, 0.0
        %v3308 = vsel %vm2340, %v1163, 0.0
        %v3309 = vsel %vm2340, %v1164, 0.0
        %v3310 = vsel %vm2340, %v1165, 0.0
        %v3311 = vsel %vm2340, %v1166, 0.0
        %v3312 = vsel %vm2340, %v1167, 0.0
        %v3313 = vsel %vm2340, %v1168, 0.0
        %v3314 = vsel %vm2341, %v1169, 0.0
        %v3315 = vsel %vm2341, %v1170, 0.0
        %v3316 = vsel %vm2341, %v1171, 0.0
        %v3317 = vsel %vm2341, %v1172, 0.0
        %v3318 = vsel %vm2341, %v1173, 0.0
        %v3319 = vsel %vm2341, %v1174, 0.0
        %v3320 = vsel %vm2342, %v1175, 0.0
        %v3321 = vsel %vm2342, %v1176, 0.0
        %v3322 = vsel %vm2342, %v1177, 0.0
        %v3323 = vsel %vm2342, %v1178, 0.0
        %v3324 = vsel %vm2342, %v1179, 0.0
        %v3325 = vsel %vm2342, %v1180, 0.0
        %v3326 = vsel %vm2343, %v1181, 0.0
        %v3327 = vsel %vm2343, %v1182, 0.0
        %v3328 = vsel %vm2343, %v1183, 0.0
        %v3329 = vsel %vm2343, %v1184, 0.0
        %v3330 = vsel %vm2343, %v1185, 0.0
        %v3331 = vsel %vm2343, %v1186, 0.0
        %v3332 = vsel %vm2344, %v1187, 0.0
        %v3333 = vsel %vm2344, %v1188, 0.0
        %v3334 = vsel %vm2344, %v1189, 0.0
        %v3335 = vsel %vm2344, %v1190, 0.0
        %v3336 = vsel %vm2344, %v1191, 0.0
        %v3337 = vsel %vm2344, %v1192, 0.0
        %v3338 = vsel %vm2345, %v1193, 0.0
        %v3339 = vsel %vm2345, %v1194, 0.0
        %v3340 = vsel %vm2345, %v1195, 0.0
        %v3341 = vsel %vm2345, %v1196, 0.0
        %v3342 = vsel %vm2345, %v1197, 0.0
        %v3343 = vsel %vm2345, %v1198, 0.0
        %v3344 = vsel %vm2346, %v1199, 0.0
        %v3345 = vsel %vm2346, %v1200, 0.0
        %v3346 = vsel %vm2346, %v1201, 0.0
        %v3347 = vsel %vm2346, %v1202, 0.0
        %v3348 = vsel %vm2346, %v1203, 0.0
        %v3349 = vsel %vm2346, %v1204, 0.0
        %v3350 = vsel %vm2347, %v1205, 0.0
        %v3351 = vsel %vm2347, %v1206, 0.0
        %v3352 = vsel %vm2347, %v1207, 0.0
        %v3353 = vsel %vm2347, %v1208, 0.0
        %v3354 = vsel %vm2347, %v1209, 0.0
        %v3355 = vsel %vm2347, %v1210, 0.0
        %v3356 = vsel %vm2306, %v1211, 0.0
        %v3357 = vsel %vm2306, %v1212, 0.0
        %v3358 = vsel %vm2306, %v1213, 0.0
        %v3359 = vsel %vm2306, %v1214, 0.0
        %v3360 = vsel %vm2306, %v1215, 0.0
        %v3361 = vsel %vm2306, %v1216, 0.0
        %v3362 = vsel %vm2307, %v1217, 0.0
        %v3363 = vsel %vm2307, %v1218, 0.0
        %v3364 = vsel %vm2307, %v1219, 0.0
        %v3365 = vsel %vm2307, %v1220, 0.0
        %v3366 = vsel %vm2307, %v1221, 0.0
        %v3367 = vsel %vm2307, %v1222, 0.0
        %v3368 = vsel %vm2308, %v1223, 0.0
        %v3369 = vsel %vm2308, %v1224, 0.0
        %v3370 = vsel %vm2308, %v1225, 0.0
        %v3371 = vsel %vm2308, %v1226, 0.0
        %v3372 = vsel %vm2308, %v1227, 0.0
        %v3373 = vsel %vm2308, %v1228, 0.0
        %v3374 = vsel %vm2309, %v1229, 0.0
        %v3375 = vsel %vm2309, %v1230, 0.0
        %v3376 = vsel %vm2309, %v1231, 0.0
        %v3377 = vsel %vm2309, %v1232, 0.0
        %v3378 = vsel %vm2309, %v1233, 0.0
        %v3379 = vsel %vm2309, %v1234, 0.0
        %v3380 = vsel %vm2310, %v1235, 0.0
        %v3381 = vsel %vm2310, %v1236, 0.0
        %v3382 = vsel %vm2310, %v1237, 0.0
        %v3383 = vsel %vm2310, %v1238, 0.0
        %v3384 = vsel %vm2310, %v1239, 0.0
        %v3385 = vsel %vm2310, %v1240, 0.0
        %v3386 = vsel %vm2311, %v1241, 0.0
        %v3387 = vsel %vm2311, %v1242, 0.0
        %v3388 = vsel %vm2311, %v1243, 0.0
        %v3389 = vsel %vm2311, %v1244, 0.0
        %v3390 = vsel %vm2311, %v1245, 0.0
        %v3391 = vsel %vm2311, %v1246, 0.0
        %v3392 = vsel %vm2312, %v1247, 0.0
        %v3393 = vsel %vm2312, %v1248, 0.0
        %v3394 = vsel %vm2312, %v1249, 0.0
        %v3395 = vsel %vm2312, %v1250, 0.0
        %v3396 = vsel %vm2312, %v1251, 0.0
        %v3397 = vsel %vm2312, %v1252, 0.0
        %v3398 = vsel %vm2313, %v1253, 0.0
        %v3399 = vsel %vm2313, %v1254, 0.0
        %v3400 = vsel %vm2313, %v1255, 0.0
        %v3401 = vsel %vm2313, %v1256, 0.0
        %v3402 = vsel %vm2313, %v1257, 0.0
        %v3403 = vsel %vm2313, %v1258, 0.0
        %v3404 = vsel %vm2314, %v1259, 0.0
        %v3405 = vsel %vm2314, %v1260, 0.0
        %v3406 = vsel %vm2314, %v1261, 0.0
        %v3407 = vsel %vm2314, %v1262, 0.0
        %v3408 = vsel %vm2314, %v1263, 0.0
        %v3409 = vsel %vm2314, %v1264, 0.0
        %v3410 = vsel %vm2315, %v1265, 0.0
        %v3411 = vsel %vm2315, %v1266, 0.0
        %v3412 = vsel %vm2315, %v1267, 0.0
        %v3413 = vsel %vm2315, %v1268, 0.0
        %v3414 = vsel %vm2315, %v1269, 0.0
        %v3415 = vsel %vm2315, %v1270, 0.0
        %v3416 = vsel %vm2316, %v1271, 0.0
        %v3417 = vsel %vm2316, %v1272, 0.0
        %v3418 = vsel %vm2316, %v1273, 0.0
        %v3419 = vsel %vm2316, %v1274, 0.0
        %v3420 = vsel %vm2316, %v1275, 0.0
        %v3421 = vsel %vm2316, %v1276, 0.0
        %v3422 = vsel %vm2317, %v1277, 0.0
        %v3423 = vsel %vm2317, %v1278, 0.0
        %v3424 = vsel %vm2317, %v1279, 0.0
        %v3425 = vsel %vm2317, %v1280, 0.0
        %v3426 = vsel %vm2317, %v1281, 0.0
        %v3427 = vsel %vm2317, %v1282, 0.0
        %v3428 = vsel %vm2318, %v1283, 0.0
        %v3429 = vsel %vm2318, %v1284, 0.0
        %v3430 = vsel %vm2318, %v1285, 0.0
        %v3431 = vsel %vm2318, %v1286, 0.0
        %v3432 = vsel %vm2318, %v1287, 0.0
        %v3433 = vsel %vm2318, %v1288, 0.0
        %v3434 = vsel %vm2319, %v1289, 0.0
        %v3435 = vsel %vm2319, %v1290, 0.0
        %v3436 = vsel %vm2319, %v1291, 0.0
        %v3437 = vsel %vm2319, %v1292, 0.0
        %v3438 = vsel %vm2319, %v1293, 0.0
        %v3439 = vsel %vm2319, %v1294, 0.0
        %v3440 = vsel %vm2320, %v1295, 0.0
        %v3441 = vsel %vm2320, %v1296, 0.0
        %v3442 = vsel %vm2320, %v1297, 0.0
        %v3443 = vsel %vm2320, %v1298, 0.0
        %v3444 = vsel %vm2320, %v1299, 0.0
        %v3445 = vsel %vm2320, %v1300, 0.0
        %v3446 = vsel %vm2321, %v1301, 0.0
        %v3447 = vsel %vm2321, %v1302, 0.0
        %v3448 = vsel %vm2321, %v1303, 0.0
        %v3449 = vsel %vm2321, %v1304, 0.0
        %v3450 = vsel %vm2321, %v1305, 0.0
        %v3451 = vsel %vm2321, %v1306, 0.0
        %v3452 = vsel %vm2322, %v1307, 0.0
        %v3453 = vsel %vm2322, %v1308, 0.0
        %v3454 = vsel %vm2322, %v1309, 0.0
        %v3455 = vsel %vm2322, %v1310, 0.0
        %v3456 = vsel %vm2322, %v1311, 0.0
        %v3457 = vsel %vm2322, %v1312, 0.0
        %v3458 = vsel %vm2323, %v1313, 0.0
        %v3459 = vsel %vm2323, %v1314, 0.0
        %v3460 = vsel %vm2323, %v1315, 0.0
        %v3461 = vsel %vm2323, %v1316, 0.0
        %v3462 = vsel %vm2323, %v1317, 0.0
        %v3463 = vsel %vm2323, %v1318, 0.0
        %v3464 = vsel %vm2324, %v1319, 0.0
        %v3465 = vsel %vm2324, %v1320, 0.0
        %v3466 = vsel %vm2324, %v1321, 0.0
        %v3467 = vsel %vm2324, %v1322, 0.0
        %v3468 = vsel %vm2324, %v1323, 0.0
        %v3469 = vsel %vm2324, %v1324, 0.0
        %v3470 = vsel %vm2325, %v1325, 0.0
        %v3471 = vsel %vm2325, %v1326, 0.0
        %v3472 = vsel %vm2325, %v1327, 0.0
        %v3473 = vsel %vm2325, %v1328, 0.0
        %v3474 = vsel %vm2325, %v1329, 0.0
        %v3475 = vsel %vm2325, %v1330, 0.0
        %v3476 = vsel %vm2326, %v1331, 0.0
        %v3477 = vsel %vm2326, %v1332, 0.0
        %v3478 = vsel %vm2326, %v1333, 0.0
        %v3479 = vsel %vm2326, %v1334, 0.0
        %v3480 = vsel %vm2326, %v1335, 0.0
        %v3481 = vsel %vm2326, %v1336, 0.0
        %v3482 = vsel %vm2327, %v1337, 0.0
        %v3483 = vsel %vm2327, %v1338, 0.0
        %v3484 = vsel %vm2327, %v1339, 0.0
        %v3485 = vsel %vm2327, %v1340, 0.0
        %v3486 = vsel %vm2327, %v1341, 0.0
        %v3487 = vsel %vm2327, %v1342, 0.0
        %v3488 = vsel %vm2328, %v1343, 0.0
        %v3489 = vsel %vm2328, %v1344, 0.0
        %v3490 = vsel %vm2328, %v1345, 0.0
        %v3491 = vsel %vm2328, %v1346, 0.0
        %v3492 = vsel %vm2328, %v1347, 0.0
        %v3493 = vsel %vm2328, %v1348, 0.0
        %v3494 = vsel %vm2329, %v1349, 0.0
        %v3495 = vsel %vm2329, %v1350, 0.0
        %v3496 = vsel %vm2329, %v1351, 0.0
        %v3497 = vsel %vm2329, %v1352, 0.0
        %v3498 = vsel %vm2329, %v1353, 0.0
        %v3499 = vsel %vm2329, %v1354, 0.0
        %v3500 = vsel %vm2330, %v1355, 0.0
        %v3501 = vsel %vm2330, %v1356, 0.0
        %v3502 = vsel %vm2330, %v1357, 0.0
        %v3503 = vsel %vm2330, %v1358, 0.0
        %v3504 = vsel %vm2330, %v1359, 0.0
        %v3505 = vsel %vm2330, %v1360, 0.0
        %v3506 = vsel %vm2331, %v1361, 0.0
        %v3507 = vsel %vm2331, %v1362, 0.0
        %v3508 = vsel %vm2331, %v1363, 0.0
        %v3509 = vsel %vm2331, %v1364, 0.0
        %v3510 = vsel %vm2331, %v1365, 0.0
        %v3511 = vsel %vm2331, %v1366, 0.0
        %v3512 = vsel %vm2332, %v1367, 0.0
        %v3513 = vsel %vm2332, %v1368, 0.0
        %v3514 = vsel %vm2332, %v1369, 0.0
        %v3515 = vsel %vm2332, %v1370, 0.0
        %v3516 = vsel %vm2332, %v1371, 0.0
        %v3517 = vsel %vm2332, %v1372, 0.0
        %v3518 = vsel %vm2333, %v1373, 0.0
        %v3519 = vsel %vm2333, %v1374, 0.0
        %v3520 = vsel %vm2333, %v1375, 0.0
        %v3521 = vsel %vm2333, %v1376, 0.0
        %v3522 = vsel %vm2333, %v1377, 0.0
        %v3523 = vsel %vm2333, %v1378, 0.0
        %v3524 = vsel %vm2334, %v1379, 0.0
        %v3525 = vsel %vm2334, %v1380, 0.0
        %v3526 = vsel %vm2334, %v1381, 0.0
        %v3527 = vsel %vm2334, %v1382, 0.0
        %v3528 = vsel %vm2334, %v1383, 0.0
        %v3529 = vsel %vm2334, %v1384, 0.0
        %v3530 = vsel %vm2335, %v1385, 0.0
        %v3531 = vsel %vm2335, %v1386, 0.0
        %v3532 = vsel %vm2335, %v1387, 0.0
        %v3533 = vsel %vm2335, %v1388, 0.0
        %v3534 = vsel %vm2335, %v1389, 0.0
        %v3535 = vsel %vm2335, %v1390, 0.0
        %v3536 = vsel %vm2336, %v1391, 0.0
        %v3537 = vsel %vm2336, %v1392, 0.0
        %v3538 = vsel %vm2336, %v1393, 0.0
        %v3539 = vsel %vm2336, %v1394, 0.0
        %v3540 = vsel %vm2336, %v1395, 0.0
        %v3541 = vsel %vm2336, %v1396, 0.0
        %v3542 = vsel %vm2337, %v1397, 0.0
        %v3543 = vsel %vm2337, %v1398, 0.0
        %v3544 = vsel %vm2337, %v1399, 0.0
        %v3545 = vsel %vm2337, %v1400, 0.0
        %v3546 = vsel %vm2337, %v1401, 0.0
        %v3547 = vsel %vm2337, %v1402, 0.0
        %v3548 = vsel %vm2338, %v1403, 0.0
        %v3549 = vsel %vm2338, %v1404, 0.0
        %v3550 = vsel %vm2338, %v1405, 0.0
        %v3551 = vsel %vm2338, %v1406, 0.0
        %v3552 = vsel %vm2338, %v1407, 0.0
        %v3553 = vsel %vm2338, %v1408, 0.0
        %v3554 = vsel %vm2339, %v1409, 0.0
        %v3555 = vsel %vm2339, %v1410, 0.0
        %v3556 = vsel %vm2339, %v1411, 0.0
        %v3557 = vsel %vm2339, %v1412, 0.0
        %v3558 = vsel %vm2339, %v1413, 0.0
        %v3559 = vsel %vm2339, %v1414, 0.0
        %v3560 = vsel %vm2340, %v1415, 0.0
        %v3561 = vsel %vm2340, %v1416, 0.0
        %v3562 = vsel %vm2340, %v1417, 0.0
        %v3563 = vsel %vm2340, %v1418, 0.0
        %v3564 = vsel %vm2340, %v1419, 0.0
        %v3565 = vsel %vm2340, %v1420, 0.0
        %v3566 = vsel %vm2341, %v1421, 0.0
        %v3567 = vsel %vm2341, %v1422, 0.0
        %v3568 = vsel %vm2341, %v1423, 0.0
        %v3569 = vsel %vm2341, %v1424, 0.0
        %v3570 = vsel %vm2341, %v1425, 0.0
        %v3571 = vsel %vm2341, %v1426, 0.0
        %v3572 = vsel %vm2342, %v1427, 0.0
        %v3573 = vsel %vm2342, %v1428, 0.0
        %v3574 = vsel %vm2342, %v1429, 0.0
        %v3575 = vsel %vm2342, %v1430, 0.0
        %v3576 = vsel %vm2342, %v1431, 0.0
        %v3577 = vsel %vm2342, %v1432, 0.0
        %v3578 = vsel %vm2343, %v1433, 0.0
        %v3579 = vsel %vm2343, %v1434, 0.0
        %v3580 = vsel %vm2343, %v1435, 0.0
        %v3581 = vsel %vm2343, %v1436, 0.0
        %v3582 = vsel %vm2343, %v1437, 0.0
        %v3583 = vsel %vm2343, %v1438, 0.0
        %v3584 = vsel %vm2344, %v1439, 0.0
        %v3585 = vsel %vm2344, %v1440, 0.0
        %v3586 = vsel %vm2344, %v1441, 0.0
        %v3587 = vsel %vm2344, %v1442, 0.0
        %v3588 = vsel %vm2344, %v1443, 0.0
        %v3589 = vsel %vm2344, %v1444, 0.0
        %v3590 = vsel %vm2345, %v1445, 0.0
        %v3591 = vsel %vm2345, %v1446, 0.0
        %v3592 = vsel %vm2345, %v1447, 0.0
        %v3593 = vsel %vm2345, %v1448, 0.0
        %v3594 = vsel %vm2345, %v1449, 0.0
        %v3595 = vsel %vm2345, %v1450, 0.0
        %v3596 = vsel %vm2346, %v1451, 0.0
        %v3597 = vsel %vm2346, %v1452, 0.0
        %v3598 = vsel %vm2346, %v1453, 0.0
        %v3599 = vsel %vm2346, %v1454, 0.0
        %v3600 = vsel %vm2346, %v1455, 0.0
        %v3601 = vsel %vm2346, %v1456, 0.0
        %v3602 = vsel %vm2347, %v1457, 0.0
        %v3603 = vsel %vm2347, %v1458, 0.0
        %v3604 = vsel %vm2347, %v1459, 0.0
        %v3605 = vsel %vm2347, %v1460, 0.0
        %v3606 = vsel %vm2347, %v1461, 0.0
        %v3607 = vsel %vm2347, %v1462, 0.0
        %v3608 = vsel %vm2306, %v1463, 0.0
        %v3609 = vsel %vm2306, %v1464, 0.0
        %v3610 = vsel %vm2306, %v1465, 0.0
        %v3611 = vsel %vm2306, %v1466, 0.0
        %v3612 = vsel %vm2306, %v1467, 0.0
        %v3613 = vsel %vm2306, %v1468, 0.0
        %v3614 = vsel %vm2307, %v1469, 0.0
        %v3615 = vsel %vm2307, %v1470, 0.0
        %v3616 = vsel %vm2307, %v1471, 0.0
        %v3617 = vsel %vm2307, %v1472, 0.0
        %v3618 = vsel %vm2307, %v1473, 0.0
        %v3619 = vsel %vm2307, %v1474, 0.0
        %v3620 = vsel %vm2308, %v1475, 0.0
        %v3621 = vsel %vm2308, %v1476, 0.0
        %v3622 = vsel %vm2308, %v1477, 0.0
        %v3623 = vsel %vm2308, %v1478, 0.0
        %v3624 = vsel %vm2308, %v1479, 0.0
        %v3625 = vsel %vm2308, %v1480, 0.0
        %v3626 = vsel %vm2309, %v1481, 0.0
        %v3627 = vsel %vm2309, %v1482, 0.0
        %v3628 = vsel %vm2309, %v1483, 0.0
        %v3629 = vsel %vm2309, %v1484, 0.0
        %v3630 = vsel %vm2309, %v1485, 0.0
        %v3631 = vsel %vm2309, %v1486, 0.0
        %v3632 = vsel %vm2310, %v1487, 0.0
        %v3633 = vsel %vm2310, %v1488, 0.0
        %v3634 = vsel %vm2310, %v1489, 0.0
        %v3635 = vsel %vm2310, %v1490, 0.0
        %v3636 = vsel %vm2310, %v1491, 0.0
        %v3637 = vsel %vm2310, %v1492, 0.0
        %v3638 = vsel %vm2311, %v1493, 0.0
        %v3639 = vsel %vm2311, %v1494, 0.0
        %v3640 = vsel %vm2311, %v1495, 0.0
        %v3641 = vsel %vm2311, %v1496, 0.0
        %v3642 = vsel %vm2311, %v1497, 0.0
        %v3643 = vsel %vm2311, %v1498, 0.0
        %v3644 = vsel %vm2312, %v1499, 0.0
        %v3645 = vsel %vm2312, %v1500, 0.0
        %v3646 = vsel %vm2312, %v1501, 0.0
        %v3647 = vsel %vm2312, %v1502, 0.0
        %v3648 = vsel %vm2312, %v1503, 0.0
        %v3649 = vsel %vm2312, %v1504, 0.0
        %v3650 = vsel %vm2313, %v1505, 0.0
        %v3651 = vsel %vm2313, %v1506, 0.0
        %v3652 = vsel %vm2313, %v1507, 0.0
        %v3653 = vsel %vm2313, %v1508, 0.0
        %v3654 = vsel %vm2313, %v1509, 0.0
        %v3655 = vsel %vm2313, %v1510, 0.0
        %v3656 = vsel %vm2314, %v1511, 0.0
        %v3657 = vsel %vm2314, %v1512, 0.0
        %v3658 = vsel %vm2314, %v1513, 0.0
        %v3659 = vsel %vm2314, %v1514, 0.0
        %v3660 = vsel %vm2314, %v1515, 0.0
        %v3661 = vsel %vm2314, %v1516, 0.0
        %v3662 = vsel %vm2315, %v1517, 0.0
        %v3663 = vsel %vm2315, %v1518, 0.0
        %v3664 = vsel %vm2315, %v1519, 0.0
        %v3665 = vsel %vm2315, %v1520, 0.0
        %v3666 = vsel %vm2315, %v1521, 0.0
        %v3667 = vsel %vm2315, %v1522, 0.0
        %v3668 = vsel %vm2316, %v1523, 0.0
        %v3669 = vsel %vm2316, %v1524, 0.0
        %v3670 = vsel %vm2316, %v1525, 0.0
        %v3671 = vsel %vm2316, %v1526, 0.0
        %v3672 = vsel %vm2316, %v1527, 0.0
        %v3673 = vsel %vm2316, %v1528, 0.0
        %v3674 = vsel %vm2317, %v1529, 0.0
        %v3675 = vsel %vm2317, %v1530, 0.0
        %v3676 = vsel %vm2317, %v1531, 0.0
        %v3677 = vsel %vm2317, %v1532, 0.0
        %v3678 = vsel %vm2317, %v1533, 0.0
        %v3679 = vsel %vm2317, %v1534, 0.0
        %v3680 = vsel %vm2318, %v1535, 0.0
        %v3681 = vsel %vm2318, %v1536, 0.0
        %v3682 = vsel %vm2318, %v1537, 0.0
        %v3683 = vsel %vm2318, %v1538, 0.0
        %v3684 = vsel %vm2318, %v1539, 0.0
        %v3685 = vsel %vm2318, %v1540, 0.0
        %v3686 = vsel %vm2319, %v1541, 0.0
        %v3687 = vsel %vm2319, %v1542, 0.0
        %v3688 = vsel %vm2319, %v1543, 0.0
        %v3689 = vsel %vm2319, %v1544, 0.0
        %v3690 = vsel %vm2319, %v1545, 0.0
        %v3691 = vsel %vm2319, %v1546, 0.0
        %v3692 = vsel %vm2320, %v1547, 0.0
        %v3693 = vsel %vm2320, %v1548, 0.0
        %v3694 = vsel %vm2320, %v1549, 0.0
        %v3695 = vsel %vm2320, %v1550, 0.0
        %v3696 = vsel %vm2320, %v1551, 0.0
        %v3697 = vsel %vm2320, %v1552, 0.0
        %v3698 = vsel %vm2321, %v1553, 0.0
        %v3699 = vsel %vm2321, %v1554, 0.0
        %v3700 = vsel %vm2321, %v1555, 0.0
        %v3701 = vsel %vm2321, %v1556, 0.0
        %v3702 = vsel %vm2321, %v1557, 0.0
        %v3703 = vsel %vm2321, %v1558, 0.0
        %v3704 = vsel %vm2322, %v1559, 0.0
        %v3705 = vsel %vm2322, %v1560, 0.0
        %v3706 = vsel %vm2322, %v1561, 0.0
        %v3707 = vsel %vm2322, %v1562, 0.0
        %v3708 = vsel %vm2322, %v1563, 0.0
        %v3709 = vsel %vm2322, %v1564, 0.0
        %v3710 = vsel %vm2323, %v1565, 0.0
        %v3711 = vsel %vm2323, %v1566, 0.0
        %v3712 = vsel %vm2323, %v1567, 0.0
        %v3713 = vsel %vm2323, %v1568, 0.0
        %v3714 = vsel %vm2323, %v1569, 0.0
        %v3715 = vsel %vm2323, %v1570, 0.0
        %v3716 = vsel %vm2324, %v1571, 0.0
        %v3717 = vsel %vm2324, %v1572, 0.0
        %v3718 = vsel %vm2324, %v1573, 0.0
        %v3719 = vsel %vm2324, %v1574, 0.0
        %v3720 = vsel %vm2324, %v1575, 0.0
        %v3721 = vsel %vm2324, %v1576, 0.0
        %v3722 = vsel %vm2325, %v1577, 0.0
        %v3723 = vsel %vm2325, %v1578, 0.0
        %v3724 = vsel %vm2325, %v1579, 0.0
        %v3725 = vsel %vm2325, %v1580, 0.0
        %v3726 = vsel %vm2325, %v1581, 0.0
        %v3727 = vsel %vm2325, %v1582, 0.0
        %v3728 = vsel %vm2326, %v1583, 0.0
        %v3729 = vsel %vm2326, %v1584, 0.0
        %v3730 = vsel %vm2326, %v1585, 0.0
        %v3731 = vsel %vm2326, %v1586, 0.0
        %v3732 = vsel %vm2326, %v1587, 0.0
        %v3733 = vsel %vm2326, %v1588, 0.0
        %v3734 = vsel %vm2327, %v1589, 0.0
        %v3735 = vsel %vm2327, %v1590, 0.0
        %v3736 = vsel %vm2327, %v1591, 0.0
        %v3737 = vsel %vm2327, %v1592, 0.0
        %v3738 = vsel %vm2327, %v1593, 0.0
        %v3739 = vsel %vm2327, %v1594, 0.0
        %v3740 = vsel %vm2328, %v1595, 0.0
        %v3741 = vsel %vm2328, %v1596, 0.0
        %v3742 = vsel %vm2328, %v1597, 0.0
        %v3743 = vsel %vm2328, %v1598, 0.0
        %v3744 = vsel %vm2328, %v1599, 0.0
        %v3745 = vsel %vm2328, %v1600, 0.0
        %v3746 = vsel %vm2329, %v1601, 0.0
        %v3747 = vsel %vm2329, %v1602, 0.0
        %v3748 = vsel %vm2329, %v1603, 0.0
        %v3749 = vsel %vm2329, %v1604, 0.0
        %v3750 = vsel %vm2329, %v1605, 0.0
        %v3751 = vsel %vm2329, %v1606, 0.0
        %v3752 = vsel %vm2330, %v1607, 0.0
        %v3753 = vsel %vm2330, %v1608, 0.0
        %v3754 = vsel %vm2330, %v1609, 0.0
        %v3755 = vsel %vm2330, %v1610, 0.0
        %v3756 = vsel %vm2330, %v1611, 0.0
        %v3757 = vsel %vm2330, %v1612, 0.0
        %v3758 = vsel %vm2331, %v1613, 0.0
        %v3759 = vsel %vm2331, %v1614, 0.0
        %v3760 = vsel %vm2331, %v1615, 0.0
        %v3761 = vsel %vm2331, %v1616, 0.0
        %v3762 = vsel %vm2331, %v1617, 0.0
        %v3763 = vsel %vm2331, %v1618, 0.0
        %v3764 = vsel %vm2332, %v1619, 0.0
        %v3765 = vsel %vm2332, %v1620, 0.0
        %v3766 = vsel %vm2332, %v1621, 0.0
        %v3767 = vsel %vm2332, %v1622, 0.0
        %v3768 = vsel %vm2332, %v1623, 0.0
        %v3769 = vsel %vm2332, %v1624, 0.0
        %v3770 = vsel %vm2333, %v1625, 0.0
        %v3771 = vsel %vm2333, %v1626, 0.0
        %v3772 = vsel %vm2333, %v1627, 0.0
        %v3773 = vsel %vm2333, %v1628, 0.0
        %v3774 = vsel %vm2333, %v1629, 0.0
        %v3775 = vsel %vm2333, %v1630, 0.0
        %v3776 = vsel %vm2334, %v1631, 0.0
        %v3777 = vsel %vm2334, %v1632, 0.0
        %v3778 = vsel %vm2334, %v1633, 0.0
        %v3779 = vsel %vm2334, %v1634, 0.0
        %v3780 = vsel %vm2334, %v1635, 0.0
        %v3781 = vsel %vm2334, %v1636, 0.0
        %v3782 = vsel %vm2335, %v1637, 0.0
        %v3783 = vsel %vm2335, %v1638, 0.0
        %v3784 = vsel %vm2335, %v1639, 0.0
        %v3785 = vsel %vm2335, %v1640, 0.0
        %v3786 = vsel %vm2335, %v1641, 0.0
        %v3787 = vsel %vm2335, %v1642, 0.0
        %v3788 = vsel %vm2336, %v1643, 0.0
        %v3789 = vsel %vm2336, %v1644, 0.0
        %v3790 = vsel %vm2336, %v1645, 0.0
        %v3791 = vsel %vm2336, %v1646, 0.0
        %v3792 = vsel %vm2336, %v1647, 0.0
        %v3793 = vsel %vm2336, %v1648, 0.0
        %v3794 = vsel %vm2337, %v1649, 0.0
        %v3795 = vsel %vm2337, %v1650, 0.0
        %v3796 = vsel %vm2337, %v1651, 0.0
        %v3797 = vsel %vm2337, %v1652, 0.0
        %v3798 = vsel %vm2337, %v1653, 0.0
        %v3799 = vsel %vm2337, %v1654, 0.0
        %v3800 = vsel %vm2338, %v1655, 0.0
        %v3801 = vsel %vm2338, %v1656, 0.0
        %v3802 = vsel %vm2338, %v1657, 0.0
        %v3803 = vsel %vm2338, %v1658, 0.0
        %v3804 = vsel %vm2338, %v1659, 0.0
        %v3805 = vsel %vm2338, %v1660, 0.0
        %v3806 = vsel %vm2339, %v1661, 0.0
        %v3807 = vsel %vm2339, %v1662, 0.0
        %v3808 = vsel %vm2339, %v1663, 0.0
        %v3809 = vsel %vm2339, %v1664, 0.0
        %v3810 = vsel %vm2339, %v1665, 0.0
        %v3811 = vsel %vm2339, %v1666, 0.0
        %v3812 = vsel %vm2340, %v1667, 0.0
        %v3813 = vsel %vm2340, %v1668, 0.0
        %v3814 = vsel %vm2340, %v1669, 0.0
        %v3815 = vsel %vm2340, %v1670, 0.0
        %v3816 = vsel %vm2340, %v1671, 0.0
        %v3817 = vsel %vm2340, %v1672, 0.0
        %v3818 = vsel %vm2341, %v1673, 0.0
        %v3819 = vsel %vm2341, %v1674, 0.0
        %v3820 = vsel %vm2341, %v1675, 0.0
        %v3821 = vsel %vm2341, %v1676, 0.0
        %v3822 = vsel %vm2341, %v1677, 0.0
        %v3823 = vsel %vm2341, %v1678, 0.0
        %v3824 = vsel %vm2342, %v1679, 0.0
        %v3825 = vsel %vm2342, %v1680, 0.0
        %v3826 = vsel %vm2342, %v1681, 0.0
        %v3827 = vsel %vm2342, %v1682, 0.0
        %v3828 = vsel %vm2342, %v1683, 0.0
        %v3829 = vsel %vm2342, %v1684, 0.0
        %v3830 = vsel %vm2343, %v1685, 0.0
        %v3831 = vsel %vm2343, %v1686, 0.0
        %v3832 = vsel %vm2343, %v1687, 0.0
        %v3833 = vsel %vm2343, %v1688, 0.0
        %v3834 = vsel %vm2343, %v1689, 0.0
        %v3835 = vsel %vm2343, %v1690, 0.0
        %v3836 = vsel %vm2344, %v1691, 0.0
        %v3837 = vsel %vm2344, %v1692, 0.0
        %v3838 = vsel %vm2344, %v1693, 0.0
        %v3839 = vsel %vm2344, %v1694, 0.0
        %v3840 = vsel %vm2344, %v1695, 0.0
        %v3841 = vsel %vm2344, %v1696, 0.0
        %v3842 = vsel %vm2345, %v1697, 0.0
        %v3843 = vsel %vm2345, %v1698, 0.0
        %v3844 = vsel %vm2345, %v1699, 0.0
        %v3845 = vsel %vm2345, %v1700, 0.0
        %v3846 = vsel %vm2345, %v1701, 0.0
        %v3847 = vsel %vm2345, %v1702, 0.0
        %v3848 = vsel %vm2346, %v1703, 0.0
        %v3849 = vsel %vm2346, %v1704, 0.0
        %v3850 = vsel %vm2346, %v1705, 0.0
        %v3851 = vsel %vm2346, %v1706, 0.0
        %v3852 = vsel %vm2346, %v1707, 0.0
        %v3853 = vsel %vm2346, %v1708, 0.0
        %v3854 = vsel %vm2347, %v1709, 0.0
        %v3855 = vsel %vm2347, %v1710, 0.0
        %v3856 = vsel %vm2347, %v1711, 0.0
        %v3857 = vsel %vm2347, %v1712, 0.0
        %v3858 = vsel %vm2347, %v1713, 0.0
        %v3859 = vsel %vm2347, %v1714, 0.0
        %v3860 = vsel %vm2306, %v1715, 0.0
        %v3861 = vsel %vm2306, %v1716, 0.0
        %v3862 = vsel %vm2306, %v1717, 0.0
        %v3863 = vsel %vm2306, %v1718, 0.0
        %v3864 = vsel %vm2306, %v1719, 0.0
        %v3865 = vsel %vm2306, %v1720, 0.0
        %v3866 = vsel %vm2307, %v1721, 0.0
        %v3867 = vsel %vm2307, %v1722, 0.0
        %v3868 = vsel %vm2307, %v1723, 0.0
        %v3869 = vsel %vm2307, %v1724, 0.0
        %v3870 = vsel %vm2307, %v1725, 0.0
        %v3871 = vsel %vm2307, %v1726, 0.0
        %v3872 = vsel %vm2308, %v1727, 0.0
        %v3873 = vsel %vm2308, %v1728, 0.0
        %v3874 = vsel %vm2308, %v1729, 0.0
        %v3875 = vsel %vm2308, %v1730, 0.0
        %v3876 = vsel %vm2308, %v1731, 0.0
        %v3877 = vsel %vm2308, %v1732, 0.0
        %v3878 = vsel %vm2309, %v1733, 0.0
        %v3879 = vsel %vm2309, %v1734, 0.0
        %v3880 = vsel %vm2309, %v1735, 0.0
        %v3881 = vsel %vm2309, %v1736, 0.0
        %v3882 = vsel %vm2309, %v1737, 0.0
        %v3883 = vsel %vm2309, %v1738, 0.0
        %v3884 = vsel %vm2310, %v1739, 0.0
        %v3885 = vsel %vm2310, %v1740, 0.0
        %v3886 = vsel %vm2310, %v1741, 0.0
        %v3887 = vsel %vm2310, %v1742, 0.0
        %v3888 = vsel %vm2310, %v1743, 0.0
        %v3889 = vsel %vm2310, %v1744, 0.0
        %v3890 = vsel %vm2311, %v1745, 0.0
        %v3891 = vsel %vm2311, %v1746, 0.0
        %v3892 = vsel %vm2311, %v1747, 0.0
        %v3893 = vsel %vm2311, %v1748, 0.0
        %v3894 = vsel %vm2311, %v1749, 0.0
        %v3895 = vsel %vm2311, %v1750, 0.0
        %v3896 = vsel %vm2312, %v1751, 0.0
        %v3897 = vsel %vm2312, %v1752, 0.0
        %v3898 = vsel %vm2312, %v1753, 0.0
        %v3899 = vsel %vm2312, %v1754, 0.0
        %v3900 = vsel %vm2312, %v1755, 0.0
        %v3901 = vsel %vm2312, %v1756, 0.0
        %v3902 = vsel %vm2313, %v1757, 0.0
        %v3903 = vsel %vm2313, %v1758, 0.0
        %v3904 = vsel %vm2313, %v1759, 0.0
        %v3905 = vsel %vm2313, %v1760, 0.0
        %v3906 = vsel %vm2313, %v1761, 0.0
        %v3907 = vsel %vm2313, %v1762, 0.0
        %v3908 = vsel %vm2314, %v1763, 0.0
        %v3909 = vsel %vm2314, %v1764, 0.0
        %v3910 = vsel %vm2314, %v1765, 0.0
        %v3911 = vsel %vm2314, %v1766, 0.0
        %v3912 = vsel %vm2314, %v1767, 0.0
        %v3913 = vsel %vm2314, %v1768, 0.0
        %v3914 = vsel %vm2315, %v1769, 0.0
        %v3915 = vsel %vm2315, %v1770, 0.0
        %v3916 = vsel %vm2315, %v1771, 0.0
        %v3917 = vsel %vm2315, %v1772, 0.0
        %v3918 = vsel %vm2315, %v1773, 0.0
        %v3919 = vsel %vm2315, %v1774, 0.0
        %v3920 = vsel %vm2316, %v1775, 0.0
        %v3921 = vsel %vm2316, %v1776, 0.0
        %v3922 = vsel %vm2316, %v1777, 0.0
        %v3923 = vsel %vm2316, %v1778, 0.0
        %v3924 = vsel %vm2316, %v1779, 0.0
        %v3925 = vsel %vm2316, %v1780, 0.0
        %v3926 = vsel %vm2317, %v1781, 0.0
        %v3927 = vsel %vm2317, %v1782, 0.0
        %v3928 = vsel %vm2317, %v1783, 0.0
        %v3929 = vsel %vm2317, %v1784, 0.0
        %v3930 = vsel %vm2317, %v1785, 0.0
        %v3931 = vsel %vm2317, %v1786, 0.0
        %v3932 = vsel %vm2318, %v1787, 0.0
        %v3933 = vsel %vm2318, %v1788, 0.0
        %v3934 = vsel %vm2318, %v1789, 0.0
        %v3935 = vsel %vm2318, %v1790, 0.0
        %v3936 = vsel %vm2318, %v1791, 0.0
        %v3937 = vsel %vm2318, %v1792, 0.0
        %v3938 = vsel %vm2319, %v1793, 0.0
        %v3939 = vsel %vm2319, %v1794, 0.0
        %v3940 = vsel %vm2319, %v1795, 0.0
        %v3941 = vsel %vm2319, %v1796, 0.0
        %v3942 = vsel %vm2319, %v1797, 0.0
        %v3943 = vsel %vm2319, %v1798, 0.0
        %v3944 = vsel %vm2320, %v1799, 0.0
        %v3945 = vsel %vm2320, %v1800, 0.0
        %v3946 = vsel %vm2320, %v1801, 0.0
        %v3947 = vsel %vm2320, %v1802, 0.0
        %v3948 = vsel %vm2320, %v1803, 0.0
        %v3949 = vsel %vm2320, %v1804, 0.0
        %v3950 = vsel %vm2321, %v1805, 0.0
        %v3951 = vsel %vm2321, %v1806, 0.0
        %v3952 = vsel %vm2321, %v1807, 0.0
        %v3953 = vsel %vm2321, %v1808, 0.0
        %v3954 = vsel %vm2321, %v1809, 0.0
        %v3955 = vsel %vm2321, %v1810, 0.0
        %v3956 = vsel %vm2322, %v1811, 0.0
        %v3957 = vsel %vm2322, %v1812, 0.0
        %v3958 = vsel %vm2322, %v1813, 0.0
        %v3959 = vsel %vm2322, %v1814, 0.0
        %v3960 = vsel %vm2322, %v1815, 0.0
        %v3961 = vsel %vm2322, %v1816, 0.0
        %v3962 = vsel %vm2323, %v1817, 0.0
        %v3963 = vsel %vm2323, %v1818, 0.0
        %v3964 = vsel %vm2323, %v1819, 0.0
        %v3965 = vsel %vm2323, %v1820, 0.0
        %v3966 = vsel %vm2323, %v1821, 0.0
        %v3967 = vsel %vm2323, %v1822, 0.0
        %v3968 = vsel %vm2324, %v1823, 0.0
        %v3969 = vsel %vm2324, %v1824, 0.0
        %v3970 = vsel %vm2324, %v1825, 0.0
        %v3971 = vsel %vm2324, %v1826, 0.0
        %v3972 = vsel %vm2324, %v1827, 0.0
        %v3973 = vsel %vm2324, %v1828, 0.0
        %v3974 = vsel %vm2325, %v1829, 0.0
        %v3975 = vsel %vm2325, %v1830, 0.0
        %v3976 = vsel %vm2325, %v1831, 0.0
        %v3977 = vsel %vm2325, %v1832, 0.0
        %v3978 = vsel %vm2325, %v1833, 0.0
        %v3979 = vsel %vm2325, %v1834, 0.0
        %v3980 = vsel %vm2326, %v1835, 0.0
        %v3981 = vsel %vm2326, %v1836, 0.0
        %v3982 = vsel %vm2326, %v1837, 0.0
        %v3983 = vsel %vm2326, %v1838, 0.0
        %v3984 = vsel %vm2326, %v1839, 0.0
        %v3985 = vsel %vm2326, %v1840, 0.0
        %v3986 = vsel %vm2327, %v1841, 0.0
        %v3987 = vsel %vm2327, %v1842, 0.0
        %v3988 = vsel %vm2327, %v1843, 0.0
        %v3989 = vsel %vm2327, %v1844, 0.0
        %v3990 = vsel %vm2327, %v1845, 0.0
        %v3991 = vsel %vm2327, %v1846, 0.0
        %v3992 = vsel %vm2328, %v1847, 0.0
        %v3993 = vsel %vm2328, %v1848, 0.0
        %v3994 = vsel %vm2328, %v1849, 0.0
        %v3995 = vsel %vm2328, %v1850, 0.0
        %v3996 = vsel %vm2328, %v1851, 0.0
        %v3997 = vsel %vm2328, %v1852, 0.0
        %v3998 = vsel %vm2329, %v1853, 0.0
        %v3999 = vsel %vm2329, %v1854, 0.0
        %v4000 = vsel %vm2329, %v1855, 0.0
        %v4001 = vsel %vm2329, %v1856, 0.0
        %v4002 = vsel %vm2329, %v1857, 0.0
        %v4003 = vsel %vm2329, %v1858, 0.0
        %v4004 = vsel %vm2330, %v1859, 0.0
        %v4005 = vsel %vm2330, %v1860, 0.0
        %v4006 = vsel %vm2330, %v1861, 0.0
        %v4007 = vsel %vm2330, %v1862, 0.0
        %v4008 = vsel %vm2330, %v1863, 0.0
        %v4009 = vsel %vm2330, %v1864, 0.0
        %v4010 = vsel %vm2331, %v1865, 0.0
        %v4011 = vsel %vm2331, %v1866, 0.0
        %v4012 = vsel %vm2331, %v1867, 0.0
        %v4013 = vsel %vm2331, %v1868, 0.0
        %v4014 = vsel %vm2331, %v1869, 0.0
        %v4015 = vsel %vm2331, %v1870, 0.0
        %v4016 = vsel %vm2332, %v1871, 0.0
        %v4017 = vsel %vm2332, %v1872, 0.0
        %v4018 = vsel %vm2332, %v1873, 0.0
        %v4019 = vsel %vm2332, %v1874, 0.0
        %v4020 = vsel %vm2332, %v1875, 0.0
        %v4021 = vsel %vm2332, %v1876, 0.0
        %v4022 = vsel %vm2333, %v1877, 0.0
        %v4023 = vsel %vm2333, %v1878, 0.0
        %v4024 = vsel %vm2333, %v1879, 0.0
        %v4025 = vsel %vm2333, %v1880, 0.0
        %v4026 = vsel %vm2333, %v1881, 0.0
        %v4027 = vsel %vm2333, %v1882, 0.0
        %v4028 = vsel %vm2334, %v1883, 0.0
        %v4029 = vsel %vm2334, %v1884, 0.0
        %v4030 = vsel %vm2334, %v1885, 0.0
        %v4031 = vsel %vm2334, %v1886, 0.0
        %v4032 = vsel %vm2334, %v1887, 0.0
        %v4033 = vsel %vm2334, %v1888, 0.0
        %v4034 = vsel %vm2335, %v1889, 0.0
        %v4035 = vsel %vm2335, %v1890, 0.0
        %v4036 = vsel %vm2335, %v1891, 0.0
        %v4037 = vsel %vm2335, %v1892, 0.0
        %v4038 = vsel %vm2335, %v1893, 0.0
        %v4039 = vsel %vm2335, %v1894, 0.0
        %v4040 = vsel %vm2336, %v1895, 0.0
        %v4041 = vsel %vm2336, %v1896, 0.0
        %v4042 = vsel %vm2336, %v1897, 0.0
        %v4043 = vsel %vm2336, %v1898, 0.0
        %v4044 = vsel %vm2336, %v1899, 0.0
        %v4045 = vsel %vm2336, %v1900, 0.0
        %v4046 = vsel %vm2337, %v1901, 0.0
        %v4047 = vsel %vm2337, %v1902, 0.0
        %v4048 = vsel %vm2337, %v1903, 0.0
        %v4049 = vsel %vm2337, %v1904, 0.0
        %v4050 = vsel %vm2337, %v1905, 0.0
        %v4051 = vsel %vm2337, %v1906, 0.0
        %v4052 = vsel %vm2338, %v1907, 0.0
        %v4053 = vsel %vm2338, %v1908, 0.0
        %v4054 = vsel %vm2338, %v1909, 0.0
        %v4055 = vsel %vm2338, %v1910, 0.0
        %v4056 = vsel %vm2338, %v1911, 0.0
        %v4057 = vsel %vm2338, %v1912, 0.0
        %v4058 = vsel %vm2339, %v1913, 0.0
        %v4059 = vsel %vm2339, %v1914, 0.0
        %v4060 = vsel %vm2339, %v1915, 0.0
        %v4061 = vsel %vm2339, %v1916, 0.0
        %v4062 = vsel %vm2339, %v1917, 0.0
        %v4063 = vsel %vm2339, %v1918, 0.0
        %v4064 = vsel %vm2340, %v1919, 0.0
        %v4065 = vsel %vm2340, %v1920, 0.0
        %v4066 = vsel %vm2340, %v1921, 0.0
        %v4067 = vsel %vm2340, %v1922, 0.0
        %v4068 = vsel %vm2340, %v1923, 0.0
        %v4069 = vsel %vm2340, %v1924, 0.0
        %v4070 = vsel %vm2341, %v1925, 0.0
        %v4071 = vsel %vm2341, %v1926, 0.0
        %v4072 = vsel %vm2341, %v1927, 0.0
        %v4073 = vsel %vm2341, %v1928, 0.0
        %v4074 = vsel %vm2341, %v1929, 0.0
        %v4075 = vsel %vm2341, %v1930, 0.0
        %v4076 = vsel %vm2342, %v1931, 0.0
        %v4077 = vsel %vm2342, %v1932, 0.0
        %v4078 = vsel %vm2342, %v1933, 0.0
        %v4079 = vsel %vm2342, %v1934, 0.0
        %v4080 = vsel %vm2342, %v1935, 0.0
        %v4081 = vsel %vm2342, %v1936, 0.0
        %v4082 = vsel %vm2343, %v1937, 0.0
        %v4083 = vsel %vm2343, %v1938, 0.0
        %v4084 = vsel %vm2343, %v1939, 0.0
        %v4085 = vsel %vm2343, %v1940, 0.0
        %v4086 = vsel %vm2343, %v1941, 0.0
        %v4087 = vsel %vm2343, %v1942, 0.0
        %v4088 = vsel %vm2344, %v1943, 0.0
        %v4089 = vsel %vm2344, %v1944, 0.0
        %v4090 = vsel %vm2344, %v1945, 0.0
        %v4091 = vsel %vm2344, %v1946, 0.0
        %v4092 = vsel %vm2344, %v1947, 0.0
        %v4093 = vsel %vm2344, %v1948, 0.0
        %v4094 = vsel %vm2345, %v1949, 0.0
        %v4095 = vsel %vm2345, %v1950, 0.0
        %v4096 = vsel %vm2345, %v1951, 0.0
        %v4097 = vsel %vm2345, %v1952, 0.0
        %v4098 = vsel %vm2345, %v1953, 0.0
        %v4099 = vsel %vm2345, %v1954, 0.0
        %v4100 = vsel %vm2346, %v1955, 0.0
        %v4101 = vsel %vm2346, %v1956, 0.0
        %v4102 = vsel %vm2346, %v1957, 0.0
        %v4103 = vsel %vm2346, %v1958, 0.0
        %v4104 = vsel %vm2346, %v1959, 0.0
        %v4105 = vsel %vm2346, %v1960, 0.0
        %v4106 = vsel %vm2347, %v1961, 0.0
        %v4107 = vsel %vm2347, %v1962, 0.0
        %v4108 = vsel %vm2347, %v1963, 0.0
        %v4109 = vsel %vm2347, %v1964, 0.0
        %v4110 = vsel %vm2347, %v1965, 0.0
        %v4111 = vsel %vm2347, %v1966, 0.0
        %v4112 = vsel %vm2306, %v1967, 0.0
        %v4113 = vsel %vm2306, %v1968, 0.0
        %v4114 = vsel %vm2306, %v1969, 0.0
        %v4115 = vsel %vm2306, %v1970, 0.0
        %v4116 = vsel %vm2306, %v1971, 0.0
        %v4117 = vsel %vm2306, %v1972, 0.0
        %v4118 = vsel %vm2307, %v1973, 0.0
        %v4119 = vsel %vm2307, %v1974, 0.0
        %v4120 = vsel %vm2307, %v1975, 0.0
        %v4121 = vsel %vm2307, %v1976, 0.0
        %v4122 = vsel %vm2307, %v1977, 0.0
        %v4123 = vsel %vm2307, %v1978, 0.0
        %v4124 = vsel %vm2308, %v1979, 0.0
        %v4125 = vsel %vm2308, %v1980, 0.0
        %v4126 = vsel %vm2308, %v1981, 0.0
        %v4127 = vsel %vm2308, %v1982, 0.0
        %v4128 = vsel %vm2308, %v1983, 0.0
        %v4129 = vsel %vm2308, %v1984, 0.0
        %v4130 = vsel %vm2309, %v1985, 0.0
        %v4131 = vsel %vm2309, %v1986, 0.0
        %v4132 = vsel %vm2309, %v1987, 0.0
        %v4133 = vsel %vm2309, %v1988, 0.0
        %v4134 = vsel %vm2309, %v1989, 0.0
        %v4135 = vsel %vm2309, %v1990, 0.0
        %v4136 = vsel %vm2310, %v1991, 0.0
        %v4137 = vsel %vm2310, %v1992, 0.0
        %v4138 = vsel %vm2310, %v1993, 0.0
        %v4139 = vsel %vm2310, %v1994, 0.0
        %v4140 = vsel %vm2310, %v1995, 0.0
        %v4141 = vsel %vm2310, %v1996, 0.0
        %v4142 = vsel %vm2311, %v1997, 0.0
        %v4143 = vsel %vm2311, %v1998, 0.0
        %v4144 = vsel %vm2311, %v1999, 0.0
        %v4145 = vsel %vm2311, %v2000, 0.0
        %v4146 = vsel %vm2311, %v2001, 0.0
        %v4147 = vsel %vm2311, %v2002, 0.0
        %v4148 = vsel %vm2312, %v2003, 0.0
        %v4149 = vsel %vm2312, %v2004, 0.0
        %v4150 = vsel %vm2312, %v2005, 0.0
        %v4151 = vsel %vm2312, %v2006, 0.0
        %v4152 = vsel %vm2312, %v2007, 0.0
        %v4153 = vsel %vm2312, %v2008, 0.0
        %v4154 = vsel %vm2313, %v2009, 0.0
        %v4155 = vsel %vm2313, %v2010, 0.0
        %v4156 = vsel %vm2313, %v2011, 0.0
        %v4157 = vsel %vm2313, %v2012, 0.0
        %v4158 = vsel %vm2313, %v2013, 0.0
        %v4159 = vsel %vm2313, %v2014, 0.0
        %v4160 = vsel %vm2314, %v2015, 0.0
        %v4161 = vsel %vm2314, %v2016, 0.0
        %v4162 = vsel %vm2314, %v2017, 0.0
        %v4163 = vsel %vm2314, %v2018, 0.0
        %v4164 = vsel %vm2314, %v2019, 0.0
        %v4165 = vsel %vm2314, %v2020, 0.0
        %v4166 = vsel %vm2315, %v2021, 0.0
        %v4167 = vsel %vm2315, %v2022, 0.0
        %v4168 = vsel %vm2315, %v2023, 0.0
        %v4169 = vsel %vm2315, %v2024, 0.0
        %v4170 = vsel %vm2315, %v2025, 0.0
        %v4171 = vsel %vm2315, %v2026, 0.0
        %v4172 = vsel %vm2316, %v2027, 0.0
        %v4173 = vsel %vm2316, %v2028, 0.0
        %v4174 = vsel %vm2316, %v2029, 0.0
        %v4175 = vsel %vm2316, %v2030, 0.0
        %v4176 = vsel %vm2316, %v2031, 0.0
        %v4177 = vsel %vm2316, %v2032, 0.0
        %v4178 = vsel %vm2317, %v2033, 0.0
        %v4179 = vsel %vm2317, %v2034, 0.0
        %v4180 = vsel %vm2317, %v2035, 0.0
        %v4181 = vsel %vm2317, %v2036, 0.0
        %v4182 = vsel %vm2317, %v2037, 0.0
        %v4183 = vsel %vm2317, %v2038, 0.0
        %v4184 = vsel %vm2318, %v2039, 0.0
        %v4185 = vsel %vm2318, %v2040, 0.0
        %v4186 = vsel %vm2318, %v2041, 0.0
        %v4187 = vsel %vm2318, %v2042, 0.0
        %v4188 = vsel %vm2318, %v2043, 0.0
        %v4189 = vsel %vm2318, %v2044, 0.0
        %v4190 = vsel %vm2319, %v2045, 0.0
        %v4191 = vsel %vm2319, %v2046, 0.0
        %v4192 = vsel %vm2319, %v2047, 0.0
        %v4193 = vsel %vm2319, %v2048, 0.0
        %v4194 = vsel %vm2319, %v2049, 0.0
        %v4195 = vsel %vm2319, %v2050, 0.0
        %v4196 = vsel %vm2320, %v2051, 0.0
        %v4197 = vsel %vm2320, %v2052, 0.0
        %v4198 = vsel %vm2320, %v2053, 0.0
        %v4199 = vsel %vm2320, %v2054, 0.0
        %v4200 = vsel %vm2320, %v2055, 0.0
        %v4201 = vsel %vm2320, %v2056, 0.0
        %v4202 = vsel %vm2321, %v2057, 0.0
        %v4203 = vsel %vm2321, %v2058, 0.0
        %v4204 = vsel %vm2321, %v2059, 0.0
        %v4205 = vsel %vm2321, %v2060, 0.0
        %v4206 = vsel %vm2321, %v2061, 0.0
        %v4207 = vsel %vm2321, %v2062, 0.0
        %v4208 = vsel %vm2322, %v2063, 0.0
        %v4209 = vsel %vm2322, %v2064, 0.0
        %v4210 = vsel %vm2322, %v2065, 0.0
        %v4211 = vsel %vm2322, %v2066, 0.0
        %v4212 = vsel %vm2322, %v2067, 0.0
        %v4213 = vsel %vm2322, %v2068, 0.0
        %v4214 = vsel %vm2323, %v2069, 0.0
        %v4215 = vsel %vm2323, %v2070, 0.0
        %v4216 = vsel %vm2323, %v2071, 0.0
        %v4217 = vsel %vm2323, %v2072, 0.0
        %v4218 = vsel %vm2323, %v2073, 0.0
        %v4219 = vsel %vm2323, %v2074, 0.0
        %v4220 = vsel %vm2324, %v2075, 0.0
        %v4221 = vsel %vm2324, %v2076, 0.0
        %v4222 = vsel %vm2324, %v2077, 0.0
        %v4223 = vsel %vm2324, %v2078, 0.0
        %v4224 = vsel %vm2324, %v2079, 0.0
        %v4225 = vsel %vm2324, %v2080, 0.0
        %v4226 = vsel %vm2325, %v2081, 0.0
        %v4227 = vsel %vm2325, %v2082, 0.0
        %v4228 = vsel %vm2325, %v2083, 0.0
        %v4229 = vsel %vm2325, %v2084, 0.0
        %v4230 = vsel %vm2325, %v2085, 0.0
        %v4231 = vsel %vm2325, %v2086, 0.0
        %v4232 = vsel %vm2326, %v2087, 0.0
        %v4233 = vsel %vm2326, %v2088, 0.0
        %v4234 = vsel %vm2326, %v2089, 0.0
        %v4235 = vsel %vm2326, %v2090, 0.0
        %v4236 = vsel %vm2326, %v2091, 0.0
        %v4237 = vsel %vm2326, %v2092, 0.0
        %v4238 = vsel %vm2327, %v2093, 0.0
        %v4239 = vsel %vm2327, %v2094, 0.0
        %v4240 = vsel %vm2327, %v2095, 0.0
        %v4241 = vsel %vm2327, %v2096, 0.0
        %v4242 = vsel %vm2327, %v2097, 0.0
        %v4243 = vsel %vm2327, %v2098, 0.0
        %v4244 = vsel %vm2328, %v2099, 0.0
        %v4245 = vsel %vm2328, %v2100, 0.0
        %v4246 = vsel %vm2328, %v2101, 0.0
        %v4247 = vsel %vm2328, %v2102, 0.0
        %v4248 = vsel %vm2328, %v2103, 0.0
        %v4249 = vsel %vm2328, %v2104, 0.0
        %v4250 = vsel %vm2329, %v2105, 0.0
        %v4251 = vsel %vm2329, %v2106, 0.0
        %v4252 = vsel %vm2329, %v2107, 0.0
        %v4253 = vsel %vm2329, %v2108, 0.0
        %v4254 = vsel %vm2329, %v2109, 0.0
        %v4255 = vsel %vm2329, %v2110, 0.0
        %v4256 = vsel %vm2330, %v2111, 0.0
        %v4257 = vsel %vm2330, %v2112, 0.0
        %v4258 = vsel %vm2330, %v2113, 0.0
        %v4259 = vsel %vm2330, %v2114, 0.0
        %v4260 = vsel %vm2330, %v2115, 0.0
        %v4261 = vsel %vm2330, %v2116, 0.0
        %v4262 = vsel %vm2331, %v2117, 0.0
        %v4263 = vsel %vm2331, %v2118, 0.0
        %v4264 = vsel %vm2331, %v2119, 0.0
        %v4265 = vsel %vm2331, %v2120, 0.0
        %v4266 = vsel %vm2331, %v2121, 0.0
        %v4267 = vsel %vm2331, %v2122, 0.0
        %v4268 = vsel %vm2332, %v2123, 0.0
        %v4269 = vsel %vm2332, %v2124, 0.0
        %v4270 = vsel %vm2332, %v2125, 0.0
        %v4271 = vsel %vm2332, %v2126, 0.0
        %v4272 = vsel %vm2332, %v2127, 0.0
        %v4273 = vsel %vm2332, %v2128, 0.0
        %v4274 = vsel %vm2333, %v2129, 0.0
        %v4275 = vsel %vm2333, %v2130, 0.0
        %v4276 = vsel %vm2333, %v2131, 0.0
        %v4277 = vsel %vm2333, %v2132, 0.0
        %v4278 = vsel %vm2333, %v2133, 0.0
        %v4279 = vsel %vm2333, %v2134, 0.0
        %v4280 = vsel %vm2334, %v2135, 0.0
        %v4281 = vsel %vm2334, %v2136, 0.0
        %v4282 = vsel %vm2334, %v2137, 0.0
        %v4283 = vsel %vm2334, %v2138, 0.0
        %v4284 = vsel %vm2334, %v2139, 0.0
        %v4285 = vsel %vm2334, %v2140, 0.0
        %v4286 = vsel %vm2335, %v2141, 0.0
        %v4287 = vsel %vm2335, %v2142, 0.0
        %v4288 = vsel %vm2335, %v2143, 0.0
        %v4289 = vsel %vm2335, %v2144, 0.0
        %v4290 = vsel %vm2335, %v2145, 0.0
        %v4291 = vsel %vm2335, %v2146, 0.0
        %v4292 = vsel %vm2336, %v2147, 0.0
        %v4293 = vsel %vm2336, %v2148, 0.0
        %v4294 = vsel %vm2336, %v2149, 0.0
        %v4295 = vsel %vm2336, %v2150, 0.0
        %v4296 = vsel %vm2336, %v2151, 0.0
        %v4297 = vsel %vm2336, %v2152, 0.0
        %v4298 = vsel %vm2337, %v2153, 0.0
        %v4299 = vsel %vm2337, %v2154, 0.0
        %v4300 = vsel %vm2337, %v2155, 0.0
        %v4301 = vsel %vm2337, %v2156, 0.0
        %v4302 = vsel %vm2337, %v2157, 0.0
        %v4303 = vsel %vm2337, %v2158, 0.0
        %v4304 = vsel %vm2338, %v2159, 0.0
        %v4305 = vsel %vm2338, %v2160, 0.0
        %v4306 = vsel %vm2338, %v2161, 0.0
        %v4307 = vsel %vm2338, %v2162, 0.0
        %v4308 = vsel %vm2338, %v2163, 0.0
        %v4309 = vsel %vm2338, %v2164, 0.0
        %v4310 = vsel %vm2339, %v2165, 0.0
        %v4311 = vsel %vm2339, %v2166, 0.0
        %v4312 = vsel %vm2339, %v2167, 0.0
        %v4313 = vsel %vm2339, %v2168, 0.0
        %v4314 = vsel %vm2339, %v2169, 0.0
        %v4315 = vsel %vm2339, %v2170, 0.0
        %v4316 = vsel %vm2340, %v2171, 0.0
        %v4317 = vsel %vm2340, %v2172, 0.0
        %v4318 = vsel %vm2340, %v2173, 0.0
        %v4319 = vsel %vm2340, %v2174, 0.0
        %v4320 = vsel %vm2340, %v2175, 0.0
        %v4321 = vsel %vm2340, %v2176, 0.0
        %v4322 = vsel %vm2341, %v2177, 0.0
        %v4323 = vsel %vm2341, %v2178, 0.0
        %v4324 = vsel %vm2341, %v2179, 0.0
        %v4325 = vsel %vm2341, %v2180, 0.0
        %v4326 = vsel %vm2341, %v2181, 0.0
        %v4327 = vsel %vm2341, %v2182, 0.0
        %v4328 = vsel %vm2342, %v2183, 0.0
        %v4329 = vsel %vm2342, %v2184, 0.0
        %v4330 = vsel %vm2342, %v2185, 0.0
        %v4331 = vsel %vm2342, %v2186, 0.0
        %v4332 = vsel %vm2342, %v2187, 0.0
        %v4333 = vsel %vm2342, %v2188, 0.0
        %v4334 = vsel %vm2343, %v2189, 0.0
        %v4335 = vsel %vm2343, %v2190, 0.0
        %v4336 = vsel %vm2343, %v2191, 0.0
        %v4337 = vsel %vm2343, %v2192, 0.0
        %v4338 = vsel %vm2343, %v2193, 0.0
        %v4339 = vsel %vm2343, %v2194, 0.0
        %v4340 = vsel %vm2344, %v2195, 0.0
        %v4341 = vsel %vm2344, %v2196, 0.0
        %v4342 = vsel %vm2344, %v2197, 0.0
        %v4343 = vsel %vm2344, %v2198, 0.0
        %v4344 = vsel %vm2344, %v2199, 0.0
        %v4345 = vsel %vm2344, %v2200, 0.0
        %v4346 = vsel %vm2345, %v2201, 0.0
        %v4347 = vsel %vm2345, %v2202, 0.0
        %v4348 = vsel %vm2345, %v2203, 0.0
        %v4349 = vsel %vm2345, %v2204, 0.0
        %v4350 = vsel %vm2345, %v2205, 0.0
        %v4351 = vsel %vm2345, %v2206, 0.0
        %v4352 = vsel %vm2346, %v2207, 0.0
        %v4353 = vsel %vm2346, %v2208, 0.0
        %v4354 = vsel %vm2346, %v2209, 0.0
        %v4355 = vsel %vm2346, %v2210, 0.0
        %v4356 = vsel %vm2346, %v2211, 0.0
        %v4357 = vsel %vm2346, %v2212, 0.0
        %v4358 = vsel %vm2347, %v2213, 0.0
        %v4359 = vsel %vm2347, %v2214, 0.0
        %v4360 = vsel %vm2347, %v2215, 0.0
        %v4361 = vsel %vm2347, %v2216, 0.0
        %v4362 = vsel %vm2347, %v2217, 0.0
        %v4363 = vsel %vm2347, %v2218, 0.0
        %v4364 = vld [vmem:[%s185] sm:$0xff]
        %v4365 = vld [vmem:[%s185 + $0x8] sm:$0xff]
        %v4366 = vld [vmem:[%s185 + $0x10] sm:$0xff]
        %v4367 = vld [vmem:[%s185 + $0x18] sm:$0xff]
        %v4368 = vld [vmem:[%s185 + $0x20] sm:$0xff]
        %v4369 = vld [vmem:[%s185 + $0x28] sm:$0xff]
        %v4370 = vadd.f32 %v2348, %v2354
        %v4371 = vadd.f32 %v4370, %v2360
        %v4372 = vadd.f32 %v4371, %v2366
        %v4373 = vadd.f32 %v4372, %v2372
        %v4374 = vadd.f32 %v4373, %v2378
        %v4375 = vadd.f32 %v4374, %v2384
        %v4376 = vadd.f32 %v4375, %v2390
        %v4377 = vadd.f32 %v4376, %v2396
        %v4378 = vadd.f32 %v4377, %v2402
        %v4379 = vadd.f32 %v4378, %v2408
        %v4380 = vadd.f32 %v4379, %v2414
        %v4381 = vadd.f32 %v4380, %v2420
        %v4382 = vadd.f32 %v4381, %v2426
        %v4383 = vadd.f32 %v4382, %v2432
        %v4384 = vadd.f32 %v4383, %v2438
        %v4385 = vadd.f32 %v4384, %v2444
        %v4386 = vadd.f32 %v4385, %v2450
        %v4387 = vadd.f32 %v4386, %v2456
        %v4388 = vadd.f32 %v4387, %v2462
        %v4389 = vadd.f32 %v4388, %v2468
        %v4390 = vadd.f32 %v4389, %v2474
        %v4391 = vadd.f32 %v4390, %v2480
        %v4392 = vadd.f32 %v4391, %v2486
        %v4393 = vadd.f32 %v4392, %v2492
        %v4394 = vadd.f32 %v4393, %v2498
        %v4395 = vadd.f32 %v4394, %v2504
        %v4396 = vadd.f32 %v4395, %v2510
        %v4397 = vadd.f32 %v4396, %v2516
        %v4398 = vadd.f32 %v4397, %v2522
        %v4399 = vadd.f32 %v4398, %v2528
        %v4400 = vadd.f32 %v4399, %v2534
        %v4401 = vadd.f32 %v4400, %v2540
        %v4402 = vadd.f32 %v4401, %v2546
        %v4403 = vadd.f32 %v4402, %v2552
        %v4404 = vadd.f32 %v4403, %v2558
        %v4405 = vadd.f32 %v4404, %v2564
        %v4406 = vadd.f32 %v4405, %v2570
        %v4407 = vadd.f32 %v4406, %v2576
        %v4408 = vadd.f32 %v4407, %v2582
        %v4409 = vadd.f32 %v4408, %v2588
        %v4410 = vadd.f32 %v4409, %v2594
        %v4411 = vrot.slane %v4410, 4
        %v4412 = vadd.f32 %v4410, %v4411
        %v4413 = vrot.slane %v4412, 2
        %v4414 = vadd.f32 %v4412, %v4413
        %v4415 = vrot.slane %v4414, 1
        %v4416 = vadd.f32 %v4414, %v4415
        %v4417 = vadd.f32 %v2349, %v2355
        %v4418 = vadd.f32 %v4417, %v2361
        %v4419 = vadd.f32 %v4418, %v2367
        %v4420 = vadd.f32 %v4419, %v2373
        %v4421 = vadd.f32 %v4420, %v2379
        %v4422 = vadd.f32 %v4421, %v2385
        %v4423 = vadd.f32 %v4422, %v2391
        %v4424 = vadd.f32 %v4423, %v2397
        %v4425 = vadd.f32 %v4424, %v2403
        %v4426 = vadd.f32 %v4425, %v2409
        %v4427 = vadd.f32 %v4426, %v2415
        %v4428 = vadd.f32 %v4427, %v2421
        %v4429 = vadd.f32 %v4428, %v2427
        %v4430 = vadd.f32 %v4429, %v2433
        %v4431 = vadd.f32 %v4430, %v2439
        %v4432 = vadd.f32 %v4431, %v2445
        %v4433 = vadd.f32 %v4432, %v2451
        %v4434 = vadd.f32 %v4433, %v2457
        %v4435 = vadd.f32 %v4434, %v2463
        %v4436 = vadd.f32 %v4435, %v2469
        %v4437 = vadd.f32 %v4436, %v2475
        %v4438 = vadd.f32 %v4437, %v2481
        %v4439 = vadd.f32 %v4438, %v2487
        %v4440 = vadd.f32 %v4439, %v2493
        %v4441 = vadd.f32 %v4440, %v2499
        %v4442 = vadd.f32 %v4441, %v2505
        %v4443 = vadd.f32 %v4442, %v2511
        %v4444 = vadd.f32 %v4443, %v2517
        %v4445 = vadd.f32 %v4444, %v2523
        %v4446 = vadd.f32 %v4445, %v2529
        %v4447 = vadd.f32 %v4446, %v2535
        %v4448 = vadd.f32 %v4447, %v2541
        %v4449 = vadd.f32 %v4448, %v2547
        %v4450 = vadd.f32 %v4449, %v2553
        %v4451 = vadd.f32 %v4450, %v2559
        %v4452 = vadd.f32 %v4451, %v2565
        %v4453 = vadd.f32 %v4452, %v2571
        %v4454 = vadd.f32 %v4453, %v2577
        %v4455 = vadd.f32 %v4454, %v2583
        %v4456 = vadd.f32 %v4455, %v2589
        %v4457 = vadd.f32 %v4456, %v2595
        %v4458 = vrot.slane %v4457, 4
        %v4459 = vadd.f32 %v4457, %v4458
        %v4460 = vrot.slane %v4459, 2
        %v4461 = vadd.f32 %v4459, %v4460
        %v4462 = vrot.slane %v4461, 1
        %v4463 = vadd.f32 %v4461, %v4462
        %v4464 = vadd.f32 %v2350, %v2356
        %v4465 = vadd.f32 %v4464, %v2362
        %v4466 = vadd.f32 %v4465, %v2368
        %v4467 = vadd.f32 %v4466, %v2374
        %v4468 = vadd.f32 %v4467, %v2380
        %v4469 = vadd.f32 %v4468, %v2386
        %v4470 = vadd.f32 %v4469, %v2392
        %v4471 = vadd.f32 %v4470, %v2398
        %v4472 = vadd.f32 %v4471, %v2404
        %v4473 = vadd.f32 %v4472, %v2410
        %v4474 = vadd.f32 %v4473, %v2416
        %v4475 = vadd.f32 %v4474, %v2422
        %v4476 = vadd.f32 %v4475, %v2428
        %v4477 = vadd.f32 %v4476, %v2434
        %v4478 = vadd.f32 %v4477, %v2440
        %v4479 = vadd.f32 %v4478, %v2446
        %v4480 = vadd.f32 %v4479, %v2452
        %v4481 = vadd.f32 %v4480, %v2458
        %v4482 = vadd.f32 %v4481, %v2464
        %v4483 = vadd.f32 %v4482, %v2470
        %v4484 = vadd.f32 %v4483, %v2476
        %v4485 = vadd.f32 %v4484, %v2482
        %v4486 = vadd.f32 %v4485, %v2488
        %v4487 = vadd.f32 %v4486, %v2494
        %v4488 = vadd.f32 %v4487, %v2500
        %v4489 = vadd.f32 %v4488, %v2506
        %v4490 = vadd.f32 %v4489, %v2512
        %v4491 = vadd.f32 %v4490, %v2518
        %v4492 = vadd.f32 %v4491, %v2524
        %v4493 = vadd.f32 %v4492, %v2530
        %v4494 = vadd.f32 %v4493, %v2536
        %v4495 = vadd.f32 %v4494, %v2542
        %v4496 = vadd.f32 %v4495, %v2548
        %v4497 = vadd.f32 %v4496, %v2554
        %v4498 = vadd.f32 %v4497, %v2560
        %v4499 = vadd.f32 %v4498, %v2566
        %v4500 = vadd.f32 %v4499, %v2572
        %v4501 = vadd.f32 %v4500, %v2578
        %v4502 = vadd.f32 %v4501, %v2584
        %v4503 = vadd.f32 %v4502, %v2590
        %v4504 = vadd.f32 %v4503, %v2596
        %v4505 = vrot.slane %v4504, 4
        %v4506 = vadd.f32 %v4504, %v4505
        %v4507 = vrot.slane %v4506, 2
        %v4508 = vadd.f32 %v4506, %v4507
        %v4509 = vrot.slane %v4508, 1
        %v4510 = vadd.f32 %v4508, %v4509
        %v4511 = vadd.f32 %v2351, %v2357
        %v4512 = vadd.f32 %v4511, %v2363
        %v4513 = vadd.f32 %v4512, %v2369
        %v4514 = vadd.f32 %v4513, %v2375
        %v4515 = vadd.f32 %v4514, %v2381
        %v4516 = vadd.f32 %v4515, %v2387
        %v4517 = vadd.f32 %v4516, %v2393
        %v4518 = vadd.f32 %v4517, %v2399
        %v4519 = vadd.f32 %v4518, %v2405
        %v4520 = vadd.f32 %v4519, %v2411
        %v4521 = vadd.f32 %v4520, %v2417
        %v4522 = vadd.f32 %v4521, %v2423
        %v4523 = vadd.f32 %v4522, %v2429
        %v4524 = vadd.f32 %v4523, %v2435
        %v4525 = vadd.f32 %v4524, %v2441
        %v4526 = vadd.f32 %v4525, %v2447
        %v4527 = vadd.f32 %v4526, %v2453
        %v4528 = vadd.f32 %v4527, %v2459
        %v4529 = vadd.f32 %v4528, %v2465
        %v4530 = vadd.f32 %v4529, %v2471
        %v4531 = vadd.f32 %v4530, %v2477
        %v4532 = vadd.f32 %v4531, %v2483
        %v4533 = vadd.f32 %v4532, %v2489
        %v4534 = vadd.f32 %v4533, %v2495
        %v4535 = vadd.f32 %v4534, %v2501
        %v4536 = vadd.f32 %v4535, %v2507
        %v4537 = vadd.f32 %v4536, %v2513
        %v4538 = vadd.f32 %v4537, %v2519
        %v4539 = vadd.f32 %v4538, %v2525
        %v4540 = vadd.f32 %v4539, %v2531
        %v4541 = vadd.f32 %v4540, %v2537
        %v4542 = vadd.f32 %v4541, %v2543
        %v4543 = vadd.f32 %v4542, %v2549
        %v4544 = vadd.f32 %v4543, %v2555
        %v4545 = vadd.f32 %v4544, %v2561
        %v4546 = vadd.f32 %v4545, %v2567
        %v4547 = vadd.f32 %v4546, %v2573
        %v4548 = vadd.f32 %v4547, %v2579
        %v4549 = vadd.f32 %v4548, %v2585
        %v4550 = vadd.f32 %v4549, %v2591
        %v4551 = vadd.f32 %v4550, %v2597
        %v4552 = vrot.slane %v4551, 4
        %v4553 = vadd.f32 %v4551, %v4552
        %v4554 = vrot.slane %v4553, 2
        %v4555 = vadd.f32 %v4553, %v4554
        %v4556 = vrot.slane %v4555, 1
        %v4557 = vadd.f32 %v4555, %v4556
        %v4558 = vadd.f32 %v2352, %v2358
        %v4559 = vadd.f32 %v4558, %v2364
        %v4560 = vadd.f32 %v4559, %v2370
        %v4561 = vadd.f32 %v4560, %v2376
        %v4562 = vadd.f32 %v4561, %v2382
        %v4563 = vadd.f32 %v4562, %v2388
        %v4564 = vadd.f32 %v4563, %v2394
        %v4565 = vadd.f32 %v4564, %v2400
        %v4566 = vadd.f32 %v4565, %v2406
        %v4567 = vadd.f32 %v4566, %v2412
        %v4568 = vadd.f32 %v4567, %v2418
        %v4569 = vadd.f32 %v4568, %v2424
        %v4570 = vadd.f32 %v4569, %v2430
        %v4571 = vadd.f32 %v4570, %v2436
        %v4572 = vadd.f32 %v4571, %v2442
        %v4573 = vadd.f32 %v4572, %v2448
        %v4574 = vadd.f32 %v4573, %v2454
        %v4575 = vadd.f32 %v4574, %v2460
        %v4576 = vadd.f32 %v4575, %v2466
        %v4577 = vadd.f32 %v4576, %v2472
        %v4578 = vadd.f32 %v4577, %v2478
        %v4579 = vadd.f32 %v4578, %v2484
        %v4580 = vadd.f32 %v4579, %v2490
        %v4581 = vadd.f32 %v4580, %v2496
        %v4582 = vadd.f32 %v4581, %v2502
        %v4583 = vadd.f32 %v4582, %v2508
        %v4584 = vadd.f32 %v4583, %v2514
        %v4585 = vadd.f32 %v4584, %v2520
        %v4586 = vadd.f32 %v4585, %v2526
        %v4587 = vadd.f32 %v4586, %v2532
        %v4588 = vadd.f32 %v4587, %v2538
        %v4589 = vadd.f32 %v4588, %v2544
        %v4590 = vadd.f32 %v4589, %v2550
        %v4591 = vadd.f32 %v4590, %v2556
        %v4592 = vadd.f32 %v4591, %v2562
        %v4593 = vadd.f32 %v4592, %v2568
        %v4594 = vadd.f32 %v4593, %v2574
        %v4595 = vadd.f32 %v4594, %v2580
        %v4596 = vadd.f32 %v4595, %v2586
        %v4597 = vadd.f32 %v4596, %v2592
        %v4598 = vadd.f32 %v4597, %v2598
        %v4599 = vrot.slane %v4598, 4
        %v4600 = vadd.f32 %v4598, %v4599
        %v4601 = vrot.slane %v4600, 2
        %v4602 = vadd.f32 %v4600, %v4601
        %v4603 = vrot.slane %v4602, 1
        %v4604 = vadd.f32 %v4602, %v4603
        %v4605 = vadd.f32 %v2353, %v2359
        %v4606 = vadd.f32 %v4605, %v2365
        %v4607 = vadd.f32 %v4606, %v2371
        %v4608 = vadd.f32 %v4607, %v2377
        %v4609 = vadd.f32 %v4608, %v2383
        %v4610 = vadd.f32 %v4609, %v2389
        %v4611 = vadd.f32 %v4610, %v2395
        %v4612 = vadd.f32 %v4611, %v2401
        %v4613 = vadd.f32 %v4612, %v2407
        %v4614 = vadd.f32 %v4613, %v2413
        %v4615 = vadd.f32 %v4614, %v2419
        %v4616 = vadd.f32 %v4615, %v2425
        %v4617 = vadd.f32 %v4616, %v2431
        %v4618 = vadd.f32 %v4617, %v2437
        %v4619 = vadd.f32 %v4618, %v2443
        %v4620 = vadd.f32 %v4619, %v2449
        %v4621 = vadd.f32 %v4620, %v2455
        %v4622 = vadd.f32 %v4621, %v2461
        %v4623 = vadd.f32 %v4622, %v2467
        %v4624 = vadd.f32 %v4623, %v2473
        %v4625 = vadd.f32 %v4624, %v2479
        %v4626 = vadd.f32 %v4625, %v2485
        %v4627 = vadd.f32 %v4626, %v2491
        %v4628 = vadd.f32 %v4627, %v2497
        %v4629 = vadd.f32 %v4628, %v2503
        %v4630 = vadd.f32 %v4629, %v2509
        %v4631 = vadd.f32 %v4630, %v2515
        %v4632 = vadd.f32 %v4631, %v2521
        %v4633 = vadd.f32 %v4632, %v2527
        %v4634 = vadd.f32 %v4633, %v2533
        %v4635 = vadd.f32 %v4634, %v2539
        %v4636 = vadd.f32 %v4635, %v2545
        %v4637 = vadd.f32 %v4636, %v2551
        %v4638 = vadd.f32 %v4637, %v2557
        %v4639 = vadd.f32 %v4638, %v2563
        %v4640 = vadd.f32 %v4639, %v2569
        %v4641 = vadd.f32 %v4640, %v2575
        %v4642 = vadd.f32 %v4641, %v2581
        %v4643 = vadd.f32 %v4642, %v2587
        %v4644 = vadd.f32 %v4643, %v2593
        %v4645 = vadd.f32 %v4644, %v2599
        %v4646 = vrot.slane %v4645, 4
        %v4647 = vadd.f32 %v4645, %v4646
        %v4648 = vrot.slane %v4647, 2
        %v4649 = vadd.f32 %v4647, %v4648
        %v4650 = vrot.slane %v4649, 1
        %v4651 = vadd.f32 %v4649, %v4650
        %v4652 = vadd.f32 %v2600, %v2606
        %v4653 = vadd.f32 %v4652, %v2612
        %v4654 = vadd.f32 %v4653, %v2618
        %v4655 = vadd.f32 %v4654, %v2624
        %v4656 = vadd.f32 %v4655, %v2630
        %v4657 = vadd.f32 %v4656, %v2636
        %v4658 = vadd.f32 %v4657, %v2642
        %v4659 = vadd.f32 %v4658, %v2648
        %v4660 = vadd.f32 %v4659, %v2654
        %v4661 = vadd.f32 %v4660, %v2660
        %v4662 = vadd.f32 %v4661, %v2666
        %v4663 = vadd.f32 %v4662, %v2672
        %v4664 = vadd.f32 %v4663, %v2678
        %v4665 = vadd.f32 %v4664, %v2684
        %v4666 = vadd.f32 %v4665, %v2690
        %v4667 = vadd.f32 %v4666, %v2696
        %v4668 = vadd.f32 %v4667, %v2702
        %v4669 = vadd.f32 %v4668, %v2708
        %v4670 = vadd.f32 %v4669, %v2714
        %v4671 = vadd.f32 %v4670, %v2720
        %v4672 = vadd.f32 %v4671, %v2726
        %v4673 = vadd.f32 %v4672, %v2732
        %v4674 = vadd.f32 %v4673, %v2738
        %v4675 = vadd.f32 %v4674, %v2744
        %v4676 = vadd.f32 %v4675, %v2750
        %v4677 = vadd.f32 %v4676, %v2756
        %v4678 = vadd.f32 %v4677, %v2762
        %v4679 = vadd.f32 %v4678, %v2768
        %v4680 = vadd.f32 %v4679, %v2774
        %v4681 = vadd.f32 %v4680, %v2780
        %v4682 = vadd.f32 %v4681, %v2786
        %v4683 = vadd.f32 %v4682, %v2792
        %v4684 = vadd.f32 %v4683, %v2798
        %v4685 = vadd.f32 %v4684, %v2804
        %v4686 = vadd.f32 %v4685, %v2810
        %v4687 = vadd.f32 %v4686, %v2816
        %v4688 = vadd.f32 %v4687, %v2822
        %v4689 = vadd.f32 %v4688, %v2828
        %v4690 = vadd.f32 %v4689, %v2834
        %v4691 = vadd.f32 %v4690, %v2840
        %v4692 = vadd.f32 %v4691, %v2846
        %v4693 = vrot.slane %v4692, 4
        %v4694 = vadd.f32 %v4692, %v4693
        %v4695 = vrot.slane %v4694, 2
        %v4696 = vadd.f32 %v4694, %v4695
        %v4697 = vrot.slane %v4696, 1
        %v4698 = vadd.f32 %v4696, %v4697
        %v4699 = vadd.f32 %v2601, %v2607
        %v4700 = vadd.f32 %v4699, %v2613
        %v4701 = vadd.f32 %v4700, %v2619
        %v4702 = vadd.f32 %v4701, %v2625
        %v4703 = vadd.f32 %v4702, %v2631
        %v4704 = vadd.f32 %v4703, %v2637
        %v4705 = vadd.f32 %v4704, %v2643
        %v4706 = vadd.f32 %v4705, %v2649
        %v4707 = vadd.f32 %v4706, %v2655
        %v4708 = vadd.f32 %v4707, %v2661
        %v4709 = vadd.f32 %v4708, %v2667
        %v4710 = vadd.f32 %v4709, %v2673
        %v4711 = vadd.f32 %v4710, %v2679
        %v4712 = vadd.f32 %v4711, %v2685
        %v4713 = vadd.f32 %v4712, %v2691
        %v4714 = vadd.f32 %v4713, %v2697
        %v4715 = vadd.f32 %v4714, %v2703
        %v4716 = vadd.f32 %v4715, %v2709
        %v4717 = vadd.f32 %v4716, %v2715
        %v4718 = vadd.f32 %v4717, %v2721
        %v4719 = vadd.f32 %v4718, %v2727
        %v4720 = vadd.f32 %v4719, %v2733
        %v4721 = vadd.f32 %v4720, %v2739
        %v4722 = vadd.f32 %v4721, %v2745
        %v4723 = vadd.f32 %v4722, %v2751
        %v4724 = vadd.f32 %v4723, %v2757
        %v4725 = vadd.f32 %v4724, %v2763
        %v4726 = vadd.f32 %v4725, %v2769
        %v4727 = vadd.f32 %v4726, %v2775
        %v4728 = vadd.f32 %v4727, %v2781
        %v4729 = vadd.f32 %v4728, %v2787
        %v4730 = vadd.f32 %v4729, %v2793
        %v4731 = vadd.f32 %v4730, %v2799
        %v4732 = vadd.f32 %v4731, %v2805
        %v4733 = vadd.f32 %v4732, %v2811
        %v4734 = vadd.f32 %v4733, %v2817
        %v4735 = vadd.f32 %v4734, %v2823
        %v4736 = vadd.f32 %v4735, %v2829
        %v4737 = vadd.f32 %v4736, %v2835
        %v4738 = vadd.f32 %v4737, %v2841
        %v4739 = vadd.f32 %v4738, %v2847
        %v4740 = vrot.slane %v4739, 4
        %v4741 = vadd.f32 %v4739, %v4740
        %v4742 = vrot.slane %v4741, 2
        %v4743 = vadd.f32 %v4741, %v4742
        %v4744 = vrot.slane %v4743, 1
        %v4745 = vadd.f32 %v4743, %v4744
        %v4746 = vadd.f32 %v2602, %v2608
        %v4747 = vadd.f32 %v4746, %v2614
        %v4748 = vadd.f32 %v4747, %v2620
        %v4749 = vadd.f32 %v4748, %v2626
        %v4750 = vadd.f32 %v4749, %v2632
        %v4751 = vadd.f32 %v4750, %v2638
        %v4752 = vadd.f32 %v4751, %v2644
        %v4753 = vadd.f32 %v4752, %v2650
        %v4754 = vadd.f32 %v4753, %v2656
        %v4755 = vadd.f32 %v4754, %v2662
        %v4756 = vadd.f32 %v4755, %v2668
        %v4757 = vadd.f32 %v4756, %v2674
        %v4758 = vadd.f32 %v4757, %v2680
        %v4759 = vadd.f32 %v4758, %v2686
        %v4760 = vadd.f32 %v4759, %v2692
        %v4761 = vadd.f32 %v4760, %v2698
        %v4762 = vadd.f32 %v4761, %v2704
        %v4763 = vadd.f32 %v4762, %v2710
        %v4764 = vadd.f32 %v4763, %v2716
        %v4765 = vadd.f32 %v4764, %v2722
        %v4766 = vadd.f32 %v4765, %v2728
        %v4767 = vadd.f32 %v4766, %v2734
        %v4768 = vadd.f32 %v4767, %v2740
        %v4769 = vadd.f32 %v4768, %v2746
        %v4770 = vadd.f32 %v4769, %v2752
        %v4771 = vadd.f32 %v4770, %v2758
        %v4772 = vadd.f32 %v4771, %v2764
        %v4773 = vadd.f32 %v4772, %v2770
        %v4774 = vadd.f32 %v4773, %v2776
        %v4775 = vadd.f32 %v4774, %v2782
        %v4776 = vadd.f32 %v4775, %v2788
        %v4777 = vadd.f32 %v4776, %v2794
        %v4778 = vadd.f32 %v4777, %v2800
        %v4779 = vadd.f32 %v4778, %v2806
        %v4780 = vadd.f32 %v4779, %v2812
        %v4781 = vadd.f32 %v4780, %v2818
        %v4782 = vadd.f32 %v4781, %v2824
        %v4783 = vadd.f32 %v4782, %v2830
        %v4784 = vadd.f32 %v4783, %v2836
        %v4785 = vadd.f32 %v4784, %v2842
        %v4786 = vadd.f32 %v4785, %v2848
        %v4787 = vrot.slane %v4786, 4
        %v4788 = vadd.f32 %v4786, %v4787
        %v4789 = vrot.slane %v4788, 2
        %v4790 = vadd.f32 %v4788, %v4789
        %v4791 = vrot.slane %v4790, 1
        %v4792 = vadd.f32 %v4790, %v4791
        %v4793 = vadd.f32 %v2603, %v2609
        %v4794 = vadd.f32 %v4793, %v2615
        %v4795 = vadd.f32 %v4794, %v2621
        %v4796 = vadd.f32 %v4795, %v2627
        %v4797 = vadd.f32 %v4796, %v2633
        %v4798 = vadd.f32 %v4797, %v2639
        %v4799 = vadd.f32 %v4798, %v2645
        %v4800 = vadd.f32 %v4799, %v2651
        %v4801 = vadd.f32 %v4800, %v2657
        %v4802 = vadd.f32 %v4801, %v2663
        %v4803 = vadd.f32 %v4802, %v2669
        %v4804 = vadd.f32 %v4803, %v2675
        %v4805 = vadd.f32 %v4804, %v2681
        %v4806 = vadd.f32 %v4805, %v2687
        %v4807 = vadd.f32 %v4806, %v2693
        %v4808 = vadd.f32 %v4807, %v2699
        %v4809 = vadd.f32 %v4808, %v2705
        %v4810 = vadd.f32 %v4809, %v2711
        %v4811 = vadd.f32 %v4810, %v2717
        %v4812 = vadd.f32 %v4811, %v2723
        %v4813 = vadd.f32 %v4812, %v2729
        %v4814 = vadd.f32 %v4813, %v2735
        %v4815 = vadd.f32 %v4814, %v2741
        %v4816 = vadd.f32 %v4815, %v2747
        %v4817 = vadd.f32 %v4816, %v2753
        %v4818 = vadd.f32 %v4817, %v2759
        %v4819 = vadd.f32 %v4818, %v2765
        %v4820 = vadd.f32 %v4819, %v2771
        %v4821 = vadd.f32 %v4820, %v2777
        %v4822 = vadd.f32 %v4821, %v2783
        %v4823 = vadd.f32 %v4822, %v2789
        %v4824 = vadd.f32 %v4823, %v2795
        %v4825 = vadd.f32 %v4824, %v2801
        %v4826 = vadd.f32 %v4825, %v2807
        %v4827 = vadd.f32 %v4826, %v2813
        %v4828 = vadd.f32 %v4827, %v2819
        %v4829 = vadd.f32 %v4828, %v2825
        %v4830 = vadd.f32 %v4829, %v2831
        %v4831 = vadd.f32 %v4830, %v2837
        %v4832 = vadd.f32 %v4831, %v2843
        %v4833 = vadd.f32 %v4832, %v2849
        %v4834 = vrot.slane %v4833, 4
        %v4835 = vadd.f32 %v4833, %v4834
        %v4836 = vrot.slane %v4835, 2
        %v4837 = vadd.f32 %v4835, %v4836
        %v4838 = vrot.slane %v4837, 1
        %v4839 = vadd.f32 %v4837, %v4838
        %v4840 = vadd.f32 %v2604, %v2610
        %v4841 = vadd.f32 %v4840, %v2616
        %v4842 = vadd.f32 %v4841, %v2622
        %v4843 = vadd.f32 %v4842, %v2628
        %v4844 = vadd.f32 %v4843, %v2634
        %v4845 = vadd.f32 %v4844, %v2640
        %v4846 = vadd.f32 %v4845, %v2646
        %v4847 = vadd.f32 %v4846, %v2652
        %v4848 = vadd.f32 %v4847, %v2658
        %v4849 = vadd.f32 %v4848, %v2664
        %v4850 = vadd.f32 %v4849, %v2670
        %v4851 = vadd.f32 %v4850, %v2676
        %v4852 = vadd.f32 %v4851, %v2682
        %v4853 = vadd.f32 %v4852, %v2688
        %v4854 = vadd.f32 %v4853, %v2694
        %v4855 = vadd.f32 %v4854, %v2700
        %v4856 = vadd.f32 %v4855, %v2706
        %v4857 = vadd.f32 %v4856, %v2712
        %v4858 = vadd.f32 %v4857, %v2718
        %v4859 = vadd.f32 %v4858, %v2724
        %v4860 = vadd.f32 %v4859, %v2730
        %v4861 = vadd.f32 %v4860, %v2736
        %v4862 = vadd.f32 %v4861, %v2742
        %v4863 = vadd.f32 %v4862, %v2748
        %v4864 = vadd.f32 %v4863, %v2754
        %v4865 = vadd.f32 %v4864, %v2760
        %v4866 = vadd.f32 %v4865, %v2766
        %v4867 = vadd.f32 %v4866, %v2772
        %v4868 = vadd.f32 %v4867, %v2778
        %v4869 = vadd.f32 %v4868, %v2784
        %v4870 = vadd.f32 %v4869, %v2790
        %v4871 = vadd.f32 %v4870, %v2796
        %v4872 = vadd.f32 %v4871, %v2802
        %v4873 = vadd.f32 %v4872, %v2808
        %v4874 = vadd.f32 %v4873, %v2814
        %v4875 = vadd.f32 %v4874, %v2820
        %v4876 = vadd.f32 %v4875, %v2826
        %v4877 = vadd.f32 %v4876, %v2832
        %v4878 = vadd.f32 %v4877, %v2838
        %v4879 = vadd.f32 %v4878, %v2844
        %v4880 = vadd.f32 %v4879, %v2850
        %v4881 = vrot.slane %v4880, 4
        %v4882 = vadd.f32 %v4880, %v4881
        %v4883 = vrot.slane %v4882, 2
        %v4884 = vadd.f32 %v4882, %v4883
        %v4885 = vrot.slane %v4884, 1
        %v4886 = vadd.f32 %v4884, %v4885
        %v4887 = vadd.f32 %v2605, %v2611
        %v4888 = vadd.f32 %v4887, %v2617
        %v4889 = vadd.f32 %v4888, %v2623
        %v4890 = vadd.f32 %v4889, %v2629
        %v4891 = vadd.f32 %v4890, %v2635
        %v4892 = vadd.f32 %v4891, %v2641
        %v4893 = vadd.f32 %v4892, %v2647
        %v4894 = vadd.f32 %v4893, %v2653
        %v4895 = vadd.f32 %v4894, %v2659
        %v4896 = vadd.f32 %v4895, %v2665
        %v4897 = vadd.f32 %v4896, %v2671
        %v4898 = vadd.f32 %v4897, %v2677
        %v4899 = vadd.f32 %v4898, %v2683
        %v4900 = vadd.f32 %v4899, %v2689
        %v4901 = vadd.f32 %v4900, %v2695
        %v4902 = vadd.f32 %v4901, %v2701
        %v4903 = vadd.f32 %v4902, %v2707
        %v4904 = vadd.f32 %v4903, %v2713
        %v4905 = vadd.f32 %v4904, %v2719
        %v4906 = vadd.f32 %v4905, %v2725
        %v4907 = vadd.f32 %v4906, %v2731
        %v4908 = vadd.f32 %v4907, %v2737
        %v4909 = vadd.f32 %v4908, %v2743
        %v4910 = vadd.f32 %v4909, %v2749
        %v4911 = vadd.f32 %v4910, %v2755
        %v4912 = vadd.f32 %v4911, %v2761
        %v4913 = vadd.f32 %v4912, %v2767
        %v4914 = vadd.f32 %v4913, %v2773
        %v4915 = vadd.f32 %v4914, %v2779
        %v4916 = vadd.f32 %v4915, %v2785
        %v4917 = vadd.f32 %v4916, %v2791
        %v4918 = vadd.f32 %v4917, %v2797
        %v4919 = vadd.f32 %v4918, %v2803
        %v4920 = vadd.f32 %v4919, %v2809
        %v4921 = vadd.f32 %v4920, %v2815
        %v4922 = vadd.f32 %v4921, %v2821
        %v4923 = vadd.f32 %v4922, %v2827
        %v4924 = vadd.f32 %v4923, %v2833
        %v4925 = vadd.f32 %v4924, %v2839
        %v4926 = vadd.f32 %v4925, %v2845
        %v4927 = vadd.f32 %v4926, %v2851
        %v4928 = vrot.slane %v4927, 4
        %v4929 = vadd.f32 %v4927, %v4928
        %v4930 = vrot.slane %v4929, 2
        %v4931 = vadd.f32 %v4929, %v4930
        %v4932 = vrot.slane %v4931, 1
        %v4933 = vadd.f32 %v4931, %v4932
        %v4934 = vadd.f32 %v2852, %v2858
        %v4935 = vadd.f32 %v4934, %v2864
        %v4936 = vadd.f32 %v4935, %v2870
        %v4937 = vadd.f32 %v4936, %v2876
        %v4938 = vadd.f32 %v4937, %v2882
        %v4939 = vadd.f32 %v4938, %v2888
        %v4940 = vadd.f32 %v4939, %v2894
        %v4941 = vadd.f32 %v4940, %v2900
        %v4942 = vadd.f32 %v4941, %v2906
        %v4943 = vadd.f32 %v4942, %v2912
        %v4944 = vadd.f32 %v4943, %v2918
        %v4945 = vadd.f32 %v4944, %v2924
        %v4946 = vadd.f32 %v4945, %v2930
        %v4947 = vadd.f32 %v4946, %v2936
        %v4948 = vadd.f32 %v4947, %v2942
        %v4949 = vadd.f32 %v4948, %v2948
        %v4950 = vadd.f32 %v4949, %v2954
        %v4951 = vadd.f32 %v4950, %v2960
        %v4952 = vadd.f32 %v4951, %v2966
        %v4953 = vadd.f32 %v4952, %v2972
        %v4954 = vadd.f32 %v4953, %v2978
        %v4955 = vadd.f32 %v4954, %v2984
        %v4956 = vadd.f32 %v4955, %v2990
        %v4957 = vadd.f32 %v4956, %v2996
        %v4958 = vadd.f32 %v4957, %v3002
        %v4959 = vadd.f32 %v4958, %v3008
        %v4960 = vadd.f32 %v4959, %v3014
        %v4961 = vadd.f32 %v4960, %v3020
        %v4962 = vadd.f32 %v4961, %v3026
        %v4963 = vadd.f32 %v4962, %v3032
        %v4964 = vadd.f32 %v4963, %v3038
        %v4965 = vadd.f32 %v4964, %v3044
        %v4966 = vadd.f32 %v4965, %v3050
        %v4967 = vadd.f32 %v4966, %v3056
        %v4968 = vadd.f32 %v4967, %v3062
        %v4969 = vadd.f32 %v4968, %v3068
        %v4970 = vadd.f32 %v4969, %v3074
        %v4971 = vadd.f32 %v4970, %v3080
        %v4972 = vadd.f32 %v4971, %v3086
        %v4973 = vadd.f32 %v4972, %v3092
        %v4974 = vadd.f32 %v4973, %v3098
        %v4975 = vrot.slane %v4974, 4
        %v4976 = vadd.f32 %v4974, %v4975
        %v4977 = vrot.slane %v4976, 2
        %v4978 = vadd.f32 %v4976, %v4977
        %v4979 = vrot.slane %v4978, 1
        %v4980 = vadd.f32 %v4978, %v4979
        %v4981 = vadd.f32 %v2853, %v2859
        %v4982 = vadd.f32 %v4981, %v2865
        %v4983 = vadd.f32 %v4982, %v2871
        %v4984 = vadd.f32 %v4983, %v2877
        %v4985 = vadd.f32 %v4984, %v2883
        %v4986 = vadd.f32 %v4985, %v2889
        %v4987 = vadd.f32 %v4986, %v2895
        %v4988 = vadd.f32 %v4987, %v2901
        %v4989 = vadd.f32 %v4988, %v2907
        %v4990 = vadd.f32 %v4989, %v2913
        %v4991 = vadd.f32 %v4990, %v2919
        %v4992 = vadd.f32 %v4991, %v2925
        %v4993 = vadd.f32 %v4992, %v2931
        %v4994 = vadd.f32 %v4993, %v2937
        %v4995 = vadd.f32 %v4994, %v2943
        %v4996 = vadd.f32 %v4995, %v2949
        %v4997 = vadd.f32 %v4996, %v2955
        %v4998 = vadd.f32 %v4997, %v2961
        %v4999 = vadd.f32 %v4998, %v2967
        %v5000 = vadd.f32 %v4999, %v2973
        %v5001 = vadd.f32 %v5000, %v2979
        %v5002 = vadd.f32 %v5001, %v2985
        %v5003 = vadd.f32 %v5002, %v2991
        %v5004 = vadd.f32 %v5003, %v2997
        %v5005 = vadd.f32 %v5004, %v3003
        %v5006 = vadd.f32 %v5005, %v3009
        %v5007 = vadd.f32 %v5006, %v3015
        %v5008 = vadd.f32 %v5007, %v3021
        %v5009 = vadd.f32 %v5008, %v3027
        %v5010 = vadd.f32 %v5009, %v3033
        %v5011 = vadd.f32 %v5010, %v3039
        %v5012 = vadd.f32 %v5011, %v3045
        %v5013 = vadd.f32 %v5012, %v3051
        %v5014 = vadd.f32 %v5013, %v3057
        %v5015 = vadd.f32 %v5014, %v3063
        %v5016 = vadd.f32 %v5015, %v3069
        %v5017 = vadd.f32 %v5016, %v3075
        %v5018 = vadd.f32 %v5017, %v3081
        %v5019 = vadd.f32 %v5018, %v3087
        %v5020 = vadd.f32 %v5019, %v3093
        %v5021 = vadd.f32 %v5020, %v3099
        %v5022 = vrot.slane %v5021, 4
        %v5023 = vadd.f32 %v5021, %v5022
        %v5024 = vrot.slane %v5023, 2
        %v5025 = vadd.f32 %v5023, %v5024
        %v5026 = vrot.slane %v5025, 1
        %v5027 = vadd.f32 %v5025, %v5026
        %v5028 = vadd.f32 %v2854, %v2860
        %v5029 = vadd.f32 %v5028, %v2866
        %v5030 = vadd.f32 %v5029, %v2872
        %v5031 = vadd.f32 %v5030, %v2878
        %v5032 = vadd.f32 %v5031, %v2884
        %v5033 = vadd.f32 %v5032, %v2890
        %v5034 = vadd.f32 %v5033, %v2896
        %v5035 = vadd.f32 %v5034, %v2902
        %v5036 = vadd.f32 %v5035, %v2908
        %v5037 = vadd.f32 %v5036, %v2914
        %v5038 = vadd.f32 %v5037, %v2920
        %v5039 = vadd.f32 %v5038, %v2926
        %v5040 = vadd.f32 %v5039, %v2932
        %v5041 = vadd.f32 %v5040, %v2938
        %v5042 = vadd.f32 %v5041, %v2944
        %v5043 = vadd.f32 %v5042, %v2950
        %v5044 = vadd.f32 %v5043, %v2956
        %v5045 = vadd.f32 %v5044, %v2962
        %v5046 = vadd.f32 %v5045, %v2968
        %v5047 = vadd.f32 %v5046, %v2974
        %v5048 = vadd.f32 %v5047, %v2980
        %v5049 = vadd.f32 %v5048, %v2986
        %v5050 = vadd.f32 %v5049, %v2992
        %v5051 = vadd.f32 %v5050, %v2998
        %v5052 = vadd.f32 %v5051, %v3004
        %v5053 = vadd.f32 %v5052, %v3010
        %v5054 = vadd.f32 %v5053, %v3016
        %v5055 = vadd.f32 %v5054, %v3022
        %v5056 = vadd.f32 %v5055, %v3028
        %v5057 = vadd.f32 %v5056, %v3034
        %v5058 = vadd.f32 %v5057, %v3040
        %v5059 = vadd.f32 %v5058, %v3046
        %v5060 = vadd.f32 %v5059, %v3052
        %v5061 = vadd.f32 %v5060, %v3058
        %v5062 = vadd.f32 %v5061, %v3064
        %v5063 = vadd.f32 %v5062, %v3070
        %v5064 = vadd.f32 %v5063, %v3076
        %v5065 = vadd.f32 %v5064, %v3082
        %v5066 = vadd.f32 %v5065, %v3088
        %v5067 = vadd.f32 %v5066, %v3094
        %v5068 = vadd.f32 %v5067, %v3100
        %v5069 = vrot.slane %v5068, 4
        %v5070 = vadd.f32 %v5068, %v5069
        %v5071 = vrot.slane %v5070, 2
        %v5072 = vadd.f32 %v5070, %v5071
        %v5073 = vrot.slane %v5072, 1
        %v5074 = vadd.f32 %v5072, %v5073
        %v5075 = vadd.f32 %v2855, %v2861
        %v5076 = vadd.f32 %v5075, %v2867
        %v5077 = vadd.f32 %v5076, %v2873
        %v5078 = vadd.f32 %v5077, %v2879
        %v5079 = vadd.f32 %v5078, %v2885
        %v5080 = vadd.f32 %v5079, %v2891
        %v5081 = vadd.f32 %v5080, %v2897
        %v5082 = vadd.f32 %v5081, %v2903
        %v5083 = vadd.f32 %v5082, %v2909
        %v5084 = vadd.f32 %v5083, %v2915
        %v5085 = vadd.f32 %v5084, %v2921
        %v5086 = vadd.f32 %v5085, %v2927
        %v5087 = vadd.f32 %v5086, %v2933
        %v5088 = vadd.f32 %v5087, %v2939
        %v5089 = vadd.f32 %v5088, %v2945
        %v5090 = vadd.f32 %v5089, %v2951
        %v5091 = vadd.f32 %v5090, %v2957
        %v5092 = vadd.f32 %v5091, %v2963
        %v5093 = vadd.f32 %v5092, %v2969
        %v5094 = vadd.f32 %v5093, %v2975
        %v5095 = vadd.f32 %v5094, %v2981
        %v5096 = vadd.f32 %v5095, %v2987
        %v5097 = vadd.f32 %v5096, %v2993
        %v5098 = vadd.f32 %v5097, %v2999
        %v5099 = vadd.f32 %v5098, %v3005
        %v5100 = vadd.f32 %v5099, %v3011
        %v5101 = vadd.f32 %v5100, %v3017
        %v5102 = vadd.f32 %v5101, %v3023
        %v5103 = vadd.f32 %v5102, %v3029
        %v5104 = vadd.f32 %v5103, %v3035
        %v5105 = vadd.f32 %v5104, %v3041
        %v5106 = vadd.f32 %v5105, %v3047
        %v5107 = vadd.f32 %v5106, %v3053
        %v5108 = vadd.f32 %v5107, %v3059
        %v5109 = vadd.f32 %v5108, %v3065
        %v5110 = vadd.f32 %v5109, %v3071
        %v5111 = vadd.f32 %v5110, %v3077
        %v5112 = vadd.f32 %v5111, %v3083
        %v5113 = vadd.f32 %v5112, %v3089
        %v5114 = vadd.f32 %v5113, %v3095
        %v5115 = vadd.f32 %v5114, %v3101
        %v5116 = vrot.slane %v5115, 4
        %v5117 = vadd.f32 %v5115, %v5116
        %v5118 = vrot.slane %v5117, 2
        %v5119 = vadd.f32 %v5117, %v5118
        %v5120 = vrot.slane %v5119, 1
        %v5121 = vadd.f32 %v5119, %v5120
        %v5122 = vadd.f32 %v2856, %v2862
        %v5123 = vadd.f32 %v5122, %v2868
        %v5124 = vadd.f32 %v5123, %v2874
        %v5125 = vadd.f32 %v5124, %v2880
        %v5126 = vadd.f32 %v5125, %v2886
        %v5127 = vadd.f32 %v5126, %v2892
        %v5128 = vadd.f32 %v5127, %v2898
        %v5129 = vadd.f32 %v5128, %v2904
        %v5130 = vadd.f32 %v5129, %v2910
        %v5131 = vadd.f32 %v5130, %v2916
        %v5132 = vadd.f32 %v5131, %v2922
        %v5133 = vadd.f32 %v5132, %v2928
        %v5134 = vadd.f32 %v5133, %v2934
        %v5135 = vadd.f32 %v5134, %v2940
        %v5136 = vadd.f32 %v5135, %v2946
        %v5137 = vadd.f32 %v5136, %v2952
        %v5138 = vadd.f32 %v5137, %v2958
        %v5139 = vadd.f32 %v5138, %v2964
        %v5140 = vadd.f32 %v5139, %v2970
        %v5141 = vadd.f32 %v5140, %v2976
        %v5142 = vadd.f32 %v5141, %v2982
        %v5143 = vadd.f32 %v5142, %v2988
        %v5144 = vadd.f32 %v5143, %v2994
        %v5145 = vadd.f32 %v5144, %v3000
        %v5146 = vadd.f32 %v5145, %v3006
        %v5147 = vadd.f32 %v5146, %v3012
        %v5148 = vadd.f32 %v5147, %v3018
        %v5149 = vadd.f32 %v5148, %v3024
        %v5150 = vadd.f32 %v5149, %v3030
        %v5151 = vadd.f32 %v5150, %v3036
        %v5152 = vadd.f32 %v5151, %v3042
        %v5153 = vadd.f32 %v5152, %v3048
        %v5154 = vadd.f32 %v5153, %v3054
        %v5155 = vadd.f32 %v5154, %v3060
        %v5156 = vadd.f32 %v5155, %v3066
        %v5157 = vadd.f32 %v5156, %v3072
        %v5158 = vadd.f32 %v5157, %v3078
        %v5159 = vadd.f32 %v5158, %v3084
        %v5160 = vadd.f32 %v5159, %v3090
        %v5161 = vadd.f32 %v5160, %v3096
        %v5162 = vadd.f32 %v5161, %v3102
        %v5163 = vrot.slane %v5162, 4
        %v5164 = vadd.f32 %v5162, %v5163
        %v5165 = vrot.slane %v5164, 2
        %v5166 = vadd.f32 %v5164, %v5165
        %v5167 = vrot.slane %v5166, 1
        %v5168 = vadd.f32 %v5166, %v5167
        %v5169 = vadd.f32 %v2857, %v2863
        %v5170 = vadd.f32 %v5169, %v2869
        %v5171 = vadd.f32 %v5170, %v2875
        %v5172 = vadd.f32 %v5171, %v2881
        %v5173 = vadd.f32 %v5172, %v2887
        %v5174 = vadd.f32 %v5173, %v2893
        %v5175 = vadd.f32 %v5174, %v2899
        %v5176 = vadd.f32 %v5175, %v2905
        %v5177 = vadd.f32 %v5176, %v2911
        %v5178 = vadd.f32 %v5177, %v2917
        %v5179 = vadd.f32 %v5178, %v2923
        %v5180 = vadd.f32 %v5179, %v2929
        %v5181 = vadd.f32 %v5180, %v2935
        %v5182 = vadd.f32 %v5181, %v2941
        %v5183 = vadd.f32 %v5182, %v2947
        %v5184 = vadd.f32 %v5183, %v2953
        %v5185 = vadd.f32 %v5184, %v2959
        %v5186 = vadd.f32 %v5185, %v2965
        %v5187 = vadd.f32 %v5186, %v2971
        %v5188 = vadd.f32 %v5187, %v2977
        %v5189 = vadd.f32 %v5188, %v2983
        %v5190 = vadd.f32 %v5189, %v2989
        %v5191 = vadd.f32 %v5190, %v2995
        %v5192 = vadd.f32 %v5191, %v3001
        %v5193 = vadd.f32 %v5192, %v3007
        %v5194 = vadd.f32 %v5193, %v3013
        %v5195 = vadd.f32 %v5194, %v3019
        %v5196 = vadd.f32 %v5195, %v3025
        %v5197 = vadd.f32 %v5196, %v3031
        %v5198 = vadd.f32 %v5197, %v3037
        %v5199 = vadd.f32 %v5198, %v3043
        %v5200 = vadd.f32 %v5199, %v3049
        %v5201 = vadd.f32 %v5200, %v3055
        %v5202 = vadd.f32 %v5201, %v3061
        %v5203 = vadd.f32 %v5202, %v3067
        %v5204 = vadd.f32 %v5203, %v3073
        %v5205 = vadd.f32 %v5204, %v3079
        %v5206 = vadd.f32 %v5205, %v3085
        %v5207 = vadd.f32 %v5206, %v3091
        %v5208 = vadd.f32 %v5207, %v3097
        %v5209 = vadd.f32 %v5208, %v3103
        %v5210 = vrot.slane %v5209, 4
        %v5211 = vadd.f32 %v5209, %v5210
        %v5212 = vrot.slane %v5211, 2
        %v5213 = vadd.f32 %v5211, %v5212
        %v5214 = vrot.slane %v5213, 1
        %v5215 = vadd.f32 %v5213, %v5214
        %v5216 = vadd.f32 %v3104, %v3110
        %v5217 = vadd.f32 %v5216, %v3116
        %v5218 = vadd.f32 %v5217, %v3122
        %v5219 = vadd.f32 %v5218, %v3128
        %v5220 = vadd.f32 %v5219, %v3134
        %v5221 = vadd.f32 %v5220, %v3140
        %v5222 = vadd.f32 %v5221, %v3146
        %v5223 = vadd.f32 %v5222, %v3152
        %v5224 = vadd.f32 %v5223, %v3158
        %v5225 = vadd.f32 %v5224, %v3164
        %v5226 = vadd.f32 %v5225, %v3170
        %v5227 = vadd.f32 %v5226, %v3176
        %v5228 = vadd.f32 %v5227, %v3182
        %v5229 = vadd.f32 %v5228, %v3188
        %v5230 = vadd.f32 %v5229, %v3194
        %v5231 = vadd.f32 %v5230, %v3200
        %v5232 = vadd.f32 %v5231, %v3206
        %v5233 = vadd.f32 %v5232, %v3212
        %v5234 = vadd.f32 %v5233, %v3218
        %v5235 = vadd.f32 %v5234, %v3224
        %v5236 = vadd.f32 %v5235, %v3230
        %v5237 = vadd.f32 %v5236, %v3236
        %v5238 = vadd.f32 %v5237, %v3242
        %v5239 = vadd.f32 %v5238, %v3248
        %v5240 = vadd.f32 %v5239, %v3254
        %v5241 = vadd.f32 %v5240, %v3260
        %v5242 = vadd.f32 %v5241, %v3266
        %v5243 = vadd.f32 %v5242, %v3272
        %v5244 = vadd.f32 %v5243, %v3278
        %v5245 = vadd.f32 %v5244, %v3284
        %v5246 = vadd.f32 %v5245, %v3290
        %v5247 = vadd.f32 %v5246, %v3296
        %v5248 = vadd.f32 %v5247, %v3302
        %v5249 = vadd.f32 %v5248, %v3308
        %v5250 = vadd.f32 %v5249, %v3314
        %v5251 = vadd.f32 %v5250, %v3320
        %v5252 = vadd.f32 %v5251, %v3326
        %v5253 = vadd.f32 %v5252, %v3332
        %v5254 = vadd.f32 %v5253, %v3338
        %v5255 = vadd.f32 %v5254, %v3344
        %v5256 = vadd.f32 %v5255, %v3350
        %v5257 = vrot.slane %v5256, 4
        %v5258 = vadd.f32 %v5256, %v5257
        %v5259 = vrot.slane %v5258, 2
        %v5260 = vadd.f32 %v5258, %v5259
        %v5261 = vrot.slane %v5260, 1
        %v5262 = vadd.f32 %v5260, %v5261
        %v5263 = vadd.f32 %v3105, %v3111
        %v5264 = vadd.f32 %v5263, %v3117
        %v5265 = vadd.f32 %v5264, %v3123
        %v5266 = vadd.f32 %v5265, %v3129
        %v5267 = vadd.f32 %v5266, %v3135
        %v5268 = vadd.f32 %v5267, %v3141
        %v5269 = vadd.f32 %v5268, %v3147
        %v5270 = vadd.f32 %v5269, %v3153
        %v5271 = vadd.f32 %v5270, %v3159
        %v5272 = vadd.f32 %v5271, %v3165
        %v5273 = vadd.f32 %v5272, %v3171
        %v5274 = vadd.f32 %v5273, %v3177
        %v5275 = vadd.f32 %v5274, %v3183
        %v5276 = vadd.f32 %v5275, %v3189
        %v5277 = vadd.f32 %v5276, %v3195
        %v5278 = vadd.f32 %v5277, %v3201
        %v5279 = vadd.f32 %v5278, %v3207
        %v5280 = vadd.f32 %v5279, %v3213
        %v5281 = vadd.f32 %v5280, %v3219
        %v5282 = vadd.f32 %v5281, %v3225
        %v5283 = vadd.f32 %v5282, %v3231
        %v5284 = vadd.f32 %v5283, %v3237
        %v5285 = vadd.f32 %v5284, %v3243
        %v5286 = vadd.f32 %v5285, %v3249
        %v5287 = vadd.f32 %v5286, %v3255
        %v5288 = vadd.f32 %v5287, %v3261
        %v5289 = vadd.f32 %v5288, %v3267
        %v5290 = vadd.f32 %v5289, %v3273
        %v5291 = vadd.f32 %v5290, %v3279
        %v5292 = vadd.f32 %v5291, %v3285
        %v5293 = vadd.f32 %v5292, %v3291
        %v5294 = vadd.f32 %v5293, %v3297
        %v5295 = vadd.f32 %v5294, %v3303
        %v5296 = vadd.f32 %v5295, %v3309
        %v5297 = vadd.f32 %v5296, %v3315
        %v5298 = vadd.f32 %v5297, %v3321
        %v5299 = vadd.f32 %v5298, %v3327
        %v5300 = vadd.f32 %v5299, %v3333
        %v5301 = vadd.f32 %v5300, %v3339
        %v5302 = vadd.f32 %v5301, %v3345
        %v5303 = vadd.f32 %v5302, %v3351
        %v5304 = vrot.slane %v5303, 4
        %v5305 = vadd.f32 %v5303, %v5304
        %v5306 = vrot.slane %v5305, 2
        %v5307 = vadd.f32 %v5305, %v5306
        %v5308 = vrot.slane %v5307, 1
        %v5309 = vadd.f32 %v5307, %v5308
        %v5310 = vadd.f32 %v3106, %v3112
        %v5311 = vadd.f32 %v5310, %v3118
        %v5312 = vadd.f32 %v5311, %v3124
        %v5313 = vadd.f32 %v5312, %v3130
        %v5314 = vadd.f32 %v5313, %v3136
        %v5315 = vadd.f32 %v5314, %v3142
        %v5316 = vadd.f32 %v5315, %v3148
        %v5317 = vadd.f32 %v5316, %v3154
        %v5318 = vadd.f32 %v5317, %v3160
        %v5319 = vadd.f32 %v5318, %v3166
        %v5320 = vadd.f32 %v5319, %v3172
        %v5321 = vadd.f32 %v5320, %v3178
        %v5322 = vadd.f32 %v5321, %v3184
        %v5323 = vadd.f32 %v5322, %v3190
        %v5324 = vadd.f32 %v5323, %v3196
        %v5325 = vadd.f32 %v5324, %v3202
        %v5326 = vadd.f32 %v5325, %v3208
        %v5327 = vadd.f32 %v5326, %v3214
        %v5328 = vadd.f32 %v5327, %v3220
        %v5329 = vadd.f32 %v5328, %v3226
        %v5330 = vadd.f32 %v5329, %v3232
        %v5331 = vadd.f32 %v5330, %v3238
        %v5332 = vadd.f32 %v5331, %v3244
        %v5333 = vadd.f32 %v5332, %v3250
        %v5334 = vadd.f32 %v5333, %v3256
        %v5335 = vadd.f32 %v5334, %v3262
        %v5336 = vadd.f32 %v5335, %v3268
        %v5337 = vadd.f32 %v5336, %v3274
        %v5338 = vadd.f32 %v5337, %v3280
        %v5339 = vadd.f32 %v5338, %v3286
        %v5340 = vadd.f32 %v5339, %v3292
        %v5341 = vadd.f32 %v5340, %v3298
        %v5342 = vadd.f32 %v5341, %v3304
        %v5343 = vadd.f32 %v5342, %v3310
        %v5344 = vadd.f32 %v5343, %v3316
        %v5345 = vadd.f32 %v5344, %v3322
        %v5346 = vadd.f32 %v5345, %v3328
        %v5347 = vadd.f32 %v5346, %v3334
        %v5348 = vadd.f32 %v5347, %v3340
        %v5349 = vadd.f32 %v5348, %v3346
        %v5350 = vadd.f32 %v5349, %v3352
        %v5351 = vrot.slane %v5350, 4
        %v5352 = vadd.f32 %v5350, %v5351
        %v5353 = vrot.slane %v5352, 2
        %v5354 = vadd.f32 %v5352, %v5353
        %v5355 = vrot.slane %v5354, 1
        %v5356 = vadd.f32 %v5354, %v5355
        %v5357 = vadd.f32 %v3107, %v3113
        %v5358 = vadd.f32 %v5357, %v3119
        %v5359 = vadd.f32 %v5358, %v3125
        %v5360 = vadd.f32 %v5359, %v3131
        %v5361 = vadd.f32 %v5360, %v3137
        %v5362 = vadd.f32 %v5361, %v3143
        %v5363 = vadd.f32 %v5362, %v3149
        %v5364 = vadd.f32 %v5363, %v3155
        %v5365 = vadd.f32 %v5364, %v3161
        %v5366 = vadd.f32 %v5365, %v3167
        %v5367 = vadd.f32 %v5366, %v3173
        %v5368 = vadd.f32 %v5367, %v3179
        %v5369 = vadd.f32 %v5368, %v3185
        %v5370 = vadd.f32 %v5369, %v3191
        %v5371 = vadd.f32 %v5370, %v3197
        %v5372 = vadd.f32 %v5371, %v3203
        %v5373 = vadd.f32 %v5372, %v3209
        %v5374 = vadd.f32 %v5373, %v3215
        %v5375 = vadd.f32 %v5374, %v3221
        %v5376 = vadd.f32 %v5375, %v3227
        %v5377 = vadd.f32 %v5376, %v3233
        %v5378 = vadd.f32 %v5377, %v3239
        %v5379 = vadd.f32 %v5378, %v3245
        %v5380 = vadd.f32 %v5379, %v3251
        %v5381 = vadd.f32 %v5380, %v3257
        %v5382 = vadd.f32 %v5381, %v3263
        %v5383 = vadd.f32 %v5382, %v3269
        %v5384 = vadd.f32 %v5383, %v3275
        %v5385 = vadd.f32 %v5384, %v3281
        %v5386 = vadd.f32 %v5385, %v3287
        %v5387 = vadd.f32 %v5386, %v3293
        %v5388 = vadd.f32 %v5387, %v3299
        %v5389 = vadd.f32 %v5388, %v3305
        %v5390 = vadd.f32 %v5389, %v3311
        %v5391 = vadd.f32 %v5390, %v3317
        %v5392 = vadd.f32 %v5391, %v3323
        %v5393 = vadd.f32 %v5392, %v3329
        %v5394 = vadd.f32 %v5393, %v3335
        %v5395 = vadd.f32 %v5394, %v3341
        %v5396 = vadd.f32 %v5395, %v3347
        %v5397 = vadd.f32 %v5396, %v3353
        %v5398 = vrot.slane %v5397, 4
        %v5399 = vadd.f32 %v5397, %v5398
        %v5400 = vrot.slane %v5399, 2
        %v5401 = vadd.f32 %v5399, %v5400
        %v5402 = vrot.slane %v5401, 1
        %v5403 = vadd.f32 %v5401, %v5402
        %v5404 = vadd.f32 %v3108, %v3114
        %v5405 = vadd.f32 %v5404, %v3120
        %v5406 = vadd.f32 %v5405, %v3126
        %v5407 = vadd.f32 %v5406, %v3132
        %v5408 = vadd.f32 %v5407, %v3138
        %v5409 = vadd.f32 %v5408, %v3144
        %v5410 = vadd.f32 %v5409, %v3150
        %v5411 = vadd.f32 %v5410, %v3156
        %v5412 = vadd.f32 %v5411, %v3162
        %v5413 = vadd.f32 %v5412, %v3168
        %v5414 = vadd.f32 %v5413, %v3174
        %v5415 = vadd.f32 %v5414, %v3180
        %v5416 = vadd.f32 %v5415, %v3186
        %v5417 = vadd.f32 %v5416, %v3192
        %v5418 = vadd.f32 %v5417, %v3198
        %v5419 = vadd.f32 %v5418, %v3204
        %v5420 = vadd.f32 %v5419, %v3210
        %v5421 = vadd.f32 %v5420, %v3216
        %v5422 = vadd.f32 %v5421, %v3222
        %v5423 = vadd.f32 %v5422, %v3228
        %v5424 = vadd.f32 %v5423, %v3234
        %v5425 = vadd.f32 %v5424, %v3240
        %v5426 = vadd.f32 %v5425, %v3246
        %v5427 = vadd.f32 %v5426, %v3252
        %v5428 = vadd.f32 %v5427, %v3258
        %v5429 = vadd.f32 %v5428, %v3264
        %v5430 = vadd.f32 %v5429, %v3270
        %v5431 = vadd.f32 %v5430, %v3276
        %v5432 = vadd.f32 %v5431, %v3282
        %v5433 = vadd.f32 %v5432, %v3288
        %v5434 = vadd.f32 %v5433, %v3294
        %v5435 = vadd.f32 %v5434, %v3300
        %v5436 = vadd.f32 %v5435, %v3306
        %v5437 = vadd.f32 %v5436, %v3312
        %v5438 = vadd.f32 %v5437, %v3318
        %v5439 = vadd.f32 %v5438, %v3324
        %v5440 = vadd.f32 %v5439, %v3330
        %v5441 = vadd.f32 %v5440, %v3336
        %v5442 = vadd.f32 %v5441, %v3342
        %v5443 = vadd.f32 %v5442, %v3348
        %v5444 = vadd.f32 %v5443, %v3354
        %v5445 = vrot.slane %v5444, 4
        %v5446 = vadd.f32 %v5444, %v5445
        %v5447 = vrot.slane %v5446, 2
        %v5448 = vadd.f32 %v5446, %v5447
        %v5449 = vrot.slane %v5448, 1
        %v5450 = vadd.f32 %v5448, %v5449
        %v5451 = vadd.f32 %v3109, %v3115
        %v5452 = vadd.f32 %v5451, %v3121
        %v5453 = vadd.f32 %v5452, %v3127
        %v5454 = vadd.f32 %v5453, %v3133
        %v5455 = vadd.f32 %v5454, %v3139
        %v5456 = vadd.f32 %v5455, %v3145
        %v5457 = vadd.f32 %v5456, %v3151
        %v5458 = vadd.f32 %v5457, %v3157
        %v5459 = vadd.f32 %v5458, %v3163
        %v5460 = vadd.f32 %v5459, %v3169
        %v5461 = vadd.f32 %v5460, %v3175
        %v5462 = vadd.f32 %v5461, %v3181
        %v5463 = vadd.f32 %v5462, %v3187
        %v5464 = vadd.f32 %v5463, %v3193
        %v5465 = vadd.f32 %v5464, %v3199
        %v5466 = vadd.f32 %v5465, %v3205
        %v5467 = vadd.f32 %v5466, %v3211
        %v5468 = vadd.f32 %v5467, %v3217
        %v5469 = vadd.f32 %v5468, %v3223
        %v5470 = vadd.f32 %v5469, %v3229
        %v5471 = vadd.f32 %v5470, %v3235
        %v5472 = vadd.f32 %v5471, %v3241
        %v5473 = vadd.f32 %v5472, %v3247
        %v5474 = vadd.f32 %v5473, %v3253
        %v5475 = vadd.f32 %v5474, %v3259
        %v5476 = vadd.f32 %v5475, %v3265
        %v5477 = vadd.f32 %v5476, %v3271
        %v5478 = vadd.f32 %v5477, %v3277
        %v5479 = vadd.f32 %v5478, %v3283
        %v5480 = vadd.f32 %v5479, %v3289
        %v5481 = vadd.f32 %v5480, %v3295
        %v5482 = vadd.f32 %v5481, %v3301
        %v5483 = vadd.f32 %v5482, %v3307
        %v5484 = vadd.f32 %v5483, %v3313
        %v5485 = vadd.f32 %v5484, %v3319
        %v5486 = vadd.f32 %v5485, %v3325
        %v5487 = vadd.f32 %v5486, %v3331
        %v5488 = vadd.f32 %v5487, %v3337
        %v5489 = vadd.f32 %v5488, %v3343
        %v5490 = vadd.f32 %v5489, %v3349
        %v5491 = vadd.f32 %v5490, %v3355
        %v5492 = vrot.slane %v5491, 4
        %v5493 = vadd.f32 %v5491, %v5492
        %v5494 = vrot.slane %v5493, 2
        %v5495 = vadd.f32 %v5493, %v5494
        %v5496 = vrot.slane %v5495, 1
        %v5497 = vadd.f32 %v5495, %v5496
        %v5498 = vadd.f32 %v3356, %v3362
        %v5499 = vadd.f32 %v5498, %v3368
        %v5500 = vadd.f32 %v5499, %v3374
        %v5501 = vadd.f32 %v5500, %v3380
        %v5502 = vadd.f32 %v5501, %v3386
        %v5503 = vadd.f32 %v5502, %v3392
        %v5504 = vadd.f32 %v5503, %v3398
        %v5505 = vadd.f32 %v5504, %v3404
        %v5506 = vadd.f32 %v5505, %v3410
        %v5507 = vadd.f32 %v5506, %v3416
        %v5508 = vadd.f32 %v5507, %v3422
        %v5509 = vadd.f32 %v5508, %v3428
        %v5510 = vadd.f32 %v5509, %v3434
        %v5511 = vadd.f32 %v5510, %v3440
        %v5512 = vadd.f32 %v5511, %v3446
        %v5513 = vadd.f32 %v5512, %v3452
        %v5514 = vadd.f32 %v5513, %v3458
        %v5515 = vadd.f32 %v5514, %v3464
        %v5516 = vadd.f32 %v5515, %v3470
        %v5517 = vadd.f32 %v5516, %v3476
        %v5518 = vadd.f32 %v5517, %v3482
        %v5519 = vadd.f32 %v5518, %v3488
        %v5520 = vadd.f32 %v5519, %v3494
        %v5521 = vadd.f32 %v5520, %v3500
        %v5522 = vadd.f32 %v5521, %v3506
        %v5523 = vadd.f32 %v5522, %v3512
        %v5524 = vadd.f32 %v5523, %v3518
        %v5525 = vadd.f32 %v5524, %v3524
        %v5526 = vadd.f32 %v5525, %v3530
        %v5527 = vadd.f32 %v5526, %v3536
        %v5528 = vadd.f32 %v5527, %v3542
        %v5529 = vadd.f32 %v5528, %v3548
        %v5530 = vadd.f32 %v5529, %v3554
        %v5531 = vadd.f32 %v5530, %v3560
        %v5532 = vadd.f32 %v5531, %v3566
        %v5533 = vadd.f32 %v5532, %v3572
        %v5534 = vadd.f32 %v5533, %v3578
        %v5535 = vadd.f32 %v5534, %v3584
        %v5536 = vadd.f32 %v5535, %v3590
        %v5537 = vadd.f32 %v5536, %v3596
        %v5538 = vadd.f32 %v5537, %v3602
        %v5539 = vrot.slane %v5538, 4
        %v5540 = vadd.f32 %v5538, %v5539
        %v5541 = vrot.slane %v5540, 2
        %v5542 = vadd.f32 %v5540, %v5541
        %v5543 = vrot.slane %v5542, 1
        %v5544 = vadd.f32 %v5542, %v5543
        %v5545 = vadd.f32 %v3357, %v3363
        %v5546 = vadd.f32 %v5545, %v3369
        %v5547 = vadd.f32 %v5546, %v3375
        %v5548 = vadd.f32 %v5547, %v3381
        %v5549 = vadd.f32 %v5548, %v3387
        %v5550 = vadd.f32 %v5549, %v3393
        %v5551 = vadd.f32 %v5550, %v3399
        %v5552 = vadd.f32 %v5551, %v3405
        %v5553 = vadd.f32 %v5552, %v3411
        %v5554 = vadd.f32 %v5553, %v3417
        %v5555 = vadd.f32 %v5554, %v3423
        %v5556 = vadd.f32 %v5555, %v3429
        %v5557 = vadd.f32 %v5556, %v3435
        %v5558 = vadd.f32 %v5557, %v3441
        %v5559 = vadd.f32 %v5558, %v3447
        %v5560 = vadd.f32 %v5559, %v3453
        %v5561 = vadd.f32 %v5560, %v3459
        %v5562 = vadd.f32 %v5561, %v3465
        %v5563 = vadd.f32 %v5562, %v3471
        %v5564 = vadd.f32 %v5563, %v3477
        %v5565 = vadd.f32 %v5564, %v3483
        %v5566 = vadd.f32 %v5565, %v3489
        %v5567 = vadd.f32 %v5566, %v3495
        %v5568 = vadd.f32 %v5567, %v3501
        %v5569 = vadd.f32 %v5568, %v3507
        %v5570 = vadd.f32 %v5569, %v3513
        %v5571 = vadd.f32 %v5570, %v3519
        %v5572 = vadd.f32 %v5571, %v3525
        %v5573 = vadd.f32 %v5572, %v3531
        %v5574 = vadd.f32 %v5573, %v3537
        %v5575 = vadd.f32 %v5574, %v3543
        %v5576 = vadd.f32 %v5575, %v3549
        %v5577 = vadd.f32 %v5576, %v3555
        %v5578 = vadd.f32 %v5577, %v3561
        %v5579 = vadd.f32 %v5578, %v3567
        %v5580 = vadd.f32 %v5579, %v3573
        %v5581 = vadd.f32 %v5580, %v3579
        %v5582 = vadd.f32 %v5581, %v3585
        %v5583 = vadd.f32 %v5582, %v3591
        %v5584 = vadd.f32 %v5583, %v3597
        %v5585 = vadd.f32 %v5584, %v3603
        %v5586 = vrot.slane %v5585, 4
        %v5587 = vadd.f32 %v5585, %v5586
        %v5588 = vrot.slane %v5587, 2
        %v5589 = vadd.f32 %v5587, %v5588
        %v5590 = vrot.slane %v5589, 1
        %v5591 = vadd.f32 %v5589, %v5590
        %v5592 = vadd.f32 %v3358, %v3364
        %v5593 = vadd.f32 %v5592, %v3370
        %v5594 = vadd.f32 %v5593, %v3376
        %v5595 = vadd.f32 %v5594, %v3382
        %v5596 = vadd.f32 %v5595, %v3388
        %v5597 = vadd.f32 %v5596, %v3394
        %v5598 = vadd.f32 %v5597, %v3400
        %v5599 = vadd.f32 %v5598, %v3406
        %v5600 = vadd.f32 %v5599, %v3412
        %v5601 = vadd.f32 %v5600, %v3418
        %v5602 = vadd.f32 %v5601, %v3424
        %v5603 = vadd.f32 %v5602, %v3430
        %v5604 = vadd.f32 %v5603, %v3436
        %v5605 = vadd.f32 %v5604, %v3442
        %v5606 = vadd.f32 %v5605, %v3448
        %v5607 = vadd.f32 %v5606, %v3454
        %v5608 = vadd.f32 %v5607, %v3460
        %v5609 = vadd.f32 %v5608, %v3466
        %v5610 = vadd.f32 %v5609, %v3472
        %v5611 = vadd.f32 %v5610, %v3478
        %v5612 = vadd.f32 %v5611, %v3484
        %v5613 = vadd.f32 %v5612, %v3490
        %v5614 = vadd.f32 %v5613, %v3496
        %v5615 = vadd.f32 %v5614, %v3502
        %v5616 = vadd.f32 %v5615, %v3508
        %v5617 = vadd.f32 %v5616, %v3514
        %v5618 = vadd.f32 %v5617, %v3520
        %v5619 = vadd.f32 %v5618, %v3526
        %v5620 = vadd.f32 %v5619, %v3532
        %v5621 = vadd.f32 %v5620, %v3538
        %v5622 = vadd.f32 %v5621, %v3544
        %v5623 = vadd.f32 %v5622, %v3550
        %v5624 = vadd.f32 %v5623, %v3556
        %v5625 = vadd.f32 %v5624, %v3562
        %v5626 = vadd.f32 %v5625, %v3568
        %v5627 = vadd.f32 %v5626, %v3574
        %v5628 = vadd.f32 %v5627, %v3580
        %v5629 = vadd.f32 %v5628, %v3586
        %v5630 = vadd.f32 %v5629, %v3592
        %v5631 = vadd.f32 %v5630, %v3598
        %v5632 = vadd.f32 %v5631, %v3604
        %v5633 = vrot.slane %v5632, 4
        %v5634 = vadd.f32 %v5632, %v5633
        %v5635 = vrot.slane %v5634, 2
        %v5636 = vadd.f32 %v5634, %v5635
        %v5637 = vrot.slane %v5636, 1
        %v5638 = vadd.f32 %v5636, %v5637
        %v5639 = vadd.f32 %v3359, %v3365
        %v5640 = vadd.f32 %v5639, %v3371
        %v5641 = vadd.f32 %v5640, %v3377
        %v5642 = vadd.f32 %v5641, %v3383
        %v5643 = vadd.f32 %v5642, %v3389
        %v5644 = vadd.f32 %v5643, %v3395
        %v5645 = vadd.f32 %v5644, %v3401
        %v5646 = vadd.f32 %v5645, %v3407
        %v5647 = vadd.f32 %v5646, %v3413
        %v5648 = vadd.f32 %v5647, %v3419
        %v5649 = vadd.f32 %v5648, %v3425
        %v5650 = vadd.f32 %v5649, %v3431
        %v5651 = vadd.f32 %v5650, %v3437
        %v5652 = vadd.f32 %v5651, %v3443
        %v5653 = vadd.f32 %v5652, %v3449
        %v5654 = vadd.f32 %v5653, %v3455
        %v5655 = vadd.f32 %v5654, %v3461
        %v5656 = vadd.f32 %v5655, %v3467
        %v5657 = vadd.f32 %v5656, %v3473
        %v5658 = vadd.f32 %v5657, %v3479
        %v5659 = vadd.f32 %v5658, %v3485
        %v5660 = vadd.f32 %v5659, %v3491
        %v5661 = vadd.f32 %v5660, %v3497
        %v5662 = vadd.f32 %v5661, %v3503
        %v5663 = vadd.f32 %v5662, %v3509
        %v5664 = vadd.f32 %v5663, %v3515
        %v5665 = vadd.f32 %v5664, %v3521
        %v5666 = vadd.f32 %v5665, %v3527
        %v5667 = vadd.f32 %v5666, %v3533
        %v5668 = vadd.f32 %v5667, %v3539
        %v5669 = vadd.f32 %v5668, %v3545
        %v5670 = vadd.f32 %v5669, %v3551
        %v5671 = vadd.f32 %v5670, %v3557
        %v5672 = vadd.f32 %v5671, %v3563
        %v5673 = vadd.f32 %v5672, %v3569
        %v5674 = vadd.f32 %v5673, %v3575
        %v5675 = vadd.f32 %v5674, %v3581
        %v5676 = vadd.f32 %v5675, %v3587
        %v5677 = vadd.f32 %v5676, %v3593
        %v5678 = vadd.f32 %v5677, %v3599
        %v5679 = vadd.f32 %v5678, %v3605
        %v5680 = vrot.slane %v5679, 4
        %v5681 = vadd.f32 %v5679, %v5680
        %v5682 = vrot.slane %v5681, 2
        %v5683 = vadd.f32 %v5681, %v5682
        %v5684 = vrot.slane %v5683, 1
        %v5685 = vadd.f32 %v5683, %v5684
        %v5686 = vadd.f32 %v3360, %v3366
        %v5687 = vadd.f32 %v5686, %v3372
        %v5688 = vadd.f32 %v5687, %v3378
        %v5689 = vadd.f32 %v5688, %v3384
        %v5690 = vadd.f32 %v5689, %v3390
        %v5691 = vadd.f32 %v5690, %v3396
        %v5692 = vadd.f32 %v5691, %v3402
        %v5693 = vadd.f32 %v5692, %v3408
        %v5694 = vadd.f32 %v5693, %v3414
        %v5695 = vadd.f32 %v5694, %v3420
        %v5696 = vadd.f32 %v5695, %v3426
        %v5697 = vadd.f32 %v5696, %v3432
        %v5698 = vadd.f32 %v5697, %v3438
        %v5699 = vadd.f32 %v5698, %v3444
        %v5700 = vadd.f32 %v5699, %v3450
        %v5701 = vadd.f32 %v5700, %v3456
        %v5702 = vadd.f32 %v5701, %v3462
        %v5703 = vadd.f32 %v5702, %v3468
        %v5704 = vadd.f32 %v5703, %v3474
        %v5705 = vadd.f32 %v5704, %v3480
        %v5706 = vadd.f32 %v5705, %v3486
        %v5707 = vadd.f32 %v5706, %v3492
        %v5708 = vadd.f32 %v5707, %v3498
        %v5709 = vadd.f32 %v5708, %v3504
        %v5710 = vadd.f32 %v5709, %v3510
        %v5711 = vadd.f32 %v5710, %v3516
        %v5712 = vadd.f32 %v5711, %v3522
        %v5713 = vadd.f32 %v5712, %v3528
        %v5714 = vadd.f32 %v5713, %v3534
        %v5715 = vadd.f32 %v5714, %v3540
        %v5716 = vadd.f32 %v5715, %v3546
        %v5717 = vadd.f32 %v5716, %v3552
        %v5718 = vadd.f32 %v5717, %v3558
        %v5719 = vadd.f32 %v5718, %v3564
        %v5720 = vadd.f32 %v5719, %v3570
        %v5721 = vadd.f32 %v5720, %v3576
        %v5722 = vadd.f32 %v5721, %v3582
        %v5723 = vadd.f32 %v5722, %v3588
        %v5724 = vadd.f32 %v5723, %v3594
        %v5725 = vadd.f32 %v5724, %v3600
        %v5726 = vadd.f32 %v5725, %v3606
        %v5727 = vrot.slane %v5726, 4
        %v5728 = vadd.f32 %v5726, %v5727
        %v5729 = vrot.slane %v5728, 2
        %v5730 = vadd.f32 %v5728, %v5729
        %v5731 = vrot.slane %v5730, 1
        %v5732 = vadd.f32 %v5730, %v5731
        %v5733 = vadd.f32 %v3361, %v3367
        %v5734 = vadd.f32 %v5733, %v3373
        %v5735 = vadd.f32 %v5734, %v3379
        %v5736 = vadd.f32 %v5735, %v3385
        %v5737 = vadd.f32 %v5736, %v3391
        %v5738 = vadd.f32 %v5737, %v3397
        %v5739 = vadd.f32 %v5738, %v3403
        %v5740 = vadd.f32 %v5739, %v3409
        %v5741 = vadd.f32 %v5740, %v3415
        %v5742 = vadd.f32 %v5741, %v3421
        %v5743 = vadd.f32 %v5742, %v3427
        %v5744 = vadd.f32 %v5743, %v3433
        %v5745 = vadd.f32 %v5744, %v3439
        %v5746 = vadd.f32 %v5745, %v3445
        %v5747 = vadd.f32 %v5746, %v3451
        %v5748 = vadd.f32 %v5747, %v3457
        %v5749 = vadd.f32 %v5748, %v3463
        %v5750 = vadd.f32 %v5749, %v3469
        %v5751 = vadd.f32 %v5750, %v3475
        %v5752 = vadd.f32 %v5751, %v3481
        %v5753 = vadd.f32 %v5752, %v3487
        %v5754 = vadd.f32 %v5753, %v3493
        %v5755 = vadd.f32 %v5754, %v3499
        %v5756 = vadd.f32 %v5755, %v3505
        %v5757 = vadd.f32 %v5756, %v3511
        %v5758 = vadd.f32 %v5757, %v3517
        %v5759 = vadd.f32 %v5758, %v3523
        %v5760 = vadd.f32 %v5759, %v3529
        %v5761 = vadd.f32 %v5760, %v3535
        %v5762 = vadd.f32 %v5761, %v3541
        %v5763 = vadd.f32 %v5762, %v3547
        %v5764 = vadd.f32 %v5763, %v3553
        %v5765 = vadd.f32 %v5764, %v3559
        %v5766 = vadd.f32 %v5765, %v3565
        %v5767 = vadd.f32 %v5766, %v3571
        %v5768 = vadd.f32 %v5767, %v3577
        %v5769 = vadd.f32 %v5768, %v3583
        %v5770 = vadd.f32 %v5769, %v3589
        %v5771 = vadd.f32 %v5770, %v3595
        %v5772 = vadd.f32 %v5771, %v3601
        %v5773 = vadd.f32 %v5772, %v3607
        %v5774 = vrot.slane %v5773, 4
        %v5775 = vadd.f32 %v5773, %v5774
        %v5776 = vrot.slane %v5775, 2
        %v5777 = vadd.f32 %v5775, %v5776
        %v5778 = vrot.slane %v5777, 1
        %v5779 = vadd.f32 %v5777, %v5778
        %v5780 = vadd.f32 %v3608, %v3614
        %v5781 = vadd.f32 %v5780, %v3620
        %v5782 = vadd.f32 %v5781, %v3626
        %v5783 = vadd.f32 %v5782, %v3632
        %v5784 = vadd.f32 %v5783, %v3638
        %v5785 = vadd.f32 %v5784, %v3644
        %v5786 = vadd.f32 %v5785, %v3650
        %v5787 = vadd.f32 %v5786, %v3656
        %v5788 = vadd.f32 %v5787, %v3662
        %v5789 = vadd.f32 %v5788, %v3668
        %v5790 = vadd.f32 %v5789, %v3674
        %v5791 = vadd.f32 %v5790, %v3680
        %v5792 = vadd.f32 %v5791, %v3686
        %v5793 = vadd.f32 %v5792, %v3692
        %v5794 = vadd.f32 %v5793, %v3698
        %v5795 = vadd.f32 %v5794, %v3704
        %v5796 = vadd.f32 %v5795, %v3710
        %v5797 = vadd.f32 %v5796, %v3716
        %v5798 = vadd.f32 %v5797, %v3722
        %v5799 = vadd.f32 %v5798, %v3728
        %v5800 = vadd.f32 %v5799, %v3734
        %v5801 = vadd.f32 %v5800, %v3740
        %v5802 = vadd.f32 %v5801, %v3746
        %v5803 = vadd.f32 %v5802, %v3752
        %v5804 = vadd.f32 %v5803, %v3758
        %v5805 = vadd.f32 %v5804, %v3764
        %v5806 = vadd.f32 %v5805, %v3770
        %v5807 = vadd.f32 %v5806, %v3776
        %v5808 = vadd.f32 %v5807, %v3782
        %v5809 = vadd.f32 %v5808, %v3788
        %v5810 = vadd.f32 %v5809, %v3794
        %v5811 = vadd.f32 %v5810, %v3800
        %v5812 = vadd.f32 %v5811, %v3806
        %v5813 = vadd.f32 %v5812, %v3812
        %v5814 = vadd.f32 %v5813, %v3818
        %v5815 = vadd.f32 %v5814, %v3824
        %v5816 = vadd.f32 %v5815, %v3830
        %v5817 = vadd.f32 %v5816, %v3836
        %v5818 = vadd.f32 %v5817, %v3842
        %v5819 = vadd.f32 %v5818, %v3848
        %v5820 = vadd.f32 %v5819, %v3854
        %v5821 = vrot.slane %v5820, 4
        %v5822 = vadd.f32 %v5820, %v5821
        %v5823 = vrot.slane %v5822, 2
        %v5824 = vadd.f32 %v5822, %v5823
        %v5825 = vrot.slane %v5824, 1
        %v5826 = vadd.f32 %v5824, %v5825
        %v5827 = vadd.f32 %v3609, %v3615
        %v5828 = vadd.f32 %v5827, %v3621
        %v5829 = vadd.f32 %v5828, %v3627
        %v5830 = vadd.f32 %v5829, %v3633
        %v5831 = vadd.f32 %v5830, %v3639
        %v5832 = vadd.f32 %v5831, %v3645
        %v5833 = vadd.f32 %v5832, %v3651
        %v5834 = vadd.f32 %v5833, %v3657
        %v5835 = vadd.f32 %v5834, %v3663
        %v5836 = vadd.f32 %v5835, %v3669
        %v5837 = vadd.f32 %v5836, %v3675
        %v5838 = vadd.f32 %v5837, %v3681
        %v5839 = vadd.f32 %v5838, %v3687
        %v5840 = vadd.f32 %v5839, %v3693
        %v5841 = vadd.f32 %v5840, %v3699
        %v5842 = vadd.f32 %v5841, %v3705
        %v5843 = vadd.f32 %v5842, %v3711
        %v5844 = vadd.f32 %v5843, %v3717
        %v5845 = vadd.f32 %v5844, %v3723
        %v5846 = vadd.f32 %v5845, %v3729
        %v5847 = vadd.f32 %v5846, %v3735
        %v5848 = vadd.f32 %v5847, %v3741
        %v5849 = vadd.f32 %v5848, %v3747
        %v5850 = vadd.f32 %v5849, %v3753
        %v5851 = vadd.f32 %v5850, %v3759
        %v5852 = vadd.f32 %v5851, %v3765
        %v5853 = vadd.f32 %v5852, %v3771
        %v5854 = vadd.f32 %v5853, %v3777
        %v5855 = vadd.f32 %v5854, %v3783
        %v5856 = vadd.f32 %v5855, %v3789
        %v5857 = vadd.f32 %v5856, %v3795
        %v5858 = vadd.f32 %v5857, %v3801
        %v5859 = vadd.f32 %v5858, %v3807
        %v5860 = vadd.f32 %v5859, %v3813
        %v5861 = vadd.f32 %v5860, %v3819
        %v5862 = vadd.f32 %v5861, %v3825
        %v5863 = vadd.f32 %v5862, %v3831
        %v5864 = vadd.f32 %v5863, %v3837
        %v5865 = vadd.f32 %v5864, %v3843
        %v5866 = vadd.f32 %v5865, %v3849
        %v5867 = vadd.f32 %v5866, %v3855
        %v5868 = vrot.slane %v5867, 4
        %v5869 = vadd.f32 %v5867, %v5868
        %v5870 = vrot.slane %v5869, 2
        %v5871 = vadd.f32 %v5869, %v5870
        %v5872 = vrot.slane %v5871, 1
        %v5873 = vadd.f32 %v5871, %v5872
        %v5874 = vadd.f32 %v3610, %v3616
        %v5875 = vadd.f32 %v5874, %v3622
        %v5876 = vadd.f32 %v5875, %v3628
        %v5877 = vadd.f32 %v5876, %v3634
        %v5878 = vadd.f32 %v5877, %v3640
        %v5879 = vadd.f32 %v5878, %v3646
        %v5880 = vadd.f32 %v5879, %v3652
        %v5881 = vadd.f32 %v5880, %v3658
        %v5882 = vadd.f32 %v5881, %v3664
        %v5883 = vadd.f32 %v5882, %v3670
        %v5884 = vadd.f32 %v5883, %v3676
        %v5885 = vadd.f32 %v5884, %v3682
        %v5886 = vadd.f32 %v5885, %v3688
        %v5887 = vadd.f32 %v5886, %v3694
        %v5888 = vadd.f32 %v5887, %v3700
        %v5889 = vadd.f32 %v5888, %v3706
        %v5890 = vadd.f32 %v5889, %v3712
        %v5891 = vadd.f32 %v5890, %v3718
        %v5892 = vadd.f32 %v5891, %v3724
        %v5893 = vadd.f32 %v5892, %v3730
        %v5894 = vadd.f32 %v5893, %v3736
        %v5895 = vadd.f32 %v5894, %v3742
        %v5896 = vadd.f32 %v5895, %v3748
        %v5897 = vadd.f32 %v5896, %v3754
        %v5898 = vadd.f32 %v5897, %v3760
        %v5899 = vadd.f32 %v5898, %v3766
        %v5900 = vadd.f32 %v5899, %v3772
        %v5901 = vadd.f32 %v5900, %v3778
        %v5902 = vadd.f32 %v5901, %v3784
        %v5903 = vadd.f32 %v5902, %v3790
        %v5904 = vadd.f32 %v5903, %v3796
        %v5905 = vadd.f32 %v5904, %v3802
        %v5906 = vadd.f32 %v5905, %v3808
        %v5907 = vadd.f32 %v5906, %v3814
        %v5908 = vadd.f32 %v5907, %v3820
        %v5909 = vadd.f32 %v5908, %v3826
        %v5910 = vadd.f32 %v5909, %v3832
        %v5911 = vadd.f32 %v5910, %v3838
        %v5912 = vadd.f32 %v5911, %v3844
        %v5913 = vadd.f32 %v5912, %v3850
        %v5914 = vadd.f32 %v5913, %v3856
        %v5915 = vrot.slane %v5914, 4
        %v5916 = vadd.f32 %v5914, %v5915
        %v5917 = vrot.slane %v5916, 2
        %v5918 = vadd.f32 %v5916, %v5917
        %v5919 = vrot.slane %v5918, 1
        %v5920 = vadd.f32 %v5918, %v5919
        %v5921 = vadd.f32 %v3611, %v3617
        %v5922 = vadd.f32 %v5921, %v3623
        %v5923 = vadd.f32 %v5922, %v3629
        %v5924 = vadd.f32 %v5923, %v3635
        %v5925 = vadd.f32 %v5924, %v3641
        %v5926 = vadd.f32 %v5925, %v3647
        %v5927 = vadd.f32 %v5926, %v3653
        %v5928 = vadd.f32 %v5927, %v3659
        %v5929 = vadd.f32 %v5928, %v3665
        %v5930 = vadd.f32 %v5929, %v3671
        %v5931 = vadd.f32 %v5930, %v3677
        %v5932 = vadd.f32 %v5931, %v3683
        %v5933 = vadd.f32 %v5932, %v3689
        %v5934 = vadd.f32 %v5933, %v3695
        %v5935 = vadd.f32 %v5934, %v3701
        %v5936 = vadd.f32 %v5935, %v3707
        %v5937 = vadd.f32 %v5936, %v3713
        %v5938 = vadd.f32 %v5937, %v3719
        %v5939 = vadd.f32 %v5938, %v3725
        %v5940 = vadd.f32 %v5939, %v3731
        %v5941 = vadd.f32 %v5940, %v3737
        %v5942 = vadd.f32 %v5941, %v3743
        %v5943 = vadd.f32 %v5942, %v3749
        %v5944 = vadd.f32 %v5943, %v3755
        %v5945 = vadd.f32 %v5944, %v3761
        %v5946 = vadd.f32 %v5945, %v3767
        %v5947 = vadd.f32 %v5946, %v3773
        %v5948 = vadd.f32 %v5947, %v3779
        %v5949 = vadd.f32 %v5948, %v3785
        %v5950 = vadd.f32 %v5949, %v3791
        %v5951 = vadd.f32 %v5950, %v3797
        %v5952 = vadd.f32 %v5951, %v3803
        %v5953 = vadd.f32 %v5952, %v3809
        %v5954 = vadd.f32 %v5953, %v3815
        %v5955 = vadd.f32 %v5954, %v3821
        %v5956 = vadd.f32 %v5955, %v3827
        %v5957 = vadd.f32 %v5956, %v3833
        %v5958 = vadd.f32 %v5957, %v3839
        %v5959 = vadd.f32 %v5958, %v3845
        %v5960 = vadd.f32 %v5959, %v3851
        %v5961 = vadd.f32 %v5960, %v3857
        %v5962 = vrot.slane %v5961, 4
        %v5963 = vadd.f32 %v5961, %v5962
        %v5964 = vrot.slane %v5963, 2
        %v5965 = vadd.f32 %v5963, %v5964
        %v5966 = vrot.slane %v5965, 1
        %v5967 = vadd.f32 %v5965, %v5966
        %v5968 = vadd.f32 %v3612, %v3618
        %v5969 = vadd.f32 %v5968, %v3624
        %v5970 = vadd.f32 %v5969, %v3630
        %v5971 = vadd.f32 %v5970, %v3636
        %v5972 = vadd.f32 %v5971, %v3642
        %v5973 = vadd.f32 %v5972, %v3648
        %v5974 = vadd.f32 %v5973, %v3654
        %v5975 = vadd.f32 %v5974, %v3660
        %v5976 = vadd.f32 %v5975, %v3666
        %v5977 = vadd.f32 %v5976, %v3672
        %v5978 = vadd.f32 %v5977, %v3678
        %v5979 = vadd.f32 %v5978, %v3684
        %v5980 = vadd.f32 %v5979, %v3690
        %v5981 = vadd.f32 %v5980, %v3696
        %v5982 = vadd.f32 %v5981, %v3702
        %v5983 = vadd.f32 %v5982, %v3708
        %v5984 = vadd.f32 %v5983, %v3714
        %v5985 = vadd.f32 %v5984, %v3720
        %v5986 = vadd.f32 %v5985, %v3726
        %v5987 = vadd.f32 %v5986, %v3732
        %v5988 = vadd.f32 %v5987, %v3738
        %v5989 = vadd.f32 %v5988, %v3744
        %v5990 = vadd.f32 %v5989, %v3750
        %v5991 = vadd.f32 %v5990, %v3756
        %v5992 = vadd.f32 %v5991, %v3762
        %v5993 = vadd.f32 %v5992, %v3768
        %v5994 = vadd.f32 %v5993, %v3774
        %v5995 = vadd.f32 %v5994, %v3780
        %v5996 = vadd.f32 %v5995, %v3786
        %v5997 = vadd.f32 %v5996, %v3792
        %v5998 = vadd.f32 %v5997, %v3798
        %v5999 = vadd.f32 %v5998, %v3804
        %v6000 = vadd.f32 %v5999, %v3810
        %v6001 = vadd.f32 %v6000, %v3816
        %v6002 = vadd.f32 %v6001, %v3822
        %v6003 = vadd.f32 %v6002, %v3828
        %v6004 = vadd.f32 %v6003, %v3834
        %v6005 = vadd.f32 %v6004, %v3840
        %v6006 = vadd.f32 %v6005, %v3846
        %v6007 = vadd.f32 %v6006, %v3852
        %v6008 = vadd.f32 %v6007, %v3858
        %v6009 = vrot.slane %v6008, 4
        %v6010 = vadd.f32 %v6008, %v6009
        %v6011 = vrot.slane %v6010, 2
        %v6012 = vadd.f32 %v6010, %v6011
        %v6013 = vrot.slane %v6012, 1
        %v6014 = vadd.f32 %v6012, %v6013
        %v6015 = vadd.f32 %v3613, %v3619
        %v6016 = vadd.f32 %v6015, %v3625
        %v6017 = vadd.f32 %v6016, %v3631
        %v6018 = vadd.f32 %v6017, %v3637
        %v6019 = vadd.f32 %v6018, %v3643
        %v6020 = vadd.f32 %v6019, %v3649
        %v6021 = vadd.f32 %v6020, %v3655
        %v6022 = vadd.f32 %v6021, %v3661
        %v6023 = vadd.f32 %v6022, %v3667
        %v6024 = vadd.f32 %v6023, %v3673
        %v6025 = vadd.f32 %v6024, %v3679
        %v6026 = vadd.f32 %v6025, %v3685
        %v6027 = vadd.f32 %v6026, %v3691
        %v6028 = vadd.f32 %v6027, %v3697
        %v6029 = vadd.f32 %v6028, %v3703
        %v6030 = vadd.f32 %v6029, %v3709
        %v6031 = vadd.f32 %v6030, %v3715
        %v6032 = vadd.f32 %v6031, %v3721
        %v6033 = vadd.f32 %v6032, %v3727
        %v6034 = vadd.f32 %v6033, %v3733
        %v6035 = vadd.f32 %v6034, %v3739
        %v6036 = vadd.f32 %v6035, %v3745
        %v6037 = vadd.f32 %v6036, %v3751
        %v6038 = vadd.f32 %v6037, %v3757
        %v6039 = vadd.f32 %v6038, %v3763
        %v6040 = vadd.f32 %v6039, %v3769
        %v6041 = vadd.f32 %v6040, %v3775
        %v6042 = vadd.f32 %v6041, %v3781
        %v6043 = vadd.f32 %v6042, %v3787
        %v6044 = vadd.f32 %v6043, %v3793
        %v6045 = vadd.f32 %v6044, %v3799
        %v6046 = vadd.f32 %v6045, %v3805
        %v6047 = vadd.f32 %v6046, %v3811
        %v6048 = vadd.f32 %v6047, %v3817
        %v6049 = vadd.f32 %v6048, %v3823
        %v6050 = vadd.f32 %v6049, %v3829
        %v6051 = vadd.f32 %v6050, %v3835
        %v6052 = vadd.f32 %v6051, %v3841
        %v6053 = vadd.f32 %v6052, %v3847
        %v6054 = vadd.f32 %v6053, %v3853
        %v6055 = vadd.f32 %v6054, %v3859
        %v6056 = vrot.slane %v6055, 4
        %v6057 = vadd.f32 %v6055, %v6056
        %v6058 = vrot.slane %v6057, 2
        %v6059 = vadd.f32 %v6057, %v6058
        %v6060 = vrot.slane %v6059, 1
        %v6061 = vadd.f32 %v6059, %v6060
        %v6062 = vadd.f32 %v3860, %v3866
        %v6063 = vadd.f32 %v6062, %v3872
        %v6064 = vadd.f32 %v6063, %v3878
        %v6065 = vadd.f32 %v6064, %v3884
        %v6066 = vadd.f32 %v6065, %v3890
        %v6067 = vadd.f32 %v6066, %v3896
        %v6068 = vadd.f32 %v6067, %v3902
        %v6069 = vadd.f32 %v6068, %v3908
        %v6070 = vadd.f32 %v6069, %v3914
        %v6071 = vadd.f32 %v6070, %v3920
        %v6072 = vadd.f32 %v6071, %v3926
        %v6073 = vadd.f32 %v6072, %v3932
        %v6074 = vadd.f32 %v6073, %v3938
        %v6075 = vadd.f32 %v6074, %v3944
        %v6076 = vadd.f32 %v6075, %v3950
        %v6077 = vadd.f32 %v6076, %v3956
        %v6078 = vadd.f32 %v6077, %v3962
        %v6079 = vadd.f32 %v6078, %v3968
        %v6080 = vadd.f32 %v6079, %v3974
        %v6081 = vadd.f32 %v6080, %v3980
        %v6082 = vadd.f32 %v6081, %v3986
        %v6083 = vadd.f32 %v6082, %v3992
        %v6084 = vadd.f32 %v6083, %v3998
        %v6085 = vadd.f32 %v6084, %v4004
        %v6086 = vadd.f32 %v6085, %v4010
        %v6087 = vadd.f32 %v6086, %v4016
        %v6088 = vadd.f32 %v6087, %v4022
        %v6089 = vadd.f32 %v6088, %v4028
        %v6090 = vadd.f32 %v6089, %v4034
        %v6091 = vadd.f32 %v6090, %v4040
        %v6092 = vadd.f32 %v6091, %v4046
        %v6093 = vadd.f32 %v6092, %v4052
        %v6094 = vadd.f32 %v6093, %v4058
        %v6095 = vadd.f32 %v6094, %v4064
        %v6096 = vadd.f32 %v6095, %v4070
        %v6097 = vadd.f32 %v6096, %v4076
        %v6098 = vadd.f32 %v6097, %v4082
        %v6099 = vadd.f32 %v6098, %v4088
        %v6100 = vadd.f32 %v6099, %v4094
        %v6101 = vadd.f32 %v6100, %v4100
        %v6102 = vadd.f32 %v6101, %v4106
        %v6103 = vrot.slane %v6102, 4
        %v6104 = vadd.f32 %v6102, %v6103
        %v6105 = vrot.slane %v6104, 2
        %v6106 = vadd.f32 %v6104, %v6105
        %v6107 = vrot.slane %v6106, 1
        %v6108 = vadd.f32 %v6106, %v6107
        %v6109 = vadd.f32 %v3861, %v3867
        %v6110 = vadd.f32 %v6109, %v3873
        %v6111 = vadd.f32 %v6110, %v3879
        %v6112 = vadd.f32 %v6111, %v3885
        %v6113 = vadd.f32 %v6112, %v3891
        %v6114 = vadd.f32 %v6113, %v3897
        %v6115 = vadd.f32 %v6114, %v3903
        %v6116 = vadd.f32 %v6115, %v3909
        %v6117 = vadd.f32 %v6116, %v3915
        %v6118 = vadd.f32 %v6117, %v3921
        %v6119 = vadd.f32 %v6118, %v3927
        %v6120 = vadd.f32 %v6119, %v3933
        %v6121 = vadd.f32 %v6120, %v3939
        %v6122 = vadd.f32 %v6121, %v3945
        %v6123 = vadd.f32 %v6122, %v3951
        %v6124 = vadd.f32 %v6123, %v3957
        %v6125 = vadd.f32 %v6124, %v3963
        %v6126 = vadd.f32 %v6125, %v3969
        %v6127 = vadd.f32 %v6126, %v3975
        %v6128 = vadd.f32 %v6127, %v3981
        %v6129 = vadd.f32 %v6128, %v3987
        %v6130 = vadd.f32 %v6129, %v3993
        %v6131 = vadd.f32 %v6130, %v3999
        %v6132 = vadd.f32 %v6131, %v4005
        %v6133 = vadd.f32 %v6132, %v4011
        %v6134 = vadd.f32 %v6133, %v4017
        %v6135 = vadd.f32 %v6134, %v4023
        %v6136 = vadd.f32 %v6135, %v4029
        %v6137 = vadd.f32 %v6136, %v4035
        %v6138 = vadd.f32 %v6137, %v4041
        %v6139 = vadd.f32 %v6138, %v4047
        %v6140 = vadd.f32 %v6139, %v4053
        %v6141 = vadd.f32 %v6140, %v4059
        %v6142 = vadd.f32 %v6141, %v4065
        %v6143 = vadd.f32 %v6142, %v4071
        %v6144 = vadd.f32 %v6143, %v4077
        %v6145 = vadd.f32 %v6144, %v4083
        %v6146 = vadd.f32 %v6145, %v4089
        %v6147 = vadd.f32 %v6146, %v4095
        %v6148 = vadd.f32 %v6147, %v4101
        %v6149 = vadd.f32 %v6148, %v4107
        %v6150 = vrot.slane %v6149, 4
        %v6151 = vadd.f32 %v6149, %v6150
        %v6152 = vrot.slane %v6151, 2
        %v6153 = vadd.f32 %v6151, %v6152
        %v6154 = vrot.slane %v6153, 1
        %v6155 = vadd.f32 %v6153, %v6154
        %v6156 = vadd.f32 %v3862, %v3868
        %v6157 = vadd.f32 %v6156, %v3874
        %v6158 = vadd.f32 %v6157, %v3880
        %v6159 = vadd.f32 %v6158, %v3886
        %v6160 = vadd.f32 %v6159, %v3892
        %v6161 = vadd.f32 %v6160, %v3898
        %v6162 = vadd.f32 %v6161, %v3904
        %v6163 = vadd.f32 %v6162, %v3910
        %v6164 = vadd.f32 %v6163, %v3916
        %v6165 = vadd.f32 %v6164, %v3922
        %v6166 = vadd.f32 %v6165, %v3928
        %v6167 = vadd.f32 %v6166, %v3934
        %v6168 = vadd.f32 %v6167, %v3940
        %v6169 = vadd.f32 %v6168, %v3946
        %v6170 = vadd.f32 %v6169, %v3952
        %v6171 = vadd.f32 %v6170, %v3958
        %v6172 = vadd.f32 %v6171, %v3964
        %v6173 = vadd.f32 %v6172, %v3970
        %v6174 = vadd.f32 %v6173, %v3976
        %v6175 = vadd.f32 %v6174, %v3982
        %v6176 = vadd.f32 %v6175, %v3988
        %v6177 = vadd.f32 %v6176, %v3994
        %v6178 = vadd.f32 %v6177, %v4000
        %v6179 = vadd.f32 %v6178, %v4006
        %v6180 = vadd.f32 %v6179, %v4012
        %v6181 = vadd.f32 %v6180, %v4018
        %v6182 = vadd.f32 %v6181, %v4024
        %v6183 = vadd.f32 %v6182, %v4030
        %v6184 = vadd.f32 %v6183, %v4036
        %v6185 = vadd.f32 %v6184, %v4042
        %v6186 = vadd.f32 %v6185, %v4048
        %v6187 = vadd.f32 %v6186, %v4054
        %v6188 = vadd.f32 %v6187, %v4060
        %v6189 = vadd.f32 %v6188, %v4066
        %v6190 = vadd.f32 %v6189, %v4072
        %v6191 = vadd.f32 %v6190, %v4078
        %v6192 = vadd.f32 %v6191, %v4084
        %v6193 = vadd.f32 %v6192, %v4090
        %v6194 = vadd.f32 %v6193, %v4096
        %v6195 = vadd.f32 %v6194, %v4102
        %v6196 = vadd.f32 %v6195, %v4108
        %v6197 = vrot.slane %v6196, 4
        %v6198 = vadd.f32 %v6196, %v6197
        %v6199 = vrot.slane %v6198, 2
        %v6200 = vadd.f32 %v6198, %v6199
        %v6201 = vrot.slane %v6200, 1
        %v6202 = vadd.f32 %v6200, %v6201
        %v6203 = vadd.f32 %v3863, %v3869
        %v6204 = vadd.f32 %v6203, %v3875
        %v6205 = vadd.f32 %v6204, %v3881
        %v6206 = vadd.f32 %v6205, %v3887
        %v6207 = vadd.f32 %v6206, %v3893
        %v6208 = vadd.f32 %v6207, %v3899
        %v6209 = vadd.f32 %v6208, %v3905
        %v6210 = vadd.f32 %v6209, %v3911
        %v6211 = vadd.f32 %v6210, %v3917
        %v6212 = vadd.f32 %v6211, %v3923
        %v6213 = vadd.f32 %v6212, %v3929
        %v6214 = vadd.f32 %v6213, %v3935
        %v6215 = vadd.f32 %v6214, %v3941
        %v6216 = vadd.f32 %v6215, %v3947
        %v6217 = vadd.f32 %v6216, %v3953
        %v6218 = vadd.f32 %v6217, %v3959
        %v6219 = vadd.f32 %v6218, %v3965
        %v6220 = vadd.f32 %v6219, %v3971
        %v6221 = vadd.f32 %v6220, %v3977
        %v6222 = vadd.f32 %v6221, %v3983
        %v6223 = vadd.f32 %v6222, %v3989
        %v6224 = vadd.f32 %v6223, %v3995
        %v6225 = vadd.f32 %v6224, %v4001
        %v6226 = vadd.f32 %v6225, %v4007
        %v6227 = vadd.f32 %v6226, %v4013
        %v6228 = vadd.f32 %v6227, %v4019
        %v6229 = vadd.f32 %v6228, %v4025
        %v6230 = vadd.f32 %v6229, %v4031
        %v6231 = vadd.f32 %v6230, %v4037
        %v6232 = vadd.f32 %v6231, %v4043
        %v6233 = vadd.f32 %v6232, %v4049
        %v6234 = vadd.f32 %v6233, %v4055
        %v6235 = vadd.f32 %v6234, %v4061
        %v6236 = vadd.f32 %v6235, %v4067
        %v6237 = vadd.f32 %v6236, %v4073
        %v6238 = vadd.f32 %v6237, %v4079
        %v6239 = vadd.f32 %v6238, %v4085
        %v6240 = vadd.f32 %v6239, %v4091
        %v6241 = vadd.f32 %v6240, %v4097
        %v6242 = vadd.f32 %v6241, %v4103
        %v6243 = vadd.f32 %v6242, %v4109
        %v6244 = vrot.slane %v6243, 4
        %v6245 = vadd.f32 %v6243, %v6244
        %v6246 = vrot.slane %v6245, 2
        %v6247 = vadd.f32 %v6245, %v6246
        %v6248 = vrot.slane %v6247, 1
        %v6249 = vadd.f32 %v6247, %v6248
        %v6250 = vadd.f32 %v3864, %v3870
        %v6251 = vadd.f32 %v6250, %v3876
        %v6252 = vadd.f32 %v6251, %v3882
        %v6253 = vadd.f32 %v6252, %v3888
        %v6254 = vadd.f32 %v6253, %v3894
        %v6255 = vadd.f32 %v6254, %v3900
        %v6256 = vadd.f32 %v6255, %v3906
        %v6257 = vadd.f32 %v6256, %v3912
        %v6258 = vadd.f32 %v6257, %v3918
        %v6259 = vadd.f32 %v6258, %v3924
        %v6260 = vadd.f32 %v6259, %v3930
        %v6261 = vadd.f32 %v6260, %v3936
        %v6262 = vadd.f32 %v6261, %v3942
        %v6263 = vadd.f32 %v6262, %v3948
        %v6264 = vadd.f32 %v6263, %v3954
        %v6265 = vadd.f32 %v6264, %v3960
        %v6266 = vadd.f32 %v6265, %v3966
        %v6267 = vadd.f32 %v6266, %v3972
        %v6268 = vadd.f32 %v6267, %v3978
        %v6269 = vadd.f32 %v6268, %v3984
        %v6270 = vadd.f32 %v6269, %v3990
        %v6271 = vadd.f32 %v6270, %v3996
        %v6272 = vadd.f32 %v6271, %v4002
        %v6273 = vadd.f32 %v6272, %v4008
        %v6274 = vadd.f32 %v6273, %v4014
        %v6275 = vadd.f32 %v6274, %v4020
        %v6276 = vadd.f32 %v6275, %v4026
        %v6277 = vadd.f32 %v6276, %v4032
        %v6278 = vadd.f32 %v6277, %v4038
        %v6279 = vadd.f32 %v6278, %v4044
        %v6280 = vadd.f32 %v6279, %v4050
        %v6281 = vadd.f32 %v6280, %v4056
        %v6282 = vadd.f32 %v6281, %v4062
        %v6283 = vadd.f32 %v6282, %v4068
        %v6284 = vadd.f32 %v6283, %v4074
        %v6285 = vadd.f32 %v6284, %v4080
        %v6286 = vadd.f32 %v6285, %v4086
        %v6287 = vadd.f32 %v6286, %v4092
        %v6288 = vadd.f32 %v6287, %v4098
        %v6289 = vadd.f32 %v6288, %v4104
        %v6290 = vadd.f32 %v6289, %v4110
        %v6291 = vrot.slane %v6290, 4
        %v6292 = vadd.f32 %v6290, %v6291
        %v6293 = vrot.slane %v6292, 2
        %v6294 = vadd.f32 %v6292, %v6293
        %v6295 = vrot.slane %v6294, 1
        %v6296 = vadd.f32 %v6294, %v6295
        %v6297 = vadd.f32 %v3865, %v3871
        %v6298 = vadd.f32 %v6297, %v3877
        %v6299 = vadd.f32 %v6298, %v3883
        %v6300 = vadd.f32 %v6299, %v3889
        %v6301 = vadd.f32 %v6300, %v3895
        %v6302 = vadd.f32 %v6301, %v3901
        %v6303 = vadd.f32 %v6302, %v3907
        %v6304 = vadd.f32 %v6303, %v3913
        %v6305 = vadd.f32 %v6304, %v3919
        %v6306 = vadd.f32 %v6305, %v3925
        %v6307 = vadd.f32 %v6306, %v3931
        %v6308 = vadd.f32 %v6307, %v3937
        %v6309 = vadd.f32 %v6308, %v3943
        %v6310 = vadd.f32 %v6309, %v3949
        %v6311 = vadd.f32 %v6310, %v3955
        %v6312 = vadd.f32 %v6311, %v3961
        %v6313 = vadd.f32 %v6312, %v3967
        %v6314 = vadd.f32 %v6313, %v3973
        %v6315 = vadd.f32 %v6314, %v3979
        %v6316 = vadd.f32 %v6315, %v3985
        %v6317 = vadd.f32 %v6316, %v3991
        %v6318 = vadd.f32 %v6317, %v3997
        %v6319 = vadd.f32 %v6318, %v4003
        %v6320 = vadd.f32 %v6319, %v4009
        %v6321 = vadd.f32 %v6320, %v4015
        %v6322 = vadd.f32 %v6321, %v4021
        %v6323 = vadd.f32 %v6322, %v4027
        %v6324 = vadd.f32 %v6323, %v4033
        %v6325 = vadd.f32 %v6324, %v4039
        %v6326 = vadd.f32 %v6325, %v4045
        %v6327 = vadd.f32 %v6326, %v4051
        %v6328 = vadd.f32 %v6327, %v4057
        %v6329 = vadd.f32 %v6328, %v4063
        %v6330 = vadd.f32 %v6329, %v4069
        %v6331 = vadd.f32 %v6330, %v4075
        %v6332 = vadd.f32 %v6331, %v4081
        %v6333 = vadd.f32 %v6332, %v4087
        %v6334 = vadd.f32 %v6333, %v4093
        %v6335 = vadd.f32 %v6334, %v4099
        %v6336 = vadd.f32 %v6335, %v4105
        %v6337 = vadd.f32 %v6336, %v4111
        %v6338 = vrot.slane %v6337, 4
        %v6339 = vadd.f32 %v6337, %v6338
        %v6340 = vrot.slane %v6339, 2
        %v6341 = vadd.f32 %v6339, %v6340
        %v6342 = vrot.slane %v6341, 1
        %v6343 = vadd.f32 %v6341, %v6342
        %v6344 = vadd.f32 %v4112, %v4118
        %v6345 = vadd.f32 %v6344, %v4124
        %v6346 = vadd.f32 %v6345, %v4130
        %v6347 = vadd.f32 %v6346, %v4136
        %v6348 = vadd.f32 %v6347, %v4142
        %v6349 = vadd.f32 %v6348, %v4148
        %v6350 = vadd.f32 %v6349, %v4154
        %v6351 = vadd.f32 %v6350, %v4160
        %v6352 = vadd.f32 %v6351, %v4166
        %v6353 = vadd.f32 %v6352, %v4172
        %v6354 = vadd.f32 %v6353, %v4178
        %v6355 = vadd.f32 %v6354, %v4184
        %v6356 = vadd.f32 %v6355, %v4190
        %v6357 = vadd.f32 %v6356, %v4196
        %v6358 = vadd.f32 %v6357, %v4202
        %v6359 = vadd.f32 %v6358, %v4208
        %v6360 = vadd.f32 %v6359, %v4214
        %v6361 = vadd.f32 %v6360, %v4220
        %v6362 = vadd.f32 %v6361, %v4226
        %v6363 = vadd.f32 %v6362, %v4232
        %v6364 = vadd.f32 %v6363, %v4238
        %v6365 = vadd.f32 %v6364, %v4244
        %v6366 = vadd.f32 %v6365, %v4250
        %v6367 = vadd.f32 %v6366, %v4256
        %v6368 = vadd.f32 %v6367, %v4262
        %v6369 = vadd.f32 %v6368, %v4268
        %v6370 = vadd.f32 %v6369, %v4274
        %v6371 = vadd.f32 %v6370, %v4280
        %v6372 = vadd.f32 %v6371, %v4286
        %v6373 = vadd.f32 %v6372, %v4292
        %v6374 = vadd.f32 %v6373, %v4298
        %v6375 = vadd.f32 %v6374, %v4304
        %v6376 = vadd.f32 %v6375, %v4310
        %v6377 = vadd.f32 %v6376, %v4316
        %v6378 = vadd.f32 %v6377, %v4322
        %v6379 = vadd.f32 %v6378, %v4328
        %v6380 = vadd.f32 %v6379, %v4334
        %v6381 = vadd.f32 %v6380, %v4340
        %v6382 = vadd.f32 %v6381, %v4346
        %v6383 = vadd.f32 %v6382, %v4352
        %v6384 = vadd.f32 %v6383, %v4358
        %v6385 = vrot.slane %v6384, 4
        %v6386 = vadd.f32 %v6384, %v6385
        %v6387 = vrot.slane %v6386, 2
        %v6388 = vadd.f32 %v6386, %v6387
        %v6389 = vrot.slane %v6388, 1
        %v6390 = vadd.f32 %v6388, %v6389
        %v6391 = vadd.f32 %v4113, %v4119
        %v6392 = vadd.f32 %v6391, %v4125
        %v6393 = vadd.f32 %v6392, %v4131
        %v6394 = vadd.f32 %v6393, %v4137
        %v6395 = vadd.f32 %v6394, %v4143
        %v6396 = vadd.f32 %v6395, %v4149
        %v6397 = vadd.f32 %v6396, %v4155
        %v6398 = vadd.f32 %v6397, %v4161
        %v6399 = vadd.f32 %v6398, %v4167
        %v6400 = vadd.f32 %v6399, %v4173
        %v6401 = vadd.f32 %v6400, %v4179
        %v6402 = vadd.f32 %v6401, %v4185
        %v6403 = vadd.f32 %v6402, %v4191
        %v6404 = vadd.f32 %v6403, %v4197
        %v6405 = vadd.f32 %v6404, %v4203
        %v6406 = vadd.f32 %v6405, %v4209
        %v6407 = vadd.f32 %v6406, %v4215
        %v6408 = vadd.f32 %v6407, %v4221
        %v6409 = vadd.f32 %v6408, %v4227
        %v6410 = vadd.f32 %v6409, %v4233
        %v6411 = vadd.f32 %v6410, %v4239
        %v6412 = vadd.f32 %v6411, %v4245
        %v6413 = vadd.f32 %v6412, %v4251
        %v6414 = vadd.f32 %v6413, %v4257
        %v6415 = vadd.f32 %v6414, %v4263
        %v6416 = vadd.f32 %v6415, %v4269
        %v6417 = vadd.f32 %v6416, %v4275
        %v6418 = vadd.f32 %v6417, %v4281
        %v6419 = vadd.f32 %v6418, %v4287
        %v6420 = vadd.f32 %v6419, %v4293
        %v6421 = vadd.f32 %v6420, %v4299
        %v6422 = vadd.f32 %v6421, %v4305
        %v6423 = vadd.f32 %v6422, %v4311
        %v6424 = vadd.f32 %v6423, %v4317
        %v6425 = vadd.f32 %v6424, %v4323
        %v6426 = vadd.f32 %v6425, %v4329
        %v6427 = vadd.f32 %v6426, %v4335
        %v6428 = vadd.f32 %v6427, %v4341
        %v6429 = vadd.f32 %v6428, %v4347
        %v6430 = vadd.f32 %v6429, %v4353
        %v6431 = vadd.f32 %v6430, %v4359
        %v6432 = vrot.slane %v6431, 4
        %v6433 = vadd.f32 %v6431, %v6432
        %v6434 = vrot.slane %v6433, 2
        %v6435 = vadd.f32 %v6433, %v6434
        %v6436 = vrot.slane %v6435, 1
        %v6437 = vadd.f32 %v6435, %v6436
        %v6438 = vadd.f32 %v4114, %v4120
        %v6439 = vadd.f32 %v6438, %v4126
        %v6440 = vadd.f32 %v6439, %v4132
        %v6441 = vadd.f32 %v6440, %v4138
        %v6442 = vadd.f32 %v6441, %v4144
        %v6443 = vadd.f32 %v6442, %v4150
        %v6444 = vadd.f32 %v6443, %v4156
        %v6445 = vadd.f32 %v6444, %v4162
        %v6446 = vadd.f32 %v6445, %v4168
        %v6447 = vadd.f32 %v6446, %v4174
        %v6448 = vadd.f32 %v6447, %v4180
        %v6449 = vadd.f32 %v6448, %v4186
        %v6450 = vadd.f32 %v6449, %v4192
        %v6451 = vadd.f32 %v6450, %v4198
        %v6452 = vadd.f32 %v6451, %v4204
        %v6453 = vadd.f32 %v6452, %v4210
        %v6454 = vadd.f32 %v6453, %v4216
        %v6455 = vadd.f32 %v6454, %v4222
        %v6456 = vadd.f32 %v6455, %v4228
        %v6457 = vadd.f32 %v6456, %v4234
        %v6458 = vadd.f32 %v6457, %v4240
        %v6459 = vadd.f32 %v6458, %v4246
        %v6460 = vadd.f32 %v6459, %v4252
        %v6461 = vadd.f32 %v6460, %v4258
        %v6462 = vadd.f32 %v6461, %v4264
        %v6463 = vadd.f32 %v6462, %v4270
        %v6464 = vadd.f32 %v6463, %v4276
        %v6465 = vadd.f32 %v6464, %v4282
        %v6466 = vadd.f32 %v6465, %v4288
        %v6467 = vadd.f32 %v6466, %v4294
        %v6468 = vadd.f32 %v6467, %v4300
        %v6469 = vadd.f32 %v6468, %v4306
        %v6470 = vadd.f32 %v6469, %v4312
        %v6471 = vadd.f32 %v6470, %v4318
        %v6472 = vadd.f32 %v6471, %v4324
        %v6473 = vadd.f32 %v6472, %v4330
        %v6474 = vadd.f32 %v6473, %v4336
        %v6475 = vadd.f32 %v6474, %v4342
        %v6476 = vadd.f32 %v6475, %v4348
        %v6477 = vadd.f32 %v6476, %v4354
        %v6478 = vadd.f32 %v6477, %v4360
        %v6479 = vrot.slane %v6478, 4
        %v6480 = vadd.f32 %v6478, %v6479
        %v6481 = vrot.slane %v6480, 2
        %v6482 = vadd.f32 %v6480, %v6481
        %v6483 = vrot.slane %v6482, 1
        %v6484 = vadd.f32 %v6482, %v6483
        %v6485 = vadd.f32 %v4115, %v4121
        %v6486 = vadd.f32 %v6485, %v4127
        %v6487 = vadd.f32 %v6486, %v4133
        %v6488 = vadd.f32 %v6487, %v4139
        %v6489 = vadd.f32 %v6488, %v4145
        %v6490 = vadd.f32 %v6489, %v4151
        %v6491 = vadd.f32 %v6490, %v4157
        %v6492 = vadd.f32 %v6491, %v4163
        %v6493 = vadd.f32 %v6492, %v4169
        %v6494 = vadd.f32 %v6493, %v4175
        %v6495 = vadd.f32 %v6494, %v4181
        %v6496 = vadd.f32 %v6495, %v4187
        %v6497 = vadd.f32 %v6496, %v4193
        %v6498 = vadd.f32 %v6497, %v4199
        %v6499 = vadd.f32 %v6498, %v4205
        %v6500 = vadd.f32 %v6499, %v4211
        %v6501 = vadd.f32 %v6500, %v4217
        %v6502 = vadd.f32 %v6501, %v4223
        %v6503 = vadd.f32 %v6502, %v4229
        %v6504 = vadd.f32 %v6503, %v4235
        %v6505 = vadd.f32 %v6504, %v4241
        %v6506 = vadd.f32 %v6505, %v4247
        %v6507 = vadd.f32 %v6506, %v4253
        %v6508 = vadd.f32 %v6507, %v4259
        %v6509 = vadd.f32 %v6508, %v4265
        %v6510 = vadd.f32 %v6509, %v4271
        %v6511 = vadd.f32 %v6510, %v4277
        %v6512 = vadd.f32 %v6511, %v4283
        %v6513 = vadd.f32 %v6512, %v4289
        %v6514 = vadd.f32 %v6513, %v4295
        %v6515 = vadd.f32 %v6514, %v4301
        %v6516 = vadd.f32 %v6515, %v4307
        %v6517 = vadd.f32 %v6516, %v4313
        %v6518 = vadd.f32 %v6517, %v4319
        %v6519 = vadd.f32 %v6518, %v4325
        %v6520 = vadd.f32 %v6519, %v4331
        %v6521 = vadd.f32 %v6520, %v4337
        %v6522 = vadd.f32 %v6521, %v4343
        %v6523 = vadd.f32 %v6522, %v4349
        %v6524 = vadd.f32 %v6523, %v4355
        %v6525 = vadd.f32 %v6524, %v4361
        %v6526 = vrot.slane %v6525, 4
        %v6527 = vadd.f32 %v6525, %v6526
        %v6528 = vrot.slane %v6527, 2
        %v6529 = vadd.f32 %v6527, %v6528
        %v6530 = vrot.slane %v6529, 1
        %v6531 = vadd.f32 %v6529, %v6530
        %v6532 = vadd.f32 %v4116, %v4122
        %v6533 = vadd.f32 %v6532, %v4128
        %v6534 = vadd.f32 %v6533, %v4134
        %v6535 = vadd.f32 %v6534, %v4140
        %v6536 = vadd.f32 %v6535, %v4146
        %v6537 = vadd.f32 %v6536, %v4152
        %v6538 = vadd.f32 %v6537, %v4158
        %v6539 = vadd.f32 %v6538, %v4164
        %v6540 = vadd.f32 %v6539, %v4170
        %v6541 = vadd.f32 %v6540, %v4176
        %v6542 = vadd.f32 %v6541, %v4182
        %v6543 = vadd.f32 %v6542, %v4188
        %v6544 = vadd.f32 %v6543, %v4194
        %v6545 = vadd.f32 %v6544, %v4200
        %v6546 = vadd.f32 %v6545, %v4206
        %v6547 = vadd.f32 %v6546, %v4212
        %v6548 = vadd.f32 %v6547, %v4218
        %v6549 = vadd.f32 %v6548, %v4224
        %v6550 = vadd.f32 %v6549, %v4230
        %v6551 = vadd.f32 %v6550, %v4236
        %v6552 = vadd.f32 %v6551, %v4242
        %v6553 = vadd.f32 %v6552, %v4248
        %v6554 = vadd.f32 %v6553, %v4254
        %v6555 = vadd.f32 %v6554, %v4260
        %v6556 = vadd.f32 %v6555, %v4266
        %v6557 = vadd.f32 %v6556, %v4272
        %v6558 = vadd.f32 %v6557, %v4278
        %v6559 = vadd.f32 %v6558, %v4284
        %v6560 = vadd.f32 %v6559, %v4290
        %v6561 = vadd.f32 %v6560, %v4296
        %v6562 = vadd.f32 %v6561, %v4302
        %v6563 = vadd.f32 %v6562, %v4308
        %v6564 = vadd.f32 %v6563, %v4314
        %v6565 = vadd.f32 %v6564, %v4320
        %v6566 = vadd.f32 %v6565, %v4326
        %v6567 = vadd.f32 %v6566, %v4332
        %v6568 = vadd.f32 %v6567, %v4338
        %v6569 = vadd.f32 %v6568, %v4344
        %v6570 = vadd.f32 %v6569, %v4350
        %v6571 = vadd.f32 %v6570, %v4356
        %v6572 = vadd.f32 %v6571, %v4362
        %v6573 = vrot.slane %v6572, 4
        %v6574 = vadd.f32 %v6572, %v6573
        %v6575 = vrot.slane %v6574, 2
        %v6576 = vadd.f32 %v6574, %v6575
        %v6577 = vrot.slane %v6576, 1
        %v6578 = vadd.f32 %v6576, %v6577
        %v6579 = vadd.f32 %v4117, %v4123
        %v6580 = vadd.f32 %v6579, %v4129
        %v6581 = vadd.f32 %v6580, %v4135
        %v6582 = vadd.f32 %v6581, %v4141
        %v6583 = vadd.f32 %v6582, %v4147
        %v6584 = vadd.f32 %v6583, %v4153
        %v6585 = vadd.f32 %v6584, %v4159
        %v6586 = vadd.f32 %v6585, %v4165
        %v6587 = vadd.f32 %v6586, %v4171
        %v6588 = vadd.f32 %v6587, %v4177
        %v6589 = vadd.f32 %v6588, %v4183
        %v6590 = vadd.f32 %v6589, %v4189
        %v6591 = vadd.f32 %v6590, %v4195
        %v6592 = vadd.f32 %v6591, %v4201
        %v6593 = vadd.f32 %v6592, %v4207
        %v6594 = vadd.f32 %v6593, %v4213
        %v6595 = vadd.f32 %v6594, %v4219
        %v6596 = vadd.f32 %v6595, %v4225
        %v6597 = vadd.f32 %v6596, %v4231
        %v6598 = vadd.f32 %v6597, %v4237
        %v6599 = vadd.f32 %v6598, %v4243
        %v6600 = vadd.f32 %v6599, %v4249
        %v6601 = vadd.f32 %v6600, %v4255
        %v6602 = vadd.f32 %v6601, %v4261
        %v6603 = vadd.f32 %v6602, %v4267
        %v6604 = vadd.f32 %v6603, %v4273
        %v6605 = vadd.f32 %v6604, %v4279
        %v6606 = vadd.f32 %v6605, %v4285
        %v6607 = vadd.f32 %v6606, %v4291
        %v6608 = vadd.f32 %v6607, %v4297
        %v6609 = vadd.f32 %v6608, %v4303
        %v6610 = vadd.f32 %v6609, %v4309
        %v6611 = vadd.f32 %v6610, %v4315
        %v6612 = vadd.f32 %v6611, %v4321
        %v6613 = vadd.f32 %v6612, %v4327
        %v6614 = vadd.f32 %v6613, %v4333
        %v6615 = vadd.f32 %v6614, %v4339
        %v6616 = vadd.f32 %v6615, %v4345
        %v6617 = vadd.f32 %v6616, %v4351
        %v6618 = vadd.f32 %v6617, %v4357
        %v6619 = vadd.f32 %v6618, %v4363
        %v6620 = vrot.slane %v6619, 4
        %v6621 = vadd.f32 %v6619, %v6620
        %v6622 = vrot.slane %v6621, 2
        %v6623 = vadd.f32 %v6621, %v6622
        %v6624 = vrot.slane %v6623, 1
        %v6625 = vadd.f32 %v6623, %v6624
        %vm6674 = vcmask 1041409
        %v6675 = vsel %vm6674, %v4698, %v4416
        %vm6676 = vcmask 1042434
        %v6677 = vsel %vm6676, %v4980, %v6675
        %vm6678 = vcmask 1043459
        %v6679 = vsel %vm6678, %v5262, %v6677
        %vm6680 = vcmask 1044484
        %v6681 = vsel %vm6680, %v5544, %v6679
        %vm6682 = vcmask 1045509
        %v6683 = vsel %vm6682, %v5826, %v6681
        %vm6684 = vcmask 1046534
        %v6685 = vsel %vm6684, %v6108, %v6683
        %vm6686 = vcmask 1047559
        %v6687 = vsel %vm6686, %v6390, %v6685
        %v6688 = vsel %vm6674, %v4745, %v4463
        %v6689 = vsel %vm6676, %v5027, %v6688
        %v6690 = vsel %vm6678, %v5309, %v6689
        %v6691 = vsel %vm6680, %v5591, %v6690
        %v6692 = vsel %vm6682, %v5873, %v6691
        %v6693 = vsel %vm6684, %v6155, %v6692
        %v6694 = vsel %vm6686, %v6437, %v6693
        %v6695 = vsel %vm6674, %v4792, %v4510
        %v6696 = vsel %vm6676, %v5074, %v6695
        %v6697 = vsel %vm6678, %v5356, %v6696
        %v6698 = vsel %vm6680, %v5638, %v6697
        %v6699 = vsel %vm6682, %v5920, %v6698
        %v6700 = vsel %vm6684, %v6202, %v6699
        %v6701 = vsel %vm6686, %v6484, %v6700
        %v6702 = vsel %vm6674, %v4839, %v4557
        %v6703 = vsel %vm6676, %v5121, %v6702
        %v6704 = vsel %vm6678, %v5403, %v6703
        %v6705 = vsel %vm6680, %v5685, %v6704
        %v6706 = vsel %vm6682, %v5967, %v6705
        %v6707 = vsel %vm6684, %v6249, %v6706
        %v6708 = vsel %vm6686, %v6531, %v6707
        %v6709 = vsel %vm6674, %v4886, %v4604
        %v6710 = vsel %vm6676, %v5168, %v6709
        %v6711 = vsel %vm6678, %v5450, %v6710
        %v6712 = vsel %vm6680, %v5732, %v6711
        %v6713 = vsel %vm6682, %v6014, %v6712
        %v6714 = vsel %vm6684, %v6296, %v6713
        %v6715 = vsel %vm6686, %v6578, %v6714
        %v6716 = vsel %vm6674, %v4933, %v4651
        %v6717 = vsel %vm6676, %v5215, %v6716
        %v6718 = vsel %vm6678, %v5497, %v6717
        %v6719 = vsel %vm6680, %v5779, %v6718
        %v6720 = vsel %vm6682, %v6061, %v6719
        %v6721 = vsel %vm6684, %v6343, %v6720
        %v6722 = vsel %vm6686, %v6625, %v6721
        %v6729 = vadd.f32 %v4364, %v6687
        %v6730 = vadd.f32 %v4365, %v6694
        %v6731 = vadd.f32 %v4366, %v6701
        %v6732 = vadd.f32 %v4367, %v6708
        %v6733 = vadd.f32 %v4368, %v6715
        %v6734 = vadd.f32 %v4369, %v6722
        %6735 = vst [vmem:[%s185] sm:$0xff] %v6729
        %6736 = vst [vmem:[%s185 + $0x8] sm:$0xff] %v6730
        %6737 = vst [vmem:[%s185 + $0x10] sm:$0xff] %v6731
        %6738 = vst [vmem:[%s185 + $0x18] sm:$0xff] %v6732
        %6739 = vst [vmem:[%s185 + $0x20] sm:$0xff] %v6733
        %6740 = vst [vmem:[%s185 + $0x28] sm:$0xff] %v6734
        %p6741 = scmp.eq.s32.totalorder %s23, 1
        // Predicated region
        $region33: #{tpu_custom_call.1} parent=23 // pred_check
          %p6742 = pneg %p6741
        $region34: #{tpu_custom_call.1} parent=23 // pred_check_branch
          %6744 = sbr.rel (%p6742) target = $region36
        $region35: #{tpu_custom_call.1} parent=23 // pred_region
          %v6745 = vld [vmem:[%s185] sm:$0xff]
          %v6746 = vld [vmem:[%s185 + $0x8] sm:$0xff]
          %v6747 = vld [vmem:[%s185 + $0x10] sm:$0xff]
          %v6748 = vld [vmem:[%s185 + $0x18] sm:$0xff]
          %v6749 = vld [vmem:[%s185 + $0x20] sm:$0xff]
          %v6750 = vld [vmem:[%s185 + $0x28] sm:$0xff]
          %v6751 = vmul.f32 %v6745, 0.0028571428
          %v6752 = vmul.f32 %v6746, 0.0028571428
          %v6753 = vmul.f32 %v6747, 0.0028571428
          %v6754 = vmul.f32 %v6748, 0.0028571428
          %v6755 = vmul.f32 %v6749, 0.0028571428
          %v6756 = vmul.f32 %v6750, 0.0028571428
          %6757 = vst [vmem:[%s185] sm:$0xff] %v6751
          %6758 = vst [vmem:[%s185 + $0x8] sm:$0xff] %v6752
          %6759 = vst [vmem:[%s185 + $0x10] sm:$0xff] %v6753
          %6760 = vst [vmem:[%s185 + $0x18] sm:$0xff] %v6754
          %6761 = vst [vmem:[%s185 + $0x20] sm:$0xff] %v6755
          %6762 = vst [vmem:[%s185 + $0x28] sm:$0xff] %v6756
        $region36: #{tpu_custom_call.1} parent=23 // pred_fallthru
          _
        %s6763 = sand.u32 %s66, 1
        %s6764 = scalar_lea.sflag [#allocation4], %s6763
        %s6765 = sand.u32 %s66, 1
        %s6766 = smul.addr %s6765, 48
        %s6767 = scalar_lea.vmem [#allocation5], %s6766
        // Predicated region
        $region37: #{tpu_custom_call.1} parent=23 // pred_check
          %p6768 = pneg %p76
        $region38: #{tpu_custom_call.1} parent=23 // pred_check_branch
          %6770 = sbr.rel (%p6768) target = $region40
        $region39: #{tpu_custom_call.1} parent=23 // pred_region
          %s6772 = ssub.s32 768, 768
          %6773 = vsyncadd %s6764, %s6772
          %s6774 = smul.addr %s22, 6
          %s6775 = smul.addr %s6774, 128
          %s6776 = scalar_lea.hbm %s1, %s6775
          %s6778 = sshll.u32 %s6767, 4
          %s6779 = int_to_ptr.vmem [resolvable:$true] %s6778
          %6781 = dma.vmem_to_hbm [thread:$0]  %s6779, 768, %s6776, %s6764
        $region40: #{tpu_custom_call.1} parent=23 // pred_fallthru
          _
      $region24: #{tpu_custom_call.1} parent=5 // pred_fallthru
        _
      %p6782 = scmp.le.s32.totalorder 2, %s13
      // Predicated region
      $region41: #{tpu_custom_call.1} parent=5 // pred_check
        %p6783 = pneg %p6782
      $region42: #{tpu_custom_call.1} parent=5 // pred_check_branch
        %6785 = sbr.rel (%p6783) target = $region44
      $region43: #{tpu_custom_call.1} parent=5 // pred_region
        %s6786 = ssub.s32 %s13, 2
        // Predicated region
        $region45: #{tpu_custom_call.1} parent=43 // pred_check
          %p6787 = pneg %p82
        $region46: #{tpu_custom_call.1} parent=43 // pred_check_branch
          %6789 = sbr.rel (%p6787) target = $region48
        $region47: #{tpu_custom_call.1} parent=43 // pred_region
          %s6790 = sand.u32 %s67, 1
          %s6791 = scalar_lea.sflag [#allocation4], %s6790
          %s6792 = sand.u32 %s67, 1
          %s6793 = smul.addr %s6792, 48
          %s6794 = scalar_lea.vmem [#allocation5], %s6793
          %6795 = dma.done %s6791, 768
        $region48: #{tpu_custom_call.1} parent=43 // pred_fallthru
          _
      $region44: #{tpu_custom_call.1} parent=5 // pred_fallthru
        _
    $region6: #{tpu_custom_call.1} parent=1 // loop_footer
      %s17 = sadd.s32 1, %s13
    $region7: #{tpu_custom_call.1} parent=1 // loop_footer_branch
      %12 = sbr.rel target = $region3
    $region8: #{tpu_custom_call.1} parent=1 // loop_exit
      _
    %6796 = vsyncpa [#allocation3], 1
    %s6797 = scalar_lea.sflag [#allocation3], 1
    %6798 = vsyncpa %s6797, 1
    %6799 = vsyncpa [#allocation4], 1
    %s6800 = scalar_lea.sflag [#allocation4], 1
    %6801 = vsyncpa %s6800, 1

</llo_original>
